<compile_context>
chip_gen: v7x
topology: tpu7x:2x2x1
jax: 0.10.0
libtpu: 0.0.40
codegen_flags: <defaults>
</compile_context>

<pallas_src>
import functools

import jax
import jax.numpy as jnp
from jax import lax
from jax.experimental import pallas as pl
from jax.experimental.pallas import tpu as pltpu


def _act(x, kind):
    if kind == "relu":
        return jnp.maximum(x, 0.0)
    if kind == "hswish":
        return x * jnp.clip(x + 3.0, 0.0, 6.0) * (1.0 / 6.0)
    return x  # identity


def _round_up(x, m):
    return ((x + m - 1) // m) * m


def _vmem_limit_bytes():
    # Per-generation scoped-VMEM ceiling: ~half of physical VMEM, capped at
    # 64 MB (v5e/v6e: 128 MiB physical -> 64 MB; v7x: 64 MiB -> 32 MB).
    try:
        cap = int(pltpu.get_tpu_info().vmem_capacity_bytes)
    except Exception:
        cap = 64 * 1024 * 1024
    return int(min(cap // 2, 64 * 1024 * 1024))


def _pick_rb(Ho, Wo, Hp, Wp, Cin, k, stride, cb, budget, max_rb=None):
    """Largest divisor of Ho whose kernel-A working set fits `budget` bytes."""
    def est(rb):
        rows_in = (rb - 1) * stride + k
        x_blk = Hp * _round_up(Wp, 8) * _round_up(Cin, 128) * 4 * 2   # resident input (lane padded)
        y_blk = rb * _round_up(Wo, 8) * cb * 2 * 2                    # bf16 out tile, 2 bufs
        e_tmp = rows_in * _round_up(Wp, 8) * cb * 4                   # expanded band
        ex_tmp = k * rows_in * _round_up(Wo, 8) * cb * 4              # k W-shifted copies
        acc_tmp = 2 * rb * _round_up(Wo, 8) * cb * 4                  # dw accumulator + activated
        return x_blk + y_blk + e_tmp + ex_tmp + acc_tmp

    cap = Ho if max_rb is None else min(Ho, max_rb)
    best = 1
    for d in range(1, cap + 1):
        if Ho % d == 0 and est(d) <= budget:
            best = d
    return best


# --------------- shared band compute: 1x1 expand + BN/act + dw kxk + BN/act ---
def _expand_dw_band(xpad_ref, wexp_ref, s1_ref, b1_ref, wdw_ref, s2_ref, b2_ref,
                    *, row0, k, stride, rb, p, H, W, Wo, act_kind):
    rows_in = (rb - 1) * stride + k
    x = xpad_ref[0, pl.ds(row0, rows_in), :, :]            # (rows_in, Wp, Cin)
    rows, Wp, Cin = x.shape
    Cb = wexp_ref.shape[1]

    # 1x1 expand + folded BN + activation (f32), computed in padded coordinates
    e = jnp.dot(x.reshape(rows * Wp, Cin).astype(jnp.float32), wexp_ref[...],
                preferred_element_type=jnp.float32)
    e = _act(e * s1_ref[...] + b1_ref[...], act_kind)
    e = e.reshape(rows, Wp, Cb)

    # zero the spatial-padding positions: the depthwise conv pads its
    # *activated* input with zeros, but expand(0) = act(b1) != 0 in general.
    # TODO(synk): apply the row part only on edge bands (pl.when) and the column
    #             part as two p-wide slice stores to skip this full-band VPU
    #             multiply on interior bands (~1/k^2 of kernel-A VPU work).
    rr = row0 + lax.broadcasted_iota(jnp.int32, (rows, Wp, 1), 0)
    cc = lax.broadcasted_iota(jnp.int32, (rows, Wp, 1), 1)
    valid = (rr >= p) & (rr < p + H) & (cc >= p) & (cc < p + W)
    e = e * valid.astype(jnp.float32)

    # depthwise kxk: hoist the k sublane (W) shifts; dy offsets are cheap
    # leading-dim strided slices.
    w_span = (Wo - 1) * stride + 1
    r_span = (rb - 1) * stride + 1
    ex = [lax.slice(e, (0, dx, 0), (rows, dx + w_span, Cb), (1, stride, 1))
          for dx in range(k)]                              # each (rows, Wo, Cb)
    acc = jnp.zeros((rb, Wo, Cb), jnp.float32)
    for dy in range(k):
        for dx in range(k):
            rows_sl = lax.slice(ex[dx], (dy, 0, 0), (dy + r_span, Wo, Cb),
                                (stride, 1, 1))            # (rb, Wo, Cb)
            acc = acc + rows_sl * wdw_ref[dy, dx, :][None, None, :]

    return _act(acc * s2_ref[0][None, None, :] + b2_ref[0][None, None, :],
                act_kind)                                  # (rb, Wo, Cb) f32


# --------------- kernel A (SE path): fused expand+dw, bf16 y + SE pool sums ---
def _expand_dw_kernel(xpad_ref, wexp_ref, s1_ref, b1_ref, wdw_ref, s2_ref,
                      b2_ref, y_ref, psum_ref, *, k, stride, rb, p, H, W,
                      act_kind):
    band = pl.program_id(2)
    row0 = band * (rb * stride)
    Wo = y_ref.shape[2]

    yb = _expand_dw_band(xpad_ref, wexp_ref, s1_ref, b1_ref, wdw_ref, s2_ref,
                         b2_ref, row0=row0, k=k, stride=stride, rb=rb, p=p,
                         H=H, W=W, Wo=Wo, act_kind=act_kind)
    y_ref[0] = yb.astype(y_ref.dtype)                      # bf16 writeback

    # SE global-average-pool partial sums accumulated across row bands.
    # Invariant: the band axis is the innermost grid axis and is "arbitrary".
    @pl.when(band == 0)
    def _init():
        psum_ref[...] = jnp.zeros_like(psum_ref)

    psum_ref[...] += jnp.sum(yb, axis=(0, 1))[None, None, :]


def expand_dw(xpad, w_exp, s1, b1, w_dw, s2, b2, *, k, stride, act_kind,
              H, W, Ho, Wo, rb, vmem_limit):
    N, Hp, Wp, Cin = xpad.shape
    Ep = w_exp.shape[1]
    cb = 128
    n_c = Ep // cb
    n_band = Ho // rb
    p = k // 2

    kern = functools.partial(_expand_dw_kernel, k=k, stride=stride, rb=rb, p=p,
                             H=H, W=W, act_kind=act_kind)
    return pl.pallas_call(
        kern,
        out_shape=(jax.ShapeDtypeStruct((N, Ho, Wo, Ep), jnp.bfloat16),
                   jax.ShapeDtypeStruct((N, 1, Ep), jnp.float32)),
        grid=(N, n_c, n_band),
        in_specs=[
            pl.BlockSpec((1, Hp, Wp, Cin), lambda n, c, b: (n, 0, 0, 0)),
            pl.BlockSpec((Cin, cb), lambda n, c, b: (0, c)),
            pl.BlockSpec((1, cb), lambda n, c, b: (0, c)),
            pl.BlockSpec((1, cb), lambda n, c, b: (0, c)),
            pl.BlockSpec((k, k, cb), lambda n, c, b: (0, 0, c)),
            pl.BlockSpec((1, cb), lambda n, c, b: (0, c)),
            pl.BlockSpec((1, cb), lambda n, c, b: (0, c)),
        ],
        out_specs=(
            pl.BlockSpec((1, rb, Wo, cb), lambda n, c, b: (n, b, 0, c)),
            pl.BlockSpec((1, 1, cb), lambda n, c, b: (n, 0, c)),
        ),
        compiler_params=pltpu.CompilerParams(
            dimension_semantics=("parallel", "parallel", "arbitrary"),
            vmem_limit_bytes=vmem_limit),
    )(xpad, w_exp, s1, b1, w_dw, s2, b2)


# --------------- kernel A' (no-SE path): expand+dw+project+residual, one pass --
def _expand_dw_proj_kernel(xpad_ref, wexp_ref, s1_ref, b1_ref, wdw_ref, s2_ref,
                           b2_ref, wproj_ref, s3_ref, b3_ref, o_ref, acc_ref,
                           *, k, stride, rb, p, H, W, act_kind, add):
    band = pl.program_id(1)
    c = pl.program_id(2)
    n_c = pl.num_programs(2)
    row0 = band * (rb * stride)
    Wo = o_ref.shape[2]
    cout = o_ref.shape[3]

    yb = _expand_dw_band(xpad_ref, wexp_ref, s1_ref, b1_ref, wdw_ref, s2_ref,
                         b2_ref, row0=row0, k=k, stride=stride, rb=rb, p=p,
                         H=H, W=W, Wo=Wo, act_kind=act_kind)
    Cb = yb.shape[-1]

    @pl.when(c == 0)
    def _init():
        acc_ref[...] = jnp.zeros_like(acc_ref)

    # accumulate the 1x1 projection over exp-channel chunks (c is innermost,
    # "arbitrary"); the expanded intermediate never leaves VMEM.
    acc_ref[...] += jnp.dot(yb.reshape(rb * Wo, Cb), wproj_ref[...],
                            preferred_element_type=jnp.float32)

    @pl.when(c == n_c - 1)
    def _finalize():
        out = acc_ref[...] * s3_ref[...] + b3_ref[...]
        if add:
            # residual straight from the already-resident padded input
            # (add => stride == 1, Wo == W, Cin == cout).
            res = xpad_ref[0, pl.ds(p + row0, rb), :, :][:, p:p + W, :]
            out = out + res.reshape(rb * W, cout).astype(jnp.float32)
        o_ref[0] = out.reshape(rb, Wo, cout).astype(o_ref.dtype)


def expand_dw_proj(xpad, w_exp, s1, b1, w_dw, s2, b2, w_proj, s3, b3, *,
                   k, stride, act_kind, add, H, W, Ho, Wo, rb, out_dtype,
                   vmem_limit):
    N, Hp, Wp, Cin = xpad.shape
    Ep = w_exp.shape[1]
    cout = w_proj.shape[1]
    cb = 128
    n_c = Ep // cb
    n_band = Ho // rb
    p = k // 2

    kern = functools.partial(_expand_dw_proj_kernel, k=k, stride=stride, rb=rb,
                             p=p, H=H, W=W, act_kind=act_kind, add=add)
    return pl.pallas_call(
        kern,
        out_shape=jax.ShapeDtypeStruct((N, Ho, Wo, cout), out_dtype),
        grid=(N, n_band, n_c),
        in_specs=[
            pl.BlockSpec((1, Hp, Wp, Cin), lambda n, b, c: (n, 0, 0, 0)),
            pl.BlockSpec((Cin, cb), lambda n, b, c: (0, c)),
            pl.BlockSpec((1, cb), lambda n, b, c: (0, c)),
            pl.BlockSpec((1, cb), lambda n, b, c: (0, c)),
            pl.BlockSpec((k, k, cb), lambda n, b, c: (0, 0, c)),
            pl.BlockSpec((1, cb), lambda n, b, c: (0, c)),
            pl.BlockSpec((1, cb), lambda n, b, c: (0, c)),
            pl.BlockSpec((cb, cout), lambda n, b, c: (c, 0)),
            pl.BlockSpec((1, cout), lambda n, b, c: (0, 0)),
            pl.BlockSpec((1, cout), lambda n, b, c: (0, 0)),
        ],
        out_specs=pl.BlockSpec((1, rb, Wo, cout), lambda n, b, c: (n, b, 0, 0)),
        scratch_shapes=[pltpu.VMEM((rb * Wo, cout), jnp.float32)],
        compiler_params=pltpu.CompilerParams(
            dimension_semantics=("parallel", "parallel", "arbitrary"),
            vmem_limit_bytes=vmem_limit),
    )(xpad, w_exp, s1, b1, w_dw, s2, b2, w_proj, s3, b3)


# --------------- kernel C (SE path): gated bf16 1x1 project + BN (+ residual) --
def _project_kernel(y_ref, g_ref, w_ref, s_ref, b_ref, o_ref):
    yg = y_ref[0] * g_ref[0]                               # bf16 * bf16 -> bf16
    out = jnp.dot(yg, w_ref[...], preferred_element_type=jnp.float32)
    out = out * s_ref[...] + b_ref[...]
    o_ref[0] = out.astype(o_ref.dtype)


def _project_res_kernel(y_ref, g_ref, w_ref, s_ref, b_ref, r_ref, o_ref):
    yg = y_ref[0] * g_ref[0]
    out = jnp.dot(yg, w_ref[...], preferred_element_type=jnp.float32)
    out = out * s_ref[...] + b_ref[...] + r_ref[0].astype(jnp.float32)
    o_ref[0] = out.astype(o_ref.dtype)


def project_conv(y3d, gate3d, w_proj, s3, b3, res3d, *, out_dtype, vmem_limit):
    N, M, Ep = y3d.shape
    cout = w_proj.shape[1]
    tm = min(M, 1024)                                      # big mem-bound tiles
    grid = (N, pl.cdiv(M, tm))

    y_spec = pl.BlockSpec((1, tm, Ep), lambda n, j: (n, j, 0))
    g_spec = pl.BlockSpec((1, 1, Ep), lambda n, j: (n, 0, 0))
    w_spec = pl.BlockSpec((Ep, cout), lambda n, j: (0, 0))
    sb_spec = pl.BlockSpec((1, cout), lambda n, j: (0, 0))
    o_spec = pl.BlockSpec((1, tm, cout), lambda n, j: (n, j, 0))

    if res3d is None:
        kern = _project_kernel
        in_specs = [y_spec, g_spec, w_spec, sb_spec, sb_spec]
        args = (y3d, gate3d, w_proj, s3, b3)
    else:
        kern = _project_res_kernel
        in_specs = [y_spec, g_spec, w_spec, sb_spec, sb_spec,
                    pl.BlockSpec((1, tm, res3d.shape[-1]), lambda n, j: (n, j, 0))]
        args = (y3d, gate3d, w_proj, s3, b3, res3d)

    return pl.pallas_call(
        kern,
        out_shape=jax.ShapeDtypeStruct((N, M, cout), out_dtype),
        grid=grid,
        in_specs=in_specs,
        out_specs=o_spec,
        compiler_params=pltpu.CompilerParams(
            dimension_semantics=("parallel", "parallel"),
            vmem_limit_bytes=vmem_limit),
    )(*args)


# --------------- full BNeck forward (Pallas) -----------------------------------
def bneck_forward(x_nchw, params, *, k, stride, se, act_kind, add, max_rb=None):
    x = jnp.transpose(x_nchw, (0, 2, 3, 1)).astype(jnp.float32)   # NCHW -> NHWC
    N, H, W, Cin = x.shape
    exp = params["w_exp"].shape[1]
    cout = params["w_proj"].shape[1]
    p = k // 2
    Ho = (H + 2 * p - k) // stride + 1
    Wo = (W + 2 * p - k) // stride + 1

    # pad exp to a multiple of 128 so every channel chunk is lane-dense
    Ep = _round_up(exp, 128)
    pe = Ep - exp
    w_exp = jnp.pad(params["w_exp"], ((0, 0), (0, pe)))
    s1 = jnp.pad(params["s1"], ((0, 0), (0, pe)))
    b1 = jnp.pad(params["b1"], ((0, 0), (0, pe)))
    w_dw = jnp.pad(params["w_dw"], ((0, 0), (0, 0), (0, pe)))
    s2 = jnp.pad(params["s2"], ((0, 0), (0, pe)))
    b2 = jnp.pad(params["b2"], ((0, 0), (0, pe)))
    w_proj = jnp.pad(params["w_proj"], ((0, pe), (0, 0)))
    s3, b3 = params["s3"], params["b3"]

    xpad = jnp.pad(x, ((0, 0), (p, p), (p, p), (0, 0)))
    Hp, Wp = H + 2 * p, W + 2 * p

    vmem_limit = _vmem_limit_bytes()
    rb = _pick_rb(Ho, Wo, Hp, Wp, Cin, k, stride, 128,
                  budget=int(vmem_limit * 0.75), max_rb=max_rb)

    if not se:
        # one-pass fused kernel: expanded intermediate never touches HBM
        out = expand_dw_proj(xpad, w_exp, s1, b1, w_dw, s2, b2, w_proj, s3, b3,
                             k=k, stride=stride, act_kind=act_kind, add=add,
                             H=H, W=W, Ho=Ho, Wo=Wo, rb=rb,
                             out_dtype=x.dtype, vmem_limit=vmem_limit)
        return jnp.transpose(out, (0, 3, 1, 2))            # NHWC -> NCHW

    # two-pass SE path: y carried in bf16, SE pool sums emitted by kernel A
    y, psum = expand_dw(xpad, w_exp, s1, b1, w_dw, s2, b2,
                        k=k, stride=stride, act_kind=act_kind,
                        H=H, W=W, Ho=Ho, Wo=Wo, rb=rb, vmem_limit=vmem_limit)

    # SE gate is an (N, exp)-sized op: plain XLA (a pallas_call is pure launch
    # overhead here); gate is folded into the projection input.
    w_fc1 = jnp.pad(params["w_fc1"], ((0, pe), (0, 0)))
    w_fc2 = jnp.pad(params["w_fc2"], ((0, 0), (0, pe)))
    mean = psum.reshape(N, Ep) * (1.0 / float(Ho * Wo))
    f = jnp.maximum(mean @ w_fc1, 0.0)
    gate = jnp.clip((f @ w_fc2) * (1.0 / 6.0) + 0.5, 0.0, 1.0)

    y3d = y.reshape(N, Ho * Wo, Ep)
    gate3d = gate.astype(jnp.bfloat16).reshape(N, 1, Ep)
    res3d = x.reshape(N, H * W, Cin) if add else None      # unpadded residual

    out = project_conv(y3d, gate3d, w_proj.astype(jnp.bfloat16), s3, b3, res3d,
                       out_dtype=x.dtype, vmem_limit=vmem_limit)
    out = out.reshape(N, Ho, Wo, cout)
    return jnp.transpose(out, (0, 3, 1, 2))                # NHWC -> NCHW


# --------------- pure-JAX reference for correctness -----------------------------
def bneck_reference(x_nchw, params, *, k, stride, se, act_kind, add):
    x = jnp.transpose(x_nchw, (0, 2, 3, 1))
    y = _act(jnp.einsum("nhwc,cd->nhwd", x, params["w_exp"]) * params["s1"]
             + params["b1"], act_kind)
    C = params["w_dw"].shape[-1]
    ydw = lax.conv_general_dilated(
        y, params["w_dw"].reshape(k, k, 1, C), (stride, stride),
        [(k // 2, k // 2)] * 2,
        dimension_numbers=("NHWC", "HWIO", "NHWC"), feature_group_count=C)
    y = _act(ydw * params["s2"] + params["b2"], act_kind)
    if se:
        m = jnp.mean(y, axis=(1, 2))
        f = jnp.maximum(m @ params["w_fc1"], 0.0)
        g = jnp.clip((f @ params["w_fc2"]) / 6.0 + 0.5, 0.0, 1.0)
        y = y * g[:, None, None, :]
    out = jnp.einsum("nhwc,cd->nhwd", y, params["w_proj"]) * params["s3"] \
        + params["b3"]
    if add:
        out = out + x
    return jnp.transpose(out, (0, 3, 1, 2))


def _make_params(key, in_ch, out_ch, exp, k):
    r = max(exp // 4, 1)
    keys = jax.random.split(key, 17)

    def bn_fold(kg, kb, km, kv, C):
        gamma = 1.0 + 0.1 * jax.random.normal(kg, (C,), jnp.float32)
        beta = 0.1 * jax.random.normal(kb, (C,), jnp.float32)
        mean = 0.1 * jax.random.normal(km, (C,), jnp.float32)
        var = 1.0 + 0.1 * jnp.abs(jax.random.normal(kv, (C,), jnp.float32))
        s = gamma / jnp.sqrt(var + 1e-5)
        b = beta - mean * s
        return s.reshape(1, C), b.reshape(1, C)

    s1, b1 = bn_fold(keys[0], keys[1], keys[2], keys[3], exp)
    s2, b2 = bn_fold(keys[4], keys[5], keys[6], keys[7], exp)
    s3, b3 = bn_fold(keys[8], keys[9], keys[10], keys[11], out_ch)
    return {
        "w_exp": 0.2 * jax.random.normal(keys[12], (in_ch, exp), jnp.float32),
        "s1": s1, "b1": b1,
        "w_dw": 0.2 * jax.random.normal(keys[13], (k, k, exp), jnp.float32),
        "s2": s2, "b2": b2,
        "w_fc1": 0.2 * jax.random.normal(keys[14], (exp, r), jnp.float32),
        "w_fc2": 0.2 * jax.random.normal(keys[15], (r, exp), jnp.float32),
        "w_proj": 0.2 * jax.random.normal(keys[16], (exp, out_ch), jnp.float32),
        "s3": s3, "b3": b3,
    }


if __name__ == "__main__":
    N, H, W = 2, 16, 16
    key = jax.random.PRNGKey(0)
    kp, kx = jax.random.split(key)

    # (name, in, out, exp, k, stride, se, act, max_rb, tol)
    # - config 0: SE path (bf16 y + bf16 projection) -> looser tolerance.
    # - config 1/2: fused one-pass path (f32), with/without residual, k3/k5.
    # - config 3: SE path forced multi-band (exercises psum accumulation).
    configs = [
        ("se_relu_k3_s1_res",      4, 4, 32, 3, 1, True,  "relu",   None, 5e-2),
        ("fused_hswish_k3_s1_res", 4, 4, 32, 3, 1, False, "hswish", None, 2e-3),
        ("fused_hswish_k5_s2",     4, 8, 32, 5, 2, False, "hswish", None, 2e-3),
        ("se_relu_k3_s2_bands",    4, 8, 32, 3, 2, True,  "relu",   2,    5e-2),
    ]

    for idx, (name, cin, cou, exp, k, stride, se_on, act_kind, max_rb, tol) \
            in enumerate(configs):
        params = _make_params(jax.random.fold_in(kp, idx), cin, cou, exp, k)
        add = (cin == cou) and (stride == 1)
        x = jax.random.normal(jax.random.fold_in(kx, idx),
                              (N, cin, H, W), jnp.float32)

        out = jax.block_until_ready(
            bneck_forward(x, params, k=k, stride=stride, se=se_on,
                          act_kind=act_kind, add=add, max_rb=max_rb))
        ref = bneck_reference(x, params, k=k, stride=stride, se=se_on,
                              act_kind=act_kind, add=add)

        assert out.shape == ref.shape, (name, out.shape, ref.shape)
        max_err = float(jnp.max(jnp.abs(out - ref)))
        assert max_err < tol, f"{name}: mismatch vs reference: {max_err}"

    print("KERNEL_OK")
</pallas_src>

<mosaic_0001>
module attributes {stable_mosaic.version = 11 : i64} {
  func.func @_expand_dw_kernel(%arg0: i32, %arg1: i32, %arg2: i32, %arg3: memref<1x18x18x4xf32, #tpu.memory_space<vmem>>, %arg4: memref<4x128xf32, #tpu.memory_space<vmem>>, %arg5: memref<1x128xf32, #tpu.memory_space<vmem>>, %arg6: memref<1x128xf32, #tpu.memory_space<vmem>>, %arg7: memref<3x3x128xf32, #tpu.memory_space<vmem>>, %arg8: memref<1x128xf32, #tpu.memory_space<vmem>>, %arg9: memref<1x128xf32, #tpu.memory_space<vmem>>, %arg10: memref<1x16x16x128xbf16, #tpu.memory_space<vmem>>, %arg11: memref<1x1x128xf32, #tpu.memory_space<vmem>>) attributes {dimension_semantics = [#tpu.dimension_semantics<parallel>, #tpu.dimension_semantics<parallel>, #tpu.dimension_semantics<arbitrary>], iteration_bounds = array<i64: 2, 1, 1>, scalar_prefetch = 0 : i64, scratch_operands = 0 : i64, tpu.core_type = #tpu.core_type<tc>, window_params = [{transform_indices = @transform_0, window_bounds = array<i64: 1, 18, 18, 4>}, {transform_indices = @transform_1, window_bounds = array<i64: 4, 128>}, {transform_indices = @transform_2, window_bounds = array<i64: 1, 128>}, {transform_indices = @transform_3, window_bounds = array<i64: 1, 128>}, {transform_indices = @transform_4, window_bounds = array<i64: 3, 3, 128>}, {transform_indices = @transform_5, window_bounds = array<i64: 1, 128>}, {transform_indices = @transform_6, window_bounds = array<i64: 1, 128>}, {transform_indices = @transform_7, window_bounds = array<i64: 1, 16, 16, 128>}, {transform_indices = @transform_8, window_bounds = array<i64: 1, 1, 128>}]} {
    %c16_i32 = arith.constant 16 : i32
    %0 = arith.muli %arg2, %c16_i32 : i32
    %c0 = arith.constant 0 : index
    %1 = arith.index_cast %0 : i32 to index
    %c0_0 = arith.constant 0 : index
    %c0_1 = arith.constant 0 : index
    %2 = vector.load %arg3[%c0, %1, %c0_0, %c0_1] : memref<1x18x18x4xf32, #tpu.memory_space<vmem>>, vector<1x18x18x4xf32>
    %3 = vector.shape_cast %2 : vector<1x18x18x4xf32> to vector<18x18x4xf32>
    %4 = vector.shape_cast %3 : vector<18x18x4xf32> to vector<324x4xf32>
    %c0_2 = arith.constant 0 : index
    %c0_3 = arith.constant 0 : index
    %5 = vector.load %arg4[%c0_2, %c0_3] : memref<4x128xf32, #tpu.memory_space<vmem>>, vector<4x128xf32>
    %cst = arith.constant dense<0.000000e+00> : vector<324x128xf32>
    %6 = tpu.matmul %4, %5, %cst {dimension_numbers = #tpu.dot_dimension_numbers<[1], [0], [0], [1], [0, 0, 1, 1], [], []>} : vector<324x4xf32>, vector<4x128xf32>, vector<324x128xf32> -> vector<324x128xf32>
    %c0_4 = arith.constant 0 : index
    %c0_5 = arith.constant 0 : index
    %7 = vector.load %arg5[%c0_4, %c0_5] : memref<1x128xf32, #tpu.memory_space<vmem>>, vector<1x128xf32>
    %8 = vector.broadcast %7 : vector<1x128xf32> to vector<324x128xf32>
    %9 = arith.mulf %6, %8 : vector<324x128xf32>
    %c0_6 = arith.constant 0 : index
    %c0_7 = arith.constant 0 : index
    %10 = vector.load %arg6[%c0_6, %c0_7] : memref<1x128xf32, #tpu.memory_space<vmem>>, vector<1x128xf32>
    %11 = vector.broadcast %10 : vector<1x128xf32> to vector<324x128xf32>
    %12 = arith.addf %9, %11 : vector<324x128xf32>
    %cst_8 = arith.constant 0.000000e+00 : f32
    %13 = vector.broadcast %cst_8 : f32 to vector<324x128xf32>
    %14 = arith.maximumf %12, %13 : vector<324x128xf32>
    %15 = vector.shape_cast %14 : vector<324x128xf32> to vector<18x18x128xf32>
    %16 = tpu.iota {dimensions = array<i32: 0>} : vector<18x18x1xi32>
    %17 = vector.broadcast %0 : i32 to vector<18x18x1xi32>
    %18 = arith.addi %17, %16 : vector<18x18x1xi32>
    %19 = tpu.iota {dimensions = array<i32: 1>} : vector<18x18x1xi32>
    %c1_i32 = arith.constant 1 : i32
    %20 = vector.broadcast %c1_i32 : i32 to vector<18x18x1xi32>
    %21 = arith.cmpi sge, %18, %20 : vector<18x18x1xi32>
    %c17_i32 = arith.constant 17 : i32
    %22 = vector.broadcast %c17_i32 : i32 to vector<18x18x1xi32>
    %23 = arith.cmpi slt, %18, %22 : vector<18x18x1xi32>
    %24 = arith.andi %21, %23 : vector<18x18x1xi1>
    %c1_i32_9 = arith.constant 1 : i32
    %25 = vector.broadcast %c1_i32_9 : i32 to vector<18x18x1xi32>
    %26 = arith.cmpi sge, %19, %25 : vector<18x18x1xi32>
    %27 = arith.andi %24, %26 : vector<18x18x1xi1>
    %c17_i32_10 = arith.constant 17 : i32
    %28 = vector.broadcast %c17_i32_10 : i32 to vector<18x18x1xi32>
    %29 = arith.cmpi slt, %19, %28 : vector<18x18x1xi32>
    %30 = arith.andi %27, %29 : vector<18x18x1xi1>
    %31 = arith.extui %30 : vector<18x18x1xi1> to vector<18x18x1xi32>
    %32 = arith.sitofp %31 : vector<18x18x1xi32> to vector<18x18x1xf32>
    %33 = vector.broadcast %32 : vector<18x18x1xf32> to vector<18x18x128xf32>
    %34 = arith.mulf %15, %33 : vector<18x18x128xf32>
    %35 = vector.extract_strided_slice %34 {offsets = [0, 0, 0], sizes = [18, 16, 128], strides = [1, 1, 1]} : vector<18x18x128xf32> to vector<18x16x128xf32>
    %36 = vector.extract_strided_slice %34 {offsets = [0, 1, 0], sizes = [18, 16, 128], strides = [1, 1, 1]} : vector<18x18x128xf32> to vector<18x16x128xf32>
    %37 = vector.extract_strided_slice %34 {offsets = [0, 2, 0], sizes = [18, 16, 128], strides = [1, 1, 1]} : vector<18x18x128xf32> to vector<18x16x128xf32>
    %cst_11 = arith.constant 0.000000e+00 : f32
    %38 = vector.broadcast %cst_11 : f32 to vector<16x16x128xf32>
    %39 = vector.extract_strided_slice %35 {offsets = [0, 0, 0], sizes = [16, 16, 128], strides = [1, 1, 1]} : vector<18x16x128xf32> to vector<16x16x128xf32>
    %c0_12 = arith.constant 0 : index
    %c0_13 = arith.constant 0 : index
    %c0_14 = arith.constant 0 : index
    %40 = vector.load %arg7[%c0_12, %c0_13, %c0_14] : memref<3x3x128xf32, #tpu.memory_space<vmem>>, vector<1x1x128xf32>
    %41 = vector.shape_cast %40 : vector<1x1x128xf32> to vector<128xf32>
    %42 = vector.shape_cast %41 : vector<128xf32> to vector<1x1x128xf32>
    %43 = vector.broadcast %42 : vector<1x1x128xf32> to vector<16x16x128xf32>
    %44 = arith.mulf %39, %43 : vector<16x16x128xf32>
    %45 = arith.addf %38, %44 : vector<16x16x128xf32>
    %46 = vector.extract_strided_slice %36 {offsets = [0, 0, 0], sizes = [16, 16, 128], strides = [1, 1, 1]} : vector<18x16x128xf32> to vector<16x16x128xf32>
    %c0_15 = arith.constant 0 : index
    %c1 = arith.constant 1 : index
    %c0_16 = arith.constant 0 : index
    %47 = vector.load %arg7[%c0_15, %c1, %c0_16] : memref<3x3x128xf32, #tpu.memory_space<vmem>>, vector<1x1x128xf32>
    %48 = vector.shape_cast %47 : vector<1x1x128xf32> to vector<128xf32>
    %49 = vector.shape_cast %48 : vector<128xf32> to vector<1x1x128xf32>
    %50 = vector.broadcast %49 : vector<1x1x128xf32> to vector<16x16x128xf32>
    %51 = arith.mulf %46, %50 : vector<16x16x128xf32>
    %52 = arith.addf %45, %51 : vector<16x16x128xf32>
    %53 = vector.extract_strided_slice %37 {offsets = [0, 0, 0], sizes = [16, 16, 128], strides = [1, 1, 1]} : vector<18x16x128xf32> to vector<16x16x128xf32>
    %c0_17 = arith.constant 0 : index
    %c2 = arith.constant 2 : index
    %c0_18 = arith.constant 0 : index
    %54 = vector.load %arg7[%c0_17, %c2, %c0_18] : memref<3x3x128xf32, #tpu.memory_space<vmem>>, vector<1x1x128xf32>
    %55 = vector.shape_cast %54 : vector<1x1x128xf32> to vector<128xf32>
    %56 = vector.shape_cast %55 : vector<128xf32> to vector<1x1x128xf32>
    %57 = vector.broadcast %56 : vector<1x1x128xf32> to vector<16x16x128xf32>
    %58 = arith.mulf %53, %57 : vector<16x16x128xf32>
    %59 = arith.addf %52, %58 : vector<16x16x128xf32>
    %60 = vector.extract_strided_slice %35 {offsets = [1, 0, 0], sizes = [16, 16, 128], strides = [1, 1, 1]} : vector<18x16x128xf32> to vector<16x16x128xf32>
    %c1_19 = arith.constant 1 : index
    %c0_20 = arith.constant 0 : index
    %c0_21 = arith.constant 0 : index
    %61 = vector.load %arg7[%c1_19, %c0_20, %c0_21] : memref<3x3x128xf32, #tpu.memory_space<vmem>>, vector<1x1x128xf32>
    %62 = vector.shape_cast %61 : vector<1x1x128xf32> to vector<128xf32>
    %63 = vector.shape_cast %62 : vector<128xf32> to vector<1x1x128xf32>
    %64 = vector.broadcast %63 : vector<1x1x128xf32> to vector<16x16x128xf32>
    %65 = arith.mulf %60, %64 : vector<16x16x128xf32>
    %66 = arith.addf %59, %65 : vector<16x16x128xf32>
    %67 = vector.extract_strided_slice %36 {offsets = [1, 0, 0], sizes = [16, 16, 128], strides = [1, 1, 1]} : vector<18x16x128xf32> to vector<16x16x128xf32>
    %c1_22 = arith.constant 1 : index
    %c1_23 = arith.constant 1 : index
    %c0_24 = arith.constant 0 : index
    %68 = vector.load %arg7[%c1_22, %c1_23, %c0_24] : memref<3x3x128xf32, #tpu.memory_space<vmem>>, vector<1x1x128xf32>
    %69 = vector.shape_cast %68 : vector<1x1x128xf32> to vector<128xf32>
    %70 = vector.shape_cast %69 : vector<128xf32> to vector<1x1x128xf32>
    %71 = vector.broadcast %70 : vector<1x1x128xf32> to vector<16x16x128xf32>
    %72 = arith.mulf %67, %71 : vector<16x16x128xf32>
    %73 = arith.addf %66, %72 : vector<16x16x128xf32>
    %74 = vector.extract_strided_slice %37 {offsets = [1, 0, 0], sizes = [16, 16, 128], strides = [1, 1, 1]} : vector<18x16x128xf32> to vector<16x16x128xf32>
    %c1_25 = arith.constant 1 : index
    %c2_26 = arith.constant 2 : index
    %c0_27 = arith.constant 0 : index
    %75 = vector.load %arg7[%c1_25, %c2_26, %c0_27] : memref<3x3x128xf32, #tpu.memory_space<vmem>>, vector<1x1x128xf32>
    %76 = vector.shape_cast %75 : vector<1x1x128xf32> to vector<128xf32>
    %77 = vector.shape_cast %76 : vector<128xf32> to vector<1x1x128xf32>
    %78 = vector.broadcast %77 : vector<1x1x128xf32> to vector<16x16x128xf32>
    %79 = arith.mulf %74, %78 : vector<16x16x128xf32>
    %80 = arith.addf %73, %79 : vector<16x16x128xf32>
    %81 = vector.extract_strided_slice %35 {offsets = [2, 0, 0], sizes = [16, 16, 128], strides = [1, 1, 1]} : vector<18x16x128xf32> to vector<16x16x128xf32>
    %c2_28 = arith.constant 2 : index
    %c0_29 = arith.constant 0 : index
    %c0_30 = arith.constant 0 : index
    %82 = vector.load %arg7[%c2_28, %c0_29, %c0_30] : memref<3x3x128xf32, #tpu.memory_space<vmem>>, vector<1x1x128xf32>
    %83 = vector.shape_cast %82 : vector<1x1x128xf32> to vector<128xf32>
    %84 = vector.shape_cast %83 : vector<128xf32> to vector<1x1x128xf32>
    %85 = vector.broadcast %84 : vector<1x1x128xf32> to vector<16x16x128xf32>
    %86 = arith.mulf %81, %85 : vector<16x16x128xf32>
    %87 = arith.addf %80, %86 : vector<16x16x128xf32>
    %88 = vector.extract_strided_slice %36 {offsets = [2, 0, 0], sizes = [16, 16, 128], strides = [1, 1, 1]} : vector<18x16x128xf32> to vector<16x16x128xf32>
    %c2_31 = arith.constant 2 : index
    %c1_32 = arith.constant 1 : index
    %c0_33 = arith.constant 0 : index
    %89 = vector.load %arg7[%c2_31, %c1_32, %c0_33] : memref<3x3x128xf32, #tpu.memory_space<vmem>>, vector<1x1x128xf32>
    %90 = vector.shape_cast %89 : vector<1x1x128xf32> to vector<128xf32>
    %91 = vector.shape_cast %90 : vector<128xf32> to vector<1x1x128xf32>
    %92 = vector.broadcast %91 : vector<1x1x128xf32> to vector<16x16x128xf32>
    %93 = arith.mulf %88, %92 : vector<16x16x128xf32>
    %94 = arith.addf %87, %93 : vector<16x16x128xf32>
    %95 = vector.extract_strided_slice %37 {offsets = [2, 0, 0], sizes = [16, 16, 128], strides = [1, 1, 1]} : vector<18x16x128xf32> to vector<16x16x128xf32>
    %c2_34 = arith.constant 2 : index
    %c2_35 = arith.constant 2 : index
    %c0_36 = arith.constant 0 : index
    %96 = vector.load %arg7[%c2_34, %c2_35, %c0_36] : memref<3x3x128xf32, #tpu.memory_space<vmem>>, vector<1x1x128xf32>
    %97 = vector.shape_cast %96 : vector<1x1x128xf32> to vector<128xf32>
    %98 = vector.shape_cast %97 : vector<128xf32> to vector<1x1x128xf32>
    %99 = vector.broadcast %98 : vector<1x1x128xf32> to vector<16x16x128xf32>
    %100 = arith.mulf %95, %99 : vector<16x16x128xf32>
    %101 = arith.addf %94, %100 : vector<16x16x128xf32>
    %c0_37 = arith.constant 0 : index
    %c0_38 = arith.constant 0 : index
    %102 = vector.load %arg8[%c0_37, %c0_38] : memref<1x128xf32, #tpu.memory_space<vmem>>, vector<1x128xf32>
    %103 = vector.shape_cast %102 : vector<1x128xf32> to vector<128xf32>
    %104 = vector.shape_cast %103 : vector<128xf32> to vector<1x1x128xf32>
    %105 = vector.broadcast %104 : vector<1x1x128xf32> to vector<16x16x128xf32>
    %106 = arith.mulf %101, %105 : vector<16x16x128xf32>
    %c0_39 = arith.constant 0 : index
    %c0_40 = arith.constant 0 : index
    %107 = vector.load %arg9[%c0_39, %c0_40] : memref<1x128xf32, #tpu.memory_space<vmem>>, vector<1x128xf32>
    %108 = vector.shape_cast %107 : vector<1x128xf32> to vector<128xf32>
    %109 = vector.shape_cast %108 : vector<128xf32> to vector<1x1x128xf32>
    %110 = vector.broadcast %109 : vector<1x1x128xf32> to vector<16x16x128xf32>
    %111 = arith.addf %106, %110 : vector<16x16x128xf32>
    %cst_41 = arith.constant 0.000000e+00 : f32
    %112 = vector.broadcast %cst_41 : f32 to vector<16x16x128xf32>
    %113 = arith.maximumf %111, %112 : vector<16x16x128xf32>
    %114 = arith.truncf %113 : vector<16x16x128xf32> to vector<16x16x128xbf16>
    %c0_42 = arith.constant 0 : index
    %c0_43 = arith.constant 0 : index
    %c0_44 = arith.constant 0 : index
    %c0_45 = arith.constant 0 : index
    %115 = vector.load %arg10[%c0_42, %c0_43, %c0_44, %c0_45] : memref<1x16x16x128xbf16, #tpu.memory_space<vmem>>, vector<1x16x16x128xbf16>
    %116 = vector.shape_cast %115 : vector<1x16x16x128xbf16> to vector<16x16x128xbf16>
    %117 = vector.shape_cast %114 : vector<16x16x128xbf16> to vector<1x16x16x128xbf16>
    tpu.vector_store %arg10[%c0_42, %c0_43, %c0_44, %c0_45], %117 {strides = array<i32>} : memref<1x16x16x128xbf16, #tpu.memory_space<vmem>>, vector<1x16x16x128xbf16>,
    %c0_i32 = arith.constant 0 : i32
    %118 = arith.cmpi eq, %arg2, %c0_i32 : i32
    %119 = arith.extui %118 : i1 to i32
    %c0_i32_46 = arith.constant 0 : i32
    %120 = arith.cmpi ne, %119, %c0_i32_46 : i32
    scf.if %120 {
      %cst_54 = arith.constant 0.000000e+00 : f32
      %126 = vector.broadcast %cst_54 : f32 to vector<1x1x128xf32>
      %c0_55 = arith.constant 0 : index
      %c0_56 = arith.constant 0 : index
      %c0_57 = arith.constant 0 : index
      %127 = vector.load %arg11[%c0_55, %c0_56, %c0_57] : memref<1x1x128xf32, #tpu.memory_space<vmem>>, vector<1x1x128xf32>
      tpu.vector_store %arg11[%c0_55, %c0_56, %c0_57], %126 {strides = array<i32>} : memref<1x1x128xf32, #tpu.memory_space<vmem>>, vector<1x1x128xf32>,
    } else {
    }
    %c0_47 = arith.constant 0 : index
    %c0_48 = arith.constant 0 : index
    %c0_49 = arith.constant 0 : index
    %121 = vector.load %arg11[%c0_47, %c0_48, %c0_49] : memref<1x1x128xf32, #tpu.memory_space<vmem>>, vector<1x1x128xf32>
    %cst_50 = arith.constant dense<0.000000e+00> : vector<128xf32>
    %122 = vector.multi_reduction <add>, %113, %cst_50 [0, 1] : vector<16x16x128xf32> to vector<128xf32>
    %123 = vector.shape_cast %122 : vector<128xf32> to vector<1x1x128xf32>
    %124 = arith.addf %121, %123 : vector<1x1x128xf32>
    %c0_51 = arith.constant 0 : index
    %c0_52 = arith.constant 0 : index
    %c0_53 = arith.constant 0 : index
    %125 = vector.load %arg11[%c0_51, %c0_52, %c0_53] : memref<1x1x128xf32, #tpu.memory_space<vmem>>, vector<1x1x128xf32>
    tpu.vector_store %arg11[%c0_51, %c0_52, %c0_53], %124 {strides = array<i32>} : memref<1x1x128xf32, #tpu.memory_space<vmem>>, vector<1x1x128xf32>,
    return
  }
  func.func @transform_0(%arg0: i32, %arg1: i32, %arg2: i32) -> (i32, i32, i32, i32) {
    %c0_i32 = arith.constant 0 : i32
    %c0_i32_0 = arith.constant 0 : i32
    %c0_i32_1 = arith.constant 0 : i32
    %c0_i32_2 = arith.constant 0 : i32
    return %arg0, %c0_i32, %c0_i32_0, %c0_i32_1 : i32, i32, i32, i32
  }
  func.func @transform_1(%arg0: i32, %arg1: i32, %arg2: i32) -> (i32, i32) {
    %c0_i32 = arith.constant 0 : i32
    %c0_i32_0 = arith.constant 0 : i32
    return %c0_i32, %arg1 : i32, i32
  }
  func.func @transform_2(%arg0: i32, %arg1: i32, %arg2: i32) -> (i32, i32) {
    %c0_i32 = arith.constant 0 : i32
    %c0_i32_0 = arith.constant 0 : i32
    return %c0_i32, %arg1 : i32, i32
  }
  func.func @transform_3(%arg0: i32, %arg1: i32, %arg2: i32) -> (i32, i32) {
    %c0_i32 = arith.constant 0 : i32
    %c0_i32_0 = arith.constant 0 : i32
    return %c0_i32, %arg1 : i32, i32
  }
  func.func @transform_4(%arg0: i32, %arg1: i32, %arg2: i32) -> (i32, i32, i32) {
    %c0_i32 = arith.constant 0 : i32
    %c0_i32_0 = arith.constant 0 : i32
    %c0_i32_1 = arith.constant 0 : i32
    return %c0_i32, %c0_i32_0, %arg1 : i32, i32, i32
  }
  func.func @transform_5(%arg0: i32, %arg1: i32, %arg2: i32) -> (i32, i32) {
    %c0_i32 = arith.constant 0 : i32
    %c0_i32_0 = arith.constant 0 : i32
    return %c0_i32, %arg1 : i32, i32
  }
  func.func @transform_6(%arg0: i32, %arg1: i32, %arg2: i32) -> (i32, i32) {
    %c0_i32 = arith.constant 0 : i32
    %c0_i32_0 = arith.constant 0 : i32
    return %c0_i32, %arg1 : i32, i32
  }
  func.func @transform_7(%arg0: i32, %arg1: i32, %arg2: i32) -> (i32, i32, i32, i32) {
    %c0_i32 = arith.constant 0 : i32
    %c0_i32_0 = arith.constant 0 : i32
    return %arg0, %arg2, %c0_i32, %arg1 : i32, i32, i32, i32
  }
  func.func @transform_8(%arg0: i32, %arg1: i32, %arg2: i32) -> (i32, i32, i32) {
    %c0_i32 = arith.constant 0 : i32
    %c0_i32_0 = arith.constant 0 : i32
    return %arg0, %c0_i32, %arg1 : i32, i32, i32
  }
}

</mosaic_0001>

<llo_original>
// kernel: tpu_custom_call.1
$region0: #{tpu_custom_call.1}
  #allocation0 [shape = 'u32[]', space=smem, size = 0x4, offset = 0x4, fixed_abs, tag = 'smem constant byte address 0x4 - core index']
  #allocation1 [shape = 'u32[144,128]{1,0:T(1,128)}', space=vmem, size = 0x12000, scoped, tag = 'internal scratch']
  %s0 = inlined_call_operand.vmem [shape: f32[2,18,18,4], index: 0, kind: input, shape index: {}]
  %s1 = inlined_call_operand.vmem [shape: f32[4,128], index: 1, kind: input, shape index: {}]
  %s2 = inlined_call_operand.vmem [shape: f32[1,128], index: 2, kind: input, shape index: {}]
  %s3 = inlined_call_operand.vmem [shape: f32[1,128], index: 3, kind: input, shape index: {}]
  %s4 = inlined_call_operand.vmem [shape: f32[3,3,128], index: 4, kind: input, shape index: {}]
  %s5 = inlined_call_operand.vmem [shape: f32[1,128], index: 5, kind: input, shape index: {}]
  %s6 = inlined_call_operand.vmem [shape: f32[1,128], index: 6, kind: input, shape index: {}]
  %s7 = inlined_call_operand.hbm [shape: bf16[2,16,16,128], index: 7, kind: output, shape index: {0}]
  %s8 = inlined_call_operand.hbm [shape: f32[2,1,128], index: 8, kind: output, shape index: {1}]
  %9 = xla_tuple %s7, %s8
  %s10 = sld [smem:[#allocation0]]
  $region73: #{tpu_custom_call.1} parent=0
    _
  %s12 = ssub.s32 1, %s10
  %s13 = scalar_select 0, %s12, %s10
  $region1: #{tpu_custom_call.1} parent=0
    #allocation2 [shape = 'u8[131072]{0}', space=vmem, size = 0x20000, scoped, tag = 'output window, operand 0']
    #allocation3 [shape = 's32[2]{0}', space=sflag, size = 0x8, scoped, tag = 'scoped memory for tpu_custom_call.1']
    #allocation4 [shape = 'u8[1024]{0}', space=vmem, size = 0x400, scoped, tag = 'output window, operand 1']
    #allocation5 [shape = 's32[2]{0}', space=sflag, size = 0x8, scoped, tag = 'scoped memory for tpu_custom_call.1']
    %14 = vsyncpa [#allocation3], 0
    %s15 = scalar_lea.sflag [#allocation3], 1
    %16 = vsyncpa %s15, 0
    %17 = vsyncpa [#allocation5], 0
    %s18 = scalar_lea.sflag [#allocation5], 1
    %19 = vsyncpa %s18, 0
    loop: start=0, step=1, limit=4
    $region2: #{tpu_custom_call.1} parent=1 // loop_pre_header
      _
    $region3: #{tpu_custom_call.1} parent=1 // loop_header
      %s21 = sphi 0, %s25
      %p22 = scmp.ge.s32.totalorder %s21, 4
      %s28 = sphi 0, %s47
      %s29 = sphi 0, %s43
      %s30 = sphi 0, %s39
      %s31 = sphi 0, %s28
      %s32 = sphi 0, %s29
      %s33 = sphi 0, %s30
      %s34 = sphi 0, %s31
      %s35 = sphi 0, %s32
      %s36 = sphi 0, %s33
      %s50 = sphi 0, %s52
      %s53 = sphi 0, %s50
      %s54 = sphi 0, %s53
      %s70 = sphi 0, %s54
      %s76 = sphi 0, %s78
      %s79 = sphi 0, %s76
      %s80 = sphi 0, %s79
      %s96 = sphi 0, %s80
      %s102 = sphi 0, %s104
      %s105 = sphi 0, %s102
      %s106 = sphi 0, %s105
      %s122 = sphi 0, %s106
      %s128 = sphi 0, %s130
      %s131 = sphi 0, %s128
      %s132 = sphi 0, %s131
      %s148 = sphi 0, %s132
      %s154 = sphi 0, %s156
      %s157 = sphi 0, %s154
      %s158 = sphi 0, %s157
      %s174 = sphi 0, %s158
      %s180 = sphi 0, %s182
      %s183 = sphi 0, %s180
      %s184 = sphi 0, %s183
      %s200 = sphi 0, %s184
      %s206 = sphi 0, %s208
      %s209 = sphi 0, %s206
      %s210 = sphi 0, %s209
      %s226 = sphi 0, %s210
      %s236 = sphi 0, %s238
      %s239 = sphi 0, %s236
      %s240 = sphi 0, %s239
      %s256 = sphi 0, %s240
      %s264 = sphi 0, %s266
      %s267 = sphi 0, %s264
      %s268 = sphi 0, %s267
      %s284 = sphi 0, %s268
    $region4: #{tpu_custom_call.1} parent=1 // loop_header_branch
      %24 = sbr.rel (%p22) target = $region8
    $region5: #{tpu_custom_call.1} parent=1 // loop_body
      %s26 = ssub.s32 %s21, 1
      %s27 = ssub.s32 %s21, 2
      %s37 = sadd.s32 1, %s30
      %p38 = scmp.ge.s32.totalorder %s37, 1
      %s39 = scalar_select %p38, 0, %s37
      %s40 = sadd.s32 1, %s29
      %s41 = scalar_select %p38, %s40, %s29
      %p42 = scmp.ge.s32.totalorder %s41, 1
      %s43 = scalar_select %p42, 0, %s41
      %s44 = sadd.s32 1, %s28
      %s45 = scalar_select %p42, %s44, %s28
      %p46 = scmp.ge.s32.totalorder %s45, 2
      %s47 = scalar_select %p46, 0, %s45
      %s48 = ssub.s32 %s28, %s47
      %p49 = scmp.eq.s32.totalorder %s48, 0
      %s51 = sadd.s32 %s50, 1
      %s52 = scalar_select %p49, %s50, %s51
      %p55 = pneg %p49
      %p56 = scmp.eq.s32.totalorder %s21, 1
      %p57 = por %p55, %p56
      %p58 = scmp.ne.s32.totalorder %s50, %s53
      %p59 = scmp.eq.s32.totalorder %s21, 0
      %p60 = por %p58, %p59
      %p61 = scmp.ne.s32.totalorder %s50, %s53
      %p62 = scmp.eq.s32.totalorder %s26, 1
      %p63 = por %p61, %p62
      %p64 = scmp.ne.s32.totalorder %s53, %s54
      %p65 = scmp.eq.s32.totalorder %s26, 0
      %p66 = por %p64, %p65
      %p67 = scmp.ne.s32.totalorder %s53, %s54
      %p68 = scmp.eq.s32.totalorder %s27, 1
      %p69 = por %p67, %p68
      %p71 = scmp.ne.s32.totalorder %s54, %s70
      %p72 = scmp.eq.s32.totalorder %s27, 0
      %p73 = por %p71, %p72
      %s74 = ssub.s32 %s29, %s43
      %p75 = scmp.eq.s32.totalorder %s74, 0
      %s77 = sadd.s32 %s76, 1
      %s78 = scalar_select %p75, %s76, %s77
      %p81 = pneg %p75
      %p82 = scmp.eq.s32.totalorder %s21, 1
      %p83 = por %p81, %p82
      %p84 = scmp.ne.s32.totalorder %s76, %s79
      %p85 = scmp.eq.s32.totalorder %s21, 0
      %p86 = por %p84, %p85
      %p87 = scmp.ne.s32.totalorder %s76, %s79
      %p88 = scmp.eq.s32.totalorder %s26, 1
      %p89 = por %p87, %p88
      %p90 = scmp.ne.s32.totalorder %s79, %s80
      %p91 = scmp.eq.s32.totalorder %s26, 0
      %p92 = por %p90, %p91
      %p93 = scmp.ne.s32.totalorder %s79, %s80
      %p94 = scmp.eq.s32.totalorder %s27, 1
      %p95 = por %p93, %p94
      %p97 = scmp.ne.s32.totalorder %s80, %s96
      %p98 = scmp.eq.s32.totalorder %s27, 0
      %p99 = por %p97, %p98
      %s100 = ssub.s32 %s29, %s43
      %p101 = scmp.eq.s32.totalorder %s100, 0
      %s103 = sadd.s32 %s102, 1
      %s104 = scalar_select %p101, %s102, %s103
      %p107 = pneg %p101
      %p108 = scmp.eq.s32.totalorder %s21, 1
      %p109 = por %p107, %p108
      %p110 = scmp.ne.s32.totalorder %s102, %s105
      %p111 = scmp.eq.s32.totalorder %s21, 0
      %p112 = por %p110, %p111
      %p113 = scmp.ne.s32.totalorder %s102, %s105
      %p114 = scmp.eq.s32.totalorder %s26, 1
      %p115 = por %p113, %p114
      %p116 = scmp.ne.s32.totalorder %s105, %s106
      %p117 = scmp.eq.s32.totalorder %s26, 0
      %p118 = por %p116, %p117
      %p119 = scmp.ne.s32.totalorder %s105, %s106
      %p120 = scmp.eq.s32.totalorder %s27, 1
      %p121 = por %p119, %p120
      %p123 = scmp.ne.s32.totalorder %s106, %s122
      %p124 = scmp.eq.s32.totalorder %s27, 0
      %p125 = por %p123, %p124
      %s126 = ssub.s32 %s29, %s43
      %p127 = scmp.eq.s32.totalorder %s126, 0
      %s129 = sadd.s32 %s128, 1
      %s130 = scalar_select %p127, %s128, %s129
      %p133 = pneg %p127
      %p134 = scmp.eq.s32.totalorder %s21, 1
      %p135 = por %p133, %p134
      %p136 = scmp.ne.s32.totalorder %s128, %s131
      %p137 = scmp.eq.s32.totalorder %s21, 0
      %p138 = por %p136, %p137
      %p139 = scmp.ne.s32.totalorder %s128, %s131
      %p140 = scmp.eq.s32.totalorder %s26, 1
      %p141 = por %p139, %p140
      %p142 = scmp.ne.s32.totalorder %s131, %s132
      %p143 = scmp.eq.s32.totalorder %s26, 0
      %p144 = por %p142, %p143
      %p145 = scmp.ne.s32.totalorder %s131, %s132
      %p146 = scmp.eq.s32.totalorder %s27, 1
      %p147 = por %p145, %p146
      %p149 = scmp.ne.s32.totalorder %s132, %s148
      %p150 = scmp.eq.s32.totalorder %s27, 0
      %p151 = por %p149, %p150
      %s152 = ssub.s32 %s29, %s43
      %p153 = scmp.eq.s32.totalorder %s152, 0
      %s155 = sadd.s32 %s154, 1
      %s156 = scalar_select %p153, %s154, %s155
      %p159 = pneg %p153
      %p160 = scmp.eq.s32.totalorder %s21, 1
      %p161 = por %p159, %p160
      %p162 = scmp.ne.s32.totalorder %s154, %s157
      %p163 = scmp.eq.s32.totalorder %s21, 0
      %p164 = por %p162, %p163
      %p165 = scmp.ne.s32.totalorder %s154, %s157
      %p166 = scmp.eq.s32.totalorder %s26, 1
      %p167 = por %p165, %p166
      %p168 = scmp.ne.s32.totalorder %s157, %s158
      %p169 = scmp.eq.s32.totalorder %s26, 0
      %p170 = por %p168, %p169
      %p171 = scmp.ne.s32.totalorder %s157, %s158
      %p172 = scmp.eq.s32.totalorder %s27, 1
      %p173 = por %p171, %p172
      %p175 = scmp.ne.s32.totalorder %s158, %s174
      %p176 = scmp.eq.s32.totalorder %s27, 0
      %p177 = por %p175, %p176
      %s178 = ssub.s32 %s29, %s43
      %p179 = scmp.eq.s32.totalorder %s178, 0
      %s181 = sadd.s32 %s180, 1
      %s182 = scalar_select %p179, %s180, %s181
      %p185 = pneg %p179
      %p186 = scmp.eq.s32.totalorder %s21, 1
      %p187 = por %p185, %p186
      %p188 = scmp.ne.s32.totalorder %s180, %s183
      %p189 = scmp.eq.s32.totalorder %s21, 0
      %p190 = por %p188, %p189
      %p191 = scmp.ne.s32.totalorder %s180, %s183
      %p192 = scmp.eq.s32.totalorder %s26, 1
      %p193 = por %p191, %p192
      %p194 = scmp.ne.s32.totalorder %s183, %s184
      %p195 = scmp.eq.s32.totalorder %s26, 0
      %p196 = por %p194, %p195
      %p197 = scmp.ne.s32.totalorder %s183, %s184
      %p198 = scmp.eq.s32.totalorder %s27, 1
      %p199 = por %p197, %p198
      %p201 = scmp.ne.s32.totalorder %s184, %s200
      %p202 = scmp.eq.s32.totalorder %s27, 0
      %p203 = por %p201, %p202
      %s204 = ssub.s32 %s29, %s43
      %p205 = scmp.eq.s32.totalorder %s204, 0
      %s207 = sadd.s32 %s206, 1
      %s208 = scalar_select %p205, %s206, %s207
      %p211 = pneg %p205
      %p212 = scmp.eq.s32.totalorder %s21, 1
      %p213 = por %p211, %p212
      %p214 = scmp.ne.s32.totalorder %s206, %s209
      %p215 = scmp.eq.s32.totalorder %s21, 0
      %p216 = por %p214, %p215
      %p217 = scmp.ne.s32.totalorder %s206, %s209
      %p218 = scmp.eq.s32.totalorder %s26, 1
      %p219 = por %p217, %p218
      %p220 = scmp.ne.s32.totalorder %s209, %s210
      %p221 = scmp.eq.s32.totalorder %s26, 0
      %p222 = por %p220, %p221
      %p223 = scmp.ne.s32.totalorder %s209, %s210
      %p224 = scmp.eq.s32.totalorder %s27, 1
      %p225 = por %p223, %p224
      %p227 = scmp.ne.s32.totalorder %s210, %s226
      %p228 = scmp.eq.s32.totalorder %s27, 0
      %p229 = por %p227, %p228
      %s230 = ssub.s32 %s28, %s47
      %s231 = ssub.s32 %s30, %s39
      %s232 = sor.u32 %s230, %s231
      %s233 = ssub.s32 %s29, %s43
      %s234 = sor.u32 %s232, %s233
      %p235 = scmp.eq.s32.totalorder %s234, 0
      %s237 = sadd.s32 %s236, 1
      %s238 = scalar_select %p235, %s236, %s237
      %p241 = pneg %p235
      %p242 = scmp.eq.s32.totalorder %s21, 1
      %p243 = por %p241, %p242
      %p244 = scmp.ne.s32.totalorder %s236, %s239
      %p245 = scmp.eq.s32.totalorder %s21, 0
      %p246 = por %p244, %p245
      %p247 = scmp.ne.s32.totalorder %s236, %s239
      %p248 = scmp.eq.s32.totalorder %s26, 1
      %p249 = por %p247, %p248
      %p250 = scmp.ne.s32.totalorder %s239, %s240
      %p251 = scmp.eq.s32.totalorder %s26, 0
      %p252 = por %p250, %p251
      %p253 = scmp.ne.s32.totalorder %s239, %s240
      %p254 = scmp.eq.s32.totalorder %s27, 1
      %p255 = por %p253, %p254
      %p257 = scmp.ne.s32.totalorder %s240, %s256
      %p258 = scmp.eq.s32.totalorder %s27, 0
      %p259 = por %p257, %p258
      %s260 = ssub.s32 %s28, %s47
      %s261 = ssub.s32 %s29, %s43
      %s262 = sor.u32 %s260, %s261
      %p263 = scmp.eq.s32.totalorder %s262, 0
      %s265 = sadd.s32 %s264, 1
      %s266 = scalar_select %p263, %s264, %s265
      %p269 = pneg %p263
      %p270 = scmp.eq.s32.totalorder %s21, 1
      %p271 = por %p269, %p270
      %p272 = scmp.ne.s32.totalorder %s264, %s267
      %p273 = scmp.eq.s32.totalorder %s21, 0
      %p274 = por %p272, %p273
      %p275 = scmp.ne.s32.totalorder %s264, %s267
      %p276 = scmp.eq.s32.totalorder %s26, 1
      %p277 = por %p275, %p276
      %p278 = scmp.ne.s32.totalorder %s267, %s268
      %p279 = scmp.eq.s32.totalorder %s26, 0
      %p280 = por %p278, %p279
      %p281 = scmp.ne.s32.totalorder %s267, %s268
      %p282 = scmp.eq.s32.totalorder %s27, 1
      %p283 = por %p281, %p282
      %p285 = scmp.ne.s32.totalorder %s268, %s284
      %p286 = scmp.eq.s32.totalorder %s27, 0
      %p287 = por %p285, %p286
      %p288 = scmp.le.s32.totalorder 1, %s21
      %p289 = scmp.lt.s32.totalorder %s21, 3
      %p290 = pnand %p288, %p289
      %p291 = pneg %p290
      // Predicated region
      $region9: #{tpu_custom_call.1} parent=5 // pred_check
        _
      $region10: #{tpu_custom_call.1} parent=5 // pred_check_branch
        %293 = sbr.rel (%p290) target = $region12
      $region11: #{tpu_custom_call.1} parent=5 // pred_region
        %s294 = ssub.s32 %s21, 1
        // Predicated region
        $region13: #{tpu_custom_call.1} parent=11 // pred_check
          %p295 = pneg %p92
        $region14: #{tpu_custom_call.1} parent=11 // pred_check_branch
          %297 = sbr.rel (%p295) target = $region16
        $region15: #{tpu_custom_call.1} parent=11 // pred_region
          %p298 = scmp.lt.s32.totalorder %s32, 0
          %s299 = scalar_select %p298, %s32, 0
          %s300 = smul.addr %s299, 4
          %s301 = scalar_lea.vmem %s1, %s300
        $region16: #{tpu_custom_call.1} parent=11 // pred_fallthru
          _
        // Predicated region
        $region17: #{tpu_custom_call.1} parent=11 // pred_check
          %p302 = pneg %p118
        $region18: #{tpu_custom_call.1} parent=11 // pred_check_branch
          %304 = sbr.rel (%p302) target = $region20
        $region19: #{tpu_custom_call.1} parent=11 // pred_region
          %p305 = scmp.lt.s32.totalorder %s32, 0
          %s306 = scalar_select %p305, %s32, 0
          %s307 = scalar_lea.vmem %s2, %s306
        $region20: #{tpu_custom_call.1} parent=11 // pred_fallthru
          _
        // Predicated region
        $region21: #{tpu_custom_call.1} parent=11 // pred_check
          %p308 = pneg %p144
        $region22: #{tpu_custom_call.1} parent=11 // pred_check_branch
          %310 = sbr.rel (%p308) target = $region24
        $region23: #{tpu_custom_call.1} parent=11 // pred_region
          %p311 = scmp.lt.s32.totalorder %s32, 0
          %s312 = scalar_select %p311, %s32, 0
          %s313 = scalar_lea.vmem %s3, %s312
        $region24: #{tpu_custom_call.1} parent=11 // pred_fallthru
          _
        // Predicated region
        $region25: #{tpu_custom_call.1} parent=11 // pred_check
          %p314 = pneg %p170
        $region26: #{tpu_custom_call.1} parent=11 // pred_check_branch
          %316 = sbr.rel (%p314) target = $region28
        $region27: #{tpu_custom_call.1} parent=11 // pred_region
          %p317 = scmp.lt.s32.totalorder %s32, 0
          %s318 = scalar_select %p317, %s32, 0
          %s319 = smul.addr %s318, 4
          %s320 = scalar_lea.vmem %s4, %s319
        $region28: #{tpu_custom_call.1} parent=11 // pred_fallthru
          _
        // Predicated region
        $region29: #{tpu_custom_call.1} parent=11 // pred_check
          %p321 = pneg %p196
        $region30: #{tpu_custom_call.1} parent=11 // pred_check_branch
          %323 = sbr.rel (%p321) target = $region32
        $region31: #{tpu_custom_call.1} parent=11 // pred_region
          %p324 = scmp.lt.s32.totalorder %s32, 0
          %s325 = scalar_select %p324, %s32, 0
          %s326 = scalar_lea.vmem %s5, %s325
        $region32: #{tpu_custom_call.1} parent=11 // pred_fallthru
          _
        // Predicated region
        $region33: #{tpu_custom_call.1} parent=11 // pred_check
          %p327 = pneg %p222
        $region34: #{tpu_custom_call.1} parent=11 // pred_check_branch
          %329 = sbr.rel (%p327) target = $region36
        $region35: #{tpu_custom_call.1} parent=11 // pred_region
          %p330 = scmp.lt.s32.totalorder %s32, 0
          %s331 = scalar_select %p330, %s32, 0
          %s332 = scalar_lea.vmem %s6, %s331
        $region36: #{tpu_custom_call.1} parent=11 // pred_fallthru
          _
      $region12: #{tpu_custom_call.1} parent=5 // pred_fallthru
        _
      %p333 = scmp.lt.s32.totalorder %s21, 2
      // Predicated region
      $region37: #{tpu_custom_call.1} parent=5 // pred_check
        %p334 = pneg %p333
      $region38: #{tpu_custom_call.1} parent=5 // pred_check_branch
        %336 = sbr.rel (%p334) target = $region40
      $region39: #{tpu_custom_call.1} parent=5 // pred_region
        // Predicated region
        $region41: #{tpu_custom_call.1} parent=39 // pred_check
          %p337 = pneg %p60
        $region42: #{tpu_custom_call.1} parent=39 // pred_check_branch
          %339 = sbr.rel (%p337) target = $region44
        $region43: #{tpu_custom_call.1} parent=39 // pred_region
          %p340 = scmp.lt.s32.totalorder %s28, 1
          %s341 = scalar_select %p340, %s28, 1
          %s342 = smul.addr %s341, 54
          %s343 = smul.addr %s342, 8
          %s344 = scalar_lea.vmem %s0, %s343
        $region44: #{tpu_custom_call.1} parent=39 // pred_fallthru
          _
      $region40: #{tpu_custom_call.1} parent=5 // pred_fallthru
        _
      %p345 = scmp.le.s32.totalorder 1, %s21
      %p346 = scmp.lt.s32.totalorder %s21, 3
      %p347 = pnand %p345, %p346
      %p348 = pneg %p347
      // Predicated region
      $region45: #{tpu_custom_call.1} parent=5 // pred_check
        _
      $region46: #{tpu_custom_call.1} parent=5 // pred_check_branch
        %350 = sbr.rel (%p347) target = $region48
      $region47: #{tpu_custom_call.1} parent=5 // pred_region
        %s351 = ssub.s32 %s21, 1
        %p352 = scmp.lt.s32.totalorder %s31, 1
        %s353 = scalar_select %p352, %s31, 1
        %s354 = smul.addr %s353, 54
        %s355 = smul.addr %s354, 8
        %s356 = scalar_lea.vmem %s0, %s355
        %p357 = pneg %p66
        %p358 = pneg %p63
        %p359 = scmp.lt.s32.totalorder %s32, 0
        %s360 = scalar_select %p359, %s32, 0
        %s361 = smul.addr %s360, 4
        %s362 = scalar_lea.vmem %s1, %s361
        %p363 = pneg %p92
        %p364 = pneg %p89
        %p365 = scmp.lt.s32.totalorder %s32, 0
        %s366 = scalar_select %p365, %s32, 0
        %s367 = scalar_lea.vmem %s2, %s366
        %p368 = pneg %p118
        %p369 = pneg %p115
        %p370 = scmp.lt.s32.totalorder %s32, 0
        %s371 = scalar_select %p370, %s32, 0
        %s372 = scalar_lea.vmem %s3, %s371
        %p373 = pneg %p144
        %p374 = pneg %p141
        %p375 = scmp.lt.s32.totalorder %s32, 0
        %s376 = scalar_select %p375, %s32, 0
        %s377 = smul.addr %s376, 4
        %s378 = scalar_lea.vmem %s4, %s377
        %p379 = pneg %p170
        %p380 = pneg %p167
        %p381 = scmp.lt.s32.totalorder %s32, 0
        %s382 = scalar_select %p381, %s32, 0
        %s383 = scalar_lea.vmem %s5, %s382
        %p384 = pneg %p196
        %p385 = pneg %p193
        %p386 = scmp.lt.s32.totalorder %s32, 0
        %s387 = scalar_select %p386, %s32, 0
        %s388 = scalar_lea.vmem %s6, %s387
        %p389 = pneg %p222
        %p390 = pneg %p219
        %p391 = pneg %p252
        %p392 = pneg %p249
        %s393 = sand.u32 %s239, 1
        %s394 = scalar_lea.sflag [#allocation3], %s393
        %s395 = sand.u32 %s239, 1
        %s396 = smul.addr %s395, 128
        %s397 = scalar_lea.vmem [#allocation2], %s396
        %p398 = pneg %p280
        %p399 = pneg %p277
        %s400 = sand.u32 %s267, 1
        %s401 = scalar_lea.sflag [#allocation5], %s400
        %s402 = sand.u32 %s267, 1
        %s403 = scalar_lea.vmem [#allocation4], %s402
        %p404 = scmp.lt.s32.totalorder %s31, 1
        %s405 = scalar_select %p404, %s31, 1
        %s406 = smul.addr %s405, 54
        %s407 = smul.addr %s406, 8
        %s408 = scalar_lea.vmem %s0, %s407
        %p409 = scmp.lt.s32.totalorder %s32, 0
        %s410 = scalar_select %p409, %s32, 0
        %s411 = smul.addr %s410, 4
        %s412 = scalar_lea.vmem %s1, %s411
        %p413 = scmp.lt.s32.totalorder %s32, 0
        %s414 = scalar_select %p413, %s32, 0
        %s415 = scalar_lea.vmem %s2, %s414
        %p416 = scmp.lt.s32.totalorder %s32, 0
        %s417 = scalar_select %p416, %s32, 0
        %s418 = scalar_lea.vmem %s3, %s417
        %p419 = scmp.lt.s32.totalorder %s32, 0
        %s420 = scalar_select %p419, %s32, 0
        %s421 = smul.addr %s420, 4
        %s422 = scalar_lea.vmem %s4, %s421
        %p423 = scmp.lt.s32.totalorder %s32, 0
        %s424 = scalar_select %p423, %s32, 0
        %s425 = scalar_lea.vmem %s5, %s424
        %p426 = scmp.lt.s32.totalorder %s32, 0
        %s427 = scalar_select %p426, %s32, 0
        %s428 = scalar_lea.vmem %s6, %s427
        %s429 = smul.u32 16, %s33
        %s430 = smul.u32 %s33, 16
        %s431 = smul.u32 %s430, 24
        %s432 = scalar_lea.vmem %s408, %s431
        %v433 = vld [vmem:[%s432] sm:$0xff]
        %v434 = vld [vmem:[%s432 + $0x8] sm:$0xff]
        %v435 = vld [vmem:[%s432 + $0x10] sm:$0x3]
        %v436 = vld [vmem:[%s432 + $0x18] sm:$0xff]
        %v437 = vld [vmem:[%s432 + $0x20] sm:$0xff]
        %v438 = vld [vmem:[%s432 + $0x28] sm:$0x3]
        %v439 = vld [vmem:[%s432 + $0x30] sm:$0xff]
        %v440 = vld [vmem:[%s432 + $0x38] sm:$0xff]
        %v441 = vld [vmem:[%s432 + $0x40] sm:$0x3]
        %v442 = vld [vmem:[%s432 + $0x48] sm:$0xff]
        %v443 = vld [vmem:[%s432 + $0x50] sm:$0xff]
        %v444 = vld [vmem:[%s432 + $0x58] sm:$0x3]
        %v445 = vld [vmem:[%s432 + $0x60] sm:$0xff]
        %v446 = vld [vmem:[%s432 + $0x68] sm:$0xff]
        %v447 = vld [vmem:[%s432 + $0x70] sm:$0x3]
        %v448 = vld [vmem:[%s432 + $0x78] sm:$0xff]
        %v449 = vld [vmem:[%s432 + $0x80] sm:$0xff]
        %v450 = vld [vmem:[%s432 + $0x88] sm:$0x3]
        %v451 = vld [vmem:[%s432 + $0x90] sm:$0xff]
        %v452 = vld [vmem:[%s432 + $0x98] sm:$0xff]
        %v453 = vld [vmem:[%s432 + $0xa0] sm:$0x3]
        %v454 = vld [vmem:[%s432 + $0xa8] sm:$0xff]
        %v455 = vld [vmem:[%s432 + $0xb0] sm:$0xff]
        %v456 = vld [vmem:[%s432 + $0xb8] sm:$0x3]
        %v457 = vld [vmem:[%s432 + $0xc0] sm:$0xff]
        %v458 = vld [vmem:[%s432 + $0xc8] sm:$0xff]
        %v459 = vld [vmem:[%s432 + $0xd0] sm:$0x3]
        %v460 = vld [vmem:[%s432 + $0xd8] sm:$0xff]
        %v461 = vld [vmem:[%s432 + $0xe0] sm:$0xff]
        %v462 = vld [vmem:[%s432 + $0xe8] sm:$0x3]
        %v463 = vld [vmem:[%s432 + $0xf0] sm:$0xff]
        %v464 = vld [vmem:[%s432 + $0xf8] sm:$0xff]
        %v465 = vld [vmem:[%s432 + $0x100] sm:$0x3]
        %v466 = vld [vmem:[%s432 + $0x108] sm:$0xff]
        %v467 = vld [vmem:[%s432 + $0x110] sm:$0xff]
        %v468 = vld [vmem:[%s432 + $0x118] sm:$0x3]
        %v469 = vld [vmem:[%s432 + $0x120] sm:$0xff]
        %v470 = vld [vmem:[%s432 + $0x128] sm:$0xff]
        %v471 = vld [vmem:[%s432 + $0x130] sm:$0x3]
        %v472 = vld [vmem:[%s432 + $0x138] sm:$0xff]
        %v473 = vld [vmem:[%s432 + $0x140] sm:$0xff]
        %v474 = vld [vmem:[%s432 + $0x148] sm:$0x3]
        %v475 = vld [vmem:[%s432 + $0x150] sm:$0xff]
        %v476 = vld [vmem:[%s432 + $0x158] sm:$0xff]
        %v477 = vld [vmem:[%s432 + $0x160] sm:$0x3]
        %v478 = vld [vmem:[%s432 + $0x168] sm:$0xff]
        %v479 = vld [vmem:[%s432 + $0x170] sm:$0xff]
        %v480 = vld [vmem:[%s432 + $0x178] sm:$0x3]
        %v481 = vld [vmem:[%s432 + $0x180] sm:$0xff]
        %v482 = vld [vmem:[%s432 + $0x188] sm:$0xff]
        %v483 = vld [vmem:[%s432 + $0x190] sm:$0x3]
        %v484 = vld [vmem:[%s432 + $0x198] sm:$0xff]
        %v485 = vld [vmem:[%s432 + $0x1a0] sm:$0xff]
        %v486 = vld [vmem:[%s432 + $0x1a8] sm:$0x3]
        %v541 = vcombine.high %v433, %v433
        %v543 = vunpack.c.l.s4 1983009808
        %v544 = vunpack.c.0.s8 %v543
        %v545 = vlaneseq
        %v546 = vshrl.u32 %v545, 7
        %v547 = vsub.s32 %v544, %v546
        %v548 = vrot.slane %v433, %v547
        %v550 = vunpack.c.l.s4 1983009808
        %v551 = vunpack.c.0.s8 %v550
        %v552 = vlaneseq
        %v553 = vshrl.u32 %v552, 7
        %v554 = vsub.s32 %v551, %v553
        %v555 = vrot.slane %v541, %v554
        %v556 = vcombine.high %v548, %v548
        %v557 = vcombine.high %v555, %v555
        %v558 = vcombine.high %v434, %v434
        %v560 = vunpack.c.l.s4 1983009808
        %v561 = vunpack.c.0.s8 %v560
        %v562 = vlaneseq
        %v563 = vshrl.u32 %v562, 7
        %v564 = vsub.s32 %v561, %v563
        %v565 = vrot.slane %v434, %v564
        %v567 = vunpack.c.l.s4 1983009808
        %v568 = vunpack.c.0.s8 %v567
        %v569 = vlaneseq
        %v570 = vshrl.u32 %v569, 7
        %v571 = vsub.s32 %v568, %v570
        %v572 = vrot.slane %v558, %v571
        %v573 = vcombine.high %v565, %v565
        %v574 = vcombine.high %v572, %v572
        %v576 = vunpack.c.l.s4 1983009808
        %v577 = vunpack.c.0.s8 %v576
        %v578 = vlaneseq
        %v579 = vshrl.u32 %v578, 7
        %v580 = vsub.s32 %v577, %v579
        %v581 = vrot.slane %v435, %v580
        %v582 = vcombine.high %v436, %v436
        %v584 = vunpack.c.l.s4 1983009808
        %v585 = vunpack.c.0.s8 %v584
        %v586 = vlaneseq
        %v587 = vshrl.u32 %v586, 7
        %v588 = vsub.s32 %v585, %v587
        %v589 = vrot.slane %v436, %v588
        %v591 = vunpack.c.l.s4 1983009808
        %v592 = vunpack.c.0.s8 %v591
        %v593 = vlaneseq
        %v594 = vshrl.u32 %v593, 7
        %v595 = vsub.s32 %v592, %v594
        %v596 = vrot.slane %v582, %v595
        %v597 = vcombine.high %v589, %v589
        %v598 = vcombine.high %v596, %v596
        %v599 = vcombine.high %v437, %v437
        %v601 = vunpack.c.l.s4 1983009808
        %v602 = vunpack.c.0.s8 %v601
        %v603 = vlaneseq
        %v604 = vshrl.u32 %v603, 7
        %v605 = vsub.s32 %v602, %v604
        %v606 = vrot.slane %v437, %v605
        %v608 = vunpack.c.l.s4 1983009808
        %v609 = vunpack.c.0.s8 %v608
        %v610 = vlaneseq
        %v611 = vshrl.u32 %v610, 7
        %v612 = vsub.s32 %v609, %v611
        %v613 = vrot.slane %v599, %v612
        %v614 = vcombine.high %v606, %v606
        %v615 = vcombine.high %v613, %v613
        %v617 = vunpack.c.l.s4 1983009808
        %v618 = vunpack.c.0.s8 %v617
        %v619 = vlaneseq
        %v620 = vshrl.u32 %v619, 7
        %v621 = vsub.s32 %v618, %v620
        %v622 = vrot.slane %v438, %v621
        %v623 = vcombine.high %v439, %v439
        %v625 = vunpack.c.l.s4 1983009808
        %v626 = vunpack.c.0.s8 %v625
        %v627 = vlaneseq
        %v628 = vshrl.u32 %v627, 7
        %v629 = vsub.s32 %v626, %v628
        %v630 = vrot.slane %v439, %v629
        %v632 = vunpack.c.l.s4 1983009808
        %v633 = vunpack.c.0.s8 %v632
        %v634 = vlaneseq
        %v635 = vshrl.u32 %v634, 7
        %v636 = vsub.s32 %v633, %v635
        %v637 = vrot.slane %v623, %v636
        %v638 = vcombine.high %v630, %v630
        %v639 = vcombine.high %v637, %v637
        %v640 = vcombine.high %v440, %v440
        %v642 = vunpack.c.l.s4 1983009808
        %v643 = vunpack.c.0.s8 %v642
        %v644 = vlaneseq
        %v645 = vshrl.u32 %v644, 7
        %v646 = vsub.s32 %v643, %v645
        %v647 = vrot.slane %v440, %v646
        %v649 = vunpack.c.l.s4 1983009808
        %v650 = vunpack.c.0.s8 %v649
        %v651 = vlaneseq
        %v652 = vshrl.u32 %v651, 7
        %v653 = vsub.s32 %v650, %v652
        %v654 = vrot.slane %v640, %v653
        %v655 = vcombine.high %v647, %v647
        %v656 = vcombine.high %v654, %v654
        %v658 = vunpack.c.l.s4 1983009808
        %v659 = vunpack.c.0.s8 %v658
        %v660 = vlaneseq
        %v661 = vshrl.u32 %v660, 7
        %v662 = vsub.s32 %v659, %v661
        %v663 = vrot.slane %v441, %v662
        %v664 = vcombine.high %v442, %v442
        %v666 = vunpack.c.l.s4 1983009808
        %v667 = vunpack.c.0.s8 %v666
        %v668 = vlaneseq
        %v669 = vshrl.u32 %v668, 7
        %v670 = vsub.s32 %v667, %v669
        %v671 = vrot.slane %v442, %v670
        %v673 = vunpack.c.l.s4 1983009808
        %v674 = vunpack.c.0.s8 %v673
        %v675 = vlaneseq
        %v676 = vshrl.u32 %v675, 7
        %v677 = vsub.s32 %v674, %v676
        %v678 = vrot.slane %v664, %v677
        %v679 = vcombine.high %v671, %v671
        %v680 = vcombine.high %v678, %v678
        %v681 = vcombine.high %v443, %v443
        %v683 = vunpack.c.l.s4 1983009808
        %v684 = vunpack.c.0.s8 %v683
        %v685 = vlaneseq
        %v686 = vshrl.u32 %v685, 7
        %v687 = vsub.s32 %v684, %v686
        %v688 = vrot.slane %v443, %v687
        %v690 = vunpack.c.l.s4 1983009808
        %v691 = vunpack.c.0.s8 %v690
        %v692 = vlaneseq
        %v693 = vshrl.u32 %v692, 7
        %v694 = vsub.s32 %v691, %v693
        %v695 = vrot.slane %v681, %v694
        %v696 = vcombine.high %v688, %v688
        %v697 = vcombine.high %v695, %v695
        %v699 = vunpack.c.l.s4 1983009808
        %v700 = vunpack.c.0.s8 %v699
        %v701 = vlaneseq
        %v702 = vshrl.u32 %v701, 7
        %v703 = vsub.s32 %v700, %v702
        %v704 = vrot.slane %v444, %v703
        %v705 = vcombine.high %v445, %v445
        %v707 = vunpack.c.l.s4 1983009808
        %v708 = vunpack.c.0.s8 %v707
        %v709 = vlaneseq
        %v710 = vshrl.u32 %v709, 7
        %v711 = vsub.s32 %v708, %v710
        %v712 = vrot.slane %v445, %v711
        %v714 = vunpack.c.l.s4 1983009808
        %v715 = vunpack.c.0.s8 %v714
        %v716 = vlaneseq
        %v717 = vshrl.u32 %v716, 7
        %v718 = vsub.s32 %v715, %v717
        %v719 = vrot.slane %v705, %v718
        %v720 = vcombine.high %v712, %v712
        %v721 = vcombine.high %v719, %v719
        %v722 = vcombine.high %v446, %v446
        %v724 = vunpack.c.l.s4 1983009808
        %v725 = vunpack.c.0.s8 %v724
        %v726 = vlaneseq
        %v727 = vshrl.u32 %v726, 7
        %v728 = vsub.s32 %v725, %v727
        %v729 = vrot.slane %v446, %v728
        %v731 = vunpack.c.l.s4 1983009808
        %v732 = vunpack.c.0.s8 %v731
        %v733 = vlaneseq
        %v734 = vshrl.u32 %v733, 7
        %v735 = vsub.s32 %v732, %v734
        %v736 = vrot.slane %v722, %v735
        %v737 = vcombine.high %v729, %v729
        %v738 = vcombine.high %v736, %v736
        %v740 = vunpack.c.l.s4 1983009808
        %v741 = vunpack.c.0.s8 %v740
        %v742 = vlaneseq
        %v743 = vshrl.u32 %v742, 7
        %v744 = vsub.s32 %v741, %v743
        %v745 = vrot.slane %v447, %v744
        %v746 = vcombine.high %v448, %v448
        %v748 = vunpack.c.l.s4 1983009808
        %v749 = vunpack.c.0.s8 %v748
        %v750 = vlaneseq
        %v751 = vshrl.u32 %v750, 7
        %v752 = vsub.s32 %v749, %v751
        %v753 = vrot.slane %v448, %v752
        %v755 = vunpack.c.l.s4 1983009808
        %v756 = vunpack.c.0.s8 %v755
        %v757 = vlaneseq
        %v758 = vshrl.u32 %v757, 7
        %v759 = vsub.s32 %v756, %v758
        %v760 = vrot.slane %v746, %v759
        %v761 = vcombine.high %v753, %v753
        %v762 = vcombine.high %v760, %v760
        %v763 = vcombine.high %v449, %v449
        %v765 = vunpack.c.l.s4 1983009808
        %v766 = vunpack.c.0.s8 %v765
        %v767 = vlaneseq
        %v768 = vshrl.u32 %v767, 7
        %v769 = vsub.s32 %v766, %v768
        %v770 = vrot.slane %v449, %v769
        %v772 = vunpack.c.l.s4 1983009808
        %v773 = vunpack.c.0.s8 %v772
        %v774 = vlaneseq
        %v775 = vshrl.u32 %v774, 7
        %v776 = vsub.s32 %v773, %v775
        %v777 = vrot.slane %v763, %v776
        %v778 = vcombine.high %v770, %v770
        %v779 = vcombine.high %v777, %v777
        %v781 = vunpack.c.l.s4 1983009808
        %v782 = vunpack.c.0.s8 %v781
        %v783 = vlaneseq
        %v784 = vshrl.u32 %v783, 7
        %v785 = vsub.s32 %v782, %v784
        %v786 = vrot.slane %v450, %v785
        %v787 = vcombine.high %v451, %v451
        %v789 = vunpack.c.l.s4 1983009808
        %v790 = vunpack.c.0.s8 %v789
        %v791 = vlaneseq
        %v792 = vshrl.u32 %v791, 7
        %v793 = vsub.s32 %v790, %v792
        %v794 = vrot.slane %v451, %v793
        %v796 = vunpack.c.l.s4 1983009808
        %v797 = vunpack.c.0.s8 %v796
        %v798 = vlaneseq
        %v799 = vshrl.u32 %v798, 7
        %v800 = vsub.s32 %v797, %v799
        %v801 = vrot.slane %v787, %v800
        %v802 = vcombine.high %v794, %v794
        %v803 = vcombine.high %v801, %v801
        %v804 = vcombine.high %v452, %v452
        %v806 = vunpack.c.l.s4 1983009808
        %v807 = vunpack.c.0.s8 %v806
        %v808 = vlaneseq
        %v809 = vshrl.u32 %v808, 7
        %v810 = vsub.s32 %v807, %v809
        %v811 = vrot.slane %v452, %v810
        %v813 = vunpack.c.l.s4 1983009808
        %v814 = vunpack.c.0.s8 %v813
        %v815 = vlaneseq
        %v816 = vshrl.u32 %v815, 7
        %v817 = vsub.s32 %v814, %v816
        %v818 = vrot.slane %v804, %v817
        %v819 = vcombine.high %v811, %v811
        %v820 = vcombine.high %v818, %v818
        %v822 = vunpack.c.l.s4 1983009808
        %v823 = vunpack.c.0.s8 %v822
        %v824 = vlaneseq
        %v825 = vshrl.u32 %v824, 7
        %v826 = vsub.s32 %v823, %v825
        %v827 = vrot.slane %v453, %v826
        %v828 = vcombine.high %v454, %v454
        %v830 = vunpack.c.l.s4 1983009808
        %v831 = vunpack.c.0.s8 %v830
        %v832 = vlaneseq
        %v833 = vshrl.u32 %v832, 7
        %v834 = vsub.s32 %v831, %v833
        %v835 = vrot.slane %v454, %v834
        %v837 = vunpack.c.l.s4 1983009808
        %v838 = vunpack.c.0.s8 %v837
        %v839 = vlaneseq
        %v840 = vshrl.u32 %v839, 7
        %v841 = vsub.s32 %v838, %v840
        %v842 = vrot.slane %v828, %v841
        %v843 = vcombine.high %v835, %v835
        %v844 = vcombine.high %v842, %v842
        %v845 = vcombine.high %v455, %v455
        %v847 = vunpack.c.l.s4 1983009808
        %v848 = vunpack.c.0.s8 %v847
        %v849 = vlaneseq
        %v850 = vshrl.u32 %v849, 7
        %v851 = vsub.s32 %v848, %v850
        %v852 = vrot.slane %v455, %v851
        %v854 = vunpack.c.l.s4 1983009808
        %v855 = vunpack.c.0.s8 %v854
        %v856 = vlaneseq
        %v857 = vshrl.u32 %v856, 7
        %v858 = vsub.s32 %v855, %v857
        %v859 = vrot.slane %v845, %v858
        %v860 = vcombine.high %v852, %v852
        %v861 = vcombine.high %v859, %v859
        %v863 = vunpack.c.l.s4 1983009808
        %v864 = vunpack.c.0.s8 %v863
        %v865 = vlaneseq
        %v866 = vshrl.u32 %v865, 7
        %v867 = vsub.s32 %v864, %v866
        %v868 = vrot.slane %v456, %v867
        %v869 = vcombine.high %v457, %v457
        %v871 = vunpack.c.l.s4 1983009808
        %v872 = vunpack.c.0.s8 %v871
        %v873 = vlaneseq
        %v874 = vshrl.u32 %v873, 7
        %v875 = vsub.s32 %v872, %v874
        %v876 = vrot.slane %v457, %v875
        %v878 = vunpack.c.l.s4 1983009808
        %v879 = vunpack.c.0.s8 %v878
        %v880 = vlaneseq
        %v881 = vshrl.u32 %v880, 7
        %v882 = vsub.s32 %v879, %v881
        %v883 = vrot.slane %v869, %v882
        %v884 = vcombine.high %v876, %v876
        %v885 = vcombine.high %v883, %v883
        %v886 = vcombine.high %v458, %v458
        %v888 = vunpack.c.l.s4 1983009808
        %v889 = vunpack.c.0.s8 %v888
        %v890 = vlaneseq
        %v891 = vshrl.u32 %v890, 7
        %v892 = vsub.s32 %v889, %v891
        %v893 = vrot.slane %v458, %v892
        %v895 = vunpack.c.l.s4 1983009808
        %v896 = vunpack.c.0.s8 %v895
        %v897 = vlaneseq
        %v898 = vshrl.u32 %v897, 7
        %v899 = vsub.s32 %v896, %v898
        %v900 = vrot.slane %v886, %v899
        %v901 = vcombine.high %v893, %v893
        %v902 = vcombine.high %v900, %v900
        %v904 = vunpack.c.l.s4 1983009808
        %v905 = vunpack.c.0.s8 %v904
        %v906 = vlaneseq
        %v907 = vshrl.u32 %v906, 7
        %v908 = vsub.s32 %v905, %v907
        %v909 = vrot.slane %v459, %v908
        %v910 = vcombine.high %v460, %v460
        %v912 = vunpack.c.l.s4 1983009808
        %v913 = vunpack.c.0.s8 %v912
        %v914 = vlaneseq
        %v915 = vshrl.u32 %v914, 7
        %v916 = vsub.s32 %v913, %v915
        %v917 = vrot.slane %v460, %v916
        %v919 = vunpack.c.l.s4 1983009808
        %v920 = vunpack.c.0.s8 %v919
        %v921 = vlaneseq
        %v922 = vshrl.u32 %v921, 7
        %v923 = vsub.s32 %v920, %v922
        %v924 = vrot.slane %v910, %v923
        %v925 = vcombine.high %v917, %v917
        %v926 = vcombine.high %v924, %v924
        %v927 = vcombine.high %v461, %v461
        %v929 = vunpack.c.l.s4 1983009808
        %v930 = vunpack.c.0.s8 %v929
        %v931 = vlaneseq
        %v932 = vshrl.u32 %v931, 7
        %v933 = vsub.s32 %v930, %v932
        %v934 = vrot.slane %v461, %v933
        %v936 = vunpack.c.l.s4 1983009808
        %v937 = vunpack.c.0.s8 %v936
        %v938 = vlaneseq
        %v939 = vshrl.u32 %v938, 7
        %v940 = vsub.s32 %v937, %v939
        %v941 = vrot.slane %v927, %v940
        %v942 = vcombine.high %v934, %v934
        %v943 = vcombine.high %v941, %v941
        %v945 = vunpack.c.l.s4 1983009808
        %v946 = vunpack.c.0.s8 %v945
        %v947 = vlaneseq
        %v948 = vshrl.u32 %v947, 7
        %v949 = vsub.s32 %v946, %v948
        %v950 = vrot.slane %v462, %v949
        %v951 = vcombine.high %v463, %v463
        %v953 = vunpack.c.l.s4 1983009808
        %v954 = vunpack.c.0.s8 %v953
        %v955 = vlaneseq
        %v956 = vshrl.u32 %v955, 7
        %v957 = vsub.s32 %v954, %v956
        %v958 = vrot.slane %v463, %v957
        %v960 = vunpack.c.l.s4 1983009808
        %v961 = vunpack.c.0.s8 %v960
        %v962 = vlaneseq
        %v963 = vshrl.u32 %v962, 7
        %v964 = vsub.s32 %v961, %v963
        %v965 = vrot.slane %v951, %v964
        %v966 = vcombine.high %v958, %v958
        %v967 = vcombine.high %v965, %v965
        %v968 = vcombine.high %v464, %v464
        %v970 = vunpack.c.l.s4 1983009808
        %v971 = vunpack.c.0.s8 %v970
        %v972 = vlaneseq
        %v973 = vshrl.u32 %v972, 7
        %v974 = vsub.s32 %v971, %v973
        %v975 = vrot.slane %v464, %v974
        %v977 = vunpack.c.l.s4 1983009808
        %v978 = vunpack.c.0.s8 %v977
        %v979 = vlaneseq
        %v980 = vshrl.u32 %v979, 7
        %v981 = vsub.s32 %v978, %v980
        %v982 = vrot.slane %v968, %v981
        %v983 = vcombine.high %v975, %v975
        %v984 = vcombine.high %v982, %v982
        %v986 = vunpack.c.l.s4 1983009808
        %v987 = vunpack.c.0.s8 %v986
        %v988 = vlaneseq
        %v989 = vshrl.u32 %v988, 7
        %v990 = vsub.s32 %v987, %v989
        %v991 = vrot.slane %v465, %v990
        %v992 = vcombine.high %v466, %v466
        %v994 = vunpack.c.l.s4 1983009808
        %v995 = vunpack.c.0.s8 %v994
        %v996 = vlaneseq
        %v997 = vshrl.u32 %v996, 7
        %v998 = vsub.s32 %v995, %v997
        %v999 = vrot.slane %v466, %v998
        %v1001 = vunpack.c.l.s4 1983009808
        %v1002 = vunpack.c.0.s8 %v1001
        %v1003 = vlaneseq
        %v1004 = vshrl.u32 %v1003, 7
        %v1005 = vsub.s32 %v1002, %v1004
        %v1006 = vrot.slane %v992, %v1005
        %v1007 = vcombine.high %v999, %v999
        %v1008 = vcombine.high %v1006, %v1006
        %v1009 = vcombine.high %v467, %v467
        %v1011 = vunpack.c.l.s4 1983009808
        %v1012 = vunpack.c.0.s8 %v1011
        %v1013 = vlaneseq
        %v1014 = vshrl.u32 %v1013, 7
        %v1015 = vsub.s32 %v1012, %v1014
        %v1016 = vrot.slane %v467, %v1015
        %v1018 = vunpack.c.l.s4 1983009808
        %v1019 = vunpack.c.0.s8 %v1018
        %v1020 = vlaneseq
        %v1021 = vshrl.u32 %v1020, 7
        %v1022 = vsub.s32 %v1019, %v1021
        %v1023 = vrot.slane %v1009, %v1022
        %v1024 = vcombine.high %v1016, %v1016
        %v1025 = vcombine.high %v1023, %v1023
        %v1027 = vunpack.c.l.s4 1983009808
        %v1028 = vunpack.c.0.s8 %v1027
        %v1029 = vlaneseq
        %v1030 = vshrl.u32 %v1029, 7
        %v1031 = vsub.s32 %v1028, %v1030
        %v1032 = vrot.slane %v468, %v1031
        %v1033 = vcombine.high %v469, %v469
        %v1035 = vunpack.c.l.s4 1983009808
        %v1036 = vunpack.c.0.s8 %v1035
        %v1037 = vlaneseq
        %v1038 = vshrl.u32 %v1037, 7
        %v1039 = vsub.s32 %v1036, %v1038
        %v1040 = vrot.slane %v469, %v1039
        %v1042 = vunpack.c.l.s4 1983009808
        %v1043 = vunpack.c.0.s8 %v1042
        %v1044 = vlaneseq
        %v1045 = vshrl.u32 %v1044, 7
        %v1046 = vsub.s32 %v1043, %v1045
        %v1047 = vrot.slane %v1033, %v1046
        %v1048 = vcombine.high %v1040, %v1040
        %v1049 = vcombine.high %v1047, %v1047
        %v1050 = vcombine.high %v470, %v470
        %v1052 = vunpack.c.l.s4 1983009808
        %v1053 = vunpack.c.0.s8 %v1052
        %v1054 = vlaneseq
        %v1055 = vshrl.u32 %v1054, 7
        %v1056 = vsub.s32 %v1053, %v1055
        %v1057 = vrot.slane %v470, %v1056
        %v1059 = vunpack.c.l.s4 1983009808
        %v1060 = vunpack.c.0.s8 %v1059
        %v1061 = vlaneseq
        %v1062 = vshrl.u32 %v1061, 7
        %v1063 = vsub.s32 %v1060, %v1062
        %v1064 = vrot.slane %v1050, %v1063
        %v1065 = vcombine.high %v1057, %v1057
        %v1066 = vcombine.high %v1064, %v1064
        %v1068 = vunpack.c.l.s4 1983009808
        %v1069 = vunpack.c.0.s8 %v1068
        %v1070 = vlaneseq
        %v1071 = vshrl.u32 %v1070, 7
        %v1072 = vsub.s32 %v1069, %v1071
        %v1073 = vrot.slane %v471, %v1072
        %v1074 = vcombine.high %v472, %v472
        %v1076 = vunpack.c.l.s4 1983009808
        %v1077 = vunpack.c.0.s8 %v1076
        %v1078 = vlaneseq
        %v1079 = vshrl.u32 %v1078, 7
        %v1080 = vsub.s32 %v1077, %v1079
        %v1081 = vrot.slane %v472, %v1080
        %v1083 = vunpack.c.l.s4 1983009808
        %v1084 = vunpack.c.0.s8 %v1083
        %v1085 = vlaneseq
        %v1086 = vshrl.u32 %v1085, 7
        %v1087 = vsub.s32 %v1084, %v1086
        %v1088 = vrot.slane %v1074, %v1087
        %v1089 = vcombine.high %v1081, %v1081
        %v1090 = vcombine.high %v1088, %v1088
        %v1091 = vcombine.high %v473, %v473
        %v1093 = vunpack.c.l.s4 1983009808
        %v1094 = vunpack.c.0.s8 %v1093
        %v1095 = vlaneseq
        %v1096 = vshrl.u32 %v1095, 7
        %v1097 = vsub.s32 %v1094, %v1096
        %v1098 = vrot.slane %v473, %v1097
        %v1100 = vunpack.c.l.s4 1983009808
        %v1101 = vunpack.c.0.s8 %v1100
        %v1102 = vlaneseq
        %v1103 = vshrl.u32 %v1102, 7
        %v1104 = vsub.s32 %v1101, %v1103
        %v1105 = vrot.slane %v1091, %v1104
        %v1106 = vcombine.high %v1098, %v1098
        %v1107 = vcombine.high %v1105, %v1105
        %v1109 = vunpack.c.l.s4 1983009808
        %v1110 = vunpack.c.0.s8 %v1109
        %v1111 = vlaneseq
        %v1112 = vshrl.u32 %v1111, 7
        %v1113 = vsub.s32 %v1110, %v1112
        %v1114 = vrot.slane %v474, %v1113
        %v1115 = vcombine.high %v475, %v475
        %v1117 = vunpack.c.l.s4 1983009808
        %v1118 = vunpack.c.0.s8 %v1117
        %v1119 = vlaneseq
        %v1120 = vshrl.u32 %v1119, 7
        %v1121 = vsub.s32 %v1118, %v1120
        %v1122 = vrot.slane %v475, %v1121
        %v1124 = vunpack.c.l.s4 1983009808
        %v1125 = vunpack.c.0.s8 %v1124
        %v1126 = vlaneseq
        %v1127 = vshrl.u32 %v1126, 7
        %v1128 = vsub.s32 %v1125, %v1127
        %v1129 = vrot.slane %v1115, %v1128
        %v1130 = vcombine.high %v1122, %v1122
        %v1131 = vcombine.high %v1129, %v1129
        %v1132 = vcombine.high %v476, %v476
        %v1134 = vunpack.c.l.s4 1983009808
        %v1135 = vunpack.c.0.s8 %v1134
        %v1136 = vlaneseq
        %v1137 = vshrl.u32 %v1136, 7
        %v1138 = vsub.s32 %v1135, %v1137
        %v1139 = vrot.slane %v476, %v1138
        %v1141 = vunpack.c.l.s4 1983009808
        %v1142 = vunpack.c.0.s8 %v1141
        %v1143 = vlaneseq
        %v1144 = vshrl.u32 %v1143, 7
        %v1145 = vsub.s32 %v1142, %v1144
        %v1146 = vrot.slane %v1132, %v1145
        %v1147 = vcombine.high %v1139, %v1139
        %v1148 = vcombine.high %v1146, %v1146
        %v1150 = vunpack.c.l.s4 1983009808
        %v1151 = vunpack.c.0.s8 %v1150
        %v1152 = vlaneseq
        %v1153 = vshrl.u32 %v1152, 7
        %v1154 = vsub.s32 %v1151, %v1153
        %v1155 = vrot.slane %v477, %v1154
        %v1156 = vcombine.high %v478, %v478
        %v1158 = vunpack.c.l.s4 1983009808
        %v1159 = vunpack.c.0.s8 %v1158
        %v1160 = vlaneseq
        %v1161 = vshrl.u32 %v1160, 7
        %v1162 = vsub.s32 %v1159, %v1161
        %v1163 = vrot.slane %v478, %v1162
        %v1165 = vunpack.c.l.s4 1983009808
        %v1166 = vunpack.c.0.s8 %v1165
        %v1167 = vlaneseq
        %v1168 = vshrl.u32 %v1167, 7
        %v1169 = vsub.s32 %v1166, %v1168
        %v1170 = vrot.slane %v1156, %v1169
        %v1171 = vcombine.high %v1163, %v1163
        %v1172 = vcombine.high %v1170, %v1170
        %v1173 = vcombine.high %v479, %v479
        %v1175 = vunpack.c.l.s4 1983009808
        %v1176 = vunpack.c.0.s8 %v1175
        %v1177 = vlaneseq
        %v1178 = vshrl.u32 %v1177, 7
        %v1179 = vsub.s32 %v1176, %v1178
        %v1180 = vrot.slane %v479, %v1179
        %v1182 = vunpack.c.l.s4 1983009808
        %v1183 = vunpack.c.0.s8 %v1182
        %v1184 = vlaneseq
        %v1185 = vshrl.u32 %v1184, 7
        %v1186 = vsub.s32 %v1183, %v1185
        %v1187 = vrot.slane %v1173, %v1186
        %v1188 = vcombine.high %v1180, %v1180
        %v1189 = vcombine.high %v1187, %v1187
        %v1191 = vunpack.c.l.s4 1983009808
        %v1192 = vunpack.c.0.s8 %v1191
        %v1193 = vlaneseq
        %v1194 = vshrl.u32 %v1193, 7
        %v1195 = vsub.s32 %v1192, %v1194
        %v1196 = vrot.slane %v480, %v1195
        %v1197 = vcombine.high %v481, %v481
        %v1199 = vunpack.c.l.s4 1983009808
        %v1200 = vunpack.c.0.s8 %v1199
        %v1201 = vlaneseq
        %v1202 = vshrl.u32 %v1201, 7
        %v1203 = vsub.s32 %v1200, %v1202
        %v1204 = vrot.slane %v481, %v1203
        %v1206 = vunpack.c.l.s4 1983009808
        %v1207 = vunpack.c.0.s8 %v1206
        %v1208 = vlaneseq
        %v1209 = vshrl.u32 %v1208, 7
        %v1210 = vsub.s32 %v1207, %v1209
        %v1211 = vrot.slane %v1197, %v1210
        %v1212 = vcombine.high %v1204, %v1204
        %v1213 = vcombine.high %v1211, %v1211
        %v1214 = vcombine.high %v482, %v482
        %v1216 = vunpack.c.l.s4 1983009808
        %v1217 = vunpack.c.0.s8 %v1216
        %v1218 = vlaneseq
        %v1219 = vshrl.u32 %v1218, 7
        %v1220 = vsub.s32 %v1217, %v1219
        %v1221 = vrot.slane %v482, %v1220
        %v1223 = vunpack.c.l.s4 1983009808
        %v1224 = vunpack.c.0.s8 %v1223
        %v1225 = vlaneseq
        %v1226 = vshrl.u32 %v1225, 7
        %v1227 = vsub.s32 %v1224, %v1226
        %v1228 = vrot.slane %v1214, %v1227
        %v1229 = vcombine.high %v1221, %v1221
        %v1230 = vcombine.high %v1228, %v1228
        %v1232 = vunpack.c.l.s4 1983009808
        %v1233 = vunpack.c.0.s8 %v1232
        %v1234 = vlaneseq
        %v1235 = vshrl.u32 %v1234, 7
        %v1236 = vsub.s32 %v1233, %v1235
        %v1237 = vrot.slane %v483, %v1236
        %v1238 = vcombine.high %v484, %v484
        %v1240 = vunpack.c.l.s4 1983009808
        %v1241 = vunpack.c.0.s8 %v1240
        %v1242 = vlaneseq
        %v1243 = vshrl.u32 %v1242, 7
        %v1244 = vsub.s32 %v1241, %v1243
        %v1245 = vrot.slane %v484, %v1244
        %v1247 = vunpack.c.l.s4 1983009808
        %v1248 = vunpack.c.0.s8 %v1247
        %v1249 = vlaneseq
        %v1250 = vshrl.u32 %v1249, 7
        %v1251 = vsub.s32 %v1248, %v1250
        %v1252 = vrot.slane %v1238, %v1251
        %v1253 = vcombine.high %v1245, %v1245
        %v1254 = vcombine.high %v1252, %v1252
        %v1255 = vcombine.high %v485, %v485
        %v1257 = vunpack.c.l.s4 1983009808
        %v1258 = vunpack.c.0.s8 %v1257
        %v1259 = vlaneseq
        %v1260 = vshrl.u32 %v1259, 7
        %v1261 = vsub.s32 %v1258, %v1260
        %v1262 = vrot.slane %v485, %v1261
        %v1264 = vunpack.c.l.s4 1983009808
        %v1265 = vunpack.c.0.s8 %v1264
        %v1266 = vlaneseq
        %v1267 = vshrl.u32 %v1266, 7
        %v1268 = vsub.s32 %v1265, %v1267
        %v1269 = vrot.slane %v1255, %v1268
        %v1270 = vcombine.high %v1262, %v1262
        %v1271 = vcombine.high %v1269, %v1269
        %v1273 = vunpack.c.l.s4 1983009808
        %v1274 = vunpack.c.0.s8 %v1273
        %v1275 = vlaneseq
        %v1276 = vshrl.u32 %v1275, 7
        %v1277 = vsub.s32 %v1274, %v1276
        %v1278 = vrot.slane %v486, %v1277
        %v1279 = vld [vmem:[%s412] sm:$0xf]
        %v1280 = vcombine.low %v548, %v556
        %v1281 = vcombine.low %v555, %v557
        %v1283 = vunpack.c.l.s4 1983009808
        %v1284 = vunpack.c.0.s8 %v1283
        %v1285 = vlaneseq
        %v1286 = vshrl.u32 %v1285, 7
        %v1287 = vsub.s32 %v1284, %v1286
        %v1288 = vrot.slane %v1280, %v1287
        %v1290 = vunpack.c.l.s4 1983009808
        %v1291 = vunpack.c.0.s8 %v1290
        %v1292 = vlaneseq
        %v1293 = vshrl.u32 %v1292, 7
        %v1294 = vsub.s32 %v1291, %v1293
        %v1295 = vrot.slane %v1281, %v1294
        %v1296 = vcombine.low %v1288, %v1295
        %v1297 = vcombine.low %v565, %v573
        %v1298 = vcombine.low %v572, %v574
        %v1300 = vunpack.c.l.s4 1983009808
        %v1301 = vunpack.c.0.s8 %v1300
        %v1302 = vlaneseq
        %v1303 = vshrl.u32 %v1302, 7
        %v1304 = vsub.s32 %v1301, %v1303
        %v1305 = vrot.slane %v1297, %v1304
        %v1307 = vunpack.c.l.s4 1983009808
        %v1308 = vunpack.c.0.s8 %v1307
        %v1309 = vlaneseq
        %v1310 = vshrl.u32 %v1309, 7
        %v1311 = vsub.s32 %v1308, %v1310
        %v1312 = vrot.slane %v1298, %v1311
        %v1313 = vcombine.low %v1305, %v1312
        %v1314 = vcombine.low %v581, %v589
        %v1315 = vcombine.low %v597, %v596
        %v1317 = vunpack.c.l.s4 1983009808
        %v1318 = vunpack.c.0.s8 %v1317
        %v1319 = vlaneseq
        %v1320 = vshrl.u32 %v1319, 7
        %v1321 = vsub.s32 %v1318, %v1320
        %v1322 = vrot.slane %v1314, %v1321
        %v1324 = vunpack.c.l.s4 1983009808
        %v1325 = vunpack.c.0.s8 %v1324
        %v1326 = vlaneseq
        %v1327 = vshrl.u32 %v1326, 7
        %v1328 = vsub.s32 %v1325, %v1327
        %v1329 = vrot.slane %v1315, %v1328
        %v1330 = vcombine.low %v1322, %v1329
        %v1331 = vcombine.low %v598, %v606
        %v1332 = vcombine.low %v614, %v613
        %v1334 = vunpack.c.l.s4 1983009808
        %v1335 = vunpack.c.0.s8 %v1334
        %v1336 = vlaneseq
        %v1337 = vshrl.u32 %v1336, 7
        %v1338 = vsub.s32 %v1335, %v1337
        %v1339 = vrot.slane %v1331, %v1338
        %v1341 = vunpack.c.l.s4 1983009808
        %v1342 = vunpack.c.0.s8 %v1341
        %v1343 = vlaneseq
        %v1344 = vshrl.u32 %v1343, 7
        %v1345 = vsub.s32 %v1342, %v1344
        %v1346 = vrot.slane %v1332, %v1345
        %v1347 = vcombine.low %v1339, %v1346
        %v1348 = vcombine.low %v615, %v622
        %v1349 = vcombine.low %v630, %v638
        %v1351 = vunpack.c.l.s4 1983009808
        %v1352 = vunpack.c.0.s8 %v1351
        %v1353 = vlaneseq
        %v1354 = vshrl.u32 %v1353, 7
        %v1355 = vsub.s32 %v1352, %v1354
        %v1356 = vrot.slane %v1348, %v1355
        %v1358 = vunpack.c.l.s4 1983009808
        %v1359 = vunpack.c.0.s8 %v1358
        %v1360 = vlaneseq
        %v1361 = vshrl.u32 %v1360, 7
        %v1362 = vsub.s32 %v1359, %v1361
        %v1363 = vrot.slane %v1349, %v1362
        %v1364 = vcombine.low %v1356, %v1363
        %v1365 = vcombine.low %v637, %v639
        %v1366 = vcombine.low %v647, %v655
        %v1368 = vunpack.c.l.s4 1983009808
        %v1369 = vunpack.c.0.s8 %v1368
        %v1370 = vlaneseq
        %v1371 = vshrl.u32 %v1370, 7
        %v1372 = vsub.s32 %v1369, %v1371
        %v1373 = vrot.slane %v1365, %v1372
        %v1375 = vunpack.c.l.s4 1983009808
        %v1376 = vunpack.c.0.s8 %v1375
        %v1377 = vlaneseq
        %v1378 = vshrl.u32 %v1377, 7
        %v1379 = vsub.s32 %v1376, %v1378
        %v1380 = vrot.slane %v1366, %v1379
        %v1381 = vcombine.low %v1373, %v1380
        %v1382 = vcombine.low %v654, %v656
        %v1383 = vcombine.low %v663, %v671
        %v1385 = vunpack.c.l.s4 1983009808
        %v1386 = vunpack.c.0.s8 %v1385
        %v1387 = vlaneseq
        %v1388 = vshrl.u32 %v1387, 7
        %v1389 = vsub.s32 %v1386, %v1388
        %v1390 = vrot.slane %v1382, %v1389
        %v1392 = vunpack.c.l.s4 1983009808
        %v1393 = vunpack.c.0.s8 %v1392
        %v1394 = vlaneseq
        %v1395 = vshrl.u32 %v1394, 7
        %v1396 = vsub.s32 %v1393, %v1395
        %v1397 = vrot.slane %v1383, %v1396
        %v1398 = vcombine.low %v1390, %v1397
        %v1399 = vcombine.low %v679, %v678
        %v1400 = vcombine.low %v680, %v688
        %v1402 = vunpack.c.l.s4 1983009808
        %v1403 = vunpack.c.0.s8 %v1402
        %v1404 = vlaneseq
        %v1405 = vshrl.u32 %v1404, 7
        %v1406 = vsub.s32 %v1403, %v1405
        %v1407 = vrot.slane %v1399, %v1406
        %v1409 = vunpack.c.l.s4 1983009808
        %v1410 = vunpack.c.0.s8 %v1409
        %v1411 = vlaneseq
        %v1412 = vshrl.u32 %v1411, 7
        %v1413 = vsub.s32 %v1410, %v1412
        %v1414 = vrot.slane %v1400, %v1413
        %v1415 = vcombine.low %v1407, %v1414
        %v1416 = vcombine.low %v696, %v695
        %v1417 = vcombine.low %v697, %v704
        %v1419 = vunpack.c.l.s4 1983009808
        %v1420 = vunpack.c.0.s8 %v1419
        %v1421 = vlaneseq
        %v1422 = vshrl.u32 %v1421, 7
        %v1423 = vsub.s32 %v1420, %v1422
        %v1424 = vrot.slane %v1416, %v1423
        %v1426 = vunpack.c.l.s4 1983009808
        %v1427 = vunpack.c.0.s8 %v1426
        %v1428 = vlaneseq
        %v1429 = vshrl.u32 %v1428, 7
        %v1430 = vsub.s32 %v1427, %v1429
        %v1431 = vrot.slane %v1417, %v1430
        %v1432 = vcombine.low %v1424, %v1431
        %v1433 = vcombine.low %v712, %v720
        %v1434 = vcombine.low %v719, %v721
        %v1436 = vunpack.c.l.s4 1983009808
        %v1437 = vunpack.c.0.s8 %v1436
        %v1438 = vlaneseq
        %v1439 = vshrl.u32 %v1438, 7
        %v1440 = vsub.s32 %v1437, %v1439
        %v1441 = vrot.slane %v1433, %v1440
        %v1443 = vunpack.c.l.s4 1983009808
        %v1444 = vunpack.c.0.s8 %v1443
        %v1445 = vlaneseq
        %v1446 = vshrl.u32 %v1445, 7
        %v1447 = vsub.s32 %v1444, %v1446
        %v1448 = vrot.slane %v1434, %v1447
        %v1449 = vcombine.low %v1441, %v1448
        %v1450 = vcombine.low %v729, %v737
        %v1451 = vcombine.low %v736, %v738
        %v1453 = vunpack.c.l.s4 1983009808
        %v1454 = vunpack.c.0.s8 %v1453
        %v1455 = vlaneseq
        %v1456 = vshrl.u32 %v1455, 7
        %v1457 = vsub.s32 %v1454, %v1456
        %v1458 = vrot.slane %v1450, %v1457
        %v1460 = vunpack.c.l.s4 1983009808
        %v1461 = vunpack.c.0.s8 %v1460
        %v1462 = vlaneseq
        %v1463 = vshrl.u32 %v1462, 7
        %v1464 = vsub.s32 %v1461, %v1463
        %v1465 = vrot.slane %v1451, %v1464
        %v1466 = vcombine.low %v1458, %v1465
        %v1467 = vcombine.low %v745, %v753
        %v1468 = vcombine.low %v761, %v760
        %v1470 = vunpack.c.l.s4 1983009808
        %v1471 = vunpack.c.0.s8 %v1470
        %v1472 = vlaneseq
        %v1473 = vshrl.u32 %v1472, 7
        %v1474 = vsub.s32 %v1471, %v1473
        %v1475 = vrot.slane %v1467, %v1474
        %v1477 = vunpack.c.l.s4 1983009808
        %v1478 = vunpack.c.0.s8 %v1477
        %v1479 = vlaneseq
        %v1480 = vshrl.u32 %v1479, 7
        %v1481 = vsub.s32 %v1478, %v1480
        %v1482 = vrot.slane %v1468, %v1481
        %v1483 = vcombine.low %v1475, %v1482
        %v1484 = vcombine.low %v762, %v770
        %v1485 = vcombine.low %v778, %v777
        %v1487 = vunpack.c.l.s4 1983009808
        %v1488 = vunpack.c.0.s8 %v1487
        %v1489 = vlaneseq
        %v1490 = vshrl.u32 %v1489, 7
        %v1491 = vsub.s32 %v1488, %v1490
        %v1492 = vrot.slane %v1484, %v1491
        %v1494 = vunpack.c.l.s4 1983009808
        %v1495 = vunpack.c.0.s8 %v1494
        %v1496 = vlaneseq
        %v1497 = vshrl.u32 %v1496, 7
        %v1498 = vsub.s32 %v1495, %v1497
        %v1499 = vrot.slane %v1485, %v1498
        %v1500 = vcombine.low %v1492, %v1499
        %v1501 = vcombine.low %v779, %v786
        %v1502 = vcombine.low %v794, %v802
        %v1504 = vunpack.c.l.s4 1983009808
        %v1505 = vunpack.c.0.s8 %v1504
        %v1506 = vlaneseq
        %v1507 = vshrl.u32 %v1506, 7
        %v1508 = vsub.s32 %v1505, %v1507
        %v1509 = vrot.slane %v1501, %v1508
        %v1511 = vunpack.c.l.s4 1983009808
        %v1512 = vunpack.c.0.s8 %v1511
        %v1513 = vlaneseq
        %v1514 = vshrl.u32 %v1513, 7
        %v1515 = vsub.s32 %v1512, %v1514
        %v1516 = vrot.slane %v1502, %v1515
        %v1517 = vcombine.low %v1509, %v1516
        %v1518 = vcombine.low %v801, %v803
        %v1519 = vcombine.low %v811, %v819
        %v1521 = vunpack.c.l.s4 1983009808
        %v1522 = vunpack.c.0.s8 %v1521
        %v1523 = vlaneseq
        %v1524 = vshrl.u32 %v1523, 7
        %v1525 = vsub.s32 %v1522, %v1524
        %v1526 = vrot.slane %v1518, %v1525
        %v1528 = vunpack.c.l.s4 1983009808
        %v1529 = vunpack.c.0.s8 %v1528
        %v1530 = vlaneseq
        %v1531 = vshrl.u32 %v1530, 7
        %v1532 = vsub.s32 %v1529, %v1531
        %v1533 = vrot.slane %v1519, %v1532
        %v1534 = vcombine.low %v1526, %v1533
        %v1535 = vcombine.low %v818, %v820
        %v1536 = vcombine.low %v827, %v835
        %v1538 = vunpack.c.l.s4 1983009808
        %v1539 = vunpack.c.0.s8 %v1538
        %v1540 = vlaneseq
        %v1541 = vshrl.u32 %v1540, 7
        %v1542 = vsub.s32 %v1539, %v1541
        %v1543 = vrot.slane %v1535, %v1542
        %v1545 = vunpack.c.l.s4 1983009808
        %v1546 = vunpack.c.0.s8 %v1545
        %v1547 = vlaneseq
        %v1548 = vshrl.u32 %v1547, 7
        %v1549 = vsub.s32 %v1546, %v1548
        %v1550 = vrot.slane %v1536, %v1549
        %v1551 = vcombine.low %v1543, %v1550
        %v1552 = vcombine.low %v843, %v842
        %v1553 = vcombine.low %v844, %v852
        %v1555 = vunpack.c.l.s4 1983009808
        %v1556 = vunpack.c.0.s8 %v1555
        %v1557 = vlaneseq
        %v1558 = vshrl.u32 %v1557, 7
        %v1559 = vsub.s32 %v1556, %v1558
        %v1560 = vrot.slane %v1552, %v1559
        %v1562 = vunpack.c.l.s4 1983009808
        %v1563 = vunpack.c.0.s8 %v1562
        %v1564 = vlaneseq
        %v1565 = vshrl.u32 %v1564, 7
        %v1566 = vsub.s32 %v1563, %v1565
        %v1567 = vrot.slane %v1553, %v1566
        %v1568 = vcombine.low %v1560, %v1567
        %v1569 = vcombine.low %v860, %v859
        %v1570 = vcombine.low %v861, %v868
        %v1572 = vunpack.c.l.s4 1983009808
        %v1573 = vunpack.c.0.s8 %v1572
        %v1574 = vlaneseq
        %v1575 = vshrl.u32 %v1574, 7
        %v1576 = vsub.s32 %v1573, %v1575
        %v1577 = vrot.slane %v1569, %v1576
        %v1579 = vunpack.c.l.s4 1983009808
        %v1580 = vunpack.c.0.s8 %v1579
        %v1581 = vlaneseq
        %v1582 = vshrl.u32 %v1581, 7
        %v1583 = vsub.s32 %v1580, %v1582
        %v1584 = vrot.slane %v1570, %v1583
        %v1585 = vcombine.low %v1577, %v1584
        %v1586 = vcombine.low %v876, %v884
        %v1587 = vcombine.low %v883, %v885
        %v1589 = vunpack.c.l.s4 1983009808
        %v1590 = vunpack.c.0.s8 %v1589
        %v1591 = vlaneseq
        %v1592 = vshrl.u32 %v1591, 7
        %v1593 = vsub.s32 %v1590, %v1592
        %v1594 = vrot.slane %v1586, %v1593
        %v1596 = vunpack.c.l.s4 1983009808
        %v1597 = vunpack.c.0.s8 %v1596
        %v1598 = vlaneseq
        %v1599 = vshrl.u32 %v1598, 7
        %v1600 = vsub.s32 %v1597, %v1599
        %v1601 = vrot.slane %v1587, %v1600
        %v1602 = vcombine.low %v1594, %v1601
        %v1603 = vcombine.low %v893, %v901
        %v1604 = vcombine.low %v900, %v902
        %v1606 = vunpack.c.l.s4 1983009808
        %v1607 = vunpack.c.0.s8 %v1606
        %v1608 = vlaneseq
        %v1609 = vshrl.u32 %v1608, 7
        %v1610 = vsub.s32 %v1607, %v1609
        %v1611 = vrot.slane %v1603, %v1610
        %v1613 = vunpack.c.l.s4 1983009808
        %v1614 = vunpack.c.0.s8 %v1613
        %v1615 = vlaneseq
        %v1616 = vshrl.u32 %v1615, 7
        %v1617 = vsub.s32 %v1614, %v1616
        %v1618 = vrot.slane %v1604, %v1617
        %v1619 = vcombine.low %v1611, %v1618
        %v1620 = vcombine.low %v909, %v917
        %v1621 = vcombine.low %v925, %v924
        %v1623 = vunpack.c.l.s4 1983009808
        %v1624 = vunpack.c.0.s8 %v1623
        %v1625 = vlaneseq
        %v1626 = vshrl.u32 %v1625, 7
        %v1627 = vsub.s32 %v1624, %v1626
        %v1628 = vrot.slane %v1620, %v1627
        %v1630 = vunpack.c.l.s4 1983009808
        %v1631 = vunpack.c.0.s8 %v1630
        %v1632 = vlaneseq
        %v1633 = vshrl.u32 %v1632, 7
        %v1634 = vsub.s32 %v1631, %v1633
        %v1635 = vrot.slane %v1621, %v1634
        %v1636 = vcombine.low %v1628, %v1635
        %v1637 = vcombine.low %v926, %v934
        %v1638 = vcombine.low %v942, %v941
        %v1640 = vunpack.c.l.s4 1983009808
        %v1641 = vunpack.c.0.s8 %v1640
        %v1642 = vlaneseq
        %v1643 = vshrl.u32 %v1642, 7
        %v1644 = vsub.s32 %v1641, %v1643
        %v1645 = vrot.slane %v1637, %v1644
        %v1647 = vunpack.c.l.s4 1983009808
        %v1648 = vunpack.c.0.s8 %v1647
        %v1649 = vlaneseq
        %v1650 = vshrl.u32 %v1649, 7
        %v1651 = vsub.s32 %v1648, %v1650
        %v1652 = vrot.slane %v1638, %v1651
        %v1653 = vcombine.low %v1645, %v1652
        %v1654 = vcombine.low %v943, %v950
        %v1655 = vcombine.low %v958, %v966
        %v1657 = vunpack.c.l.s4 1983009808
        %v1658 = vunpack.c.0.s8 %v1657
        %v1659 = vlaneseq
        %v1660 = vshrl.u32 %v1659, 7
        %v1661 = vsub.s32 %v1658, %v1660
        %v1662 = vrot.slane %v1654, %v1661
        %v1664 = vunpack.c.l.s4 1983009808
        %v1665 = vunpack.c.0.s8 %v1664
        %v1666 = vlaneseq
        %v1667 = vshrl.u32 %v1666, 7
        %v1668 = vsub.s32 %v1665, %v1667
        %v1669 = vrot.slane %v1655, %v1668
        %v1670 = vcombine.low %v1662, %v1669
        %v1671 = vcombine.low %v965, %v967
        %v1672 = vcombine.low %v975, %v983
        %v1674 = vunpack.c.l.s4 1983009808
        %v1675 = vunpack.c.0.s8 %v1674
        %v1676 = vlaneseq
        %v1677 = vshrl.u32 %v1676, 7
        %v1678 = vsub.s32 %v1675, %v1677
        %v1679 = vrot.slane %v1671, %v1678
        %v1681 = vunpack.c.l.s4 1983009808
        %v1682 = vunpack.c.0.s8 %v1681
        %v1683 = vlaneseq
        %v1684 = vshrl.u32 %v1683, 7
        %v1685 = vsub.s32 %v1682, %v1684
        %v1686 = vrot.slane %v1672, %v1685
        %v1687 = vcombine.low %v1679, %v1686
        %v1688 = vcombine.low %v982, %v984
        %v1689 = vcombine.low %v991, %v999
        %v1691 = vunpack.c.l.s4 1983009808
        %v1692 = vunpack.c.0.s8 %v1691
        %v1693 = vlaneseq
        %v1694 = vshrl.u32 %v1693, 7
        %v1695 = vsub.s32 %v1692, %v1694
        %v1696 = vrot.slane %v1688, %v1695
        %v1698 = vunpack.c.l.s4 1983009808
        %v1699 = vunpack.c.0.s8 %v1698
        %v1700 = vlaneseq
        %v1701 = vshrl.u32 %v1700, 7
        %v1702 = vsub.s32 %v1699, %v1701
        %v1703 = vrot.slane %v1689, %v1702
        %v1704 = vcombine.low %v1696, %v1703
        %v1705 = vcombine.low %v1007, %v1006
        %v1706 = vcombine.low %v1008, %v1016
        %v1708 = vunpack.c.l.s4 1983009808
        %v1709 = vunpack.c.0.s8 %v1708
        %v1710 = vlaneseq
        %v1711 = vshrl.u32 %v1710, 7
        %v1712 = vsub.s32 %v1709, %v1711
        %v1713 = vrot.slane %v1705, %v1712
        %v1715 = vunpack.c.l.s4 1983009808
        %v1716 = vunpack.c.0.s8 %v1715
        %v1717 = vlaneseq
        %v1718 = vshrl.u32 %v1717, 7
        %v1719 = vsub.s32 %v1716, %v1718
        %v1720 = vrot.slane %v1706, %v1719
        %v1721 = vcombine.low %v1713, %v1720
        %v1722 = vcombine.low %v1024, %v1023
        %v1723 = vcombine.low %v1025, %v1032
        %v1725 = vunpack.c.l.s4 1983009808
        %v1726 = vunpack.c.0.s8 %v1725
        %v1727 = vlaneseq
        %v1728 = vshrl.u32 %v1727, 7
        %v1729 = vsub.s32 %v1726, %v1728
        %v1730 = vrot.slane %v1722, %v1729
        %v1732 = vunpack.c.l.s4 1983009808
        %v1733 = vunpack.c.0.s8 %v1732
        %v1734 = vlaneseq
        %v1735 = vshrl.u32 %v1734, 7
        %v1736 = vsub.s32 %v1733, %v1735
        %v1737 = vrot.slane %v1723, %v1736
        %v1738 = vcombine.low %v1730, %v1737
        %v1739 = vcombine.low %v1040, %v1048
        %v1740 = vcombine.low %v1047, %v1049
        %v1742 = vunpack.c.l.s4 1983009808
        %v1743 = vunpack.c.0.s8 %v1742
        %v1744 = vlaneseq
        %v1745 = vshrl.u32 %v1744, 7
        %v1746 = vsub.s32 %v1743, %v1745
        %v1747 = vrot.slane %v1739, %v1746
        %v1749 = vunpack.c.l.s4 1983009808
        %v1750 = vunpack.c.0.s8 %v1749
        %v1751 = vlaneseq
        %v1752 = vshrl.u32 %v1751, 7
        %v1753 = vsub.s32 %v1750, %v1752
        %v1754 = vrot.slane %v1740, %v1753
        %v1755 = vcombine.low %v1747, %v1754
        %v1756 = vcombine.low %v1057, %v1065
        %v1757 = vcombine.low %v1064, %v1066
        %v1759 = vunpack.c.l.s4 1983009808
        %v1760 = vunpack.c.0.s8 %v1759
        %v1761 = vlaneseq
        %v1762 = vshrl.u32 %v1761, 7
        %v1763 = vsub.s32 %v1760, %v1762
        %v1764 = vrot.slane %v1756, %v1763
        %v1766 = vunpack.c.l.s4 1983009808
        %v1767 = vunpack.c.0.s8 %v1766
        %v1768 = vlaneseq
        %v1769 = vshrl.u32 %v1768, 7
        %v1770 = vsub.s32 %v1767, %v1769
        %v1771 = vrot.slane %v1757, %v1770
        %v1772 = vcombine.low %v1764, %v1771
        %v1773 = vcombine.low %v1073, %v1081
        %v1774 = vcombine.low %v1089, %v1088
        %v1776 = vunpack.c.l.s4 1983009808
        %v1777 = vunpack.c.0.s8 %v1776
        %v1778 = vlaneseq
        %v1779 = vshrl.u32 %v1778, 7
        %v1780 = vsub.s32 %v1777, %v1779
        %v1781 = vrot.slane %v1773, %v1780
        %v1783 = vunpack.c.l.s4 1983009808
        %v1784 = vunpack.c.0.s8 %v1783
        %v1785 = vlaneseq
        %v1786 = vshrl.u32 %v1785, 7
        %v1787 = vsub.s32 %v1784, %v1786
        %v1788 = vrot.slane %v1774, %v1787
        %v1789 = vcombine.low %v1781, %v1788
        %v1790 = vcombine.low %v1090, %v1098
        %v1791 = vcombine.low %v1106, %v1105
        %v1793 = vunpack.c.l.s4 1983009808
        %v1794 = vunpack.c.0.s8 %v1793
        %v1795 = vlaneseq
        %v1796 = vshrl.u32 %v1795, 7
        %v1797 = vsub.s32 %v1794, %v1796
        %v1798 = vrot.slane %v1790, %v1797
        %v1800 = vunpack.c.l.s4 1983009808
        %v1801 = vunpack.c.0.s8 %v1800
        %v1802 = vlaneseq
        %v1803 = vshrl.u32 %v1802, 7
        %v1804 = vsub.s32 %v1801, %v1803
        %v1805 = vrot.slane %v1791, %v1804
        %v1806 = vcombine.low %v1798, %v1805
        %v1807 = vcombine.low %v1107, %v1114
        %v1808 = vcombine.low %v1122, %v1130
        %v1810 = vunpack.c.l.s4 1983009808
        %v1811 = vunpack.c.0.s8 %v1810
        %v1812 = vlaneseq
        %v1813 = vshrl.u32 %v1812, 7
        %v1814 = vsub.s32 %v1811, %v1813
        %v1815 = vrot.slane %v1807, %v1814
        %v1817 = vunpack.c.l.s4 1983009808
        %v1818 = vunpack.c.0.s8 %v1817
        %v1819 = vlaneseq
        %v1820 = vshrl.u32 %v1819, 7
        %v1821 = vsub.s32 %v1818, %v1820
        %v1822 = vrot.slane %v1808, %v1821
        %v1823 = vcombine.low %v1815, %v1822
        %v1824 = vcombine.low %v1129, %v1131
        %v1825 = vcombine.low %v1139, %v1147
        %v1827 = vunpack.c.l.s4 1983009808
        %v1828 = vunpack.c.0.s8 %v1827
        %v1829 = vlaneseq
        %v1830 = vshrl.u32 %v1829, 7
        %v1831 = vsub.s32 %v1828, %v1830
        %v1832 = vrot.slane %v1824, %v1831
        %v1834 = vunpack.c.l.s4 1983009808
        %v1835 = vunpack.c.0.s8 %v1834
        %v1836 = vlaneseq
        %v1837 = vshrl.u32 %v1836, 7
        %v1838 = vsub.s32 %v1835, %v1837
        %v1839 = vrot.slane %v1825, %v1838
        %v1840 = vcombine.low %v1832, %v1839
        %v1841 = vcombine.low %v1146, %v1148
        %v1842 = vcombine.low %v1155, %v1163
        %v1844 = vunpack.c.l.s4 1983009808
        %v1845 = vunpack.c.0.s8 %v1844
        %v1846 = vlaneseq
        %v1847 = vshrl.u32 %v1846, 7
        %v1848 = vsub.s32 %v1845, %v1847
        %v1849 = vrot.slane %v1841, %v1848
        %v1851 = vunpack.c.l.s4 1983009808
        %v1852 = vunpack.c.0.s8 %v1851
        %v1853 = vlaneseq
        %v1854 = vshrl.u32 %v1853, 7
        %v1855 = vsub.s32 %v1852, %v1854
        %v1856 = vrot.slane %v1842, %v1855
        %v1857 = vcombine.low %v1849, %v1856
        %v1858 = vcombine.low %v1171, %v1170
        %v1859 = vcombine.low %v1172, %v1180
        %v1861 = vunpack.c.l.s4 1983009808
        %v1862 = vunpack.c.0.s8 %v1861
        %v1863 = vlaneseq
        %v1864 = vshrl.u32 %v1863, 7
        %v1865 = vsub.s32 %v1862, %v1864
        %v1866 = vrot.slane %v1858, %v1865
        %v1868 = vunpack.c.l.s4 1983009808
        %v1869 = vunpack.c.0.s8 %v1868
        %v1870 = vlaneseq
        %v1871 = vshrl.u32 %v1870, 7
        %v1872 = vsub.s32 %v1869, %v1871
        %v1873 = vrot.slane %v1859, %v1872
        %v1874 = vcombine.low %v1866, %v1873
        %v1875 = vcombine.low %v1188, %v1187
        %v1876 = vcombine.low %v1189, %v1196
        %v1878 = vunpack.c.l.s4 1983009808
        %v1879 = vunpack.c.0.s8 %v1878
        %v1880 = vlaneseq
        %v1881 = vshrl.u32 %v1880, 7
        %v1882 = vsub.s32 %v1879, %v1881
        %v1883 = vrot.slane %v1875, %v1882
        %v1885 = vunpack.c.l.s4 1983009808
        %v1886 = vunpack.c.0.s8 %v1885
        %v1887 = vlaneseq
        %v1888 = vshrl.u32 %v1887, 7
        %v1889 = vsub.s32 %v1886, %v1888
        %v1890 = vrot.slane %v1876, %v1889
        %v1891 = vcombine.low %v1883, %v1890
        %v1892 = vcombine.low %v1204, %v1212
        %v1893 = vcombine.low %v1211, %v1213
        %v1895 = vunpack.c.l.s4 1983009808
        %v1896 = vunpack.c.0.s8 %v1895
        %v1897 = vlaneseq
        %v1898 = vshrl.u32 %v1897, 7
        %v1899 = vsub.s32 %v1896, %v1898
        %v1900 = vrot.slane %v1892, %v1899
        %v1902 = vunpack.c.l.s4 1983009808
        %v1903 = vunpack.c.0.s8 %v1902
        %v1904 = vlaneseq
        %v1905 = vshrl.u32 %v1904, 7
        %v1906 = vsub.s32 %v1903, %v1905
        %v1907 = vrot.slane %v1893, %v1906
        %v1908 = vcombine.low %v1900, %v1907
        %v1909 = vcombine.low %v1221, %v1229
        %v1910 = vcombine.low %v1228, %v1230
        %v1912 = vunpack.c.l.s4 1983009808
        %v1913 = vunpack.c.0.s8 %v1912
        %v1914 = vlaneseq
        %v1915 = vshrl.u32 %v1914, 7
        %v1916 = vsub.s32 %v1913, %v1915
        %v1917 = vrot.slane %v1909, %v1916
        %v1919 = vunpack.c.l.s4 1983009808
        %v1920 = vunpack.c.0.s8 %v1919
        %v1921 = vlaneseq
        %v1922 = vshrl.u32 %v1921, 7
        %v1923 = vsub.s32 %v1920, %v1922
        %v1924 = vrot.slane %v1910, %v1923
        %v1925 = vcombine.low %v1917, %v1924
        %v1926 = vcombine.low %v1237, %v1245
        %v1927 = vcombine.low %v1253, %v1252
        %v1929 = vunpack.c.l.s4 1983009808
        %v1930 = vunpack.c.0.s8 %v1929
        %v1931 = vlaneseq
        %v1932 = vshrl.u32 %v1931, 7
        %v1933 = vsub.s32 %v1930, %v1932
        %v1934 = vrot.slane %v1926, %v1933
        %v1936 = vunpack.c.l.s4 1983009808
        %v1937 = vunpack.c.0.s8 %v1936
        %v1938 = vlaneseq
        %v1939 = vshrl.u32 %v1938, 7
        %v1940 = vsub.s32 %v1937, %v1939
        %v1941 = vrot.slane %v1927, %v1940
        %v1942 = vcombine.low %v1934, %v1941
        %v1943 = vcombine.low %v1254, %v1262
        %v1944 = vcombine.low %v1270, %v1269
        %v1946 = vunpack.c.l.s4 1983009808
        %v1947 = vunpack.c.0.s8 %v1946
        %v1948 = vlaneseq
        %v1949 = vshrl.u32 %v1948, 7
        %v1950 = vsub.s32 %v1947, %v1949
        %v1951 = vrot.slane %v1943, %v1950
        %v1953 = vunpack.c.l.s4 1983009808
        %v1954 = vunpack.c.0.s8 %v1953
        %v1955 = vlaneseq
        %v1956 = vshrl.u32 %v1955, 7
        %v1957 = vsub.s32 %v1954, %v1956
        %v1958 = vrot.slane %v1944, %v1957
        %v1959 = vcombine.low %v1951, %v1958
        %v1960 = vcombine.low %v1271, %v1278
        %v1962 = vunpack.c.l.s4 1983009808
        %v1963 = vunpack.c.0.s8 %v1962
        %v1964 = vlaneseq
        %v1965 = vshrl.u32 %v1964, 7
        %v1966 = vsub.s32 %v1963, %v1965
        %v1967 = vrot.slane %v1960, %v1966
        %vm1968 = vcmask 31744
        %v1969 = vsel %vm1968, %v1296, 0
        %v1971 = vsel %vm1968, %v1313, 0
        %v1973 = vsel %vm1968, %v1330, 0
        %v1975 = vsel %vm1968, %v1347, 0
        %v1977 = vsel %vm1968, %v1364, 0
        %v1979 = vsel %vm1968, %v1381, 0
        %v1981 = vsel %vm1968, %v1398, 0
        %v1983 = vsel %vm1968, %v1415, 0
        %v1985 = vsel %vm1968, %v1432, 0
        %v1987 = vsel %vm1968, %v1449, 0
        %v1989 = vsel %vm1968, %v1466, 0
        %v1991 = vsel %vm1968, %v1483, 0
        %v1993 = vsel %vm1968, %v1500, 0
        %v1995 = vsel %vm1968, %v1517, 0
        %v1997 = vsel %vm1968, %v1534, 0
        %v1999 = vsel %vm1968, %v1551, 0
        %v2001 = vsel %vm1968, %v1568, 0
        %v2003 = vsel %vm1968, %v1585, 0
        %v2005 = vsel %vm1968, %v1602, 0
        %v2007 = vsel %vm1968, %v1619, 0
        %v2009 = vsel %vm1968, %v1636, 0
        %v2011 = vsel %vm1968, %v1653, 0
        %v2013 = vsel %vm1968, %v1670, 0
        %v2015 = vsel %vm1968, %v1687, 0
        %v2017 = vsel %vm1968, %v1704, 0
        %v2019 = vsel %vm1968, %v1721, 0
        %v2021 = vsel %vm1968, %v1738, 0
        %v2023 = vsel %vm1968, %v1755, 0
        %v2025 = vsel %vm1968, %v1772, 0
        %v2027 = vsel %vm1968, %v1789, 0
        %v2029 = vsel %vm1968, %v1806, 0
        %v2031 = vsel %vm1968, %v1823, 0
        %v2033 = vsel %vm1968, %v1840, 0
        %v2035 = vsel %vm1968, %v1857, 0
        %v2037 = vsel %vm1968, %v1874, 0
        %v2039 = vsel %vm1968, %v1891, 0
        %v2041 = vsel %vm1968, %v1908, 0
        %v2043 = vsel %vm1968, %v1925, 0
        %v2045 = vsel %vm1968, %v1942, 0
        %v2047 = vsel %vm1968, %v1959, 0
        %v2049 = vsel %vm1968, %v1967, 0
        %vm2051 = vcmask 1043456
        %v2053 = vsel %vm2051, %v1279, 0
        %2055 = vmatprep.subr.mxu0 0.0
        %2056 = vmatpush1.msra.mxu0 %v2053
        %2057 = vmatprep.subr.mxu0 0.0
        %2058 = vmatpush1.msra.mxu0 0.0
        %2059 = vmatprep.subr.mxu0 0.0
        %2060 = vmatpush1.msra.mxu0 0.0
        %2061 = vmatprep.subr.mxu0 0.0
        %2062 = vmatpush1.msra.mxu0 0.0
        %2063 = vmatprep.subr.mxu0 0.0
        %2064 = vmatpush1.msra.mxu0 0.0
        %2065 = vmatprep.subr.mxu0 0.0
        %2066 = vmatpush1.msra.mxu0 0.0
        %2067 = vmatprep.subr.mxu0 0.0
        %2068 = vmatpush1.msra.mxu0 0.0
        %2069 = vmatprep.subr.mxu0 0.0
        %2070 = vmatpush1.msra.mxu0 0.0
        %2071 = vmatprep.subr.mxu0 0.0
        %2072 = vmatpush1.msra.mxu0 0.0
        %2073 = vmatprep.subr.mxu0 0.0
        %2074 = vmatpush1.msra.mxu0 0.0
        %2075 = vmatprep.subr.mxu0 0.0
        %2076 = vmatpush1.msra.mxu0 0.0
        %2077 = vmatprep.subr.mxu0 0.0
        %2078 = vmatpush1.msra.mxu0 0.0
        %2079 = vmatprep.subr.mxu0 0.0
        %2080 = vmatpush1.msra.mxu0 0.0
        %2081 = vmatprep.subr.mxu0 0.0
        %2082 = vmatpush1.msra.mxu0 0.0
        %2083 = vmatprep.subr.mxu0 0.0
        %2084 = vmatpush1.msra.mxu0 0.0
        %2085 = vmatprep.subr.mxu0 0.0
        %2086 = vmatpush1.msra.mxu0 0.0
        %2087 = vmatprep.subr.mxu0 0.0
        %2088 = vmatpush1.msra.mxu0 0.0
        %2089 = vmatprep.subr.mxu0 0.0
        %2090 = vmatpush1.msra.mxu0 0.0
        %2091 = vmatprep.subr.mxu0 0.0
        %2092 = vmatpush1.msra.mxu0 0.0
        %2093 = vmatprep.subr.mxu0 0.0
        %2094 = vmatpush1.msra.mxu0 0.0
        %2095 = vmatprep.subr.mxu0 0.0
        %2096 = vmatpush1.msra.mxu0 0.0
        %2097 = vmatprep.subr.mxu0 0.0
        %2098 = vmatpush1.msra.mxu0 0.0
        %2099 = vmatprep.subr.mxu0 0.0
        %2100 = vmatpush1.msra.mxu0 0.0
        %2101 = vmatprep.subr.mxu0 0.0
        %2102 = vmatpush1.msra.mxu0 0.0
        %2103 = vmatprep.subr.mxu0 0.0
        %2104 = vmatpush1.msra.mxu0 0.0
        %2105 = vmatprep.subr.mxu0 0.0
        %2106 = vmatpush1.msra.mxu0 0.0
        %2107 = vmatprep.subr.mxu0 0.0
        %2108 = vmatpush1.msra.mxu0 0.0
        %2109 = vmatprep.subr.mxu0 0.0
        %2110 = vmatpush1.msra.mxu0 0.0
        %2111 = vmatprep.subr.mxu0 0.0
        %2112 = vmatpush1.msra.mxu0 0.0
        %2113 = vmatprep.subr.mxu0 0.0
        %2114 = vmatpush1.msra.mxu0 0.0
        %2115 = vmatprep.subr.mxu0 0.0
        %2116 = vmatpush1.msra.mxu0 0.0
        %2117 = vmatprep.subr.mxu0 0.0
        %2118 = vmatpush1.msra.mxu0 0.0
        %2119 = vmatprep.mubr.f32.mxu0 0.0
        %2120 = vmatmul.mubr.f32.gmra.mrb[0].mxu0 %v1969
        %v2121 = vpop.f32.mrb[0].mxu0
        %v2122 = vadd.f32 0.0, %v2121
        %v2123 = vpop.f32.mrb[0].mxu0
        %2124 = vmatprep.mubr.f32.mxu0 0.0
        %2125 = vmatmul.mubr.f32.gmra.mrb[0].mxu0 %v1971
        %v2126 = vpop.f32.mrb[0].mxu0
        %v2127 = vadd.f32 0.0, %v2126
        %v2128 = vpop.f32.mrb[0].mxu0
        %2129 = vmatprep.mubr.f32.mxu0 0.0
        %2130 = vmatmul.mubr.f32.gmra.mrb[0].mxu0 %v1973
        %v2131 = vpop.f32.mrb[0].mxu0
        %v2132 = vadd.f32 0.0, %v2131
        %v2133 = vpop.f32.mrb[0].mxu0
        %2134 = vmatprep.mubr.f32.mxu0 0.0
        %2135 = vmatmul.mubr.f32.gmra.mrb[0].mxu0 %v1975
        %v2136 = vpop.f32.mrb[0].mxu0
        %v2137 = vadd.f32 0.0, %v2136
        %v2138 = vpop.f32.mrb[0].mxu0
        %2139 = vmatprep.mubr.f32.mxu0 0.0
        %2140 = vmatmul.mubr.f32.gmra.mrb[0].mxu0 %v1977
        %v2141 = vpop.f32.mrb[0].mxu0
        %v2142 = vadd.f32 0.0, %v2141
        %v2143 = vpop.f32.mrb[0].mxu0
        %2144 = vmatprep.mubr.f32.mxu0 0.0
        %2145 = vmatmul.mubr.f32.gmra.mrb[0].mxu0 %v1979
        %v2146 = vpop.f32.mrb[0].mxu0
        %v2147 = vadd.f32 0.0, %v2146
        %v2148 = vpop.f32.mrb[0].mxu0
        %2149 = vmatprep.mubr.f32.mxu0 0.0
        %2150 = vmatmul.mubr.f32.gmra.mrb[0].mxu0 %v1981
        %v2151 = vpop.f32.mrb[0].mxu0
        %v2152 = vadd.f32 0.0, %v2151
        %v2153 = vpop.f32.mrb[0].mxu0
        %2154 = vmatprep.mubr.f32.mxu0 0.0
        %2155 = vmatmul.mubr.f32.gmra.mrb[0].mxu0 %v1983
        %v2156 = vpop.f32.mrb[0].mxu0
        %v2157 = vadd.f32 0.0, %v2156
        %v2158 = vpop.f32.mrb[0].mxu0
        %2159 = vmatprep.mubr.f32.mxu0 0.0
        %2160 = vmatmul.mubr.f32.gmra.mrb[0].mxu0 %v1985
        %v2161 = vpop.f32.mrb[0].mxu0
        %v2162 = vadd.f32 0.0, %v2161
        %v2163 = vpop.f32.mrb[0].mxu0
        %2164 = vmatprep.mubr.f32.mxu0 0.0
        %2165 = vmatmul.mubr.f32.gmra.mrb[0].mxu0 %v1987
        %v2166 = vpop.f32.mrb[0].mxu0
        %v2167 = vadd.f32 0.0, %v2166
        %v2168 = vpop.f32.mrb[0].mxu0
        %2169 = vmatprep.mubr.f32.mxu0 0.0
        %2170 = vmatmul.mubr.f32.gmra.mrb[0].mxu0 %v1989
        %v2171 = vpop.f32.mrb[0].mxu0
        %v2172 = vadd.f32 0.0, %v2171
        %v2173 = vpop.f32.mrb[0].mxu0
        %2174 = vmatprep.mubr.f32.mxu0 0.0
        %2175 = vmatmul.mubr.f32.gmra.mrb[0].mxu0 %v1991
        %v2176 = vpop.f32.mrb[0].mxu0
        %v2177 = vadd.f32 0.0, %v2176
        %v2178 = vpop.f32.mrb[0].mxu0
        %2179 = vmatprep.mubr.f32.mxu0 0.0
        %2180 = vmatmul.mubr.f32.gmra.mrb[0].mxu0 %v1993
        %v2181 = vpop.f32.mrb[0].mxu0
        %v2182 = vadd.f32 0.0, %v2181
        %v2183 = vpop.f32.mrb[0].mxu0
        %2184 = vmatprep.mubr.f32.mxu0 0.0
        %2185 = vmatmul.mubr.f32.gmra.mrb[0].mxu0 %v1995
        %v2186 = vpop.f32.mrb[0].mxu0
        %v2187 = vadd.f32 0.0, %v2186
        %v2188 = vpop.f32.mrb[0].mxu0
        %2189 = vmatprep.mubr.f32.mxu0 0.0
        %2190 = vmatmul.mubr.f32.gmra.mrb[0].mxu0 %v1997
        %v2191 = vpop.f32.mrb[0].mxu0
        %v2192 = vadd.f32 0.0, %v2191
        %v2193 = vpop.f32.mrb[0].mxu0
        %2194 = vmatprep.mubr.f32.mxu0 0.0
        %2195 = vmatmul.mubr.f32.gmra.mrb[0].mxu0 %v1999
        %v2196 = vpop.f32.mrb[0].mxu0
        %v2197 = vadd.f32 0.0, %v2196
        %v2198 = vpop.f32.mrb[0].mxu0
        %2199 = vmatprep.mubr.f32.mxu0 0.0
        %2200 = vmatmul.mubr.f32.gmra.mrb[0].mxu0 %v2001
        %v2201 = vpop.f32.mrb[0].mxu0
        %v2202 = vadd.f32 0.0, %v2201
        %v2203 = vpop.f32.mrb[0].mxu0
        %2204 = vmatprep.mubr.f32.mxu0 0.0
        %2205 = vmatmul.mubr.f32.gmra.mrb[0].mxu0 %v2003
        %v2206 = vpop.f32.mrb[0].mxu0
        %v2207 = vadd.f32 0.0, %v2206
        %v2208 = vpop.f32.mrb[0].mxu0
        %2209 = vmatprep.mubr.f32.mxu0 0.0
        %2210 = vmatmul.mubr.f32.gmra.mrb[0].mxu0 %v2005
        %v2211 = vpop.f32.mrb[0].mxu0
        %v2212 = vadd.f32 0.0, %v2211
        %v2213 = vpop.f32.mrb[0].mxu0
        %2214 = vmatprep.mubr.f32.mxu0 0.0
        %2215 = vmatmul.mubr.f32.gmra.mrb[0].mxu0 %v2007
        %v2216 = vpop.f32.mrb[0].mxu0
        %v2217 = vadd.f32 0.0, %v2216
        %v2218 = vpop.f32.mrb[0].mxu0
        %2219 = vmatprep.mubr.f32.mxu0 0.0
        %2220 = vmatmul.mubr.f32.gmra.mrb[0].mxu0 %v2009
        %v2221 = vpop.f32.mrb[0].mxu0
        %v2222 = vadd.f32 0.0, %v2221
        %v2223 = vpop.f32.mrb[0].mxu0
        %2224 = vmatprep.mubr.f32.mxu0 0.0
        %2225 = vmatmul.mubr.f32.gmra.mrb[0].mxu0 %v2011
        %v2226 = vpop.f32.mrb[0].mxu0
        %v2227 = vadd.f32 0.0, %v2226
        %v2228 = vpop.f32.mrb[0].mxu0
        %2229 = vmatprep.mubr.f32.mxu0 0.0
        %2230 = vmatmul.mubr.f32.gmra.mrb[0].mxu0 %v2013
        %v2231 = vpop.f32.mrb[0].mxu0
        %v2232 = vadd.f32 0.0, %v2231
        %v2233 = vpop.f32.mrb[0].mxu0
        %2234 = vmatprep.mubr.f32.mxu0 0.0
        %2235 = vmatmul.mubr.f32.gmra.mrb[0].mxu0 %v2015
        %v2236 = vpop.f32.mrb[0].mxu0
        %v2237 = vadd.f32 0.0, %v2236
        %v2238 = vpop.f32.mrb[0].mxu0
        %2239 = vmatprep.mubr.f32.mxu0 0.0
        %2240 = vmatmul.mubr.f32.gmra.mrb[0].mxu0 %v2017
        %v2241 = vpop.f32.mrb[0].mxu0
        %v2242 = vadd.f32 0.0, %v2241
        %v2243 = vpop.f32.mrb[0].mxu0
        %2244 = vmatprep.mubr.f32.mxu0 0.0
        %2245 = vmatmul.mubr.f32.gmra.mrb[0].mxu0 %v2019
        %v2246 = vpop.f32.mrb[0].mxu0
        %v2247 = vadd.f32 0.0, %v2246
        %v2248 = vpop.f32.mrb[0].mxu0
        %2249 = vmatprep.mubr.f32.mxu0 0.0
        %2250 = vmatmul.mubr.f32.gmra.mrb[0].mxu0 %v2021
        %v2251 = vpop.f32.mrb[0].mxu0
        %v2252 = vadd.f32 0.0, %v2251
        %v2253 = vpop.f32.mrb[0].mxu0
        %2254 = vmatprep.mubr.f32.mxu0 0.0
        %2255 = vmatmul.mubr.f32.gmra.mrb[0].mxu0 %v2023
        %v2256 = vpop.f32.mrb[0].mxu0
        %v2257 = vadd.f32 0.0, %v2256
        %v2258 = vpop.f32.mrb[0].mxu0
        %2259 = vmatprep.mubr.f32.mxu0 0.0
        %2260 = vmatmul.mubr.f32.gmra.mrb[0].mxu0 %v2025
        %v2261 = vpop.f32.mrb[0].mxu0
        %v2262 = vadd.f32 0.0, %v2261
        %v2263 = vpop.f32.mrb[0].mxu0
        %2264 = vmatprep.mubr.f32.mxu0 0.0
        %2265 = vmatmul.mubr.f32.gmra.mrb[0].mxu0 %v2027
        %v2266 = vpop.f32.mrb[0].mxu0
        %v2267 = vadd.f32 0.0, %v2266
        %v2268 = vpop.f32.mrb[0].mxu0
        %2269 = vmatprep.mubr.f32.mxu0 0.0
        %2270 = vmatmul.mubr.f32.gmra.mrb[0].mxu0 %v2029
        %v2271 = vpop.f32.mrb[0].mxu0
        %v2272 = vadd.f32 0.0, %v2271
        %v2273 = vpop.f32.mrb[0].mxu0
        %2274 = vmatprep.mubr.f32.mxu0 0.0
        %2275 = vmatmul.mubr.f32.gmra.mrb[0].mxu0 %v2031
        %v2276 = vpop.f32.mrb[0].mxu0
        %v2277 = vadd.f32 0.0, %v2276
        %v2278 = vpop.f32.mrb[0].mxu0
        %2279 = vmatprep.mubr.f32.mxu0 0.0
        %2280 = vmatmul.mubr.f32.gmra.mrb[0].mxu0 %v2033
        %v2281 = vpop.f32.mrb[0].mxu0
        %v2282 = vadd.f32 0.0, %v2281
        %v2283 = vpop.f32.mrb[0].mxu0
        %2284 = vmatprep.mubr.f32.mxu0 0.0
        %2285 = vmatmul.mubr.f32.gmra.mrb[0].mxu0 %v2035
        %v2286 = vpop.f32.mrb[0].mxu0
        %v2287 = vadd.f32 0.0, %v2286
        %v2288 = vpop.f32.mrb[0].mxu0
        %2289 = vmatprep.mubr.f32.mxu0 0.0
        %2290 = vmatmul.mubr.f32.gmra.mrb[0].mxu0 %v2037
        %v2291 = vpop.f32.mrb[0].mxu0
        %v2292 = vadd.f32 0.0, %v2291
        %v2293 = vpop.f32.mrb[0].mxu0
        %2294 = vmatprep.mubr.f32.mxu0 0.0
        %2295 = vmatmul.mubr.f32.gmra.mrb[0].mxu0 %v2039
        %v2296 = vpop.f32.mrb[0].mxu0
        %v2297 = vadd.f32 0.0, %v2296
        %v2298 = vpop.f32.mrb[0].mxu0
        %2299 = vmatprep.mubr.f32.mxu0 0.0
        %2300 = vmatmul.mubr.f32.gmra.mrb[0].mxu0 %v2041
        %v2301 = vpop.f32.mrb[0].mxu0
        %v2302 = vadd.f32 0.0, %v2301
        %v2303 = vpop.f32.mrb[0].mxu0
        %2304 = vmatprep.mubr.f32.mxu0 0.0
        %2305 = vmatmul.mubr.f32.gmra.mrb[0].mxu0 %v2043
        %v2306 = vpop.f32.mrb[0].mxu0
        %v2307 = vadd.f32 0.0, %v2306
        %v2308 = vpop.f32.mrb[0].mxu0
        %2309 = vmatprep.mubr.f32.mxu0 0.0
        %2310 = vmatmul.mubr.f32.gmra.mrb[0].mxu0 %v2045
        %v2311 = vpop.f32.mrb[0].mxu0
        %v2312 = vadd.f32 0.0, %v2311
        %v2313 = vpop.f32.mrb[0].mxu0
        %2314 = vmatprep.mubr.f32.mxu0 0.0
        %2315 = vmatmul.mubr.f32.gmra.mrb[0].mxu0 %v2047
        %v2316 = vpop.f32.mrb[0].mxu0
        %v2317 = vadd.f32 0.0, %v2316
        %v2318 = vpop.f32.mrb[0].mxu0
        %2319 = vmatprep.mubr.f32.mxu0 0.0
        %2320 = vmatmul.mubr.f32.gmra.mrb[0].mxu0 %v2049
        %v2321 = vpop.f32.mrb[0].mxu0
        %v2322 = vadd.f32 0.0, %v2321
        %v2323 = vpop.f32.mrb[0].mxu0
        %2324 = vdwg.mxu0
        %v2325 = vld [vmem:[%s415] sm:$0x1]
        %v2327 = vlaneseq
        %v2328 = vshrl.u32 %v2327, 7
        %v2329 = vsub.s32 0, %v2328
        %v2330 = vrot.slane %v2325, %v2329
        %v2332 = vmul.f32 %v2122, %v2330
        %v2333 = vmul.f32 %v2127, %v2330
        %v2334 = vmul.f32 %v2132, %v2330
        %v2335 = vmul.f32 %v2137, %v2330
        %v2336 = vmul.f32 %v2142, %v2330
        %v2337 = vmul.f32 %v2147, %v2330
        %v2338 = vmul.f32 %v2152, %v2330
        %v2339 = vmul.f32 %v2157, %v2330
        %v2340 = vmul.f32 %v2162, %v2330
        %v2341 = vmul.f32 %v2167, %v2330
        %v2342 = vmul.f32 %v2172, %v2330
        %v2343 = vmul.f32 %v2177, %v2330
        %v2344 = vmul.f32 %v2182, %v2330
        %v2345 = vmul.f32 %v2187, %v2330
        %v2346 = vmul.f32 %v2192, %v2330
        %v2347 = vmul.f32 %v2197, %v2330
        %v2348 = vmul.f32 %v2202, %v2330
        %v2349 = vmul.f32 %v2207, %v2330
        %v2350 = vmul.f32 %v2212, %v2330
        %v2351 = vmul.f32 %v2217, %v2330
        %v2352 = vmul.f32 %v2222, %v2330
        %v2353 = vmul.f32 %v2227, %v2330
        %v2354 = vmul.f32 %v2232, %v2330
        %v2355 = vmul.f32 %v2237, %v2330
        %v2356 = vmul.f32 %v2242, %v2330
        %v2357 = vmul.f32 %v2247, %v2330
        %v2358 = vmul.f32 %v2252, %v2330
        %v2359 = vmul.f32 %v2257, %v2330
        %v2360 = vmul.f32 %v2262, %v2330
        %v2361 = vmul.f32 %v2267, %v2330
        %v2362 = vmul.f32 %v2272, %v2330
        %v2363 = vmul.f32 %v2277, %v2330
        %v2364 = vmul.f32 %v2282, %v2330
        %v2365 = vmul.f32 %v2287, %v2330
        %v2366 = vmul.f32 %v2292, %v2330
        %v2367 = vmul.f32 %v2297, %v2330
        %v2368 = vmul.f32 %v2302, %v2330
        %v2369 = vmul.f32 %v2307, %v2330
        %v2370 = vmul.f32 %v2312, %v2330
        %v2371 = vmul.f32 %v2317, %v2330
        %v2372 = vmul.f32 %v2322, %v2330
        %v2373 = vld [vmem:[%s418] sm:$0x1]
        %v2375 = vlaneseq
        %v2376 = vshrl.u32 %v2375, 7
        %v2377 = vsub.s32 0, %v2376
        %v2378 = vrot.slane %v2373, %v2377
        %v2380 = vadd.f32 %v2332, %v2378
        %v2381 = vadd.f32 %v2333, %v2378
        %v2382 = vadd.f32 %v2334, %v2378
        %v2383 = vadd.f32 %v2335, %v2378
        %v2384 = vadd.f32 %v2336, %v2378
        %v2385 = vadd.f32 %v2337, %v2378
        %v2386 = vadd.f32 %v2338, %v2378
        %v2387 = vadd.f32 %v2339, %v2378
        %v2388 = vadd.f32 %v2340, %v2378
        %v2389 = vadd.f32 %v2341, %v2378
        %v2390 = vadd.f32 %v2342, %v2378
        %v2391 = vadd.f32 %v2343, %v2378
        %v2392 = vadd.f32 %v2344, %v2378
        %v2393 = vadd.f32 %v2345, %v2378
        %v2394 = vadd.f32 %v2346, %v2378
        %v2395 = vadd.f32 %v2347, %v2378
        %v2396 = vadd.f32 %v2348, %v2378
        %v2397 = vadd.f32 %v2349, %v2378
        %v2398 = vadd.f32 %v2350, %v2378
        %v2399 = vadd.f32 %v2351, %v2378
        %v2400 = vadd.f32 %v2352, %v2378
        %v2401 = vadd.f32 %v2353, %v2378
        %v2402 = vadd.f32 %v2354, %v2378
        %v2403 = vadd.f32 %v2355, %v2378
        %v2404 = vadd.f32 %v2356, %v2378
        %v2405 = vadd.f32 %v2357, %v2378
        %v2406 = vadd.f32 %v2358, %v2378
        %v2407 = vadd.f32 %v2359, %v2378
        %v2408 = vadd.f32 %v2360, %v2378
        %v2409 = vadd.f32 %v2361, %v2378
        %v2410 = vadd.f32 %v2362, %v2378
        %v2411 = vadd.f32 %v2363, %v2378
        %v2412 = vadd.f32 %v2364, %v2378
        %v2413 = vadd.f32 %v2365, %v2378
        %v2414 = vadd.f32 %v2366, %v2378
        %v2415 = vadd.f32 %v2367, %v2378
        %v2416 = vadd.f32 %v2368, %v2378
        %v2417 = vadd.f32 %v2369, %v2378
        %v2418 = vadd.f32 %v2370, %v2378
        %v2419 = vadd.f32 %v2371, %v2378
        %v2420 = vadd.f32 %v2372, %v2378
        %v2421 = vmax.f32 %v2380, 0.0
        %v2422 = vmax.f32 %v2381, 0.0
        %v2423 = vmax.f32 %v2382, 0.0
        %v2424 = vmax.f32 %v2383, 0.0
        %v2425 = vmax.f32 %v2384, 0.0
        %v2426 = vmax.f32 %v2385, 0.0
        %v2427 = vmax.f32 %v2386, 0.0
        %v2428 = vmax.f32 %v2387, 0.0
        %v2429 = vmax.f32 %v2388, 0.0
        %v2430 = vmax.f32 %v2389, 0.0
        %v2431 = vmax.f32 %v2390, 0.0
        %v2432 = vmax.f32 %v2391, 0.0
        %v2433 = vmax.f32 %v2392, 0.0
        %v2434 = vmax.f32 %v2393, 0.0
        %v2435 = vmax.f32 %v2394, 0.0
        %v2436 = vmax.f32 %v2395, 0.0
        %v2437 = vmax.f32 %v2396, 0.0
        %v2438 = vmax.f32 %v2397, 0.0
        %v2439 = vmax.f32 %v2398, 0.0
        %v2440 = vmax.f32 %v2399, 0.0
        %v2441 = vmax.f32 %v2400, 0.0
        %v2442 = vmax.f32 %v2401, 0.0
        %v2443 = vmax.f32 %v2402, 0.0
        %v2444 = vmax.f32 %v2403, 0.0
        %v2445 = vmax.f32 %v2404, 0.0
        %v2446 = vmax.f32 %v2405, 0.0
        %v2447 = vmax.f32 %v2406, 0.0
        %v2448 = vmax.f32 %v2407, 0.0
        %v2449 = vmax.f32 %v2408, 0.0
        %v2450 = vmax.f32 %v2409, 0.0
        %v2451 = vmax.f32 %v2410, 0.0
        %v2452 = vmax.f32 %v2411, 0.0
        %v2453 = vmax.f32 %v2412, 0.0
        %v2454 = vmax.f32 %v2413, 0.0
        %v2455 = vmax.f32 %v2414, 0.0
        %v2456 = vmax.f32 %v2415, 0.0
        %v2457 = vmax.f32 %v2416, 0.0
        %v2458 = vmax.f32 %v2417, 0.0
        %v2459 = vmax.f32 %v2418, 0.0
        %v2460 = vmax.f32 %v2419, 0.0
        %v2461 = vmax.f32 %v2420, 0.0
        %v2503 = vcombine.high %v2421, %v2421
        %v2505 = vunpack.c.l.s4 1983009808
        %v2506 = vunpack.c.0.s8 %v2505
        %v2507 = vlaneseq
        %v2508 = vshrl.u32 %v2507, 7
        %v2509 = vsub.s32 %v2506, %v2508
        %v2510 = vrot.slane %v2421, %v2509
        %v2512 = vunpack.c.l.s4 1983009808
        %v2513 = vunpack.c.0.s8 %v2512
        %v2514 = vlaneseq
        %v2515 = vshrl.u32 %v2514, 7
        %v2516 = vsub.s32 %v2513, %v2515
        %v2517 = vrot.slane %v2503, %v2516
        %v2518 = vcombine.high %v2510, %v2510
        %v2519 = vcombine.high %v2517, %v2517
        %v2520 = vcombine.high %v2422, %v2422
        %v2522 = vunpack.c.l.s4 1983009808
        %v2523 = vunpack.c.0.s8 %v2522
        %v2524 = vlaneseq
        %v2525 = vshrl.u32 %v2524, 7
        %v2526 = vsub.s32 %v2523, %v2525
        %v2527 = vrot.slane %v2422, %v2526
        %v2529 = vunpack.c.l.s4 1983009808
        %v2530 = vunpack.c.0.s8 %v2529
        %v2531 = vlaneseq
        %v2532 = vshrl.u32 %v2531, 7
        %v2533 = vsub.s32 %v2530, %v2532
        %v2534 = vrot.slane %v2520, %v2533
        %v2535 = vcombine.high %v2527, %v2527
        %v2536 = vcombine.high %v2534, %v2534
        %v2537 = vcombine.high %v2423, %v2423
        %v2539 = vunpack.c.l.s4 1983009808
        %v2540 = vunpack.c.0.s8 %v2539
        %v2541 = vlaneseq
        %v2542 = vshrl.u32 %v2541, 7
        %v2543 = vsub.s32 %v2540, %v2542
        %v2544 = vrot.slane %v2423, %v2543
        %v2546 = vunpack.c.l.s4 1983009808
        %v2547 = vunpack.c.0.s8 %v2546
        %v2548 = vlaneseq
        %v2549 = vshrl.u32 %v2548, 7
        %v2550 = vsub.s32 %v2547, %v2549
        %v2551 = vrot.slane %v2537, %v2550
        %v2552 = vcombine.high %v2544, %v2544
        %v2553 = vcombine.high %v2551, %v2551
        %v2554 = vcombine.high %v2424, %v2424
        %v2556 = vunpack.c.l.s4 1983009808
        %v2557 = vunpack.c.0.s8 %v2556
        %v2558 = vlaneseq
        %v2559 = vshrl.u32 %v2558, 7
        %v2560 = vsub.s32 %v2557, %v2559
        %v2561 = vrot.slane %v2424, %v2560
        %v2563 = vunpack.c.l.s4 1983009808
        %v2564 = vunpack.c.0.s8 %v2563
        %v2565 = vlaneseq
        %v2566 = vshrl.u32 %v2565, 7
        %v2567 = vsub.s32 %v2564, %v2566
        %v2568 = vrot.slane %v2554, %v2567
        %v2569 = vcombine.high %v2561, %v2561
        %v2570 = vcombine.high %v2568, %v2568
        %v2571 = vcombine.high %v2425, %v2425
        %v2573 = vunpack.c.l.s4 1983009808
        %v2574 = vunpack.c.0.s8 %v2573
        %v2575 = vlaneseq
        %v2576 = vshrl.u32 %v2575, 7
        %v2577 = vsub.s32 %v2574, %v2576
        %v2578 = vrot.slane %v2425, %v2577
        %v2580 = vunpack.c.l.s4 1983009808
        %v2581 = vunpack.c.0.s8 %v2580
        %v2582 = vlaneseq
        %v2583 = vshrl.u32 %v2582, 7
        %v2584 = vsub.s32 %v2581, %v2583
        %v2585 = vrot.slane %v2571, %v2584
        %v2586 = vcombine.high %v2578, %v2578
        %v2587 = vcombine.high %v2585, %v2585
        %v2588 = vcombine.high %v2426, %v2426
        %v2590 = vunpack.c.l.s4 1983009808
        %v2591 = vunpack.c.0.s8 %v2590
        %v2592 = vlaneseq
        %v2593 = vshrl.u32 %v2592, 7
        %v2594 = vsub.s32 %v2591, %v2593
        %v2595 = vrot.slane %v2426, %v2594
        %v2597 = vunpack.c.l.s4 1983009808
        %v2598 = vunpack.c.0.s8 %v2597
        %v2599 = vlaneseq
        %v2600 = vshrl.u32 %v2599, 7
        %v2601 = vsub.s32 %v2598, %v2600
        %v2602 = vrot.slane %v2588, %v2601
        %v2603 = vcombine.high %v2595, %v2595
        %v2604 = vcombine.high %v2602, %v2602
        %v2605 = vcombine.high %v2427, %v2427
        %v2607 = vunpack.c.l.s4 1983009808
        %v2608 = vunpack.c.0.s8 %v2607
        %v2609 = vlaneseq
        %v2610 = vshrl.u32 %v2609, 7
        %v2611 = vsub.s32 %v2608, %v2610
        %v2612 = vrot.slane %v2427, %v2611
        %v2614 = vunpack.c.l.s4 1983009808
        %v2615 = vunpack.c.0.s8 %v2614
        %v2616 = vlaneseq
        %v2617 = vshrl.u32 %v2616, 7
        %v2618 = vsub.s32 %v2615, %v2617
        %v2619 = vrot.slane %v2605, %v2618
        %v2620 = vcombine.high %v2612, %v2612
        %v2621 = vcombine.high %v2619, %v2619
        %v2622 = vcombine.high %v2428, %v2428
        %v2624 = vunpack.c.l.s4 1983009808
        %v2625 = vunpack.c.0.s8 %v2624
        %v2626 = vlaneseq
        %v2627 = vshrl.u32 %v2626, 7
        %v2628 = vsub.s32 %v2625, %v2627
        %v2629 = vrot.slane %v2428, %v2628
        %v2631 = vunpack.c.l.s4 1983009808
        %v2632 = vunpack.c.0.s8 %v2631
        %v2633 = vlaneseq
        %v2634 = vshrl.u32 %v2633, 7
        %v2635 = vsub.s32 %v2632, %v2634
        %v2636 = vrot.slane %v2622, %v2635
        %v2637 = vcombine.high %v2629, %v2629
        %v2638 = vcombine.high %v2636, %v2636
        %v2639 = vcombine.high %v2429, %v2429
        %v2641 = vunpack.c.l.s4 1983009808
        %v2642 = vunpack.c.0.s8 %v2641
        %v2643 = vlaneseq
        %v2644 = vshrl.u32 %v2643, 7
        %v2645 = vsub.s32 %v2642, %v2644
        %v2646 = vrot.slane %v2429, %v2645
        %v2648 = vunpack.c.l.s4 1983009808
        %v2649 = vunpack.c.0.s8 %v2648
        %v2650 = vlaneseq
        %v2651 = vshrl.u32 %v2650, 7
        %v2652 = vsub.s32 %v2649, %v2651
        %v2653 = vrot.slane %v2639, %v2652
        %v2654 = vcombine.high %v2646, %v2646
        %v2655 = vcombine.high %v2653, %v2653
        %v2656 = vcombine.high %v2430, %v2430
        %v2658 = vunpack.c.l.s4 1983009808
        %v2659 = vunpack.c.0.s8 %v2658
        %v2660 = vlaneseq
        %v2661 = vshrl.u32 %v2660, 7
        %v2662 = vsub.s32 %v2659, %v2661
        %v2663 = vrot.slane %v2430, %v2662
        %v2665 = vunpack.c.l.s4 1983009808
        %v2666 = vunpack.c.0.s8 %v2665
        %v2667 = vlaneseq
        %v2668 = vshrl.u32 %v2667, 7
        %v2669 = vsub.s32 %v2666, %v2668
        %v2670 = vrot.slane %v2656, %v2669
        %v2671 = vcombine.high %v2663, %v2663
        %v2672 = vcombine.high %v2670, %v2670
        %v2673 = vcombine.high %v2431, %v2431
        %v2675 = vunpack.c.l.s4 1983009808
        %v2676 = vunpack.c.0.s8 %v2675
        %v2677 = vlaneseq
        %v2678 = vshrl.u32 %v2677, 7
        %v2679 = vsub.s32 %v2676, %v2678
        %v2680 = vrot.slane %v2431, %v2679
        %v2682 = vunpack.c.l.s4 1983009808
        %v2683 = vunpack.c.0.s8 %v2682
        %v2684 = vlaneseq
        %v2685 = vshrl.u32 %v2684, 7
        %v2686 = vsub.s32 %v2683, %v2685
        %v2687 = vrot.slane %v2673, %v2686
        %v2688 = vcombine.high %v2680, %v2680
        %v2689 = vcombine.high %v2687, %v2687
        %v2690 = vcombine.high %v2432, %v2432
        %v2692 = vunpack.c.l.s4 1983009808
        %v2693 = vunpack.c.0.s8 %v2692
        %v2694 = vlaneseq
        %v2695 = vshrl.u32 %v2694, 7
        %v2696 = vsub.s32 %v2693, %v2695
        %v2697 = vrot.slane %v2432, %v2696
        %v2699 = vunpack.c.l.s4 1983009808
        %v2700 = vunpack.c.0.s8 %v2699
        %v2701 = vlaneseq
        %v2702 = vshrl.u32 %v2701, 7
        %v2703 = vsub.s32 %v2700, %v2702
        %v2704 = vrot.slane %v2690, %v2703
        %v2705 = vcombine.high %v2697, %v2697
        %v2706 = vcombine.high %v2704, %v2704
        %v2707 = vcombine.high %v2433, %v2433
        %v2709 = vunpack.c.l.s4 1983009808
        %v2710 = vunpack.c.0.s8 %v2709
        %v2711 = vlaneseq
        %v2712 = vshrl.u32 %v2711, 7
        %v2713 = vsub.s32 %v2710, %v2712
        %v2714 = vrot.slane %v2433, %v2713
        %v2716 = vunpack.c.l.s4 1983009808
        %v2717 = vunpack.c.0.s8 %v2716
        %v2718 = vlaneseq
        %v2719 = vshrl.u32 %v2718, 7
        %v2720 = vsub.s32 %v2717, %v2719
        %v2721 = vrot.slane %v2707, %v2720
        %v2722 = vcombine.high %v2714, %v2714
        %v2723 = vcombine.high %v2721, %v2721
        %v2724 = vcombine.high %v2434, %v2434
        %v2726 = vunpack.c.l.s4 1983009808
        %v2727 = vunpack.c.0.s8 %v2726
        %v2728 = vlaneseq
        %v2729 = vshrl.u32 %v2728, 7
        %v2730 = vsub.s32 %v2727, %v2729
        %v2731 = vrot.slane %v2434, %v2730
        %v2733 = vunpack.c.l.s4 1983009808
        %v2734 = vunpack.c.0.s8 %v2733
        %v2735 = vlaneseq
        %v2736 = vshrl.u32 %v2735, 7
        %v2737 = vsub.s32 %v2734, %v2736
        %v2738 = vrot.slane %v2724, %v2737
        %v2739 = vcombine.high %v2731, %v2731
        %v2740 = vcombine.high %v2738, %v2738
        %v2741 = vcombine.high %v2435, %v2435
        %v2743 = vunpack.c.l.s4 1983009808
        %v2744 = vunpack.c.0.s8 %v2743
        %v2745 = vlaneseq
        %v2746 = vshrl.u32 %v2745, 7
        %v2747 = vsub.s32 %v2744, %v2746
        %v2748 = vrot.slane %v2435, %v2747
        %v2750 = vunpack.c.l.s4 1983009808
        %v2751 = vunpack.c.0.s8 %v2750
        %v2752 = vlaneseq
        %v2753 = vshrl.u32 %v2752, 7
        %v2754 = vsub.s32 %v2751, %v2753
        %v2755 = vrot.slane %v2741, %v2754
        %v2756 = vcombine.high %v2748, %v2748
        %v2757 = vcombine.high %v2755, %v2755
        %v2758 = vcombine.high %v2436, %v2436
        %v2760 = vunpack.c.l.s4 1983009808
        %v2761 = vunpack.c.0.s8 %v2760
        %v2762 = vlaneseq
        %v2763 = vshrl.u32 %v2762, 7
        %v2764 = vsub.s32 %v2761, %v2763
        %v2765 = vrot.slane %v2436, %v2764
        %v2767 = vunpack.c.l.s4 1983009808
        %v2768 = vunpack.c.0.s8 %v2767
        %v2769 = vlaneseq
        %v2770 = vshrl.u32 %v2769, 7
        %v2771 = vsub.s32 %v2768, %v2770
        %v2772 = vrot.slane %v2758, %v2771
        %v2773 = vcombine.high %v2765, %v2765
        %v2774 = vcombine.high %v2772, %v2772
        %v2775 = vcombine.high %v2437, %v2437
        %v2777 = vunpack.c.l.s4 1983009808
        %v2778 = vunpack.c.0.s8 %v2777
        %v2779 = vlaneseq
        %v2780 = vshrl.u32 %v2779, 7
        %v2781 = vsub.s32 %v2778, %v2780
        %v2782 = vrot.slane %v2437, %v2781
        %v2784 = vunpack.c.l.s4 1983009808
        %v2785 = vunpack.c.0.s8 %v2784
        %v2786 = vlaneseq
        %v2787 = vshrl.u32 %v2786, 7
        %v2788 = vsub.s32 %v2785, %v2787
        %v2789 = vrot.slane %v2775, %v2788
        %v2790 = vcombine.high %v2782, %v2782
        %v2791 = vcombine.high %v2789, %v2789
        %v2792 = vcombine.high %v2438, %v2438
        %v2794 = vunpack.c.l.s4 1983009808
        %v2795 = vunpack.c.0.s8 %v2794
        %v2796 = vlaneseq
        %v2797 = vshrl.u32 %v2796, 7
        %v2798 = vsub.s32 %v2795, %v2797
        %v2799 = vrot.slane %v2438, %v2798
        %v2801 = vunpack.c.l.s4 1983009808
        %v2802 = vunpack.c.0.s8 %v2801
        %v2803 = vlaneseq
        %v2804 = vshrl.u32 %v2803, 7
        %v2805 = vsub.s32 %v2802, %v2804
        %v2806 = vrot.slane %v2792, %v2805
        %v2807 = vcombine.high %v2799, %v2799
        %v2808 = vcombine.high %v2806, %v2806
        %v2809 = vcombine.high %v2439, %v2439
        %v2811 = vunpack.c.l.s4 1983009808
        %v2812 = vunpack.c.0.s8 %v2811
        %v2813 = vlaneseq
        %v2814 = vshrl.u32 %v2813, 7
        %v2815 = vsub.s32 %v2812, %v2814
        %v2816 = vrot.slane %v2439, %v2815
        %v2818 = vunpack.c.l.s4 1983009808
        %v2819 = vunpack.c.0.s8 %v2818
        %v2820 = vlaneseq
        %v2821 = vshrl.u32 %v2820, 7
        %v2822 = vsub.s32 %v2819, %v2821
        %v2823 = vrot.slane %v2809, %v2822
        %v2824 = vcombine.high %v2816, %v2816
        %v2825 = vcombine.high %v2823, %v2823
        %v2826 = vcombine.high %v2440, %v2440
        %v2828 = vunpack.c.l.s4 1983009808
        %v2829 = vunpack.c.0.s8 %v2828
        %v2830 = vlaneseq
        %v2831 = vshrl.u32 %v2830, 7
        %v2832 = vsub.s32 %v2829, %v2831
        %v2833 = vrot.slane %v2440, %v2832
        %v2835 = vunpack.c.l.s4 1983009808
        %v2836 = vunpack.c.0.s8 %v2835
        %v2837 = vlaneseq
        %v2838 = vshrl.u32 %v2837, 7
        %v2839 = vsub.s32 %v2836, %v2838
        %v2840 = vrot.slane %v2826, %v2839
        %v2841 = vcombine.high %v2833, %v2833
        %v2842 = vcombine.high %v2840, %v2840
        %v2843 = vcombine.high %v2441, %v2441
        %v2845 = vunpack.c.l.s4 1983009808
        %v2846 = vunpack.c.0.s8 %v2845
        %v2847 = vlaneseq
        %v2848 = vshrl.u32 %v2847, 7
        %v2849 = vsub.s32 %v2846, %v2848
        %v2850 = vrot.slane %v2441, %v2849
        %v2852 = vunpack.c.l.s4 1983009808
        %v2853 = vunpack.c.0.s8 %v2852
        %v2854 = vlaneseq
        %v2855 = vshrl.u32 %v2854, 7
        %v2856 = vsub.s32 %v2853, %v2855
        %v2857 = vrot.slane %v2843, %v2856
        %v2858 = vcombine.high %v2850, %v2850
        %v2859 = vcombine.high %v2857, %v2857
        %v2860 = vcombine.high %v2442, %v2442
        %v2862 = vunpack.c.l.s4 1983009808
        %v2863 = vunpack.c.0.s8 %v2862
        %v2864 = vlaneseq
        %v2865 = vshrl.u32 %v2864, 7
        %v2866 = vsub.s32 %v2863, %v2865
        %v2867 = vrot.slane %v2442, %v2866
        %v2869 = vunpack.c.l.s4 1983009808
        %v2870 = vunpack.c.0.s8 %v2869
        %v2871 = vlaneseq
        %v2872 = vshrl.u32 %v2871, 7
        %v2873 = vsub.s32 %v2870, %v2872
        %v2874 = vrot.slane %v2860, %v2873
        %v2875 = vcombine.high %v2867, %v2867
        %v2876 = vcombine.high %v2874, %v2874
        %v2877 = vcombine.high %v2443, %v2443
        %v2879 = vunpack.c.l.s4 1983009808
        %v2880 = vunpack.c.0.s8 %v2879
        %v2881 = vlaneseq
        %v2882 = vshrl.u32 %v2881, 7
        %v2883 = vsub.s32 %v2880, %v2882
        %v2884 = vrot.slane %v2443, %v2883
        %v2886 = vunpack.c.l.s4 1983009808
        %v2887 = vunpack.c.0.s8 %v2886
        %v2888 = vlaneseq
        %v2889 = vshrl.u32 %v2888, 7
        %v2890 = vsub.s32 %v2887, %v2889
        %v2891 = vrot.slane %v2877, %v2890
        %v2892 = vcombine.high %v2884, %v2884
        %v2893 = vcombine.high %v2891, %v2891
        %v2894 = vcombine.high %v2444, %v2444
        %v2896 = vunpack.c.l.s4 1983009808
        %v2897 = vunpack.c.0.s8 %v2896
        %v2898 = vlaneseq
        %v2899 = vshrl.u32 %v2898, 7
        %v2900 = vsub.s32 %v2897, %v2899
        %v2901 = vrot.slane %v2444, %v2900
        %v2903 = vunpack.c.l.s4 1983009808
        %v2904 = vunpack.c.0.s8 %v2903
        %v2905 = vlaneseq
        %v2906 = vshrl.u32 %v2905, 7
        %v2907 = vsub.s32 %v2904, %v2906
        %v2908 = vrot.slane %v2894, %v2907
        %v2909 = vcombine.high %v2901, %v2901
        %v2910 = vcombine.high %v2908, %v2908
        %v2911 = vcombine.high %v2445, %v2445
        %v2913 = vunpack.c.l.s4 1983009808
        %v2914 = vunpack.c.0.s8 %v2913
        %v2915 = vlaneseq
        %v2916 = vshrl.u32 %v2915, 7
        %v2917 = vsub.s32 %v2914, %v2916
        %v2918 = vrot.slane %v2445, %v2917
        %v2920 = vunpack.c.l.s4 1983009808
        %v2921 = vunpack.c.0.s8 %v2920
        %v2922 = vlaneseq
        %v2923 = vshrl.u32 %v2922, 7
        %v2924 = vsub.s32 %v2921, %v2923
        %v2925 = vrot.slane %v2911, %v2924
        %v2926 = vcombine.high %v2918, %v2918
        %v2927 = vcombine.high %v2925, %v2925
        %v2928 = vcombine.high %v2446, %v2446
        %v2930 = vunpack.c.l.s4 1983009808
        %v2931 = vunpack.c.0.s8 %v2930
        %v2932 = vlaneseq
        %v2933 = vshrl.u32 %v2932, 7
        %v2934 = vsub.s32 %v2931, %v2933
        %v2935 = vrot.slane %v2446, %v2934
        %v2937 = vunpack.c.l.s4 1983009808
        %v2938 = vunpack.c.0.s8 %v2937
        %v2939 = vlaneseq
        %v2940 = vshrl.u32 %v2939, 7
        %v2941 = vsub.s32 %v2938, %v2940
        %v2942 = vrot.slane %v2928, %v2941
        %v2943 = vcombine.high %v2935, %v2935
        %v2944 = vcombine.high %v2942, %v2942
        %v2945 = vcombine.high %v2447, %v2447
        %v2947 = vunpack.c.l.s4 1983009808
        %v2948 = vunpack.c.0.s8 %v2947
        %v2949 = vlaneseq
        %v2950 = vshrl.u32 %v2949, 7
        %v2951 = vsub.s32 %v2948, %v2950
        %v2952 = vrot.slane %v2447, %v2951
        %v2954 = vunpack.c.l.s4 1983009808
        %v2955 = vunpack.c.0.s8 %v2954
        %v2956 = vlaneseq
        %v2957 = vshrl.u32 %v2956, 7
        %v2958 = vsub.s32 %v2955, %v2957
        %v2959 = vrot.slane %v2945, %v2958
        %v2960 = vcombine.high %v2952, %v2952
        %v2961 = vcombine.high %v2959, %v2959
        %v2962 = vcombine.high %v2448, %v2448
        %v2964 = vunpack.c.l.s4 1983009808
        %v2965 = vunpack.c.0.s8 %v2964
        %v2966 = vlaneseq
        %v2967 = vshrl.u32 %v2966, 7
        %v2968 = vsub.s32 %v2965, %v2967
        %v2969 = vrot.slane %v2448, %v2968
        %v2971 = vunpack.c.l.s4 1983009808
        %v2972 = vunpack.c.0.s8 %v2971
        %v2973 = vlaneseq
        %v2974 = vshrl.u32 %v2973, 7
        %v2975 = vsub.s32 %v2972, %v2974
        %v2976 = vrot.slane %v2962, %v2975
        %v2977 = vcombine.high %v2969, %v2969
        %v2978 = vcombine.high %v2976, %v2976
        %v2979 = vcombine.high %v2449, %v2449
        %v2981 = vunpack.c.l.s4 1983009808
        %v2982 = vunpack.c.0.s8 %v2981
        %v2983 = vlaneseq
        %v2984 = vshrl.u32 %v2983, 7
        %v2985 = vsub.s32 %v2982, %v2984
        %v2986 = vrot.slane %v2449, %v2985
        %v2988 = vunpack.c.l.s4 1983009808
        %v2989 = vunpack.c.0.s8 %v2988
        %v2990 = vlaneseq
        %v2991 = vshrl.u32 %v2990, 7
        %v2992 = vsub.s32 %v2989, %v2991
        %v2993 = vrot.slane %v2979, %v2992
        %v2994 = vcombine.high %v2986, %v2986
        %v2995 = vcombine.high %v2993, %v2993
        %v2996 = vcombine.high %v2450, %v2450
        %v2998 = vunpack.c.l.s4 1983009808
        %v2999 = vunpack.c.0.s8 %v2998
        %v3000 = vlaneseq
        %v3001 = vshrl.u32 %v3000, 7
        %v3002 = vsub.s32 %v2999, %v3001
        %v3003 = vrot.slane %v2450, %v3002
        %v3005 = vunpack.c.l.s4 1983009808
        %v3006 = vunpack.c.0.s8 %v3005
        %v3007 = vlaneseq
        %v3008 = vshrl.u32 %v3007, 7
        %v3009 = vsub.s32 %v3006, %v3008
        %v3010 = vrot.slane %v2996, %v3009
        %v3011 = vcombine.high %v3003, %v3003
        %v3012 = vcombine.high %v3010, %v3010
        %v3013 = vcombine.high %v2451, %v2451
        %v3015 = vunpack.c.l.s4 1983009808
        %v3016 = vunpack.c.0.s8 %v3015
        %v3017 = vlaneseq
        %v3018 = vshrl.u32 %v3017, 7
        %v3019 = vsub.s32 %v3016, %v3018
        %v3020 = vrot.slane %v2451, %v3019
        %v3022 = vunpack.c.l.s4 1983009808
        %v3023 = vunpack.c.0.s8 %v3022
        %v3024 = vlaneseq
        %v3025 = vshrl.u32 %v3024, 7
        %v3026 = vsub.s32 %v3023, %v3025
        %v3027 = vrot.slane %v3013, %v3026
        %v3028 = vcombine.high %v3020, %v3020
        %v3029 = vcombine.high %v3027, %v3027
        %v3030 = vcombine.high %v2452, %v2452
        %v3032 = vunpack.c.l.s4 1983009808
        %v3033 = vunpack.c.0.s8 %v3032
        %v3034 = vlaneseq
        %v3035 = vshrl.u32 %v3034, 7
        %v3036 = vsub.s32 %v3033, %v3035
        %v3037 = vrot.slane %v2452, %v3036
        %v3039 = vunpack.c.l.s4 1983009808
        %v3040 = vunpack.c.0.s8 %v3039
        %v3041 = vlaneseq
        %v3042 = vshrl.u32 %v3041, 7
        %v3043 = vsub.s32 %v3040, %v3042
        %v3044 = vrot.slane %v3030, %v3043
        %v3045 = vcombine.high %v3037, %v3037
        %v3046 = vcombine.high %v3044, %v3044
        %v3047 = vcombine.high %v2453, %v2453
        %v3049 = vunpack.c.l.s4 1983009808
        %v3050 = vunpack.c.0.s8 %v3049
        %v3051 = vlaneseq
        %v3052 = vshrl.u32 %v3051, 7
        %v3053 = vsub.s32 %v3050, %v3052
        %v3054 = vrot.slane %v2453, %v3053
        %v3056 = vunpack.c.l.s4 1983009808
        %v3057 = vunpack.c.0.s8 %v3056
        %v3058 = vlaneseq
        %v3059 = vshrl.u32 %v3058, 7
        %v3060 = vsub.s32 %v3057, %v3059
        %v3061 = vrot.slane %v3047, %v3060
        %v3062 = vcombine.high %v3054, %v3054
        %v3063 = vcombine.high %v3061, %v3061
        %v3064 = vcombine.high %v2454, %v2454
        %v3066 = vunpack.c.l.s4 1983009808
        %v3067 = vunpack.c.0.s8 %v3066
        %v3068 = vlaneseq
        %v3069 = vshrl.u32 %v3068, 7
        %v3070 = vsub.s32 %v3067, %v3069
        %v3071 = vrot.slane %v2454, %v3070
        %v3073 = vunpack.c.l.s4 1983009808
        %v3074 = vunpack.c.0.s8 %v3073
        %v3075 = vlaneseq
        %v3076 = vshrl.u32 %v3075, 7
        %v3077 = vsub.s32 %v3074, %v3076
        %v3078 = vrot.slane %v3064, %v3077
        %v3079 = vcombine.high %v3071, %v3071
        %v3080 = vcombine.high %v3078, %v3078
        %v3081 = vcombine.high %v2455, %v2455
        %v3083 = vunpack.c.l.s4 1983009808
        %v3084 = vunpack.c.0.s8 %v3083
        %v3085 = vlaneseq
        %v3086 = vshrl.u32 %v3085, 7
        %v3087 = vsub.s32 %v3084, %v3086
        %v3088 = vrot.slane %v2455, %v3087
        %v3090 = vunpack.c.l.s4 1983009808
        %v3091 = vunpack.c.0.s8 %v3090
        %v3092 = vlaneseq
        %v3093 = vshrl.u32 %v3092, 7
        %v3094 = vsub.s32 %v3091, %v3093
        %v3095 = vrot.slane %v3081, %v3094
        %v3096 = vcombine.high %v3088, %v3088
        %v3097 = vcombine.high %v3095, %v3095
        %v3098 = vcombine.high %v2456, %v2456
        %v3100 = vunpack.c.l.s4 1983009808
        %v3101 = vunpack.c.0.s8 %v3100
        %v3102 = vlaneseq
        %v3103 = vshrl.u32 %v3102, 7
        %v3104 = vsub.s32 %v3101, %v3103
        %v3105 = vrot.slane %v2456, %v3104
        %v3107 = vunpack.c.l.s4 1983009808
        %v3108 = vunpack.c.0.s8 %v3107
        %v3109 = vlaneseq
        %v3110 = vshrl.u32 %v3109, 7
        %v3111 = vsub.s32 %v3108, %v3110
        %v3112 = vrot.slane %v3098, %v3111
        %v3113 = vcombine.high %v3105, %v3105
        %v3114 = vcombine.high %v3112, %v3112
        %v3115 = vcombine.high %v2457, %v2457
        %v3117 = vunpack.c.l.s4 1983009808
        %v3118 = vunpack.c.0.s8 %v3117
        %v3119 = vlaneseq
        %v3120 = vshrl.u32 %v3119, 7
        %v3121 = vsub.s32 %v3118, %v3120
        %v3122 = vrot.slane %v2457, %v3121
        %v3124 = vunpack.c.l.s4 1983009808
        %v3125 = vunpack.c.0.s8 %v3124
        %v3126 = vlaneseq
        %v3127 = vshrl.u32 %v3126, 7
        %v3128 = vsub.s32 %v3125, %v3127
        %v3129 = vrot.slane %v3115, %v3128
        %v3130 = vcombine.high %v3122, %v3122
        %v3131 = vcombine.high %v3129, %v3129
        %v3132 = vcombine.high %v2458, %v2458
        %v3134 = vunpack.c.l.s4 1983009808
        %v3135 = vunpack.c.0.s8 %v3134
        %v3136 = vlaneseq
        %v3137 = vshrl.u32 %v3136, 7
        %v3138 = vsub.s32 %v3135, %v3137
        %v3139 = vrot.slane %v2458, %v3138
        %v3141 = vunpack.c.l.s4 1983009808
        %v3142 = vunpack.c.0.s8 %v3141
        %v3143 = vlaneseq
        %v3144 = vshrl.u32 %v3143, 7
        %v3145 = vsub.s32 %v3142, %v3144
        %v3146 = vrot.slane %v3132, %v3145
        %v3147 = vcombine.high %v3139, %v3139
        %v3148 = vcombine.high %v3146, %v3146
        %v3149 = vcombine.high %v2459, %v2459
        %v3151 = vunpack.c.l.s4 1983009808
        %v3152 = vunpack.c.0.s8 %v3151
        %v3153 = vlaneseq
        %v3154 = vshrl.u32 %v3153, 7
        %v3155 = vsub.s32 %v3152, %v3154
        %v3156 = vrot.slane %v2459, %v3155
        %v3158 = vunpack.c.l.s4 1983009808
        %v3159 = vunpack.c.0.s8 %v3158
        %v3160 = vlaneseq
        %v3161 = vshrl.u32 %v3160, 7
        %v3162 = vsub.s32 %v3159, %v3161
        %v3163 = vrot.slane %v3149, %v3162
        %v3164 = vcombine.high %v3156, %v3156
        %v3165 = vcombine.high %v3163, %v3163
        %v3166 = vcombine.high %v2460, %v2460
        %v3168 = vunpack.c.l.s4 1983009808
        %v3169 = vunpack.c.0.s8 %v3168
        %v3170 = vlaneseq
        %v3171 = vshrl.u32 %v3170, 7
        %v3172 = vsub.s32 %v3169, %v3171
        %v3173 = vrot.slane %v2460, %v3172
        %v3175 = vunpack.c.l.s4 1983009808
        %v3176 = vunpack.c.0.s8 %v3175
        %v3177 = vlaneseq
        %v3178 = vshrl.u32 %v3177, 7
        %v3179 = vsub.s32 %v3176, %v3178
        %v3180 = vrot.slane %v3166, %v3179
        %v3181 = vcombine.high %v3173, %v3173
        %v3182 = vcombine.high %v3180, %v3180
        %v3184 = vunpack.c.l.s4 1983009808
        %v3185 = vunpack.c.0.s8 %v3184
        %v3186 = vlaneseq
        %v3187 = vshrl.u32 %v3186, 7
        %v3188 = vsub.s32 %v3185, %v3187
        %v3189 = vrot.slane %v2461, %v3188
        %v3190 = vcombine.high %v3189, %v3189
        %v3353 = vstv %s430
        %v3354 = vadd.s32 %v3353, 1
        %v3355 = vadd.s32 %v3353, 2
        %v3356 = vadd.s32 %v3353, 3
        %v3357 = vadd.s32 %v3353, 4
        %v3358 = vadd.s32 %v3353, 5
        %v3359 = vadd.s32 %v3353, 6
        %v3360 = vadd.s32 %v3353, 7
        %v3361 = vadd.s32 %v3353, 8
        %v3362 = vadd.s32 %v3353, 9
        %v3363 = vadd.s32 %v3353, 10
        %v3364 = vadd.s32 %v3353, 11
        %v3365 = vadd.s32 %v3353, 12
        %v3366 = vadd.s32 %v3353, 13
        %v3367 = vadd.s32 %v3353, 14
        %v3368 = vadd.s32 %v3353, 15
        %v3369 = vadd.s32 %v3353, 16
        %v3370 = vadd.s32 %v3353, 17
        %v3371 = vlaneseq
        %v3372 = vshrl.u32 %v3371, 7
        %v3373 = vadd.s32 %v3372, 8
        %v3374 = vadd.s32 %v3372, 16
        %vm3375 = vcmp.ge.s32.totalorder %v3353, 1
        %vm3376 = vcmp.ge.s32.totalorder %v3354, 1
        %vm3377 = vcmp.ge.s32.totalorder %v3355, 1
        %vm3378 = vcmp.ge.s32.totalorder %v3356, 1
        %vm3379 = vcmp.ge.s32.totalorder %v3357, 1
        %vm3380 = vcmp.ge.s32.totalorder %v3358, 1
        %vm3381 = vcmp.ge.s32.totalorder %v3359, 1
        %vm3382 = vcmp.ge.s32.totalorder %v3360, 1
        %vm3383 = vcmp.ge.s32.totalorder %v3361, 1
        %vm3384 = vcmp.ge.s32.totalorder %v3362, 1
        %vm3385 = vcmp.ge.s32.totalorder %v3363, 1
        %vm3386 = vcmp.ge.s32.totalorder %v3364, 1
        %vm3387 = vcmp.ge.s32.totalorder %v3365, 1
        %vm3388 = vcmp.ge.s32.totalorder %v3366, 1
        %vm3389 = vcmp.ge.s32.totalorder %v3367, 1
        %vm3390 = vcmp.ge.s32.totalorder %v3368, 1
        %vm3391 = vcmp.ge.s32.totalorder %v3369, 1
        %vm3392 = vcmp.ge.s32.totalorder %v3370, 1
        %vm3393 = vcmp.lt.s32.totalorder %v3353, 17
        %vm3394 = vcmp.lt.s32.totalorder %v3354, 17
        %vm3395 = vcmp.lt.s32.totalorder %v3355, 17
        %vm3396 = vcmp.lt.s32.totalorder %v3356, 17
        %vm3397 = vcmp.lt.s32.totalorder %v3357, 17
        %vm3398 = vcmp.lt.s32.totalorder %v3358, 17
        %vm3399 = vcmp.lt.s32.totalorder %v3359, 17
        %vm3400 = vcmp.lt.s32.totalorder %v3360, 17
        %vm3401 = vcmp.lt.s32.totalorder %v3361, 17
        %vm3402 = vcmp.lt.s32.totalorder %v3362, 17
        %vm3403 = vcmp.lt.s32.totalorder %v3363, 17
        %vm3404 = vcmp.lt.s32.totalorder %v3364, 17
        %vm3405 = vcmp.lt.s32.totalorder %v3365, 17
        %vm3406 = vcmp.lt.s32.totalorder %v3366, 17
        %vm3407 = vcmp.lt.s32.totalorder %v3367, 17
        %vm3408 = vcmp.lt.s32.totalorder %v3368, 17
        %vm3409 = vcmp.lt.s32.totalorder %v3369, 17
        %vm3410 = vcmp.lt.s32.totalorder %v3370, 17
        %vm3411 = vmand %vm3375, %vm3393
        %vm3412 = vmand %vm3376, %vm3394
        %vm3413 = vmand %vm3377, %vm3395
        %vm3414 = vmand %vm3378, %vm3396
        %vm3415 = vmand %vm3379, %vm3397
        %vm3416 = vmand %vm3380, %vm3398
        %vm3417 = vmand %vm3381, %vm3399
        %vm3418 = vmand %vm3382, %vm3400
        %vm3419 = vmand %vm3383, %vm3401
        %vm3420 = vmand %vm3384, %vm3402
        %vm3421 = vmand %vm3385, %vm3403
        %vm3422 = vmand %vm3386, %vm3404
        %vm3423 = vmand %vm3387, %vm3405
        %vm3424 = vmand %vm3388, %vm3406
        %vm3425 = vmand %vm3389, %vm3407
        %vm3426 = vmand %vm3390, %vm3408
        %vm3427 = vmand %vm3391, %vm3409
        %vm3428 = vmand %vm3392, %vm3410
        %vm3429 = vcmp.ge.s32.totalorder %v3372, 1
        %vm3430 = vcmp.ge.s32.totalorder %v3373, 1
        %vm3431 = vcmp.ge.s32.totalorder %v3374, 1
        %vm3432 = vmand %vm3411, %vm3429
        %vm3433 = vmand %vm3411, %vm3430
        %vm3434 = vmand %vm3411, %vm3431
        %vm3435 = vmand %vm3412, %vm3429
        %vm3436 = vmand %vm3412, %vm3430
        %vm3437 = vmand %vm3412, %vm3431
        %vm3438 = vmand %vm3413, %vm3429
        %vm3439 = vmand %vm3413, %vm3430
        %vm3440 = vmand %vm3413, %vm3431
        %vm3441 = vmand %vm3414, %vm3429
        %vm3442 = vmand %vm3414, %vm3430
        %vm3443 = vmand %vm3414, %vm3431
        %vm3444 = vmand %vm3415, %vm3429
        %vm3445 = vmand %vm3415, %vm3430
        %vm3446 = vmand %vm3415, %vm3431
        %vm3447 = vmand %vm3416, %vm3429
        %vm3448 = vmand %vm3416, %vm3430
        %vm3449 = vmand %vm3416, %vm3431
        %vm3450 = vmand %vm3417, %vm3429
        %vm3451 = vmand %vm3417, %vm3430
        %vm3452 = vmand %vm3417, %vm3431
        %vm3453 = vmand %vm3418, %vm3429
        %vm3454 = vmand %vm3418, %vm3430
        %vm3455 = vmand %vm3418, %vm3431
        %vm3456 = vmand %vm3419, %vm3429
        %vm3457 = vmand %vm3419, %vm3430
        %vm3458 = vmand %vm3419, %vm3431
        %vm3459 = vmand %vm3420, %vm3429
        %vm3460 = vmand %vm3420, %vm3430
        %vm3461 = vmand %vm3420, %vm3431
        %vm3462 = vmand %vm3421, %vm3429
        %vm3463 = vmand %vm3421, %vm3430
        %vm3464 = vmand %vm3421, %vm3431
        %vm3465 = vmand %vm3422, %vm3429
        %vm3466 = vmand %vm3422, %vm3430
        %vm3467 = vmand %vm3422, %vm3431
        %vm3468 = vmand %vm3423, %vm3429
        %vm3469 = vmand %vm3423, %vm3430
        %vm3470 = vmand %vm3423, %vm3431
        %vm3471 = vmand %vm3424, %vm3429
        %vm3472 = vmand %vm3424, %vm3430
        %vm3473 = vmand %vm3424, %vm3431
        %vm3474 = vmand %vm3425, %vm3429
        %vm3475 = vmand %vm3425, %vm3430
        %vm3476 = vmand %vm3425, %vm3431
        %vm3477 = vmand %vm3426, %vm3429
        %vm3478 = vmand %vm3426, %vm3430
        %vm3479 = vmand %vm3426, %vm3431
        %vm3480 = vmand %vm3427, %vm3429
        %vm3481 = vmand %vm3427, %vm3430
        %vm3482 = vmand %vm3427, %vm3431
        %vm3483 = vmand %vm3428, %vm3429
        %vm3484 = vmand %vm3428, %vm3430
        %vm3485 = vmand %vm3428, %vm3431
        %vm3486 = vcmp.lt.s32.totalorder %v3372, 17
        %vm3487 = vcmp.lt.s32.totalorder %v3373, 17
        %vm3488 = vcmp.lt.s32.totalorder %v3374, 17
        %vm3489 = vmand %vm3432, %vm3486
        %vm3490 = vmand %vm3433, %vm3487
        %vm3491 = vmand %vm3434, %vm3488
        %vm3492 = vmand %vm3435, %vm3486
        %vm3493 = vmand %vm3436, %vm3487
        %vm3494 = vmand %vm3437, %vm3488
        %vm3495 = vmand %vm3438, %vm3486
        %vm3496 = vmand %vm3439, %vm3487
        %vm3497 = vmand %vm3440, %vm3488
        %vm3498 = vmand %vm3441, %vm3486
        %vm3499 = vmand %vm3442, %vm3487
        %vm3500 = vmand %vm3443, %vm3488
        %vm3501 = vmand %vm3444, %vm3486
        %vm3502 = vmand %vm3445, %vm3487
        %vm3503 = vmand %vm3446, %vm3488
        %vm3504 = vmand %vm3447, %vm3486
        %vm3505 = vmand %vm3448, %vm3487
        %vm3506 = vmand %vm3449, %vm3488
        %vm3507 = vmand %vm3450, %vm3486
        %vm3508 = vmand %vm3451, %vm3487
        %vm3509 = vmand %vm3452, %vm3488
        %vm3510 = vmand %vm3453, %vm3486
        %vm3511 = vmand %vm3454, %vm3487
        %vm3512 = vmand %vm3455, %vm3488
        %vm3513 = vmand %vm3456, %vm3486
        %vm3514 = vmand %vm3457, %vm3487
        %vm3515 = vmand %vm3458, %vm3488
        %vm3516 = vmand %vm3459, %vm3486
        %vm3517 = vmand %vm3460, %vm3487
        %vm3518 = vmand %vm3461, %vm3488
        %vm3519 = vmand %vm3462, %vm3486
        %vm3520 = vmand %vm3463, %vm3487
        %vm3521 = vmand %vm3464, %vm3488
        %vm3522 = vmand %vm3465, %vm3486
        %vm3523 = vmand %vm3466, %vm3487
        %vm3524 = vmand %vm3467, %vm3488
        %vm3525 = vmand %vm3468, %vm3486
        %vm3526 = vmand %vm3469, %vm3487
        %vm3527 = vmand %vm3470, %vm3488
        %vm3528 = vmand %vm3471, %vm3486
        %vm3529 = vmand %vm3472, %vm3487
        %vm3530 = vmand %vm3473, %vm3488
        %vm3531 = vmand %vm3474, %vm3486
        %vm3532 = vmand %vm3475, %vm3487
        %vm3533 = vmand %vm3476, %vm3488
        %vm3534 = vmand %vm3477, %vm3486
        %vm3535 = vmand %vm3478, %vm3487
        %vm3536 = vmand %vm3479, %vm3488
        %vm3537 = vmand %vm3480, %vm3486
        %vm3538 = vmand %vm3481, %vm3487
        %vm3539 = vmand %vm3482, %vm3488
        %vm3540 = vmand %vm3483, %vm3486
        %vm3541 = vmand %vm3484, %vm3487
        %vm3542 = vmand %vm3485, %vm3488
        %v3543 = vsel %vm3489, 1, 0
        %v3544 = vsel %vm3490, 1, 0
        %v3545 = vsel %vm3491, 1, 0
        %v3546 = vsel %vm3492, 1, 0
        %v3547 = vsel %vm3493, 1, 0
        %v3548 = vsel %vm3494, 1, 0
        %v3549 = vsel %vm3495, 1, 0
        %v3550 = vsel %vm3496, 1, 0
        %v3551 = vsel %vm3497, 1, 0
        %v3552 = vsel %vm3498, 1, 0
        %v3553 = vsel %vm3499, 1, 0
        %v3554 = vsel %vm3500, 1, 0
        %v3555 = vsel %vm3501, 1, 0
        %v3556 = vsel %vm3502, 1, 0
        %v3557 = vsel %vm3503, 1, 0
        %v3558 = vsel %vm3504, 1, 0
        %v3559 = vsel %vm3505, 1, 0
        %v3560 = vsel %vm3506, 1, 0
        %v3561 = vsel %vm3507, 1, 0
        %v3562 = vsel %vm3508, 1, 0
        %v3563 = vsel %vm3509, 1, 0
        %v3564 = vsel %vm3510, 1, 0
        %v3565 = vsel %vm3511, 1, 0
        %v3566 = vsel %vm3512, 1, 0
        %v3567 = vsel %vm3513, 1, 0
        %v3568 = vsel %vm3514, 1, 0
        %v3569 = vsel %vm3515, 1, 0
        %v3570 = vsel %vm3516, 1, 0
        %v3571 = vsel %vm3517, 1, 0
        %v3572 = vsel %vm3518, 1, 0
        %v3573 = vsel %vm3519, 1, 0
        %v3574 = vsel %vm3520, 1, 0
        %v3575 = vsel %vm3521, 1, 0
        %v3576 = vsel %vm3522, 1, 0
        %v3577 = vsel %vm3523, 1, 0
        %v3578 = vsel %vm3524, 1, 0
        %v3579 = vsel %vm3525, 1, 0
        %v3580 = vsel %vm3526, 1, 0
        %v3581 = vsel %vm3527, 1, 0
        %v3582 = vsel %vm3528, 1, 0
        %v3583 = vsel %vm3529, 1, 0
        %v3584 = vsel %vm3530, 1, 0
        %v3585 = vsel %vm3531, 1, 0
        %v3586 = vsel %vm3532, 1, 0
        %v3587 = vsel %vm3533, 1, 0
        %v3588 = vsel %vm3534, 1, 0
        %v3589 = vsel %vm3535, 1, 0
        %v3590 = vsel %vm3536, 1, 0
        %v3591 = vsel %vm3537, 1, 0
        %v3592 = vsel %vm3538, 1, 0
        %v3593 = vsel %vm3539, 1, 0
        %v3594 = vsel %vm3540, 1, 0
        %v3595 = vsel %vm3541, 1, 0
        %v3596 = vsel %vm3542, 1, 0
        %v3597 = vcvt.s32.f32 %v3543
        %v3598 = vcvt.s32.f32 %v3544
        %v3599 = vcvt.s32.f32 %v3545
        %v3600 = vcvt.s32.f32 %v3546
        %v3601 = vcvt.s32.f32 %v3547
        %v3602 = vcvt.s32.f32 %v3548
        %v3603 = vcvt.s32.f32 %v3549
        %v3604 = vcvt.s32.f32 %v3550
        %v3605 = vcvt.s32.f32 %v3551
        %v3606 = vcvt.s32.f32 %v3552
        %v3607 = vcvt.s32.f32 %v3553
        %v3608 = vcvt.s32.f32 %v3554
        %v3609 = vcvt.s32.f32 %v3555
        %v3610 = vcvt.s32.f32 %v3556
        %v3611 = vcvt.s32.f32 %v3557
        %v3612 = vcvt.s32.f32 %v3558
        %v3613 = vcvt.s32.f32 %v3559
        %v3614 = vcvt.s32.f32 %v3560
        %v3615 = vcvt.s32.f32 %v3561
        %v3616 = vcvt.s32.f32 %v3562
        %v3617 = vcvt.s32.f32 %v3563
        %v3618 = vcvt.s32.f32 %v3564
        %v3619 = vcvt.s32.f32 %v3565
        %v3620 = vcvt.s32.f32 %v3566
        %v3621 = vcvt.s32.f32 %v3567
        %v3622 = vcvt.s32.f32 %v3568
        %v3623 = vcvt.s32.f32 %v3569
        %v3624 = vcvt.s32.f32 %v3570
        %v3625 = vcvt.s32.f32 %v3571
        %v3626 = vcvt.s32.f32 %v3572
        %v3627 = vcvt.s32.f32 %v3573
        %v3628 = vcvt.s32.f32 %v3574
        %v3629 = vcvt.s32.f32 %v3575
        %v3630 = vcvt.s32.f32 %v3576
        %v3631 = vcvt.s32.f32 %v3577
        %v3632 = vcvt.s32.f32 %v3578
        %v3633 = vcvt.s32.f32 %v3579
        %v3634 = vcvt.s32.f32 %v3580
        %v3635 = vcvt.s32.f32 %v3581
        %v3636 = vcvt.s32.f32 %v3582
        %v3637 = vcvt.s32.f32 %v3583
        %v3638 = vcvt.s32.f32 %v3584
        %v3639 = vcvt.s32.f32 %v3585
        %v3640 = vcvt.s32.f32 %v3586
        %v3641 = vcvt.s32.f32 %v3587
        %v3642 = vcvt.s32.f32 %v3588
        %v3643 = vcvt.s32.f32 %v3589
        %v3644 = vcvt.s32.f32 %v3590
        %v3645 = vcvt.s32.f32 %v3591
        %v3646 = vcvt.s32.f32 %v3592
        %v3647 = vcvt.s32.f32 %v3593
        %v3648 = vcvt.s32.f32 %v3594
        %v3649 = vcvt.s32.f32 %v3595
        %v3650 = vcvt.s32.f32 %v3596
        %v3706 = vunpack.c.l.s4 269488144
        %v3707 = vunpack.c.0.s8 %v3706
        %v3708 = vlaneseq
        %v3709 = vshrl.u32 %v3708, 7
        %v3710 = vsub.s32 %v3707, %v3709
        %v3711 = vrot.slane %v3597, %v3710
        %v3713 = vunpack.c.l.s4 842150450
        %v3714 = vunpack.c.0.s8 %v3713
        %v3715 = vlaneseq
        %v3716 = vshrl.u32 %v3715, 7
        %v3717 = vsub.s32 %v3714, %v3716
        %v3718 = vrot.slane %v3597, %v3717
        %v3720 = vunpack.c.l.s4 1414812756
        %v3721 = vunpack.c.0.s8 %v3720
        %v3722 = vlaneseq
        %v3723 = vshrl.u32 %v3722, 7
        %v3724 = vsub.s32 %v3721, %v3723
        %v3725 = vrot.slane %v3597, %v3724
        %v3727 = vunpack.c.l.s4 1987475062
        %v3728 = vunpack.c.0.s8 %v3727
        %v3729 = vlaneseq
        %v3730 = vshrl.u32 %v3729, 7
        %v3731 = vsub.s32 %v3728, %v3730
        %v3732 = vrot.slane %v3597, %v3731
        %v3734 = vunpack.c.l.s4 269488144
        %v3735 = vunpack.c.0.s8 %v3734
        %v3736 = vlaneseq
        %v3737 = vshrl.u32 %v3736, 7
        %v3738 = vsub.s32 %v3735, %v3737
        %v3739 = vrot.slane %v3598, %v3738
        %v3741 = vunpack.c.l.s4 842150450
        %v3742 = vunpack.c.0.s8 %v3741
        %v3743 = vlaneseq
        %v3744 = vshrl.u32 %v3743, 7
        %v3745 = vsub.s32 %v3742, %v3744
        %v3746 = vrot.slane %v3598, %v3745
        %v3748 = vunpack.c.l.s4 1414812756
        %v3749 = vunpack.c.0.s8 %v3748
        %v3750 = vlaneseq
        %v3751 = vshrl.u32 %v3750, 7
        %v3752 = vsub.s32 %v3749, %v3751
        %v3753 = vrot.slane %v3598, %v3752
        %v3755 = vunpack.c.l.s4 1987475062
        %v3756 = vunpack.c.0.s8 %v3755
        %v3757 = vlaneseq
        %v3758 = vshrl.u32 %v3757, 7
        %v3759 = vsub.s32 %v3756, %v3758
        %v3760 = vrot.slane %v3598, %v3759
        %v3762 = vunpack.c.l.s4 269488144
        %v3763 = vunpack.c.0.s8 %v3762
        %v3764 = vlaneseq
        %v3765 = vshrl.u32 %v3764, 7
        %v3766 = vsub.s32 %v3763, %v3765
        %v3767 = vrot.slane %v3599, %v3766
        %v3769 = vunpack.c.l.s4 269488144
        %v3770 = vunpack.c.0.s8 %v3769
        %v3771 = vlaneseq
        %v3772 = vshrl.u32 %v3771, 7
        %v3773 = vsub.s32 %v3770, %v3772
        %v3774 = vrot.slane %v3600, %v3773
        %v3776 = vunpack.c.l.s4 842150450
        %v3777 = vunpack.c.0.s8 %v3776
        %v3778 = vlaneseq
        %v3779 = vshrl.u32 %v3778, 7
        %v3780 = vsub.s32 %v3777, %v3779
        %v3781 = vrot.slane %v3600, %v3780
        %v3783 = vunpack.c.l.s4 1414812756
        %v3784 = vunpack.c.0.s8 %v3783
        %v3785 = vlaneseq
        %v3786 = vshrl.u32 %v3785, 7
        %v3787 = vsub.s32 %v3784, %v3786
        %v3788 = vrot.slane %v3600, %v3787
        %v3790 = vunpack.c.l.s4 1987475062
        %v3791 = vunpack.c.0.s8 %v3790
        %v3792 = vlaneseq
        %v3793 = vshrl.u32 %v3792, 7
        %v3794 = vsub.s32 %v3791, %v3793
        %v3795 = vrot.slane %v3600, %v3794
        %v3797 = vunpack.c.l.s4 269488144
        %v3798 = vunpack.c.0.s8 %v3797
        %v3799 = vlaneseq
        %v3800 = vshrl.u32 %v3799, 7
        %v3801 = vsub.s32 %v3798, %v3800
        %v3802 = vrot.slane %v3601, %v3801
        %v3804 = vunpack.c.l.s4 842150450
        %v3805 = vunpack.c.0.s8 %v3804
        %v3806 = vlaneseq
        %v3807 = vshrl.u32 %v3806, 7
        %v3808 = vsub.s32 %v3805, %v3807
        %v3809 = vrot.slane %v3601, %v3808
        %v3811 = vunpack.c.l.s4 1414812756
        %v3812 = vunpack.c.0.s8 %v3811
        %v3813 = vlaneseq
        %v3814 = vshrl.u32 %v3813, 7
        %v3815 = vsub.s32 %v3812, %v3814
        %v3816 = vrot.slane %v3601, %v3815
        %v3818 = vunpack.c.l.s4 1987475062
        %v3819 = vunpack.c.0.s8 %v3818
        %v3820 = vlaneseq
        %v3821 = vshrl.u32 %v3820, 7
        %v3822 = vsub.s32 %v3819, %v3821
        %v3823 = vrot.slane %v3601, %v3822
        %v3825 = vunpack.c.l.s4 269488144
        %v3826 = vunpack.c.0.s8 %v3825
        %v3827 = vlaneseq
        %v3828 = vshrl.u32 %v3827, 7
        %v3829 = vsub.s32 %v3826, %v3828
        %v3830 = vrot.slane %v3602, %v3829
        %v3832 = vunpack.c.l.s4 269488144
        %v3833 = vunpack.c.0.s8 %v3832
        %v3834 = vlaneseq
        %v3835 = vshrl.u32 %v3834, 7
        %v3836 = vsub.s32 %v3833, %v3835
        %v3837 = vrot.slane %v3603, %v3836
        %v3839 = vunpack.c.l.s4 842150450
        %v3840 = vunpack.c.0.s8 %v3839
        %v3841 = vlaneseq
        %v3842 = vshrl.u32 %v3841, 7
        %v3843 = vsub.s32 %v3840, %v3842
        %v3844 = vrot.slane %v3603, %v3843
        %v3846 = vunpack.c.l.s4 1414812756
        %v3847 = vunpack.c.0.s8 %v3846
        %v3848 = vlaneseq
        %v3849 = vshrl.u32 %v3848, 7
        %v3850 = vsub.s32 %v3847, %v3849
        %v3851 = vrot.slane %v3603, %v3850
        %v3853 = vunpack.c.l.s4 1987475062
        %v3854 = vunpack.c.0.s8 %v3853
        %v3855 = vlaneseq
        %v3856 = vshrl.u32 %v3855, 7
        %v3857 = vsub.s32 %v3854, %v3856
        %v3858 = vrot.slane %v3603, %v3857
        %v3860 = vunpack.c.l.s4 269488144
        %v3861 = vunpack.c.0.s8 %v3860
        %v3862 = vlaneseq
        %v3863 = vshrl.u32 %v3862, 7
        %v3864 = vsub.s32 %v3861, %v3863
        %v3865 = vrot.slane %v3604, %v3864
        %v3867 = vunpack.c.l.s4 842150450
        %v3868 = vunpack.c.0.s8 %v3867
        %v3869 = vlaneseq
        %v3870 = vshrl.u32 %v3869, 7
        %v3871 = vsub.s32 %v3868, %v3870
        %v3872 = vrot.slane %v3604, %v3871
        %v3874 = vunpack.c.l.s4 1414812756
        %v3875 = vunpack.c.0.s8 %v3874
        %v3876 = vlaneseq
        %v3877 = vshrl.u32 %v3876, 7
        %v3878 = vsub.s32 %v3875, %v3877
        %v3879 = vrot.slane %v3604, %v3878
        %v3881 = vunpack.c.l.s4 1987475062
        %v3882 = vunpack.c.0.s8 %v3881
        %v3883 = vlaneseq
        %v3884 = vshrl.u32 %v3883, 7
        %v3885 = vsub.s32 %v3882, %v3884
        %v3886 = vrot.slane %v3604, %v3885
        %v3888 = vunpack.c.l.s4 269488144
        %v3889 = vunpack.c.0.s8 %v3888
        %v3890 = vlaneseq
        %v3891 = vshrl.u32 %v3890, 7
        %v3892 = vsub.s32 %v3889, %v3891
        %v3893 = vrot.slane %v3605, %v3892
        %v3895 = vunpack.c.l.s4 269488144
        %v3896 = vunpack.c.0.s8 %v3895
        %v3897 = vlaneseq
        %v3898 = vshrl.u32 %v3897, 7
        %v3899 = vsub.s32 %v3896, %v3898
        %v3900 = vrot.slane %v3606, %v3899
        %v3902 = vunpack.c.l.s4 842150450
        %v3903 = vunpack.c.0.s8 %v3902
        %v3904 = vlaneseq
        %v3905 = vshrl.u32 %v3904, 7
        %v3906 = vsub.s32 %v3903, %v3905
        %v3907 = vrot.slane %v3606, %v3906
        %v3909 = vunpack.c.l.s4 1414812756
        %v3910 = vunpack.c.0.s8 %v3909
        %v3911 = vlaneseq
        %v3912 = vshrl.u32 %v3911, 7
        %v3913 = vsub.s32 %v3910, %v3912
        %v3914 = vrot.slane %v3606, %v3913
        %v3916 = vunpack.c.l.s4 1987475062
        %v3917 = vunpack.c.0.s8 %v3916
        %v3918 = vlaneseq
        %v3919 = vshrl.u32 %v3918, 7
        %v3920 = vsub.s32 %v3917, %v3919
        %v3921 = vrot.slane %v3606, %v3920
        %v3923 = vunpack.c.l.s4 269488144
        %v3924 = vunpack.c.0.s8 %v3923
        %v3925 = vlaneseq
        %v3926 = vshrl.u32 %v3925, 7
        %v3927 = vsub.s32 %v3924, %v3926
        %v3928 = vrot.slane %v3607, %v3927
        %v3930 = vunpack.c.l.s4 842150450
        %v3931 = vunpack.c.0.s8 %v3930
        %v3932 = vlaneseq
        %v3933 = vshrl.u32 %v3932, 7
        %v3934 = vsub.s32 %v3931, %v3933
        %v3935 = vrot.slane %v3607, %v3934
        %v3937 = vunpack.c.l.s4 1414812756
        %v3938 = vunpack.c.0.s8 %v3937
        %v3939 = vlaneseq
        %v3940 = vshrl.u32 %v3939, 7
        %v3941 = vsub.s32 %v3938, %v3940
        %v3942 = vrot.slane %v3607, %v3941
        %v3944 = vunpack.c.l.s4 1987475062
        %v3945 = vunpack.c.0.s8 %v3944
        %v3946 = vlaneseq
        %v3947 = vshrl.u32 %v3946, 7
        %v3948 = vsub.s32 %v3945, %v3947
        %v3949 = vrot.slane %v3607, %v3948
        %v3951 = vunpack.c.l.s4 269488144
        %v3952 = vunpack.c.0.s8 %v3951
        %v3953 = vlaneseq
        %v3954 = vshrl.u32 %v3953, 7
        %v3955 = vsub.s32 %v3952, %v3954
        %v3956 = vrot.slane %v3608, %v3955
        %v3958 = vunpack.c.l.s4 269488144
        %v3959 = vunpack.c.0.s8 %v3958
        %v3960 = vlaneseq
        %v3961 = vshrl.u32 %v3960, 7
        %v3962 = vsub.s32 %v3959, %v3961
        %v3963 = vrot.slane %v3609, %v3962
        %v3965 = vunpack.c.l.s4 842150450
        %v3966 = vunpack.c.0.s8 %v3965
        %v3967 = vlaneseq
        %v3968 = vshrl.u32 %v3967, 7
        %v3969 = vsub.s32 %v3966, %v3968
        %v3970 = vrot.slane %v3609, %v3969
        %v3972 = vunpack.c.l.s4 1414812756
        %v3973 = vunpack.c.0.s8 %v3972
        %v3974 = vlaneseq
        %v3975 = vshrl.u32 %v3974, 7
        %v3976 = vsub.s32 %v3973, %v3975
        %v3977 = vrot.slane %v3609, %v3976
        %v3979 = vunpack.c.l.s4 1987475062
        %v3980 = vunpack.c.0.s8 %v3979
        %v3981 = vlaneseq
        %v3982 = vshrl.u32 %v3981, 7
        %v3983 = vsub.s32 %v3980, %v3982
        %v3984 = vrot.slane %v3609, %v3983
        %v3986 = vunpack.c.l.s4 269488144
        %v3987 = vunpack.c.0.s8 %v3986
        %v3988 = vlaneseq
        %v3989 = vshrl.u32 %v3988, 7
        %v3990 = vsub.s32 %v3987, %v3989
        %v3991 = vrot.slane %v3610, %v3990
        %v3993 = vunpack.c.l.s4 842150450
        %v3994 = vunpack.c.0.s8 %v3993
        %v3995 = vlaneseq
        %v3996 = vshrl.u32 %v3995, 7
        %v3997 = vsub.s32 %v3994, %v3996
        %v3998 = vrot.slane %v3610, %v3997
        %v4000 = vunpack.c.l.s4 1414812756
        %v4001 = vunpack.c.0.s8 %v4000
        %v4002 = vlaneseq
        %v4003 = vshrl.u32 %v4002, 7
        %v4004 = vsub.s32 %v4001, %v4003
        %v4005 = vrot.slane %v3610, %v4004
        %v4007 = vunpack.c.l.s4 1987475062
        %v4008 = vunpack.c.0.s8 %v4007
        %v4009 = vlaneseq
        %v4010 = vshrl.u32 %v4009, 7
        %v4011 = vsub.s32 %v4008, %v4010
        %v4012 = vrot.slane %v3610, %v4011
        %v4014 = vunpack.c.l.s4 269488144
        %v4015 = vunpack.c.0.s8 %v4014
        %v4016 = vlaneseq
        %v4017 = vshrl.u32 %v4016, 7
        %v4018 = vsub.s32 %v4015, %v4017
        %v4019 = vrot.slane %v3611, %v4018
        %v4021 = vunpack.c.l.s4 269488144
        %v4022 = vunpack.c.0.s8 %v4021
        %v4023 = vlaneseq
        %v4024 = vshrl.u32 %v4023, 7
        %v4025 = vsub.s32 %v4022, %v4024
        %v4026 = vrot.slane %v3612, %v4025
        %v4028 = vunpack.c.l.s4 842150450
        %v4029 = vunpack.c.0.s8 %v4028
        %v4030 = vlaneseq
        %v4031 = vshrl.u32 %v4030, 7
        %v4032 = vsub.s32 %v4029, %v4031
        %v4033 = vrot.slane %v3612, %v4032
        %v4035 = vunpack.c.l.s4 1414812756
        %v4036 = vunpack.c.0.s8 %v4035
        %v4037 = vlaneseq
        %v4038 = vshrl.u32 %v4037, 7
        %v4039 = vsub.s32 %v4036, %v4038
        %v4040 = vrot.slane %v3612, %v4039
        %v4042 = vunpack.c.l.s4 1987475062
        %v4043 = vunpack.c.0.s8 %v4042
        %v4044 = vlaneseq
        %v4045 = vshrl.u32 %v4044, 7
        %v4046 = vsub.s32 %v4043, %v4045
        %v4047 = vrot.slane %v3612, %v4046
        %v4049 = vunpack.c.l.s4 269488144
        %v4050 = vunpack.c.0.s8 %v4049
        %v4051 = vlaneseq
        %v4052 = vshrl.u32 %v4051, 7
        %v4053 = vsub.s32 %v4050, %v4052
        %v4054 = vrot.slane %v3613, %v4053
        %v4056 = vunpack.c.l.s4 842150450
        %v4057 = vunpack.c.0.s8 %v4056
        %v4058 = vlaneseq
        %v4059 = vshrl.u32 %v4058, 7
        %v4060 = vsub.s32 %v4057, %v4059
        %v4061 = vrot.slane %v3613, %v4060
        %v4063 = vunpack.c.l.s4 1414812756
        %v4064 = vunpack.c.0.s8 %v4063
        %v4065 = vlaneseq
        %v4066 = vshrl.u32 %v4065, 7
        %v4067 = vsub.s32 %v4064, %v4066
        %v4068 = vrot.slane %v3613, %v4067
        %v4070 = vunpack.c.l.s4 1987475062
        %v4071 = vunpack.c.0.s8 %v4070
        %v4072 = vlaneseq
        %v4073 = vshrl.u32 %v4072, 7
        %v4074 = vsub.s32 %v4071, %v4073
        %v4075 = vrot.slane %v3613, %v4074
        %v4077 = vunpack.c.l.s4 269488144
        %v4078 = vunpack.c.0.s8 %v4077
        %v4079 = vlaneseq
        %v4080 = vshrl.u32 %v4079, 7
        %v4081 = vsub.s32 %v4078, %v4080
        %v4082 = vrot.slane %v3614, %v4081
        %v4084 = vunpack.c.l.s4 269488144
        %v4085 = vunpack.c.0.s8 %v4084
        %v4086 = vlaneseq
        %v4087 = vshrl.u32 %v4086, 7
        %v4088 = vsub.s32 %v4085, %v4087
        %v4089 = vrot.slane %v3615, %v4088
        %v4091 = vunpack.c.l.s4 842150450
        %v4092 = vunpack.c.0.s8 %v4091
        %v4093 = vlaneseq
        %v4094 = vshrl.u32 %v4093, 7
        %v4095 = vsub.s32 %v4092, %v4094
        %v4096 = vrot.slane %v3615, %v4095
        %v4098 = vunpack.c.l.s4 1414812756
        %v4099 = vunpack.c.0.s8 %v4098
        %v4100 = vlaneseq
        %v4101 = vshrl.u32 %v4100, 7
        %v4102 = vsub.s32 %v4099, %v4101
        %v4103 = vrot.slane %v3615, %v4102
        %v4105 = vunpack.c.l.s4 1987475062
        %v4106 = vunpack.c.0.s8 %v4105
        %v4107 = vlaneseq
        %v4108 = vshrl.u32 %v4107, 7
        %v4109 = vsub.s32 %v4106, %v4108
        %v4110 = vrot.slane %v3615, %v4109
        %v4112 = vunpack.c.l.s4 269488144
        %v4113 = vunpack.c.0.s8 %v4112
        %v4114 = vlaneseq
        %v4115 = vshrl.u32 %v4114, 7
        %v4116 = vsub.s32 %v4113, %v4115
        %v4117 = vrot.slane %v3616, %v4116
        %v4119 = vunpack.c.l.s4 842150450
        %v4120 = vunpack.c.0.s8 %v4119
        %v4121 = vlaneseq
        %v4122 = vshrl.u32 %v4121, 7
        %v4123 = vsub.s32 %v4120, %v4122
        %v4124 = vrot.slane %v3616, %v4123
        %v4126 = vunpack.c.l.s4 1414812756
        %v4127 = vunpack.c.0.s8 %v4126
        %v4128 = vlaneseq
        %v4129 = vshrl.u32 %v4128, 7
        %v4130 = vsub.s32 %v4127, %v4129
        %v4131 = vrot.slane %v3616, %v4130
        %v4133 = vunpack.c.l.s4 1987475062
        %v4134 = vunpack.c.0.s8 %v4133
        %v4135 = vlaneseq
        %v4136 = vshrl.u32 %v4135, 7
        %v4137 = vsub.s32 %v4134, %v4136
        %v4138 = vrot.slane %v3616, %v4137
        %v4140 = vunpack.c.l.s4 269488144
        %v4141 = vunpack.c.0.s8 %v4140
        %v4142 = vlaneseq
        %v4143 = vshrl.u32 %v4142, 7
        %v4144 = vsub.s32 %v4141, %v4143
        %v4145 = vrot.slane %v3617, %v4144
        %v4147 = vunpack.c.l.s4 269488144
        %v4148 = vunpack.c.0.s8 %v4147
        %v4149 = vlaneseq
        %v4150 = vshrl.u32 %v4149, 7
        %v4151 = vsub.s32 %v4148, %v4150
        %v4152 = vrot.slane %v3618, %v4151
        %v4154 = vunpack.c.l.s4 842150450
        %v4155 = vunpack.c.0.s8 %v4154
        %v4156 = vlaneseq
        %v4157 = vshrl.u32 %v4156, 7
        %v4158 = vsub.s32 %v4155, %v4157
        %v4159 = vrot.slane %v3618, %v4158
        %v4161 = vunpack.c.l.s4 1414812756
        %v4162 = vunpack.c.0.s8 %v4161
        %v4163 = vlaneseq
        %v4164 = vshrl.u32 %v4163, 7
        %v4165 = vsub.s32 %v4162, %v4164
        %v4166 = vrot.slane %v3618, %v4165
        %v4168 = vunpack.c.l.s4 1987475062
        %v4169 = vunpack.c.0.s8 %v4168
        %v4170 = vlaneseq
        %v4171 = vshrl.u32 %v4170, 7
        %v4172 = vsub.s32 %v4169, %v4171
        %v4173 = vrot.slane %v3618, %v4172
        %v4175 = vunpack.c.l.s4 269488144
        %v4176 = vunpack.c.0.s8 %v4175
        %v4177 = vlaneseq
        %v4178 = vshrl.u32 %v4177, 7
        %v4179 = vsub.s32 %v4176, %v4178
        %v4180 = vrot.slane %v3619, %v4179
        %v4182 = vunpack.c.l.s4 842150450
        %v4183 = vunpack.c.0.s8 %v4182
        %v4184 = vlaneseq
        %v4185 = vshrl.u32 %v4184, 7
        %v4186 = vsub.s32 %v4183, %v4185
        %v4187 = vrot.slane %v3619, %v4186
        %v4189 = vunpack.c.l.s4 1414812756
        %v4190 = vunpack.c.0.s8 %v4189
        %v4191 = vlaneseq
        %v4192 = vshrl.u32 %v4191, 7
        %v4193 = vsub.s32 %v4190, %v4192
        %v4194 = vrot.slane %v3619, %v4193
        %v4196 = vunpack.c.l.s4 1987475062
        %v4197 = vunpack.c.0.s8 %v4196
        %v4198 = vlaneseq
        %v4199 = vshrl.u32 %v4198, 7
        %v4200 = vsub.s32 %v4197, %v4199
        %v4201 = vrot.slane %v3619, %v4200
        %v4203 = vunpack.c.l.s4 269488144
        %v4204 = vunpack.c.0.s8 %v4203
        %v4205 = vlaneseq
        %v4206 = vshrl.u32 %v4205, 7
        %v4207 = vsub.s32 %v4204, %v4206
        %v4208 = vrot.slane %v3620, %v4207
        %v4210 = vunpack.c.l.s4 269488144
        %v4211 = vunpack.c.0.s8 %v4210
        %v4212 = vlaneseq
        %v4213 = vshrl.u32 %v4212, 7
        %v4214 = vsub.s32 %v4211, %v4213
        %v4215 = vrot.slane %v3621, %v4214
        %v4217 = vunpack.c.l.s4 842150450
        %v4218 = vunpack.c.0.s8 %v4217
        %v4219 = vlaneseq
        %v4220 = vshrl.u32 %v4219, 7
        %v4221 = vsub.s32 %v4218, %v4220
        %v4222 = vrot.slane %v3621, %v4221
        %v4224 = vunpack.c.l.s4 1414812756
        %v4225 = vunpack.c.0.s8 %v4224
        %v4226 = vlaneseq
        %v4227 = vshrl.u32 %v4226, 7
        %v4228 = vsub.s32 %v4225, %v4227
        %v4229 = vrot.slane %v3621, %v4228
        %v4231 = vunpack.c.l.s4 1987475062
        %v4232 = vunpack.c.0.s8 %v4231
        %v4233 = vlaneseq
        %v4234 = vshrl.u32 %v4233, 7
        %v4235 = vsub.s32 %v4232, %v4234
        %v4236 = vrot.slane %v3621, %v4235
        %v4238 = vunpack.c.l.s4 269488144
        %v4239 = vunpack.c.0.s8 %v4238
        %v4240 = vlaneseq
        %v4241 = vshrl.u32 %v4240, 7
        %v4242 = vsub.s32 %v4239, %v4241
        %v4243 = vrot.slane %v3622, %v4242
        %v4245 = vunpack.c.l.s4 842150450
        %v4246 = vunpack.c.0.s8 %v4245
        %v4247 = vlaneseq
        %v4248 = vshrl.u32 %v4247, 7
        %v4249 = vsub.s32 %v4246, %v4248
        %v4250 = vrot.slane %v3622, %v4249
        %v4252 = vunpack.c.l.s4 1414812756
        %v4253 = vunpack.c.0.s8 %v4252
        %v4254 = vlaneseq
        %v4255 = vshrl.u32 %v4254, 7
        %v4256 = vsub.s32 %v4253, %v4255
        %v4257 = vrot.slane %v3622, %v4256
        %v4259 = vunpack.c.l.s4 1987475062
        %v4260 = vunpack.c.0.s8 %v4259
        %v4261 = vlaneseq
        %v4262 = vshrl.u32 %v4261, 7
        %v4263 = vsub.s32 %v4260, %v4262
        %v4264 = vrot.slane %v3622, %v4263
        %v4266 = vunpack.c.l.s4 269488144
        %v4267 = vunpack.c.0.s8 %v4266
        %v4268 = vlaneseq
        %v4269 = vshrl.u32 %v4268, 7
        %v4270 = vsub.s32 %v4267, %v4269
        %v4271 = vrot.slane %v3623, %v4270
        %v4273 = vunpack.c.l.s4 269488144
        %v4274 = vunpack.c.0.s8 %v4273
        %v4275 = vlaneseq
        %v4276 = vshrl.u32 %v4275, 7
        %v4277 = vsub.s32 %v4274, %v4276
        %v4278 = vrot.slane %v3624, %v4277
        %v4280 = vunpack.c.l.s4 842150450
        %v4281 = vunpack.c.0.s8 %v4280
        %v4282 = vlaneseq
        %v4283 = vshrl.u32 %v4282, 7
        %v4284 = vsub.s32 %v4281, %v4283
        %v4285 = vrot.slane %v3624, %v4284
        %v4287 = vunpack.c.l.s4 1414812756
        %v4288 = vunpack.c.0.s8 %v4287
        %v4289 = vlaneseq
        %v4290 = vshrl.u32 %v4289, 7
        %v4291 = vsub.s32 %v4288, %v4290
        %v4292 = vrot.slane %v3624, %v4291
        %v4294 = vunpack.c.l.s4 1987475062
        %v4295 = vunpack.c.0.s8 %v4294
        %v4296 = vlaneseq
        %v4297 = vshrl.u32 %v4296, 7
        %v4298 = vsub.s32 %v4295, %v4297
        %v4299 = vrot.slane %v3624, %v4298
        %v4301 = vunpack.c.l.s4 269488144
        %v4302 = vunpack.c.0.s8 %v4301
        %v4303 = vlaneseq
        %v4304 = vshrl.u32 %v4303, 7
        %v4305 = vsub.s32 %v4302, %v4304
        %v4306 = vrot.slane %v3625, %v4305
        %v4308 = vunpack.c.l.s4 842150450
        %v4309 = vunpack.c.0.s8 %v4308
        %v4310 = vlaneseq
        %v4311 = vshrl.u32 %v4310, 7
        %v4312 = vsub.s32 %v4309, %v4311
        %v4313 = vrot.slane %v3625, %v4312
        %v4315 = vunpack.c.l.s4 1414812756
        %v4316 = vunpack.c.0.s8 %v4315
        %v4317 = vlaneseq
        %v4318 = vshrl.u32 %v4317, 7
        %v4319 = vsub.s32 %v4316, %v4318
        %v4320 = vrot.slane %v3625, %v4319
        %v4322 = vunpack.c.l.s4 1987475062
        %v4323 = vunpack.c.0.s8 %v4322
        %v4324 = vlaneseq
        %v4325 = vshrl.u32 %v4324, 7
        %v4326 = vsub.s32 %v4323, %v4325
        %v4327 = vrot.slane %v3625, %v4326
        %v4329 = vunpack.c.l.s4 269488144
        %v4330 = vunpack.c.0.s8 %v4329
        %v4331 = vlaneseq
        %v4332 = vshrl.u32 %v4331, 7
        %v4333 = vsub.s32 %v4330, %v4332
        %v4334 = vrot.slane %v3626, %v4333
        %v4336 = vunpack.c.l.s4 269488144
        %v4337 = vunpack.c.0.s8 %v4336
        %v4338 = vlaneseq
        %v4339 = vshrl.u32 %v4338, 7
        %v4340 = vsub.s32 %v4337, %v4339
        %v4341 = vrot.slane %v3627, %v4340
        %v4343 = vunpack.c.l.s4 842150450
        %v4344 = vunpack.c.0.s8 %v4343
        %v4345 = vlaneseq
        %v4346 = vshrl.u32 %v4345, 7
        %v4347 = vsub.s32 %v4344, %v4346
        %v4348 = vrot.slane %v3627, %v4347
        %v4350 = vunpack.c.l.s4 1414812756
        %v4351 = vunpack.c.0.s8 %v4350
        %v4352 = vlaneseq
        %v4353 = vshrl.u32 %v4352, 7
        %v4354 = vsub.s32 %v4351, %v4353
        %v4355 = vrot.slane %v3627, %v4354
        %v4357 = vunpack.c.l.s4 1987475062
        %v4358 = vunpack.c.0.s8 %v4357
        %v4359 = vlaneseq
        %v4360 = vshrl.u32 %v4359, 7
        %v4361 = vsub.s32 %v4358, %v4360
        %v4362 = vrot.slane %v3627, %v4361
        %v4364 = vunpack.c.l.s4 269488144
        %v4365 = vunpack.c.0.s8 %v4364
        %v4366 = vlaneseq
        %v4367 = vshrl.u32 %v4366, 7
        %v4368 = vsub.s32 %v4365, %v4367
        %v4369 = vrot.slane %v3628, %v4368
        %v4371 = vunpack.c.l.s4 842150450
        %v4372 = vunpack.c.0.s8 %v4371
        %v4373 = vlaneseq
        %v4374 = vshrl.u32 %v4373, 7
        %v4375 = vsub.s32 %v4372, %v4374
        %v4376 = vrot.slane %v3628, %v4375
        %v4378 = vunpack.c.l.s4 1414812756
        %v4379 = vunpack.c.0.s8 %v4378
        %v4380 = vlaneseq
        %v4381 = vshrl.u32 %v4380, 7
        %v4382 = vsub.s32 %v4379, %v4381
        %v4383 = vrot.slane %v3628, %v4382
        %v4385 = vunpack.c.l.s4 1987475062
        %v4386 = vunpack.c.0.s8 %v4385
        %v4387 = vlaneseq
        %v4388 = vshrl.u32 %v4387, 7
        %v4389 = vsub.s32 %v4386, %v4388
        %v4390 = vrot.slane %v3628, %v4389
        %v4392 = vunpack.c.l.s4 269488144
        %v4393 = vunpack.c.0.s8 %v4392
        %v4394 = vlaneseq
        %v4395 = vshrl.u32 %v4394, 7
        %v4396 = vsub.s32 %v4393, %v4395
        %v4397 = vrot.slane %v3629, %v4396
        %v4399 = vunpack.c.l.s4 269488144
        %v4400 = vunpack.c.0.s8 %v4399
        %v4401 = vlaneseq
        %v4402 = vshrl.u32 %v4401, 7
        %v4403 = vsub.s32 %v4400, %v4402
        %v4404 = vrot.slane %v3630, %v4403
        %v4406 = vunpack.c.l.s4 842150450
        %v4407 = vunpack.c.0.s8 %v4406
        %v4408 = vlaneseq
        %v4409 = vshrl.u32 %v4408, 7
        %v4410 = vsub.s32 %v4407, %v4409
        %v4411 = vrot.slane %v3630, %v4410
        %v4413 = vunpack.c.l.s4 1414812756
        %v4414 = vunpack.c.0.s8 %v4413
        %v4415 = vlaneseq
        %v4416 = vshrl.u32 %v4415, 7
        %v4417 = vsub.s32 %v4414, %v4416
        %v4418 = vrot.slane %v3630, %v4417
        %v4420 = vunpack.c.l.s4 1987475062
        %v4421 = vunpack.c.0.s8 %v4420
        %v4422 = vlaneseq
        %v4423 = vshrl.u32 %v4422, 7
        %v4424 = vsub.s32 %v4421, %v4423
        %v4425 = vrot.slane %v3630, %v4424
        %v4427 = vunpack.c.l.s4 269488144
        %v4428 = vunpack.c.0.s8 %v4427
        %v4429 = vlaneseq
        %v4430 = vshrl.u32 %v4429, 7
        %v4431 = vsub.s32 %v4428, %v4430
        %v4432 = vrot.slane %v3631, %v4431
        %v4434 = vunpack.c.l.s4 842150450
        %v4435 = vunpack.c.0.s8 %v4434
        %v4436 = vlaneseq
        %v4437 = vshrl.u32 %v4436, 7
        %v4438 = vsub.s32 %v4435, %v4437
        %v4439 = vrot.slane %v3631, %v4438
        %v4441 = vunpack.c.l.s4 1414812756
        %v4442 = vunpack.c.0.s8 %v4441
        %v4443 = vlaneseq
        %v4444 = vshrl.u32 %v4443, 7
        %v4445 = vsub.s32 %v4442, %v4444
        %v4446 = vrot.slane %v3631, %v4445
        %v4448 = vunpack.c.l.s4 1987475062
        %v4449 = vunpack.c.0.s8 %v4448
        %v4450 = vlaneseq
        %v4451 = vshrl.u32 %v4450, 7
        %v4452 = vsub.s32 %v4449, %v4451
        %v4453 = vrot.slane %v3631, %v4452
        %v4455 = vunpack.c.l.s4 269488144
        %v4456 = vunpack.c.0.s8 %v4455
        %v4457 = vlaneseq
        %v4458 = vshrl.u32 %v4457, 7
        %v4459 = vsub.s32 %v4456, %v4458
        %v4460 = vrot.slane %v3632, %v4459
        %v4462 = vunpack.c.l.s4 269488144
        %v4463 = vunpack.c.0.s8 %v4462
        %v4464 = vlaneseq
        %v4465 = vshrl.u32 %v4464, 7
        %v4466 = vsub.s32 %v4463, %v4465
        %v4467 = vrot.slane %v3633, %v4466
        %v4469 = vunpack.c.l.s4 842150450
        %v4470 = vunpack.c.0.s8 %v4469
        %v4471 = vlaneseq
        %v4472 = vshrl.u32 %v4471, 7
        %v4473 = vsub.s32 %v4470, %v4472
        %v4474 = vrot.slane %v3633, %v4473
        %v4476 = vunpack.c.l.s4 1414812756
        %v4477 = vunpack.c.0.s8 %v4476
        %v4478 = vlaneseq
        %v4479 = vshrl.u32 %v4478, 7
        %v4480 = vsub.s32 %v4477, %v4479
        %v4481 = vrot.slane %v3633, %v4480
        %v4483 = vunpack.c.l.s4 1987475062
        %v4484 = vunpack.c.0.s8 %v4483
        %v4485 = vlaneseq
        %v4486 = vshrl.u32 %v4485, 7
        %v4487 = vsub.s32 %v4484, %v4486
        %v4488 = vrot.slane %v3633, %v4487
        %v4490 = vunpack.c.l.s4 269488144
        %v4491 = vunpack.c.0.s8 %v4490
        %v4492 = vlaneseq
        %v4493 = vshrl.u32 %v4492, 7
        %v4494 = vsub.s32 %v4491, %v4493
        %v4495 = vrot.slane %v3634, %v4494
        %v4497 = vunpack.c.l.s4 842150450
        %v4498 = vunpack.c.0.s8 %v4497
        %v4499 = vlaneseq
        %v4500 = vshrl.u32 %v4499, 7
        %v4501 = vsub.s32 %v4498, %v4500
        %v4502 = vrot.slane %v3634, %v4501
        %v4504 = vunpack.c.l.s4 1414812756
        %v4505 = vunpack.c.0.s8 %v4504
        %v4506 = vlaneseq
        %v4507 = vshrl.u32 %v4506, 7
        %v4508 = vsub.s32 %v4505, %v4507
        %v4509 = vrot.slane %v3634, %v4508
        %v4511 = vunpack.c.l.s4 1987475062
        %v4512 = vunpack.c.0.s8 %v4511
        %v4513 = vlaneseq
        %v4514 = vshrl.u32 %v4513, 7
        %v4515 = vsub.s32 %v4512, %v4514
        %v4516 = vrot.slane %v3634, %v4515
        %v4518 = vunpack.c.l.s4 269488144
        %v4519 = vunpack.c.0.s8 %v4518
        %v4520 = vlaneseq
        %v4521 = vshrl.u32 %v4520, 7
        %v4522 = vsub.s32 %v4519, %v4521
        %v4523 = vrot.slane %v3635, %v4522
        %v4525 = vunpack.c.l.s4 269488144
        %v4526 = vunpack.c.0.s8 %v4525
        %v4527 = vlaneseq
        %v4528 = vshrl.u32 %v4527, 7
        %v4529 = vsub.s32 %v4526, %v4528
        %v4530 = vrot.slane %v3636, %v4529
        %v4532 = vunpack.c.l.s4 842150450
        %v4533 = vunpack.c.0.s8 %v4532
        %v4534 = vlaneseq
        %v4535 = vshrl.u32 %v4534, 7
        %v4536 = vsub.s32 %v4533, %v4535
        %v4537 = vrot.slane %v3636, %v4536
        %v4539 = vunpack.c.l.s4 1414812756
        %v4540 = vunpack.c.0.s8 %v4539
        %v4541 = vlaneseq
        %v4542 = vshrl.u32 %v4541, 7
        %v4543 = vsub.s32 %v4540, %v4542
        %v4544 = vrot.slane %v3636, %v4543
        %v4546 = vunpack.c.l.s4 1987475062
        %v4547 = vunpack.c.0.s8 %v4546
        %v4548 = vlaneseq
        %v4549 = vshrl.u32 %v4548, 7
        %v4550 = vsub.s32 %v4547, %v4549
        %v4551 = vrot.slane %v3636, %v4550
        %v4553 = vunpack.c.l.s4 269488144
        %v4554 = vunpack.c.0.s8 %v4553
        %v4555 = vlaneseq
        %v4556 = vshrl.u32 %v4555, 7
        %v4557 = vsub.s32 %v4554, %v4556
        %v4558 = vrot.slane %v3637, %v4557
        %v4560 = vunpack.c.l.s4 842150450
        %v4561 = vunpack.c.0.s8 %v4560
        %v4562 = vlaneseq
        %v4563 = vshrl.u32 %v4562, 7
        %v4564 = vsub.s32 %v4561, %v4563
        %v4565 = vrot.slane %v3637, %v4564
        %v4567 = vunpack.c.l.s4 1414812756
        %v4568 = vunpack.c.0.s8 %v4567
        %v4569 = vlaneseq
        %v4570 = vshrl.u32 %v4569, 7
        %v4571 = vsub.s32 %v4568, %v4570
        %v4572 = vrot.slane %v3637, %v4571
        %v4574 = vunpack.c.l.s4 1987475062
        %v4575 = vunpack.c.0.s8 %v4574
        %v4576 = vlaneseq
        %v4577 = vshrl.u32 %v4576, 7
        %v4578 = vsub.s32 %v4575, %v4577
        %v4579 = vrot.slane %v3637, %v4578
        %v4581 = vunpack.c.l.s4 269488144
        %v4582 = vunpack.c.0.s8 %v4581
        %v4583 = vlaneseq
        %v4584 = vshrl.u32 %v4583, 7
        %v4585 = vsub.s32 %v4582, %v4584
        %v4586 = vrot.slane %v3638, %v4585
        %v4588 = vunpack.c.l.s4 269488144
        %v4589 = vunpack.c.0.s8 %v4588
        %v4590 = vlaneseq
        %v4591 = vshrl.u32 %v4590, 7
        %v4592 = vsub.s32 %v4589, %v4591
        %v4593 = vrot.slane %v3639, %v4592
        %v4595 = vunpack.c.l.s4 842150450
        %v4596 = vunpack.c.0.s8 %v4595
        %v4597 = vlaneseq
        %v4598 = vshrl.u32 %v4597, 7
        %v4599 = vsub.s32 %v4596, %v4598
        %v4600 = vrot.slane %v3639, %v4599
        %v4602 = vunpack.c.l.s4 1414812756
        %v4603 = vunpack.c.0.s8 %v4602
        %v4604 = vlaneseq
        %v4605 = vshrl.u32 %v4604, 7
        %v4606 = vsub.s32 %v4603, %v4605
        %v4607 = vrot.slane %v3639, %v4606
        %v4609 = vunpack.c.l.s4 1987475062
        %v4610 = vunpack.c.0.s8 %v4609
        %v4611 = vlaneseq
        %v4612 = vshrl.u32 %v4611, 7
        %v4613 = vsub.s32 %v4610, %v4612
        %v4614 = vrot.slane %v3639, %v4613
        %v4616 = vunpack.c.l.s4 269488144
        %v4617 = vunpack.c.0.s8 %v4616
        %v4618 = vlaneseq
        %v4619 = vshrl.u32 %v4618, 7
        %v4620 = vsub.s32 %v4617, %v4619
        %v4621 = vrot.slane %v3640, %v4620
        %v4623 = vunpack.c.l.s4 842150450
        %v4624 = vunpack.c.0.s8 %v4623
        %v4625 = vlaneseq
        %v4626 = vshrl.u32 %v4625, 7
        %v4627 = vsub.s32 %v4624, %v4626
        %v4628 = vrot.slane %v3640, %v4627
        %v4630 = vunpack.c.l.s4 1414812756
        %v4631 = vunpack.c.0.s8 %v4630
        %v4632 = vlaneseq
        %v4633 = vshrl.u32 %v4632, 7
        %v4634 = vsub.s32 %v4631, %v4633
        %v4635 = vrot.slane %v3640, %v4634
        %v4637 = vunpack.c.l.s4 1987475062
        %v4638 = vunpack.c.0.s8 %v4637
        %v4639 = vlaneseq
        %v4640 = vshrl.u32 %v4639, 7
        %v4641 = vsub.s32 %v4638, %v4640
        %v4642 = vrot.slane %v3640, %v4641
        %v4644 = vunpack.c.l.s4 269488144
        %v4645 = vunpack.c.0.s8 %v4644
        %v4646 = vlaneseq
        %v4647 = vshrl.u32 %v4646, 7
        %v4648 = vsub.s32 %v4645, %v4647
        %v4649 = vrot.slane %v3641, %v4648
        %v4651 = vunpack.c.l.s4 269488144
        %v4652 = vunpack.c.0.s8 %v4651
        %v4653 = vlaneseq
        %v4654 = vshrl.u32 %v4653, 7
        %v4655 = vsub.s32 %v4652, %v4654
        %v4656 = vrot.slane %v3642, %v4655
        %v4658 = vunpack.c.l.s4 842150450
        %v4659 = vunpack.c.0.s8 %v4658
        %v4660 = vlaneseq
        %v4661 = vshrl.u32 %v4660, 7
        %v4662 = vsub.s32 %v4659, %v4661
        %v4663 = vrot.slane %v3642, %v4662
        %v4665 = vunpack.c.l.s4 1414812756
        %v4666 = vunpack.c.0.s8 %v4665
        %v4667 = vlaneseq
        %v4668 = vshrl.u32 %v4667, 7
        %v4669 = vsub.s32 %v4666, %v4668
        %v4670 = vrot.slane %v3642, %v4669
        %v4672 = vunpack.c.l.s4 1987475062
        %v4673 = vunpack.c.0.s8 %v4672
        %v4674 = vlaneseq
        %v4675 = vshrl.u32 %v4674, 7
        %v4676 = vsub.s32 %v4673, %v4675
        %v4677 = vrot.slane %v3642, %v4676
        %v4679 = vunpack.c.l.s4 269488144
        %v4680 = vunpack.c.0.s8 %v4679
        %v4681 = vlaneseq
        %v4682 = vshrl.u32 %v4681, 7
        %v4683 = vsub.s32 %v4680, %v4682
        %v4684 = vrot.slane %v3643, %v4683
        %v4686 = vunpack.c.l.s4 842150450
        %v4687 = vunpack.c.0.s8 %v4686
        %v4688 = vlaneseq
        %v4689 = vshrl.u32 %v4688, 7
        %v4690 = vsub.s32 %v4687, %v4689
        %v4691 = vrot.slane %v3643, %v4690
        %v4693 = vunpack.c.l.s4 1414812756
        %v4694 = vunpack.c.0.s8 %v4693
        %v4695 = vlaneseq
        %v4696 = vshrl.u32 %v4695, 7
        %v4697 = vsub.s32 %v4694, %v4696
        %v4698 = vrot.slane %v3643, %v4697
        %v4700 = vunpack.c.l.s4 1987475062
        %v4701 = vunpack.c.0.s8 %v4700
        %v4702 = vlaneseq
        %v4703 = vshrl.u32 %v4702, 7
        %v4704 = vsub.s32 %v4701, %v4703
        %v4705 = vrot.slane %v3643, %v4704
        %v4707 = vunpack.c.l.s4 269488144
        %v4708 = vunpack.c.0.s8 %v4707
        %v4709 = vlaneseq
        %v4710 = vshrl.u32 %v4709, 7
        %v4711 = vsub.s32 %v4708, %v4710
        %v4712 = vrot.slane %v3644, %v4711
        %v4714 = vunpack.c.l.s4 269488144
        %v4715 = vunpack.c.0.s8 %v4714
        %v4716 = vlaneseq
        %v4717 = vshrl.u32 %v4716, 7
        %v4718 = vsub.s32 %v4715, %v4717
        %v4719 = vrot.slane %v3645, %v4718
        %v4721 = vunpack.c.l.s4 842150450
        %v4722 = vunpack.c.0.s8 %v4721
        %v4723 = vlaneseq
        %v4724 = vshrl.u32 %v4723, 7
        %v4725 = vsub.s32 %v4722, %v4724
        %v4726 = vrot.slane %v3645, %v4725
        %v4728 = vunpack.c.l.s4 1414812756
        %v4729 = vunpack.c.0.s8 %v4728
        %v4730 = vlaneseq
        %v4731 = vshrl.u32 %v4730, 7
        %v4732 = vsub.s32 %v4729, %v4731
        %v4733 = vrot.slane %v3645, %v4732
        %v4735 = vunpack.c.l.s4 1987475062
        %v4736 = vunpack.c.0.s8 %v4735
        %v4737 = vlaneseq
        %v4738 = vshrl.u32 %v4737, 7
        %v4739 = vsub.s32 %v4736, %v4738
        %v4740 = vrot.slane %v3645, %v4739
        %v4742 = vunpack.c.l.s4 269488144
        %v4743 = vunpack.c.0.s8 %v4742
        %v4744 = vlaneseq
        %v4745 = vshrl.u32 %v4744, 7
        %v4746 = vsub.s32 %v4743, %v4745
        %v4747 = vrot.slane %v3646, %v4746
        %v4749 = vunpack.c.l.s4 842150450
        %v4750 = vunpack.c.0.s8 %v4749
        %v4751 = vlaneseq
        %v4752 = vshrl.u32 %v4751, 7
        %v4753 = vsub.s32 %v4750, %v4752
        %v4754 = vrot.slane %v3646, %v4753
        %v4756 = vunpack.c.l.s4 1414812756
        %v4757 = vunpack.c.0.s8 %v4756
        %v4758 = vlaneseq
        %v4759 = vshrl.u32 %v4758, 7
        %v4760 = vsub.s32 %v4757, %v4759
        %v4761 = vrot.slane %v3646, %v4760
        %v4763 = vunpack.c.l.s4 1987475062
        %v4764 = vunpack.c.0.s8 %v4763
        %v4765 = vlaneseq
        %v4766 = vshrl.u32 %v4765, 7
        %v4767 = vsub.s32 %v4764, %v4766
        %v4768 = vrot.slane %v3646, %v4767
        %v4770 = vunpack.c.l.s4 269488144
        %v4771 = vunpack.c.0.s8 %v4770
        %v4772 = vlaneseq
        %v4773 = vshrl.u32 %v4772, 7
        %v4774 = vsub.s32 %v4771, %v4773
        %v4775 = vrot.slane %v3647, %v4774
        %v4777 = vunpack.c.l.s4 269488144
        %v4778 = vunpack.c.0.s8 %v4777
        %v4779 = vlaneseq
        %v4780 = vshrl.u32 %v4779, 7
        %v4781 = vsub.s32 %v4778, %v4780
        %v4782 = vrot.slane %v3648, %v4781
        %v4784 = vunpack.c.l.s4 842150450
        %v4785 = vunpack.c.0.s8 %v4784
        %v4786 = vlaneseq
        %v4787 = vshrl.u32 %v4786, 7
        %v4788 = vsub.s32 %v4785, %v4787
        %v4789 = vrot.slane %v3648, %v4788
        %v4791 = vunpack.c.l.s4 1414812756
        %v4792 = vunpack.c.0.s8 %v4791
        %v4793 = vlaneseq
        %v4794 = vshrl.u32 %v4793, 7
        %v4795 = vsub.s32 %v4792, %v4794
        %v4796 = vrot.slane %v3648, %v4795
        %v4798 = vunpack.c.l.s4 1987475062
        %v4799 = vunpack.c.0.s8 %v4798
        %v4800 = vlaneseq
        %v4801 = vshrl.u32 %v4800, 7
        %v4802 = vsub.s32 %v4799, %v4801
        %v4803 = vrot.slane %v3648, %v4802
        %v4805 = vunpack.c.l.s4 269488144
        %v4806 = vunpack.c.0.s8 %v4805
        %v4807 = vlaneseq
        %v4808 = vshrl.u32 %v4807, 7
        %v4809 = vsub.s32 %v4806, %v4808
        %v4810 = vrot.slane %v3649, %v4809
        %v4812 = vunpack.c.l.s4 842150450
        %v4813 = vunpack.c.0.s8 %v4812
        %v4814 = vlaneseq
        %v4815 = vshrl.u32 %v4814, 7
        %v4816 = vsub.s32 %v4813, %v4815
        %v4817 = vrot.slane %v3649, %v4816
        %v4819 = vunpack.c.l.s4 1414812756
        %v4820 = vunpack.c.0.s8 %v4819
        %v4821 = vlaneseq
        %v4822 = vshrl.u32 %v4821, 7
        %v4823 = vsub.s32 %v4820, %v4822
        %v4824 = vrot.slane %v3649, %v4823
        %v4826 = vunpack.c.l.s4 1987475062
        %v4827 = vunpack.c.0.s8 %v4826
        %v4828 = vlaneseq
        %v4829 = vshrl.u32 %v4828, 7
        %v4830 = vsub.s32 %v4827, %v4829
        %v4831 = vrot.slane %v3649, %v4830
        %v4833 = vunpack.c.l.s4 269488144
        %v4834 = vunpack.c.0.s8 %v4833
        %v4835 = vlaneseq
        %v4836 = vshrl.u32 %v4835, 7
        %v4837 = vsub.s32 %v4834, %v4836
        %v4838 = vrot.slane %v3650, %v4837
        %v5001 = vmul.f32 %v2510, %v3711
        %v5002 = vmul.f32 %v2518, %v3718
        %v5003 = vmul.f32 %v2517, %v3725
        %v5004 = vmul.f32 %v2519, %v3732
        %v5005 = vmul.f32 %v2527, %v3739
        %v5006 = vmul.f32 %v2535, %v3746
        %v5007 = vmul.f32 %v2534, %v3753
        %v5008 = vmul.f32 %v2536, %v3760
        %v5009 = vmul.f32 %v2544, %v3767
        %v5010 = vmul.f32 %v2552, %v3774
        %v5011 = vmul.f32 %v2551, %v3781
        %v5012 = vmul.f32 %v2553, %v3788
        %v5013 = vmul.f32 %v2561, %v3795
        %v5014 = vmul.f32 %v2569, %v3802
        %v5015 = vmul.f32 %v2568, %v3809
        %v5016 = vmul.f32 %v2570, %v3816
        %v5017 = vmul.f32 %v2578, %v3823
        %v5018 = vmul.f32 %v2586, %v3830
        %v5019 = vmul.f32 %v2585, %v3837
        %v5020 = vmul.f32 %v2587, %v3844
        %v5021 = vmul.f32 %v2595, %v3851
        %v5022 = vmul.f32 %v2603, %v3858
        %v5023 = vmul.f32 %v2602, %v3865
        %v5024 = vmul.f32 %v2604, %v3872
        %v5025 = vmul.f32 %v2612, %v3879
        %v5026 = vmul.f32 %v2620, %v3886
        %v5027 = vmul.f32 %v2619, %v3893
        %v5028 = vmul.f32 %v2621, %v3900
        %v5029 = vmul.f32 %v2629, %v3907
        %v5030 = vmul.f32 %v2637, %v3914
        %v5031 = vmul.f32 %v2636, %v3921
        %v5032 = vmul.f32 %v2638, %v3928
        %v5033 = vmul.f32 %v2646, %v3935
        %v5034 = vmul.f32 %v2654, %v3942
        %v5035 = vmul.f32 %v2653, %v3949
        %v5036 = vmul.f32 %v2655, %v3956
        %v5037 = vmul.f32 %v2663, %v3963
        %v5038 = vmul.f32 %v2671, %v3970
        %v5039 = vmul.f32 %v2670, %v3977
        %v5040 = vmul.f32 %v2672, %v3984
        %v5041 = vmul.f32 %v2680, %v3991
        %v5042 = vmul.f32 %v2688, %v3998
        %v5043 = vmul.f32 %v2687, %v4005
        %v5044 = vmul.f32 %v2689, %v4012
        %v5045 = vmul.f32 %v2697, %v4019
        %v5046 = vmul.f32 %v2705, %v4026
        %v5047 = vmul.f32 %v2704, %v4033
        %v5048 = vmul.f32 %v2706, %v4040
        %v5049 = vmul.f32 %v2714, %v4047
        %v5050 = vmul.f32 %v2722, %v4054
        %v5051 = vmul.f32 %v2721, %v4061
        %v5052 = vmul.f32 %v2723, %v4068
        %v5053 = vmul.f32 %v2731, %v4075
        %v5054 = vmul.f32 %v2739, %v4082
        %v5055 = vmul.f32 %v2738, %v4089
        %v5056 = vmul.f32 %v2740, %v4096
        %v5057 = vmul.f32 %v2748, %v4103
        %v5058 = vmul.f32 %v2756, %v4110
        %v5059 = vmul.f32 %v2755, %v4117
        %v5060 = vmul.f32 %v2757, %v4124
        %v5061 = vmul.f32 %v2765, %v4131
        %v5062 = vmul.f32 %v2773, %v4138
        %v5063 = vmul.f32 %v2772, %v4145
        %v5064 = vmul.f32 %v2774, %v4152
        %v5065 = vmul.f32 %v2782, %v4159
        %v5066 = vmul.f32 %v2790, %v4166
        %v5067 = vmul.f32 %v2789, %v4173
        %v5068 = vmul.f32 %v2791, %v4180
        %v5069 = vmul.f32 %v2799, %v4187
        %v5070 = vmul.f32 %v2807, %v4194
        %v5071 = vmul.f32 %v2806, %v4201
        %v5072 = vmul.f32 %v2808, %v4208
        %v5073 = vmul.f32 %v2816, %v4215
        %v5074 = vmul.f32 %v2824, %v4222
        %v5075 = vmul.f32 %v2823, %v4229
        %v5076 = vmul.f32 %v2825, %v4236
        %v5077 = vmul.f32 %v2833, %v4243
        %v5078 = vmul.f32 %v2841, %v4250
        %v5079 = vmul.f32 %v2840, %v4257
        %v5080 = vmul.f32 %v2842, %v4264
        %v5081 = vmul.f32 %v2850, %v4271
        %v5082 = vmul.f32 %v2858, %v4278
        %v5083 = vmul.f32 %v2857, %v4285
        %v5084 = vmul.f32 %v2859, %v4292
        %v5085 = vmul.f32 %v2867, %v4299
        %v5086 = vmul.f32 %v2875, %v4306
        %v5087 = vmul.f32 %v2874, %v4313
        %v5088 = vmul.f32 %v2876, %v4320
        %v5089 = vmul.f32 %v2884, %v4327
        %v5090 = vmul.f32 %v2892, %v4334
        %v5091 = vmul.f32 %v2891, %v4341
        %v5092 = vmul.f32 %v2893, %v4348
        %v5093 = vmul.f32 %v2901, %v4355
        %v5094 = vmul.f32 %v2909, %v4362
        %v5095 = vmul.f32 %v2908, %v4369
        %v5096 = vmul.f32 %v2910, %v4376
        %v5097 = vmul.f32 %v2918, %v4383
        %v5098 = vmul.f32 %v2926, %v4390
        %v5099 = vmul.f32 %v2925, %v4397
        %v5100 = vmul.f32 %v2927, %v4404
        %v5101 = vmul.f32 %v2935, %v4411
        %v5102 = vmul.f32 %v2943, %v4418
        %v5103 = vmul.f32 %v2942, %v4425
        %v5104 = vmul.f32 %v2944, %v4432
        %v5105 = vmul.f32 %v2952, %v4439
        %v5106 = vmul.f32 %v2960, %v4446
        %v5107 = vmul.f32 %v2959, %v4453
        %v5108 = vmul.f32 %v2961, %v4460
        %v5109 = vmul.f32 %v2969, %v4467
        %v5110 = vmul.f32 %v2977, %v4474
        %v5111 = vmul.f32 %v2976, %v4481
        %v5112 = vmul.f32 %v2978, %v4488
        %v5113 = vmul.f32 %v2986, %v4495
        %v5114 = vmul.f32 %v2994, %v4502
        %v5115 = vmul.f32 %v2993, %v4509
        %v5116 = vmul.f32 %v2995, %v4516
        %v5117 = vmul.f32 %v3003, %v4523
        %v5118 = vmul.f32 %v3011, %v4530
        %v5119 = vmul.f32 %v3010, %v4537
        %v5120 = vmul.f32 %v3012, %v4544
        %v5121 = vmul.f32 %v3020, %v4551
        %v5122 = vmul.f32 %v3028, %v4558
        %v5123 = vmul.f32 %v3027, %v4565
        %v5124 = vmul.f32 %v3029, %v4572
        %v5125 = vmul.f32 %v3037, %v4579
        %v5126 = vmul.f32 %v3045, %v4586
        %v5127 = vmul.f32 %v3044, %v4593
        %v5128 = vmul.f32 %v3046, %v4600
        %v5129 = vmul.f32 %v3054, %v4607
        %v5130 = vmul.f32 %v3062, %v4614
        %v5131 = vmul.f32 %v3061, %v4621
        %v5132 = vmul.f32 %v3063, %v4628
        %v5133 = vmul.f32 %v3071, %v4635
        %v5134 = vmul.f32 %v3079, %v4642
        %v5135 = vmul.f32 %v3078, %v4649
        %v5136 = vmul.f32 %v3080, %v4656
        %v5137 = vmul.f32 %v3088, %v4663
        %v5138 = vmul.f32 %v3096, %v4670
        %v5139 = vmul.f32 %v3095, %v4677
        %v5140 = vmul.f32 %v3097, %v4684
        %v5141 = vmul.f32 %v3105, %v4691
        %v5142 = vmul.f32 %v3113, %v4698
        %v5143 = vmul.f32 %v3112, %v4705
        %v5144 = vmul.f32 %v3114, %v4712
        %v5145 = vmul.f32 %v3122, %v4719
        %v5146 = vmul.f32 %v3130, %v4726
        %v5147 = vmul.f32 %v3129, %v4733
        %v5148 = vmul.f32 %v3131, %v4740
        %v5149 = vmul.f32 %v3139, %v4747
        %v5150 = vmul.f32 %v3147, %v4754
        %v5151 = vmul.f32 %v3146, %v4761
        %v5152 = vmul.f32 %v3148, %v4768
        %v5153 = vmul.f32 %v3156, %v4775
        %v5154 = vmul.f32 %v3164, %v4782
        %v5155 = vmul.f32 %v3163, %v4789
        %v5156 = vmul.f32 %v3165, %v4796
        %v5157 = vmul.f32 %v3173, %v4803
        %v5158 = vmul.f32 %v3181, %v4810
        %v5159 = vmul.f32 %v3180, %v4817
        %v5160 = vmul.f32 %v3182, %v4824
        %v5161 = vmul.f32 %v3189, %v4831
        %v5162 = vmul.f32 %v3190, %v4838
        %v5163 = vld [vmem:[%s422] sm:$0x1]
        %v5164 = vlaneseq
        %v5165 = vshrl.u32 %v5164, 7
        %v5166 = vsub.s32 0, %v5165
        %v5167 = vrot.slane %v5163, %v5166
        %v5169 = vcombine.high %v5167, %v5167
        %v5171 = vunpack.c.l.s4 1983009808
        %v5172 = vunpack.c.0.s8 %v5171
        %v5173 = vlaneseq
        %v5174 = vshrl.u32 %v5173, 7
        %v5175 = vsub.s32 %v5172, %v5174
        %v5176 = vrot.slane %v5167, %v5175
        %v5178 = vunpack.c.l.s4 1983009808
        %v5179 = vunpack.c.0.s8 %v5178
        %v5180 = vlaneseq
        %v5181 = vshrl.u32 %v5180, 7
        %v5182 = vsub.s32 %v5179, %v5181
        %v5183 = vrot.slane %v5169, %v5182
        %v5184 = vcombine.high %v5176, %v5176
        %v5185 = vcombine.high %v5183, %v5183
        %v5190 = vmul.f32 %v5001, %v5176
        %v5191 = vmul.f32 %v5002, %v5184
        %v5192 = vmul.f32 %v5003, %v5183
        %v5193 = vmul.f32 %v5004, %v5185
        %v5194 = vmul.f32 %v5005, %v5176
        %v5195 = vmul.f32 %v5006, %v5184
        %v5196 = vmul.f32 %v5007, %v5183
        %v5197 = vmul.f32 %v5008, %v5185
        %v5198 = vmul.f32 %v5010, %v5176
        %v5199 = vmul.f32 %v5011, %v5184
        %v5200 = vmul.f32 %v5012, %v5183
        %v5201 = vmul.f32 %v5013, %v5185
        %v5202 = vmul.f32 %v5014, %v5176
        %v5203 = vmul.f32 %v5015, %v5184
        %v5204 = vmul.f32 %v5016, %v5183
        %v5205 = vmul.f32 %v5017, %v5185
        %v5206 = vmul.f32 %v5019, %v5176
        %v5207 = vmul.f32 %v5020, %v5184
        %v5208 = vmul.f32 %v5021, %v5183
        %v5209 = vmul.f32 %v5022, %v5185
        %v5210 = vmul.f32 %v5023, %v5176
        %v5211 = vmul.f32 %v5024, %v5184
        %v5212 = vmul.f32 %v5025, %v5183
        %v5213 = vmul.f32 %v5026, %v5185
        %v5214 = vmul.f32 %v5028, %v5176
        %v5215 = vmul.f32 %v5029, %v5184
        %v5216 = vmul.f32 %v5030, %v5183
        %v5217 = vmul.f32 %v5031, %v5185
        %v5218 = vmul.f32 %v5032, %v5176
        %v5219 = vmul.f32 %v5033, %v5184
        %v5220 = vmul.f32 %v5034, %v5183
        %v5221 = vmul.f32 %v5035, %v5185
        %v5222 = vmul.f32 %v5037, %v5176
        %v5223 = vmul.f32 %v5038, %v5184
        %v5224 = vmul.f32 %v5039, %v5183
        %v5225 = vmul.f32 %v5040, %v5185
        %v5226 = vmul.f32 %v5041, %v5176
        %v5227 = vmul.f32 %v5042, %v5184
        %v5228 = vmul.f32 %v5043, %v5183
        %v5229 = vmul.f32 %v5044, %v5185
        %v5230 = vmul.f32 %v5046, %v5176
        %v5231 = vmul.f32 %v5047, %v5184
        %v5232 = vmul.f32 %v5048, %v5183
        %v5233 = vmul.f32 %v5049, %v5185
        %v5234 = vmul.f32 %v5050, %v5176
        %v5235 = vmul.f32 %v5051, %v5184
        %v5236 = vmul.f32 %v5052, %v5183
        %v5237 = vmul.f32 %v5053, %v5185
        %v5238 = vmul.f32 %v5055, %v5176
        %v5239 = vmul.f32 %v5056, %v5184
        %v5240 = vmul.f32 %v5057, %v5183
        %v5241 = vmul.f32 %v5058, %v5185
        %v5242 = vmul.f32 %v5059, %v5176
        %v5243 = vmul.f32 %v5060, %v5184
        %v5244 = vmul.f32 %v5061, %v5183
        %v5245 = vmul.f32 %v5062, %v5185
        %v5246 = vmul.f32 %v5064, %v5176
        %v5247 = vmul.f32 %v5065, %v5184
        %v5248 = vmul.f32 %v5066, %v5183
        %v5249 = vmul.f32 %v5067, %v5185
        %v5250 = vmul.f32 %v5068, %v5176
        %v5251 = vmul.f32 %v5069, %v5184
        %v5252 = vmul.f32 %v5070, %v5183
        %v5253 = vmul.f32 %v5071, %v5185
        %v5254 = vmul.f32 %v5073, %v5176
        %v5255 = vmul.f32 %v5074, %v5184
        %v5256 = vmul.f32 %v5075, %v5183
        %v5257 = vmul.f32 %v5076, %v5185
        %v5258 = vmul.f32 %v5077, %v5176
        %v5259 = vmul.f32 %v5078, %v5184
        %v5260 = vmul.f32 %v5079, %v5183
        %v5261 = vmul.f32 %v5080, %v5185
        %v5262 = vmul.f32 %v5082, %v5176
        %v5263 = vmul.f32 %v5083, %v5184
        %v5264 = vmul.f32 %v5084, %v5183
        %v5265 = vmul.f32 %v5085, %v5185
        %v5266 = vmul.f32 %v5086, %v5176
        %v5267 = vmul.f32 %v5087, %v5184
        %v5268 = vmul.f32 %v5088, %v5183
        %v5269 = vmul.f32 %v5089, %v5185
        %v5270 = vmul.f32 %v5091, %v5176
        %v5271 = vmul.f32 %v5092, %v5184
        %v5272 = vmul.f32 %v5093, %v5183
        %v5273 = vmul.f32 %v5094, %v5185
        %v5274 = vmul.f32 %v5095, %v5176
        %v5275 = vmul.f32 %v5096, %v5184
        %v5276 = vmul.f32 %v5097, %v5183
        %v5277 = vmul.f32 %v5098, %v5185
        %v5278 = vmul.f32 %v5100, %v5176
        %v5279 = vmul.f32 %v5101, %v5184
        %v5280 = vmul.f32 %v5102, %v5183
        %v5281 = vmul.f32 %v5103, %v5185
        %v5282 = vmul.f32 %v5104, %v5176
        %v5283 = vmul.f32 %v5105, %v5184
        %v5284 = vmul.f32 %v5106, %v5183
        %v5285 = vmul.f32 %v5107, %v5185
        %v5286 = vmul.f32 %v5109, %v5176
        %v5287 = vmul.f32 %v5110, %v5184
        %v5288 = vmul.f32 %v5111, %v5183
        %v5289 = vmul.f32 %v5112, %v5185
        %v5290 = vmul.f32 %v5113, %v5176
        %v5291 = vmul.f32 %v5114, %v5184
        %v5292 = vmul.f32 %v5115, %v5183
        %v5293 = vmul.f32 %v5116, %v5185
        %v5294 = vmul.f32 %v5118, %v5176
        %v5295 = vmul.f32 %v5119, %v5184
        %v5296 = vmul.f32 %v5120, %v5183
        %v5297 = vmul.f32 %v5121, %v5185
        %v5298 = vmul.f32 %v5122, %v5176
        %v5299 = vmul.f32 %v5123, %v5184
        %v5300 = vmul.f32 %v5124, %v5183
        %v5301 = vmul.f32 %v5125, %v5185
        %v5302 = vmul.f32 %v5127, %v5176
        %v5303 = vmul.f32 %v5128, %v5184
        %v5304 = vmul.f32 %v5129, %v5183
        %v5305 = vmul.f32 %v5130, %v5185
        %v5306 = vmul.f32 %v5131, %v5176
        %v5307 = vmul.f32 %v5132, %v5184
        %v5308 = vmul.f32 %v5133, %v5183
        %v5309 = vmul.f32 %v5134, %v5185
        %v5310 = vmul.f32 %v5136, %v5176
        %v5311 = vmul.f32 %v5137, %v5184
        %v5312 = vmul.f32 %v5138, %v5183
        %v5313 = vmul.f32 %v5139, %v5185
        %v5314 = vmul.f32 %v5140, %v5176
        %v5315 = vmul.f32 %v5141, %v5184
        %v5316 = vmul.f32 %v5142, %v5183
        %v5317 = vmul.f32 %v5143, %v5185
        %v5318 = vadd.f32 %v5190, 0.0
        %v5319 = vadd.f32 %v5191, 0.0
        %v5320 = vadd.f32 %v5192, 0.0
        %v5321 = vadd.f32 %v5193, 0.0
        %v5322 = vadd.f32 %v5194, 0.0
        %v5323 = vadd.f32 %v5195, 0.0
        %v5324 = vadd.f32 %v5196, 0.0
        %v5325 = vadd.f32 %v5197, 0.0
        %v5326 = vadd.f32 %v5198, 0.0
        %v5327 = vadd.f32 %v5199, 0.0
        %v5328 = vadd.f32 %v5200, 0.0
        %v5329 = vadd.f32 %v5201, 0.0
        %v5330 = vadd.f32 %v5202, 0.0
        %v5331 = vadd.f32 %v5203, 0.0
        %v5332 = vadd.f32 %v5204, 0.0
        %v5333 = vadd.f32 %v5205, 0.0
        %v5334 = vadd.f32 %v5206, 0.0
        %v5335 = vadd.f32 %v5207, 0.0
        %v5336 = vadd.f32 %v5208, 0.0
        %v5337 = vadd.f32 %v5209, 0.0
        %v5338 = vadd.f32 %v5210, 0.0
        %v5339 = vadd.f32 %v5211, 0.0
        %v5340 = vadd.f32 %v5212, 0.0
        %v5341 = vadd.f32 %v5213, 0.0
        %v5342 = vadd.f32 %v5214, 0.0
        %v5343 = vadd.f32 %v5215, 0.0
        %v5344 = vadd.f32 %v5216, 0.0
        %v5345 = vadd.f32 %v5217, 0.0
        %v5346 = vadd.f32 %v5218, 0.0
        %v5347 = vadd.f32 %v5219, 0.0
        %v5348 = vadd.f32 %v5220, 0.0
        %v5349 = vadd.f32 %v5221, 0.0
        %v5350 = vadd.f32 %v5222, 0.0
        %v5351 = vadd.f32 %v5223, 0.0
        %v5352 = vadd.f32 %v5224, 0.0
        %v5353 = vadd.f32 %v5225, 0.0
        %v5354 = vadd.f32 %v5226, 0.0
        %v5355 = vadd.f32 %v5227, 0.0
        %v5356 = vadd.f32 %v5228, 0.0
        %v5357 = vadd.f32 %v5229, 0.0
        %v5358 = vadd.f32 %v5230, 0.0
        %v5359 = vadd.f32 %v5231, 0.0
        %v5360 = vadd.f32 %v5232, 0.0
        %v5361 = vadd.f32 %v5233, 0.0
        %v5362 = vadd.f32 %v5234, 0.0
        %v5363 = vadd.f32 %v5235, 0.0
        %v5364 = vadd.f32 %v5236, 0.0
        %v5365 = vadd.f32 %v5237, 0.0
        %v5366 = vadd.f32 %v5238, 0.0
        %v5367 = vadd.f32 %v5239, 0.0
        %v5368 = vadd.f32 %v5240, 0.0
        %v5369 = vadd.f32 %v5241, 0.0
        %v5370 = vadd.f32 %v5242, 0.0
        %v5371 = vadd.f32 %v5243, 0.0
        %v5372 = vadd.f32 %v5244, 0.0
        %v5373 = vadd.f32 %v5245, 0.0
        %v5374 = vadd.f32 %v5246, 0.0
        %v5375 = vadd.f32 %v5247, 0.0
        %v5376 = vadd.f32 %v5248, 0.0
        %v5377 = vadd.f32 %v5249, 0.0
        %v5378 = vadd.f32 %v5250, 0.0
        %v5379 = vadd.f32 %v5251, 0.0
        %v5380 = vadd.f32 %v5252, 0.0
        %v5381 = vadd.f32 %v5253, 0.0
        %v5382 = vadd.f32 %v5254, 0.0
        %v5383 = vadd.f32 %v5255, 0.0
        %v5384 = vadd.f32 %v5256, 0.0
        %v5385 = vadd.f32 %v5257, 0.0
        %v5386 = vadd.f32 %v5258, 0.0
        %v5387 = vadd.f32 %v5259, 0.0
        %v5388 = vadd.f32 %v5260, 0.0
        %v5389 = vadd.f32 %v5261, 0.0
        %v5390 = vadd.f32 %v5262, 0.0
        %v5391 = vadd.f32 %v5263, 0.0
        %v5392 = vadd.f32 %v5264, 0.0
        %v5393 = vadd.f32 %v5265, 0.0
        %v5394 = vadd.f32 %v5266, 0.0
        %v5395 = vadd.f32 %v5267, 0.0
        %v5396 = vadd.f32 %v5268, 0.0
        %v5397 = vadd.f32 %v5269, 0.0
        %v5398 = vadd.f32 %v5270, 0.0
        %v5399 = vadd.f32 %v5271, 0.0
        %v5400 = vadd.f32 %v5272, 0.0
        %v5401 = vadd.f32 %v5273, 0.0
        %v5402 = vadd.f32 %v5274, 0.0
        %v5403 = vadd.f32 %v5275, 0.0
        %v5404 = vadd.f32 %v5276, 0.0
        %v5405 = vadd.f32 %v5277, 0.0
        %v5406 = vadd.f32 %v5278, 0.0
        %v5407 = vadd.f32 %v5279, 0.0
        %v5408 = vadd.f32 %v5280, 0.0
        %v5409 = vadd.f32 %v5281, 0.0
        %v5410 = vadd.f32 %v5282, 0.0
        %v5411 = vadd.f32 %v5283, 0.0
        %v5412 = vadd.f32 %v5284, 0.0
        %v5413 = vadd.f32 %v5285, 0.0
        %v5414 = vadd.f32 %v5286, 0.0
        %v5415 = vadd.f32 %v5287, 0.0
        %v5416 = vadd.f32 %v5288, 0.0
        %v5417 = vadd.f32 %v5289, 0.0
        %v5418 = vadd.f32 %v5290, 0.0
        %v5419 = vadd.f32 %v5291, 0.0
        %v5420 = vadd.f32 %v5292, 0.0
        %v5421 = vadd.f32 %v5293, 0.0
        %v5422 = vadd.f32 %v5294, 0.0
        %v5423 = vadd.f32 %v5295, 0.0
        %v5424 = vadd.f32 %v5296, 0.0
        %v5425 = vadd.f32 %v5297, 0.0
        %v5426 = vadd.f32 %v5298, 0.0
        %v5427 = vadd.f32 %v5299, 0.0
        %v5428 = vadd.f32 %v5300, 0.0
        %v5429 = vadd.f32 %v5301, 0.0
        %v5430 = vadd.f32 %v5302, 0.0
        %v5431 = vadd.f32 %v5303, 0.0
        %v5432 = vadd.f32 %v5304, 0.0
        %v5433 = vadd.f32 %v5305, 0.0
        %v5434 = vadd.f32 %v5306, 0.0
        %v5435 = vadd.f32 %v5307, 0.0
        %v5436 = vadd.f32 %v5308, 0.0
        %v5437 = vadd.f32 %v5309, 0.0
        %v5438 = vadd.f32 %v5310, 0.0
        %v5439 = vadd.f32 %v5311, 0.0
        %v5440 = vadd.f32 %v5312, 0.0
        %v5441 = vadd.f32 %v5313, 0.0
        %v5442 = vadd.f32 %v5314, 0.0
        %v5443 = vadd.f32 %v5315, 0.0
        %v5444 = vadd.f32 %v5316, 0.0
        %v5445 = vadd.f32 %v5317, 0.0
        %v5446 = vld [vmem:[%s422 + $0x1] sm:$0x1]
        %v5447 = vlaneseq
        %v5448 = vshrl.u32 %v5447, 7
        %v5449 = vsub.s32 0, %v5448
        %v5450 = vrot.slane %v5446, %v5449
        %v5452 = vcombine.high %v5450, %v5450
        %v5454 = vunpack.c.l.s4 1983009808
        %v5455 = vunpack.c.0.s8 %v5454
        %v5456 = vlaneseq
        %v5457 = vshrl.u32 %v5456, 7
        %v5458 = vsub.s32 %v5455, %v5457
        %v5459 = vrot.slane %v5450, %v5458
        %v5461 = vunpack.c.l.s4 1983009808
        %v5462 = vunpack.c.0.s8 %v5461
        %v5463 = vlaneseq
        %v5464 = vshrl.u32 %v5463, 7
        %v5465 = vsub.s32 %v5462, %v5464
        %v5466 = vrot.slane %v5452, %v5465
        %v5467 = vcombine.high %v5459, %v5459
        %v5468 = vcombine.high %v5466, %v5466
        %vm5469 = vcmask 1040384
        %vm5470 = vcmask 1042434
        %vm5471 = vmor %vm5469, %vm5470
        %vm5472 = vcmask 1044484
        %vm5473 = vmor %vm5471, %vm5472
        %vm5474 = vcmask 1046534
        %vm5475 = vmor %vm5473, %vm5474
        %v5476 = vrot.slane %v5459, 7
        %v5477 = vrot.slane %v5476, 2
        %v5478 = vrot.slane %v5467, 7
        %v5479 = vsel %vm5475, %v5477, %v5478
        %v5480 = vrot.slane %v5478, 2
        %v5481 = vrot.slane %v5466, 7
        %v5482 = vsel %vm5475, %v5480, %v5481
        %v5483 = vrot.slane %v5481, 2
        %v5484 = vrot.slane %v5468, 7
        %v5485 = vsel %vm5475, %v5483, %v5484
        %v5486 = vrot.slane %v5484, 2
        %v5487 = vsel %vm5475, %v5486, %v5476
        %v5494 = vmul.f32 %v5001, %v5476
        %v5495 = vmul.f32 %v5002, %v5479
        %v5496 = vmul.f32 %v5003, %v5482
        %v5497 = vmul.f32 %v5004, %v5485
        %v5498 = vmul.f32 %v5005, %v5487
        %v5499 = vmul.f32 %v5006, %v5479
        %v5500 = vmul.f32 %v5007, %v5482
        %v5501 = vmul.f32 %v5008, %v5485
        %v5502 = vmul.f32 %v5009, %v5486
        %v5503 = vmul.f32 %v5010, %v5476
        %v5504 = vmul.f32 %v5011, %v5479
        %v5505 = vmul.f32 %v5012, %v5482
        %v5506 = vmul.f32 %v5013, %v5485
        %v5507 = vmul.f32 %v5014, %v5487
        %v5508 = vmul.f32 %v5015, %v5479
        %v5509 = vmul.f32 %v5016, %v5482
        %v5510 = vmul.f32 %v5017, %v5485
        %v5511 = vmul.f32 %v5018, %v5486
        %v5512 = vmul.f32 %v5019, %v5476
        %v5513 = vmul.f32 %v5020, %v5479
        %v5514 = vmul.f32 %v5021, %v5482
        %v5515 = vmul.f32 %v5022, %v5485
        %v5516 = vmul.f32 %v5023, %v5487
        %v5517 = vmul.f32 %v5024, %v5479
        %v5518 = vmul.f32 %v5025, %v5482
        %v5519 = vmul.f32 %v5026, %v5485
        %v5520 = vmul.f32 %v5027, %v5486
        %v5521 = vmul.f32 %v5028, %v5476
        %v5522 = vmul.f32 %v5029, %v5479
        %v5523 = vmul.f32 %v5030, %v5482
        %v5524 = vmul.f32 %v5031, %v5485
        %v5525 = vmul.f32 %v5032, %v5487
        %v5526 = vmul.f32 %v5033, %v5479
        %v5527 = vmul.f32 %v5034, %v5482
        %v5528 = vmul.f32 %v5035, %v5485
        %v5529 = vmul.f32 %v5036, %v5486
        %v5530 = vmul.f32 %v5037, %v5476
        %v5531 = vmul.f32 %v5038, %v5479
        %v5532 = vmul.f32 %v5039, %v5482
        %v5533 = vmul.f32 %v5040, %v5485
        %v5534 = vmul.f32 %v5041, %v5487
        %v5535 = vmul.f32 %v5042, %v5479
        %v5536 = vmul.f32 %v5043, %v5482
        %v5537 = vmul.f32 %v5044, %v5485
        %v5538 = vmul.f32 %v5045, %v5486
        %v5539 = vmul.f32 %v5046, %v5476
        %v5540 = vmul.f32 %v5047, %v5479
        %v5541 = vmul.f32 %v5048, %v5482
        %v5542 = vmul.f32 %v5049, %v5485
        %v5543 = vmul.f32 %v5050, %v5487
        %v5544 = vmul.f32 %v5051, %v5479
        %v5545 = vmul.f32 %v5052, %v5482
        %v5546 = vmul.f32 %v5053, %v5485
        %v5547 = vmul.f32 %v5054, %v5486
        %v5548 = vmul.f32 %v5055, %v5476
        %v5549 = vmul.f32 %v5056, %v5479
        %v5550 = vmul.f32 %v5057, %v5482
        %v5551 = vmul.f32 %v5058, %v5485
        %v5552 = vmul.f32 %v5059, %v5487
        %v5553 = vmul.f32 %v5060, %v5479
        %v5554 = vmul.f32 %v5061, %v5482
        %v5555 = vmul.f32 %v5062, %v5485
        %v5556 = vmul.f32 %v5063, %v5486
        %v5557 = vmul.f32 %v5064, %v5476
        %v5558 = vmul.f32 %v5065, %v5479
        %v5559 = vmul.f32 %v5066, %v5482
        %v5560 = vmul.f32 %v5067, %v5485
        %v5561 = vmul.f32 %v5068, %v5487
        %v5562 = vmul.f32 %v5069, %v5479
        %v5563 = vmul.f32 %v5070, %v5482
        %v5564 = vmul.f32 %v5071, %v5485
        %v5565 = vmul.f32 %v5072, %v5486
        %v5566 = vmul.f32 %v5073, %v5476
        %v5567 = vmul.f32 %v5074, %v5479
        %v5568 = vmul.f32 %v5075, %v5482
        %v5569 = vmul.f32 %v5076, %v5485
        %v5570 = vmul.f32 %v5077, %v5487
        %v5571 = vmul.f32 %v5078, %v5479
        %v5572 = vmul.f32 %v5079, %v5482
        %v5573 = vmul.f32 %v5080, %v5485
        %v5574 = vmul.f32 %v5081, %v5486
        %v5575 = vmul.f32 %v5082, %v5476
        %v5576 = vmul.f32 %v5083, %v5479
        %v5577 = vmul.f32 %v5084, %v5482
        %v5578 = vmul.f32 %v5085, %v5485
        %v5579 = vmul.f32 %v5086, %v5487
        %v5580 = vmul.f32 %v5087, %v5479
        %v5581 = vmul.f32 %v5088, %v5482
        %v5582 = vmul.f32 %v5089, %v5485
        %v5583 = vmul.f32 %v5090, %v5486
        %v5584 = vmul.f32 %v5091, %v5476
        %v5585 = vmul.f32 %v5092, %v5479
        %v5586 = vmul.f32 %v5093, %v5482
        %v5587 = vmul.f32 %v5094, %v5485
        %v5588 = vmul.f32 %v5095, %v5487
        %v5589 = vmul.f32 %v5096, %v5479
        %v5590 = vmul.f32 %v5097, %v5482
        %v5591 = vmul.f32 %v5098, %v5485
        %v5592 = vmul.f32 %v5099, %v5486
        %v5593 = vmul.f32 %v5100, %v5476
        %v5594 = vmul.f32 %v5101, %v5479
        %v5595 = vmul.f32 %v5102, %v5482
        %v5596 = vmul.f32 %v5103, %v5485
        %v5597 = vmul.f32 %v5104, %v5487
        %v5598 = vmul.f32 %v5105, %v5479
        %v5599 = vmul.f32 %v5106, %v5482
        %v5600 = vmul.f32 %v5107, %v5485
        %v5601 = vmul.f32 %v5108, %v5486
        %v5602 = vmul.f32 %v5109, %v5476
        %v5603 = vmul.f32 %v5110, %v5479
        %v5604 = vmul.f32 %v5111, %v5482
        %v5605 = vmul.f32 %v5112, %v5485
        %v5606 = vmul.f32 %v5113, %v5487
        %v5607 = vmul.f32 %v5114, %v5479
        %v5608 = vmul.f32 %v5115, %v5482
        %v5609 = vmul.f32 %v5116, %v5485
        %v5610 = vmul.f32 %v5117, %v5486
        %v5611 = vmul.f32 %v5118, %v5476
        %v5612 = vmul.f32 %v5119, %v5479
        %v5613 = vmul.f32 %v5120, %v5482
        %v5614 = vmul.f32 %v5121, %v5485
        %v5615 = vmul.f32 %v5122, %v5487
        %v5616 = vmul.f32 %v5123, %v5479
        %v5617 = vmul.f32 %v5124, %v5482
        %v5618 = vmul.f32 %v5125, %v5485
        %v5619 = vmul.f32 %v5126, %v5486
        %v5620 = vmul.f32 %v5127, %v5476
        %v5621 = vmul.f32 %v5128, %v5479
        %v5622 = vmul.f32 %v5129, %v5482
        %v5623 = vmul.f32 %v5130, %v5485
        %v5624 = vmul.f32 %v5131, %v5487
        %v5625 = vmul.f32 %v5132, %v5479
        %v5626 = vmul.f32 %v5133, %v5482
        %v5627 = vmul.f32 %v5134, %v5485
        %v5628 = vmul.f32 %v5135, %v5486
        %v5629 = vmul.f32 %v5136, %v5476
        %v5630 = vmul.f32 %v5137, %v5479
        %v5631 = vmul.f32 %v5138, %v5482
        %v5632 = vmul.f32 %v5139, %v5485
        %v5633 = vmul.f32 %v5140, %v5487
        %v5634 = vmul.f32 %v5141, %v5479
        %v5635 = vmul.f32 %v5142, %v5482
        %v5636 = vmul.f32 %v5143, %v5485
        %v5637 = vmul.f32 %v5144, %v5486
        %v5782 = vrot.slane %v5494, 7
        %v5783 = vrot.slane %v5782, 2
        %v5784 = vrot.slane %v5495, 7
        %v5785 = vsel %vm5475, %v5783, %v5784
        %v5786 = vrot.slane %v5784, 2
        %v5787 = vrot.slane %v5496, 7
        %v5788 = vsel %vm5475, %v5786, %v5787
        %v5789 = vrot.slane %v5787, 2
        %v5790 = vrot.slane %v5497, 7
        %v5791 = vsel %vm5475, %v5789, %v5790
        %v5792 = vrot.slane %v5790, 2
        %v5793 = vrot.slane %v5498, 7
        %v5794 = vsel %vm5475, %v5792, %v5793
        %v5795 = vrot.slane %v5793, 2
        %v5796 = vrot.slane %v5499, 7
        %v5797 = vsel %vm5475, %v5795, %v5796
        %v5798 = vrot.slane %v5796, 2
        %v5799 = vrot.slane %v5500, 7
        %v5800 = vsel %vm5475, %v5798, %v5799
        %v5801 = vrot.slane %v5799, 2
        %v5802 = vrot.slane %v5501, 7
        %v5803 = vsel %vm5475, %v5801, %v5802
        %v5804 = vrot.slane %v5802, 2
        %v5805 = vrot.slane %v5502, 7
        %v5806 = vsel %vm5475, %v5804, %v5805
        %v5807 = vrot.slane %v5503, 7
        %v5808 = vrot.slane %v5807, 2
        %v5809 = vrot.slane %v5504, 7
        %v5810 = vsel %vm5475, %v5808, %v5809
        %v5811 = vrot.slane %v5809, 2
        %v5812 = vrot.slane %v5505, 7
        %v5813 = vsel %vm5475, %v5811, %v5812
        %v5814 = vrot.slane %v5812, 2
        %v5815 = vrot.slane %v5506, 7
        %v5816 = vsel %vm5475, %v5814, %v5815
        %v5817 = vrot.slane %v5815, 2
        %v5818 = vrot.slane %v5507, 7
        %v5819 = vsel %vm5475, %v5817, %v5818
        %v5820 = vrot.slane %v5818, 2
        %v5821 = vrot.slane %v5508, 7
        %v5822 = vsel %vm5475, %v5820, %v5821
        %v5823 = vrot.slane %v5821, 2
        %v5824 = vrot.slane %v5509, 7
        %v5825 = vsel %vm5475, %v5823, %v5824
        %v5826 = vrot.slane %v5824, 2
        %v5827 = vrot.slane %v5510, 7
        %v5828 = vsel %vm5475, %v5826, %v5827
        %v5829 = vrot.slane %v5827, 2
        %v5830 = vrot.slane %v5511, 7
        %v5831 = vsel %vm5475, %v5829, %v5830
        %v5832 = vrot.slane %v5512, 7
        %v5833 = vrot.slane %v5832, 2
        %v5834 = vrot.slane %v5513, 7
        %v5835 = vsel %vm5475, %v5833, %v5834
        %v5836 = vrot.slane %v5834, 2
        %v5837 = vrot.slane %v5514, 7
        %v5838 = vsel %vm5475, %v5836, %v5837
        %v5839 = vrot.slane %v5837, 2
        %v5840 = vrot.slane %v5515, 7
        %v5841 = vsel %vm5475, %v5839, %v5840
        %v5842 = vrot.slane %v5840, 2
        %v5843 = vrot.slane %v5516, 7
        %v5844 = vsel %vm5475, %v5842, %v5843
        %v5845 = vrot.slane %v5843, 2
        %v5846 = vrot.slane %v5517, 7
        %v5847 = vsel %vm5475, %v5845, %v5846
        %v5848 = vrot.slane %v5846, 2
        %v5849 = vrot.slane %v5518, 7
        %v5850 = vsel %vm5475, %v5848, %v5849
        %v5851 = vrot.slane %v5849, 2
        %v5852 = vrot.slane %v5519, 7
        %v5853 = vsel %vm5475, %v5851, %v5852
        %v5854 = vrot.slane %v5852, 2
        %v5855 = vrot.slane %v5520, 7
        %v5856 = vsel %vm5475, %v5854, %v5855
        %v5857 = vrot.slane %v5521, 7
        %v5858 = vrot.slane %v5857, 2
        %v5859 = vrot.slane %v5522, 7
        %v5860 = vsel %vm5475, %v5858, %v5859
        %v5861 = vrot.slane %v5859, 2
        %v5862 = vrot.slane %v5523, 7
        %v5863 = vsel %vm5475, %v5861, %v5862
        %v5864 = vrot.slane %v5862, 2
        %v5865 = vrot.slane %v5524, 7
        %v5866 = vsel %vm5475, %v5864, %v5865
        %v5867 = vrot.slane %v5865, 2
        %v5868 = vrot.slane %v5525, 7
        %v5869 = vsel %vm5475, %v5867, %v5868
        %v5870 = vrot.slane %v5868, 2
        %v5871 = vrot.slane %v5526, 7
        %v5872 = vsel %vm5475, %v5870, %v5871
        %v5873 = vrot.slane %v5871, 2
        %v5874 = vrot.slane %v5527, 7
        %v5875 = vsel %vm5475, %v5873, %v5874
        %v5876 = vrot.slane %v5874, 2
        %v5877 = vrot.slane %v5528, 7
        %v5878 = vsel %vm5475, %v5876, %v5877
        %v5879 = vrot.slane %v5877, 2
        %v5880 = vrot.slane %v5529, 7
        %v5881 = vsel %vm5475, %v5879, %v5880
        %v5882 = vrot.slane %v5530, 7
        %v5883 = vrot.slane %v5882, 2
        %v5884 = vrot.slane %v5531, 7
        %v5885 = vsel %vm5475, %v5883, %v5884
        %v5886 = vrot.slane %v5884, 2
        %v5887 = vrot.slane %v5532, 7
        %v5888 = vsel %vm5475, %v5886, %v5887
        %v5889 = vrot.slane %v5887, 2
        %v5890 = vrot.slane %v5533, 7
        %v5891 = vsel %vm5475, %v5889, %v5890
        %v5892 = vrot.slane %v5890, 2
        %v5893 = vrot.slane %v5534, 7
        %v5894 = vsel %vm5475, %v5892, %v5893
        %v5895 = vrot.slane %v5893, 2
        %v5896 = vrot.slane %v5535, 7
        %v5897 = vsel %vm5475, %v5895, %v5896
        %v5898 = vrot.slane %v5896, 2
        %v5899 = vrot.slane %v5536, 7
        %v5900 = vsel %vm5475, %v5898, %v5899
        %v5901 = vrot.slane %v5899, 2
        %v5902 = vrot.slane %v5537, 7
        %v5903 = vsel %vm5475, %v5901, %v5902
        %v5904 = vrot.slane %v5902, 2
        %v5905 = vrot.slane %v5538, 7
        %v5906 = vsel %vm5475, %v5904, %v5905
        %v5907 = vrot.slane %v5539, 7
        %v5908 = vrot.slane %v5907, 2
        %v5909 = vrot.slane %v5540, 7
        %v5910 = vsel %vm5475, %v5908, %v5909
        %v5911 = vrot.slane %v5909, 2
        %v5912 = vrot.slane %v5541, 7
        %v5913 = vsel %vm5475, %v5911, %v5912
        %v5914 = vrot.slane %v5912, 2
        %v5915 = vrot.slane %v5542, 7
        %v5916 = vsel %vm5475, %v5914, %v5915
        %v5917 = vrot.slane %v5915, 2
        %v5918 = vrot.slane %v5543, 7
        %v5919 = vsel %vm5475, %v5917, %v5918
        %v5920 = vrot.slane %v5918, 2
        %v5921 = vrot.slane %v5544, 7
        %v5922 = vsel %vm5475, %v5920, %v5921
        %v5923 = vrot.slane %v5921, 2
        %v5924 = vrot.slane %v5545, 7
        %v5925 = vsel %vm5475, %v5923, %v5924
        %v5926 = vrot.slane %v5924, 2
        %v5927 = vrot.slane %v5546, 7
        %v5928 = vsel %vm5475, %v5926, %v5927
        %v5929 = vrot.slane %v5927, 2
        %v5930 = vrot.slane %v5547, 7
        %v5931 = vsel %vm5475, %v5929, %v5930
        %v5932 = vrot.slane %v5548, 7
        %v5933 = vrot.slane %v5932, 2
        %v5934 = vrot.slane %v5549, 7
        %v5935 = vsel %vm5475, %v5933, %v5934
        %v5936 = vrot.slane %v5934, 2
        %v5937 = vrot.slane %v5550, 7
        %v5938 = vsel %vm5475, %v5936, %v5937
        %v5939 = vrot.slane %v5937, 2
        %v5940 = vrot.slane %v5551, 7
        %v5941 = vsel %vm5475, %v5939, %v5940
        %v5942 = vrot.slane %v5940, 2
        %v5943 = vrot.slane %v5552, 7
        %v5944 = vsel %vm5475, %v5942, %v5943
        %v5945 = vrot.slane %v5943, 2
        %v5946 = vrot.slane %v5553, 7
        %v5947 = vsel %vm5475, %v5945, %v5946
        %v5948 = vrot.slane %v5946, 2
        %v5949 = vrot.slane %v5554, 7
        %v5950 = vsel %vm5475, %v5948, %v5949
        %v5951 = vrot.slane %v5949, 2
        %v5952 = vrot.slane %v5555, 7
        %v5953 = vsel %vm5475, %v5951, %v5952
        %v5954 = vrot.slane %v5952, 2
        %v5955 = vrot.slane %v5556, 7
        %v5956 = vsel %vm5475, %v5954, %v5955
        %v5957 = vrot.slane %v5557, 7
        %v5958 = vrot.slane %v5957, 2
        %v5959 = vrot.slane %v5558, 7
        %v5960 = vsel %vm5475, %v5958, %v5959
        %v5961 = vrot.slane %v5959, 2
        %v5962 = vrot.slane %v5559, 7
        %v5963 = vsel %vm5475, %v5961, %v5962
        %v5964 = vrot.slane %v5962, 2
        %v5965 = vrot.slane %v5560, 7
        %v5966 = vsel %vm5475, %v5964, %v5965
        %v5967 = vrot.slane %v5965, 2
        %v5968 = vrot.slane %v5561, 7
        %v5969 = vsel %vm5475, %v5967, %v5968
        %v5970 = vrot.slane %v5968, 2
        %v5971 = vrot.slane %v5562, 7
        %v5972 = vsel %vm5475, %v5970, %v5971
        %v5973 = vrot.slane %v5971, 2
        %v5974 = vrot.slane %v5563, 7
        %v5975 = vsel %vm5475, %v5973, %v5974
        %v5976 = vrot.slane %v5974, 2
        %v5977 = vrot.slane %v5564, 7
        %v5978 = vsel %vm5475, %v5976, %v5977
        %v5979 = vrot.slane %v5977, 2
        %v5980 = vrot.slane %v5565, 7
        %v5981 = vsel %vm5475, %v5979, %v5980
        %v5982 = vrot.slane %v5566, 7
        %v5983 = vrot.slane %v5982, 2
        %v5984 = vrot.slane %v5567, 7
        %v5985 = vsel %vm5475, %v5983, %v5984
        %v5986 = vrot.slane %v5984, 2
        %v5987 = vrot.slane %v5568, 7
        %v5988 = vsel %vm5475, %v5986, %v5987
        %v5989 = vrot.slane %v5987, 2
        %v5990 = vrot.slane %v5569, 7
        %v5991 = vsel %vm5475, %v5989, %v5990
        %v5992 = vrot.slane %v5990, 2
        %v5993 = vrot.slane %v5570, 7
        %v5994 = vsel %vm5475, %v5992, %v5993
        %v5995 = vrot.slane %v5993, 2
        %v5996 = vrot.slane %v5571, 7
        %v5997 = vsel %vm5475, %v5995, %v5996
        %v5998 = vrot.slane %v5996, 2
        %v5999 = vrot.slane %v5572, 7
        %v6000 = vsel %vm5475, %v5998, %v5999
        %v6001 = vrot.slane %v5999, 2
        %v6002 = vrot.slane %v5573, 7
        %v6003 = vsel %vm5475, %v6001, %v6002
        %v6004 = vrot.slane %v6002, 2
        %v6005 = vrot.slane %v5574, 7
        %v6006 = vsel %vm5475, %v6004, %v6005
        %v6007 = vrot.slane %v5575, 7
        %v6008 = vrot.slane %v6007, 2
        %v6009 = vrot.slane %v5576, 7
        %v6010 = vsel %vm5475, %v6008, %v6009
        %v6011 = vrot.slane %v6009, 2
        %v6012 = vrot.slane %v5577, 7
        %v6013 = vsel %vm5475, %v6011, %v6012
        %v6014 = vrot.slane %v6012, 2
        %v6015 = vrot.slane %v5578, 7
        %v6016 = vsel %vm5475, %v6014, %v6015
        %v6017 = vrot.slane %v6015, 2
        %v6018 = vrot.slane %v5579, 7
        %v6019 = vsel %vm5475, %v6017, %v6018
        %v6020 = vrot.slane %v6018, 2
        %v6021 = vrot.slane %v5580, 7
        %v6022 = vsel %vm5475, %v6020, %v6021
        %v6023 = vrot.slane %v6021, 2
        %v6024 = vrot.slane %v5581, 7
        %v6025 = vsel %vm5475, %v6023, %v6024
        %v6026 = vrot.slane %v6024, 2
        %v6027 = vrot.slane %v5582, 7
        %v6028 = vsel %vm5475, %v6026, %v6027
        %v6029 = vrot.slane %v6027, 2
        %v6030 = vrot.slane %v5583, 7
        %v6031 = vsel %vm5475, %v6029, %v6030
        %v6032 = vrot.slane %v5584, 7
        %v6033 = vrot.slane %v6032, 2
        %v6034 = vrot.slane %v5585, 7
        %v6035 = vsel %vm5475, %v6033, %v6034
        %v6036 = vrot.slane %v6034, 2
        %v6037 = vrot.slane %v5586, 7
        %v6038 = vsel %vm5475, %v6036, %v6037
        %v6039 = vrot.slane %v6037, 2
        %v6040 = vrot.slane %v5587, 7
        %v6041 = vsel %vm5475, %v6039, %v6040
        %v6042 = vrot.slane %v6040, 2
        %v6043 = vrot.slane %v5588, 7
        %v6044 = vsel %vm5475, %v6042, %v6043
        %v6045 = vrot.slane %v6043, 2
        %v6046 = vrot.slane %v5589, 7
        %v6047 = vsel %vm5475, %v6045, %v6046
        %v6048 = vrot.slane %v6046, 2
        %v6049 = vrot.slane %v5590, 7
        %v6050 = vsel %vm5475, %v6048, %v6049
        %v6051 = vrot.slane %v6049, 2
        %v6052 = vrot.slane %v5591, 7
        %v6053 = vsel %vm5475, %v6051, %v6052
        %v6054 = vrot.slane %v6052, 2
        %v6055 = vrot.slane %v5592, 7
        %v6056 = vsel %vm5475, %v6054, %v6055
        %v6057 = vrot.slane %v5593, 7
        %v6058 = vrot.slane %v6057, 2
        %v6059 = vrot.slane %v5594, 7
        %v6060 = vsel %vm5475, %v6058, %v6059
        %v6061 = vrot.slane %v6059, 2
        %v6062 = vrot.slane %v5595, 7
        %v6063 = vsel %vm5475, %v6061, %v6062
        %v6064 = vrot.slane %v6062, 2
        %v6065 = vrot.slane %v5596, 7
        %v6066 = vsel %vm5475, %v6064, %v6065
        %v6067 = vrot.slane %v6065, 2
        %v6068 = vrot.slane %v5597, 7
        %v6069 = vsel %vm5475, %v6067, %v6068
        %v6070 = vrot.slane %v6068, 2
        %v6071 = vrot.slane %v5598, 7
        %v6072 = vsel %vm5475, %v6070, %v6071
        %v6073 = vrot.slane %v6071, 2
        %v6074 = vrot.slane %v5599, 7
        %v6075 = vsel %vm5475, %v6073, %v6074
        %v6076 = vrot.slane %v6074, 2
        %v6077 = vrot.slane %v5600, 7
        %v6078 = vsel %vm5475, %v6076, %v6077
        %v6079 = vrot.slane %v6077, 2
        %v6080 = vrot.slane %v5601, 7
        %v6081 = vsel %vm5475, %v6079, %v6080
        %v6082 = vrot.slane %v5602, 7
        %v6083 = vrot.slane %v6082, 2
        %v6084 = vrot.slane %v5603, 7
        %v6085 = vsel %vm5475, %v6083, %v6084
        %v6086 = vrot.slane %v6084, 2
        %v6087 = vrot.slane %v5604, 7
        %v6088 = vsel %vm5475, %v6086, %v6087
        %v6089 = vrot.slane %v6087, 2
        %v6090 = vrot.slane %v5605, 7
        %v6091 = vsel %vm5475, %v6089, %v6090
        %v6092 = vrot.slane %v6090, 2
        %v6093 = vrot.slane %v5606, 7
        %v6094 = vsel %vm5475, %v6092, %v6093
        %v6095 = vrot.slane %v6093, 2
        %v6096 = vrot.slane %v5607, 7
        %v6097 = vsel %vm5475, %v6095, %v6096
        %v6098 = vrot.slane %v6096, 2
        %v6099 = vrot.slane %v5608, 7
        %v6100 = vsel %vm5475, %v6098, %v6099
        %v6101 = vrot.slane %v6099, 2
        %v6102 = vrot.slane %v5609, 7
        %v6103 = vsel %vm5475, %v6101, %v6102
        %v6104 = vrot.slane %v6102, 2
        %v6105 = vrot.slane %v5610, 7
        %v6106 = vsel %vm5475, %v6104, %v6105
        %v6107 = vrot.slane %v5611, 7
        %v6108 = vrot.slane %v6107, 2
        %v6109 = vrot.slane %v5612, 7
        %v6110 = vsel %vm5475, %v6108, %v6109
        %v6111 = vrot.slane %v6109, 2
        %v6112 = vrot.slane %v5613, 7
        %v6113 = vsel %vm5475, %v6111, %v6112
        %v6114 = vrot.slane %v6112, 2
        %v6115 = vrot.slane %v5614, 7
        %v6116 = vsel %vm5475, %v6114, %v6115
        %v6117 = vrot.slane %v6115, 2
        %v6118 = vrot.slane %v5615, 7
        %v6119 = vsel %vm5475, %v6117, %v6118
        %v6120 = vrot.slane %v6118, 2
        %v6121 = vrot.slane %v5616, 7
        %v6122 = vsel %vm5475, %v6120, %v6121
        %v6123 = vrot.slane %v6121, 2
        %v6124 = vrot.slane %v5617, 7
        %v6125 = vsel %vm5475, %v6123, %v6124
        %v6126 = vrot.slane %v6124, 2
        %v6127 = vrot.slane %v5618, 7
        %v6128 = vsel %vm5475, %v6126, %v6127
        %v6129 = vrot.slane %v6127, 2
        %v6130 = vrot.slane %v5619, 7
        %v6131 = vsel %vm5475, %v6129, %v6130
        %v6132 = vrot.slane %v5620, 7
        %v6133 = vrot.slane %v6132, 2
        %v6134 = vrot.slane %v5621, 7
        %v6135 = vsel %vm5475, %v6133, %v6134
        %v6136 = vrot.slane %v6134, 2
        %v6137 = vrot.slane %v5622, 7
        %v6138 = vsel %vm5475, %v6136, %v6137
        %v6139 = vrot.slane %v6137, 2
        %v6140 = vrot.slane %v5623, 7
        %v6141 = vsel %vm5475, %v6139, %v6140
        %v6142 = vrot.slane %v6140, 2
        %v6143 = vrot.slane %v5624, 7
        %v6144 = vsel %vm5475, %v6142, %v6143
        %v6145 = vrot.slane %v6143, 2
        %v6146 = vrot.slane %v5625, 7
        %v6147 = vsel %vm5475, %v6145, %v6146
        %v6148 = vrot.slane %v6146, 2
        %v6149 = vrot.slane %v5626, 7
        %v6150 = vsel %vm5475, %v6148, %v6149
        %v6151 = vrot.slane %v6149, 2
        %v6152 = vrot.slane %v5627, 7
        %v6153 = vsel %vm5475, %v6151, %v6152
        %v6154 = vrot.slane %v6152, 2
        %v6155 = vrot.slane %v5628, 7
        %v6156 = vsel %vm5475, %v6154, %v6155
        %v6157 = vrot.slane %v5629, 7
        %v6158 = vrot.slane %v6157, 2
        %v6159 = vrot.slane %v5630, 7
        %v6160 = vsel %vm5475, %v6158, %v6159
        %v6161 = vrot.slane %v6159, 2
        %v6162 = vrot.slane %v5631, 7
        %v6163 = vsel %vm5475, %v6161, %v6162
        %v6164 = vrot.slane %v6162, 2
        %v6165 = vrot.slane %v5632, 7
        %v6166 = vsel %vm5475, %v6164, %v6165
        %v6167 = vrot.slane %v6165, 2
        %v6168 = vrot.slane %v5633, 7
        %v6169 = vsel %vm5475, %v6167, %v6168
        %v6170 = vrot.slane %v6168, 2
        %v6171 = vrot.slane %v5634, 7
        %v6172 = vsel %vm5475, %v6170, %v6171
        %v6173 = vrot.slane %v6171, 2
        %v6174 = vrot.slane %v5635, 7
        %v6175 = vsel %vm5475, %v6173, %v6174
        %v6176 = vrot.slane %v6174, 2
        %v6177 = vrot.slane %v5636, 7
        %v6178 = vsel %vm5475, %v6176, %v6177
        %v6179 = vrot.slane %v6177, 2
        %v6180 = vrot.slane %v5637, 7
        %v6181 = vsel %vm5475, %v6179, %v6180
        %v6310 = vadd.f32 %v5318, %v5785
        %v6311 = vadd.f32 %v5319, %v5788
        %v6312 = vadd.f32 %v5320, %v5791
        %v6313 = vadd.f32 %v5321, %v5794
        %v6314 = vadd.f32 %v5322, %v5797
        %v6315 = vadd.f32 %v5323, %v5800
        %v6316 = vadd.f32 %v5324, %v5803
        %v6317 = vadd.f32 %v5325, %v5806
        %v6318 = vadd.f32 %v5326, %v5810
        %v6319 = vadd.f32 %v5327, %v5813
        %v6320 = vadd.f32 %v5328, %v5816
        %v6321 = vadd.f32 %v5329, %v5819
        %v6322 = vadd.f32 %v5330, %v5822
        %v6323 = vadd.f32 %v5331, %v5825
        %v6324 = vadd.f32 %v5332, %v5828
        %v6325 = vadd.f32 %v5333, %v5831
        %v6326 = vadd.f32 %v5334, %v5835
        %v6327 = vadd.f32 %v5335, %v5838
        %v6328 = vadd.f32 %v5336, %v5841
        %v6329 = vadd.f32 %v5337, %v5844
        %v6330 = vadd.f32 %v5338, %v5847
        %v6331 = vadd.f32 %v5339, %v5850
        %v6332 = vadd.f32 %v5340, %v5853
        %v6333 = vadd.f32 %v5341, %v5856
        %v6334 = vadd.f32 %v5342, %v5860
        %v6335 = vadd.f32 %v5343, %v5863
        %v6336 = vadd.f32 %v5344, %v5866
        %v6337 = vadd.f32 %v5345, %v5869
        %v6338 = vadd.f32 %v5346, %v5872
        %v6339 = vadd.f32 %v5347, %v5875
        %v6340 = vadd.f32 %v5348, %v5878
        %v6341 = vadd.f32 %v5349, %v5881
        %v6342 = vadd.f32 %v5350, %v5885
        %v6343 = vadd.f32 %v5351, %v5888
        %v6344 = vadd.f32 %v5352, %v5891
        %v6345 = vadd.f32 %v5353, %v5894
        %v6346 = vadd.f32 %v5354, %v5897
        %v6347 = vadd.f32 %v5355, %v5900
        %v6348 = vadd.f32 %v5356, %v5903
        %v6349 = vadd.f32 %v5357, %v5906
        %v6350 = vadd.f32 %v5358, %v5910
        %v6351 = vadd.f32 %v5359, %v5913
        %v6352 = vadd.f32 %v5360, %v5916
        %v6353 = vadd.f32 %v5361, %v5919
        %v6354 = vadd.f32 %v5362, %v5922
        %v6355 = vadd.f32 %v5363, %v5925
        %v6356 = vadd.f32 %v5364, %v5928
        %v6357 = vadd.f32 %v5365, %v5931
        %v6358 = vadd.f32 %v5366, %v5935
        %v6359 = vadd.f32 %v5367, %v5938
        %v6360 = vadd.f32 %v5368, %v5941
        %v6361 = vadd.f32 %v5369, %v5944
        %v6362 = vadd.f32 %v5370, %v5947
        %v6363 = vadd.f32 %v5371, %v5950
        %v6364 = vadd.f32 %v5372, %v5953
        %v6365 = vadd.f32 %v5373, %v5956
        %v6366 = vadd.f32 %v5374, %v5960
        %v6367 = vadd.f32 %v5375, %v5963
        %v6368 = vadd.f32 %v5376, %v5966
        %v6369 = vadd.f32 %v5377, %v5969
        %v6370 = vadd.f32 %v5378, %v5972
        %v6371 = vadd.f32 %v5379, %v5975
        %v6372 = vadd.f32 %v5380, %v5978
        %v6373 = vadd.f32 %v5381, %v5981
        %v6374 = vadd.f32 %v5382, %v5985
        %v6375 = vadd.f32 %v5383, %v5988
        %v6376 = vadd.f32 %v5384, %v5991
        %v6377 = vadd.f32 %v5385, %v5994
        %v6378 = vadd.f32 %v5386, %v5997
        %v6379 = vadd.f32 %v5387, %v6000
        %v6380 = vadd.f32 %v5388, %v6003
        %v6381 = vadd.f32 %v5389, %v6006
        %v6382 = vadd.f32 %v5390, %v6010
        %v6383 = vadd.f32 %v5391, %v6013
        %v6384 = vadd.f32 %v5392, %v6016
        %v6385 = vadd.f32 %v5393, %v6019
        %v6386 = vadd.f32 %v5394, %v6022
        %v6387 = vadd.f32 %v5395, %v6025
        %v6388 = vadd.f32 %v5396, %v6028
        %v6389 = vadd.f32 %v5397, %v6031
        %v6390 = vadd.f32 %v5398, %v6035
        %v6391 = vadd.f32 %v5399, %v6038
        %v6392 = vadd.f32 %v5400, %v6041
        %v6393 = vadd.f32 %v5401, %v6044
        %v6394 = vadd.f32 %v5402, %v6047
        %v6395 = vadd.f32 %v5403, %v6050
        %v6396 = vadd.f32 %v5404, %v6053
        %v6397 = vadd.f32 %v5405, %v6056
        %v6398 = vadd.f32 %v5406, %v6060
        %v6399 = vadd.f32 %v5407, %v6063
        %v6400 = vadd.f32 %v5408, %v6066
        %v6401 = vadd.f32 %v5409, %v6069
        %v6402 = vadd.f32 %v5410, %v6072
        %v6403 = vadd.f32 %v5411, %v6075
        %v6404 = vadd.f32 %v5412, %v6078
        %v6405 = vadd.f32 %v5413, %v6081
        %v6406 = vadd.f32 %v5414, %v6085
        %v6407 = vadd.f32 %v5415, %v6088
        %v6408 = vadd.f32 %v5416, %v6091
        %v6409 = vadd.f32 %v5417, %v6094
        %v6410 = vadd.f32 %v5418, %v6097
        %v6411 = vadd.f32 %v5419, %v6100
        %v6412 = vadd.f32 %v5420, %v6103
        %v6413 = vadd.f32 %v5421, %v6106
        %v6414 = vadd.f32 %v5422, %v6110
        %v6415 = vadd.f32 %v5423, %v6113
        %v6416 = vadd.f32 %v5424, %v6116
        %v6417 = vadd.f32 %v5425, %v6119
        %v6418 = vadd.f32 %v5426, %v6122
        %v6419 = vadd.f32 %v5427, %v6125
        %v6420 = vadd.f32 %v5428, %v6128
        %v6421 = vadd.f32 %v5429, %v6131
        %v6422 = vadd.f32 %v5430, %v6135
        %v6423 = vadd.f32 %v5431, %v6138
        %v6424 = vadd.f32 %v5432, %v6141
        %v6425 = vadd.f32 %v5433, %v6144
        %v6426 = vadd.f32 %v5434, %v6147
        %v6427 = vadd.f32 %v5435, %v6150
        %v6428 = vadd.f32 %v5436, %v6153
        %v6429 = vadd.f32 %v5437, %v6156
        %v6430 = vadd.f32 %v5438, %v6160
        %v6431 = vadd.f32 %v5439, %v6163
        %v6432 = vadd.f32 %v5440, %v6166
        %v6433 = vadd.f32 %v5441, %v6169
        %v6434 = vadd.f32 %v5442, %v6172
        %v6435 = vadd.f32 %v5443, %v6175
        %v6436 = vadd.f32 %v5444, %v6178
        %v6437 = vadd.f32 %v5445, %v6181
        %v6438 = vld [vmem:[%s422 + $0x2] sm:$0x1]
        %v6439 = vlaneseq
        %v6440 = vshrl.u32 %v6439, 7
        %v6441 = vsub.s32 0, %v6440
        %v6442 = vrot.slane %v6438, %v6441
        %v6444 = vcombine.high %v6442, %v6442
        %v6446 = vunpack.c.l.s4 1983009808
        %v6447 = vunpack.c.0.s8 %v6446
        %v6448 = vlaneseq
        %v6449 = vshrl.u32 %v6448, 7
        %v6450 = vsub.s32 %v6447, %v6449
        %v6451 = vrot.slane %v6442, %v6450
        %v6453 = vunpack.c.l.s4 1983009808
        %v6454 = vunpack.c.0.s8 %v6453
        %v6455 = vlaneseq
        %v6456 = vshrl.u32 %v6455, 7
        %v6457 = vsub.s32 %v6454, %v6456
        %v6458 = vrot.slane %v6444, %v6457
        %v6459 = vcombine.high %v6451, %v6451
        %v6460 = vcombine.high %v6458, %v6458
        %v6465 = vmul.f32 %v5002, %v6451
        %v6466 = vmul.f32 %v5003, %v6459
        %v6467 = vmul.f32 %v5004, %v6458
        %v6468 = vmul.f32 %v5005, %v6460
        %v6469 = vmul.f32 %v5006, %v6451
        %v6470 = vmul.f32 %v5007, %v6459
        %v6471 = vmul.f32 %v5008, %v6458
        %v6472 = vmul.f32 %v5009, %v6460
        %v6473 = vmul.f32 %v5011, %v6451
        %v6474 = vmul.f32 %v5012, %v6459
        %v6475 = vmul.f32 %v5013, %v6458
        %v6476 = vmul.f32 %v5014, %v6460
        %v6477 = vmul.f32 %v5015, %v6451
        %v6478 = vmul.f32 %v5016, %v6459
        %v6479 = vmul.f32 %v5017, %v6458
        %v6480 = vmul.f32 %v5018, %v6460
        %v6481 = vmul.f32 %v5020, %v6451
        %v6482 = vmul.f32 %v5021, %v6459
        %v6483 = vmul.f32 %v5022, %v6458
        %v6484 = vmul.f32 %v5023, %v6460
        %v6485 = vmul.f32 %v5024, %v6451
        %v6486 = vmul.f32 %v5025, %v6459
        %v6487 = vmul.f32 %v5026, %v6458
        %v6488 = vmul.f32 %v5027, %v6460
        %v6489 = vmul.f32 %v5029, %v6451
        %v6490 = vmul.f32 %v5030, %v6459
        %v6491 = vmul.f32 %v5031, %v6458
        %v6492 = vmul.f32 %v5032, %v6460
        %v6493 = vmul.f32 %v5033, %v6451
        %v6494 = vmul.f32 %v5034, %v6459
        %v6495 = vmul.f32 %v5035, %v6458
        %v6496 = vmul.f32 %v5036, %v6460
        %v6497 = vmul.f32 %v5038, %v6451
        %v6498 = vmul.f32 %v5039, %v6459
        %v6499 = vmul.f32 %v5040, %v6458
        %v6500 = vmul.f32 %v5041, %v6460
        %v6501 = vmul.f32 %v5042, %v6451
        %v6502 = vmul.f32 %v5043, %v6459
        %v6503 = vmul.f32 %v5044, %v6458
        %v6504 = vmul.f32 %v5045, %v6460
        %v6505 = vmul.f32 %v5047, %v6451
        %v6506 = vmul.f32 %v5048, %v6459
        %v6507 = vmul.f32 %v5049, %v6458
        %v6508 = vmul.f32 %v5050, %v6460
        %v6509 = vmul.f32 %v5051, %v6451
        %v6510 = vmul.f32 %v5052, %v6459
        %v6511 = vmul.f32 %v5053, %v6458
        %v6512 = vmul.f32 %v5054, %v6460
        %v6513 = vmul.f32 %v5056, %v6451
        %v6514 = vmul.f32 %v5057, %v6459
        %v6515 = vmul.f32 %v5058, %v6458
        %v6516 = vmul.f32 %v5059, %v6460
        %v6517 = vmul.f32 %v5060, %v6451
        %v6518 = vmul.f32 %v5061, %v6459
        %v6519 = vmul.f32 %v5062, %v6458
        %v6520 = vmul.f32 %v5063, %v6460
        %v6521 = vmul.f32 %v5065, %v6451
        %v6522 = vmul.f32 %v5066, %v6459
        %v6523 = vmul.f32 %v5067, %v6458
        %v6524 = vmul.f32 %v5068, %v6460
        %v6525 = vmul.f32 %v5069, %v6451
        %v6526 = vmul.f32 %v5070, %v6459
        %v6527 = vmul.f32 %v5071, %v6458
        %v6528 = vmul.f32 %v5072, %v6460
        %v6529 = vmul.f32 %v5074, %v6451
        %v6530 = vmul.f32 %v5075, %v6459
        %v6531 = vmul.f32 %v5076, %v6458
        %v6532 = vmul.f32 %v5077, %v6460
        %v6533 = vmul.f32 %v5078, %v6451
        %v6534 = vmul.f32 %v5079, %v6459
        %v6535 = vmul.f32 %v5080, %v6458
        %v6536 = vmul.f32 %v5081, %v6460
        %v6537 = vmul.f32 %v5083, %v6451
        %v6538 = vmul.f32 %v5084, %v6459
        %v6539 = vmul.f32 %v5085, %v6458
        %v6540 = vmul.f32 %v5086, %v6460
        %v6541 = vmul.f32 %v5087, %v6451
        %v6542 = vmul.f32 %v5088, %v6459
        %v6543 = vmul.f32 %v5089, %v6458
        %v6544 = vmul.f32 %v5090, %v6460
        %v6545 = vmul.f32 %v5092, %v6451
        %v6546 = vmul.f32 %v5093, %v6459
        %v6547 = vmul.f32 %v5094, %v6458
        %v6548 = vmul.f32 %v5095, %v6460
        %v6549 = vmul.f32 %v5096, %v6451
        %v6550 = vmul.f32 %v5097, %v6459
        %v6551 = vmul.f32 %v5098, %v6458
        %v6552 = vmul.f32 %v5099, %v6460
        %v6553 = vmul.f32 %v5101, %v6451
        %v6554 = vmul.f32 %v5102, %v6459
        %v6555 = vmul.f32 %v5103, %v6458
        %v6556 = vmul.f32 %v5104, %v6460
        %v6557 = vmul.f32 %v5105, %v6451
        %v6558 = vmul.f32 %v5106, %v6459
        %v6559 = vmul.f32 %v5107, %v6458
        %v6560 = vmul.f32 %v5108, %v6460
        %v6561 = vmul.f32 %v5110, %v6451
        %v6562 = vmul.f32 %v5111, %v6459
        %v6563 = vmul.f32 %v5112, %v6458
        %v6564 = vmul.f32 %v5113, %v6460
        %v6565 = vmul.f32 %v5114, %v6451
        %v6566 = vmul.f32 %v5115, %v6459
        %v6567 = vmul.f32 %v5116, %v6458
        %v6568 = vmul.f32 %v5117, %v6460
        %v6569 = vmul.f32 %v5119, %v6451
        %v6570 = vmul.f32 %v5120, %v6459
        %v6571 = vmul.f32 %v5121, %v6458
        %v6572 = vmul.f32 %v5122, %v6460
        %v6573 = vmul.f32 %v5123, %v6451
        %v6574 = vmul.f32 %v5124, %v6459
        %v6575 = vmul.f32 %v5125, %v6458
        %v6576 = vmul.f32 %v5126, %v6460
        %v6577 = vmul.f32 %v5128, %v6451
        %v6578 = vmul.f32 %v5129, %v6459
        %v6579 = vmul.f32 %v5130, %v6458
        %v6580 = vmul.f32 %v5131, %v6460
        %v6581 = vmul.f32 %v5132, %v6451
        %v6582 = vmul.f32 %v5133, %v6459
        %v6583 = vmul.f32 %v5134, %v6458
        %v6584 = vmul.f32 %v5135, %v6460
        %v6585 = vmul.f32 %v5137, %v6451
        %v6586 = vmul.f32 %v5138, %v6459
        %v6587 = vmul.f32 %v5139, %v6458
        %v6588 = vmul.f32 %v5140, %v6460
        %v6589 = vmul.f32 %v5141, %v6451
        %v6590 = vmul.f32 %v5142, %v6459
        %v6591 = vmul.f32 %v5143, %v6458
        %v6592 = vmul.f32 %v5144, %v6460
        %v6593 = vadd.f32 %v6310, %v6465
        %v6594 = vadd.f32 %v6311, %v6466
        %v6595 = vadd.f32 %v6312, %v6467
        %v6596 = vadd.f32 %v6313, %v6468
        %v6597 = vadd.f32 %v6314, %v6469
        %v6598 = vadd.f32 %v6315, %v6470
        %v6599 = vadd.f32 %v6316, %v6471
        %v6600 = vadd.f32 %v6317, %v6472
        %v6601 = vadd.f32 %v6318, %v6473
        %v6602 = vadd.f32 %v6319, %v6474
        %v6603 = vadd.f32 %v6320, %v6475
        %v6604 = vadd.f32 %v6321, %v6476
        %v6605 = vadd.f32 %v6322, %v6477
        %v6606 = vadd.f32 %v6323, %v6478
        %v6607 = vadd.f32 %v6324, %v6479
        %v6608 = vadd.f32 %v6325, %v6480
        %v6609 = vadd.f32 %v6326, %v6481
        %v6610 = vadd.f32 %v6327, %v6482
        %v6611 = vadd.f32 %v6328, %v6483
        %v6612 = vadd.f32 %v6329, %v6484
        %v6613 = vadd.f32 %v6330, %v6485
        %v6614 = vadd.f32 %v6331, %v6486
        %v6615 = vadd.f32 %v6332, %v6487
        %v6616 = vadd.f32 %v6333, %v6488
        %v6617 = vadd.f32 %v6334, %v6489
        %v6618 = vadd.f32 %v6335, %v6490
        %v6619 = vadd.f32 %v6336, %v6491
        %v6620 = vadd.f32 %v6337, %v6492
        %v6621 = vadd.f32 %v6338, %v6493
        %v6622 = vadd.f32 %v6339, %v6494
        %v6623 = vadd.f32 %v6340, %v6495
        %v6624 = vadd.f32 %v6341, %v6496
        %v6625 = vadd.f32 %v6342, %v6497
        %v6626 = vadd.f32 %v6343, %v6498
        %v6627 = vadd.f32 %v6344, %v6499
        %v6628 = vadd.f32 %v6345, %v6500
        %v6629 = vadd.f32 %v6346, %v6501
        %v6630 = vadd.f32 %v6347, %v6502
        %v6631 = vadd.f32 %v6348, %v6503
        %v6632 = vadd.f32 %v6349, %v6504
        %v6633 = vadd.f32 %v6350, %v6505
        %v6634 = vadd.f32 %v6351, %v6506
        %v6635 = vadd.f32 %v6352, %v6507
        %v6636 = vadd.f32 %v6353, %v6508
        %v6637 = vadd.f32 %v6354, %v6509
        %v6638 = vadd.f32 %v6355, %v6510
        %v6639 = vadd.f32 %v6356, %v6511
        %v6640 = vadd.f32 %v6357, %v6512
        %v6641 = vadd.f32 %v6358, %v6513
        %v6642 = vadd.f32 %v6359, %v6514
        %v6643 = vadd.f32 %v6360, %v6515
        %v6644 = vadd.f32 %v6361, %v6516
        %v6645 = vadd.f32 %v6362, %v6517
        %v6646 = vadd.f32 %v6363, %v6518
        %v6647 = vadd.f32 %v6364, %v6519
        %v6648 = vadd.f32 %v6365, %v6520
        %v6649 = vadd.f32 %v6366, %v6521
        %v6650 = vadd.f32 %v6367, %v6522
        %v6651 = vadd.f32 %v6368, %v6523
        %v6652 = vadd.f32 %v6369, %v6524
        %v6653 = vadd.f32 %v6370, %v6525
        %v6654 = vadd.f32 %v6371, %v6526
        %v6655 = vadd.f32 %v6372, %v6527
        %v6656 = vadd.f32 %v6373, %v6528
        %v6657 = vadd.f32 %v6374, %v6529
        %v6658 = vadd.f32 %v6375, %v6530
        %v6659 = vadd.f32 %v6376, %v6531
        %v6660 = vadd.f32 %v6377, %v6532
        %v6661 = vadd.f32 %v6378, %v6533
        %v6662 = vadd.f32 %v6379, %v6534
        %v6663 = vadd.f32 %v6380, %v6535
        %v6664 = vadd.f32 %v6381, %v6536
        %v6665 = vadd.f32 %v6382, %v6537
        %v6666 = vadd.f32 %v6383, %v6538
        %v6667 = vadd.f32 %v6384, %v6539
        %v6668 = vadd.f32 %v6385, %v6540
        %v6669 = vadd.f32 %v6386, %v6541
        %v6670 = vadd.f32 %v6387, %v6542
        %v6671 = vadd.f32 %v6388, %v6543
        %v6672 = vadd.f32 %v6389, %v6544
        %v6673 = vadd.f32 %v6390, %v6545
        %v6674 = vadd.f32 %v6391, %v6546
        %v6675 = vadd.f32 %v6392, %v6547
        %v6676 = vadd.f32 %v6393, %v6548
        %v6677 = vadd.f32 %v6394, %v6549
        %v6678 = vadd.f32 %v6395, %v6550
        %v6679 = vadd.f32 %v6396, %v6551
        %v6680 = vadd.f32 %v6397, %v6552
        %v6681 = vadd.f32 %v6398, %v6553
        %v6682 = vadd.f32 %v6399, %v6554
        %v6683 = vadd.f32 %v6400, %v6555
        %v6684 = vadd.f32 %v6401, %v6556
        %v6685 = vadd.f32 %v6402, %v6557
        %v6686 = vadd.f32 %v6403, %v6558
        %v6687 = vadd.f32 %v6404, %v6559
        %v6688 = vadd.f32 %v6405, %v6560
        %v6689 = vadd.f32 %v6406, %v6561
        %v6690 = vadd.f32 %v6407, %v6562
        %v6691 = vadd.f32 %v6408, %v6563
        %v6692 = vadd.f32 %v6409, %v6564
        %v6693 = vadd.f32 %v6410, %v6565
        %v6694 = vadd.f32 %v6411, %v6566
        %v6695 = vadd.f32 %v6412, %v6567
        %v6696 = vadd.f32 %v6413, %v6568
        %v6697 = vadd.f32 %v6414, %v6569
        %v6698 = vadd.f32 %v6415, %v6570
        %v6699 = vadd.f32 %v6416, %v6571
        %v6700 = vadd.f32 %v6417, %v6572
        %v6701 = vadd.f32 %v6418, %v6573
        %v6702 = vadd.f32 %v6419, %v6574
        %v6703 = vadd.f32 %v6420, %v6575
        %v6704 = vadd.f32 %v6421, %v6576
        %v6705 = vadd.f32 %v6422, %v6577
        %v6706 = vadd.f32 %v6423, %v6578
        %v6707 = vadd.f32 %v6424, %v6579
        %v6708 = vadd.f32 %v6425, %v6580
        %v6709 = vadd.f32 %v6426, %v6581
        %v6710 = vadd.f32 %v6427, %v6582
        %v6711 = vadd.f32 %v6428, %v6583
        %v6712 = vadd.f32 %v6429, %v6584
        %v6713 = vadd.f32 %v6430, %v6585
        %v6714 = vadd.f32 %v6431, %v6586
        %v6715 = vadd.f32 %v6432, %v6587
        %v6716 = vadd.f32 %v6433, %v6588
        %v6717 = vadd.f32 %v6434, %v6589
        %v6718 = vadd.f32 %v6435, %v6590
        %v6719 = vadd.f32 %v6436, %v6591
        %v6720 = vadd.f32 %v6437, %v6592
        %s6721 = scalar_lea.vmem %s422, 4
        %v6722 = vld [vmem:[%s6721] sm:$0x1]
        %v6723 = vlaneseq
        %v6724 = vshrl.u32 %v6723, 7
        %v6725 = vsub.s32 0, %v6724
        %v6726 = vrot.slane %v6722, %v6725
        %v6728 = vcombine.high %v6726, %v6726
        %v6730 = vunpack.c.l.s4 1983009808
        %v6731 = vunpack.c.0.s8 %v6730
        %v6732 = vlaneseq
        %v6733 = vshrl.u32 %v6732, 7
        %v6734 = vsub.s32 %v6731, %v6733
        %v6735 = vrot.slane %v6726, %v6734
        %v6737 = vunpack.c.l.s4 1983009808
        %v6738 = vunpack.c.0.s8 %v6737
        %v6739 = vlaneseq
        %v6740 = vshrl.u32 %v6739, 7
        %v6741 = vsub.s32 %v6738, %v6740
        %v6742 = vrot.slane %v6728, %v6741
        %v6743 = vcombine.high %v6735, %v6735
        %v6744 = vcombine.high %v6742, %v6742
        %v6749 = vmul.f32 %v5010, %v6735
        %v6750 = vmul.f32 %v5011, %v6743
        %v6751 = vmul.f32 %v5012, %v6742
        %v6752 = vmul.f32 %v5013, %v6744
        %v6753 = vmul.f32 %v5014, %v6735
        %v6754 = vmul.f32 %v5015, %v6743
        %v6755 = vmul.f32 %v5016, %v6742
        %v6756 = vmul.f32 %v5017, %v6744
        %v6757 = vmul.f32 %v5019, %v6735
        %v6758 = vmul.f32 %v5020, %v6743
        %v6759 = vmul.f32 %v5021, %v6742
        %v6760 = vmul.f32 %v5022, %v6744
        %v6761 = vmul.f32 %v5023, %v6735
        %v6762 = vmul.f32 %v5024, %v6743
        %v6763 = vmul.f32 %v5025, %v6742
        %v6764 = vmul.f32 %v5026, %v6744
        %v6765 = vmul.f32 %v5028, %v6735
        %v6766 = vmul.f32 %v5029, %v6743
        %v6767 = vmul.f32 %v5030, %v6742
        %v6768 = vmul.f32 %v5031, %v6744
        %v6769 = vmul.f32 %v5032, %v6735
        %v6770 = vmul.f32 %v5033, %v6743
        %v6771 = vmul.f32 %v5034, %v6742
        %v6772 = vmul.f32 %v5035, %v6744
        %v6773 = vmul.f32 %v5037, %v6735
        %v6774 = vmul.f32 %v5038, %v6743
        %v6775 = vmul.f32 %v5039, %v6742
        %v6776 = vmul.f32 %v5040, %v6744
        %v6777 = vmul.f32 %v5041, %v6735
        %v6778 = vmul.f32 %v5042, %v6743
        %v6779 = vmul.f32 %v5043, %v6742
        %v6780 = vmul.f32 %v5044, %v6744
        %v6781 = vmul.f32 %v5046, %v6735
        %v6782 = vmul.f32 %v5047, %v6743
        %v6783 = vmul.f32 %v5048, %v6742
        %v6784 = vmul.f32 %v5049, %v6744
        %v6785 = vmul.f32 %v5050, %v6735
        %v6786 = vmul.f32 %v5051, %v6743
        %v6787 = vmul.f32 %v5052, %v6742
        %v6788 = vmul.f32 %v5053, %v6744
        %v6789 = vmul.f32 %v5055, %v6735
        %v6790 = vmul.f32 %v5056, %v6743
        %v6791 = vmul.f32 %v5057, %v6742
        %v6792 = vmul.f32 %v5058, %v6744
        %v6793 = vmul.f32 %v5059, %v6735
        %v6794 = vmul.f32 %v5060, %v6743
        %v6795 = vmul.f32 %v5061, %v6742
        %v6796 = vmul.f32 %v5062, %v6744
        %v6797 = vmul.f32 %v5064, %v6735
        %v6798 = vmul.f32 %v5065, %v6743
        %v6799 = vmul.f32 %v5066, %v6742
        %v6800 = vmul.f32 %v5067, %v6744
        %v6801 = vmul.f32 %v5068, %v6735
        %v6802 = vmul.f32 %v5069, %v6743
        %v6803 = vmul.f32 %v5070, %v6742
        %v6804 = vmul.f32 %v5071, %v6744
        %v6805 = vmul.f32 %v5073, %v6735
        %v6806 = vmul.f32 %v5074, %v6743
        %v6807 = vmul.f32 %v5075, %v6742
        %v6808 = vmul.f32 %v5076, %v6744
        %v6809 = vmul.f32 %v5077, %v6735
        %v6810 = vmul.f32 %v5078, %v6743
        %v6811 = vmul.f32 %v5079, %v6742
        %v6812 = vmul.f32 %v5080, %v6744
        %v6813 = vmul.f32 %v5082, %v6735
        %v6814 = vmul.f32 %v5083, %v6743
        %v6815 = vmul.f32 %v5084, %v6742
        %v6816 = vmul.f32 %v5085, %v6744
        %v6817 = vmul.f32 %v5086, %v6735
        %v6818 = vmul.f32 %v5087, %v6743
        %v6819 = vmul.f32 %v5088, %v6742
        %v6820 = vmul.f32 %v5089, %v6744
        %v6821 = vmul.f32 %v5091, %v6735
        %v6822 = vmul.f32 %v5092, %v6743
        %v6823 = vmul.f32 %v5093, %v6742
        %v6824 = vmul.f32 %v5094, %v6744
        %v6825 = vmul.f32 %v5095, %v6735
        %v6826 = vmul.f32 %v5096, %v6743
        %v6827 = vmul.f32 %v5097, %v6742
        %v6828 = vmul.f32 %v5098, %v6744
        %v6829 = vmul.f32 %v5100, %v6735
        %v6830 = vmul.f32 %v5101, %v6743
        %v6831 = vmul.f32 %v5102, %v6742
        %v6832 = vmul.f32 %v5103, %v6744
        %v6833 = vmul.f32 %v5104, %v6735
        %v6834 = vmul.f32 %v5105, %v6743
        %v6835 = vmul.f32 %v5106, %v6742
        %v6836 = vmul.f32 %v5107, %v6744
        %v6837 = vmul.f32 %v5109, %v6735
        %v6838 = vmul.f32 %v5110, %v6743
        %v6839 = vmul.f32 %v5111, %v6742
        %v6840 = vmul.f32 %v5112, %v6744
        %v6841 = vmul.f32 %v5113, %v6735
        %v6842 = vmul.f32 %v5114, %v6743
        %v6843 = vmul.f32 %v5115, %v6742
        %v6844 = vmul.f32 %v5116, %v6744
        %v6845 = vmul.f32 %v5118, %v6735
        %v6846 = vmul.f32 %v5119, %v6743
        %v6847 = vmul.f32 %v5120, %v6742
        %v6848 = vmul.f32 %v5121, %v6744
        %v6849 = vmul.f32 %v5122, %v6735
        %v6850 = vmul.f32 %v5123, %v6743
        %v6851 = vmul.f32 %v5124, %v6742
        %v6852 = vmul.f32 %v5125, %v6744
        %v6853 = vmul.f32 %v5127, %v6735
        %v6854 = vmul.f32 %v5128, %v6743
        %v6855 = vmul.f32 %v5129, %v6742
        %v6856 = vmul.f32 %v5130, %v6744
        %v6857 = vmul.f32 %v5131, %v6735
        %v6858 = vmul.f32 %v5132, %v6743
        %v6859 = vmul.f32 %v5133, %v6742
        %v6860 = vmul.f32 %v5134, %v6744
        %v6861 = vmul.f32 %v5136, %v6735
        %v6862 = vmul.f32 %v5137, %v6743
        %v6863 = vmul.f32 %v5138, %v6742
        %v6864 = vmul.f32 %v5139, %v6744
        %v6865 = vmul.f32 %v5140, %v6735
        %v6866 = vmul.f32 %v5141, %v6743
        %v6867 = vmul.f32 %v5142, %v6742
        %v6868 = vmul.f32 %v5143, %v6744
        %v6869 = vmul.f32 %v5145, %v6735
        %v6870 = vmul.f32 %v5146, %v6743
        %v6871 = vmul.f32 %v5147, %v6742
        %v6872 = vmul.f32 %v5148, %v6744
        %v6873 = vmul.f32 %v5149, %v6735
        %v6874 = vmul.f32 %v5150, %v6743
        %v6875 = vmul.f32 %v5151, %v6742
        %v6876 = vmul.f32 %v5152, %v6744
        %v6877 = vadd.f32 %v6593, %v6749
        %v6878 = vadd.f32 %v6594, %v6750
        %v6879 = vadd.f32 %v6595, %v6751
        %v6880 = vadd.f32 %v6596, %v6752
        %v6881 = vadd.f32 %v6597, %v6753
        %v6882 = vadd.f32 %v6598, %v6754
        %v6883 = vadd.f32 %v6599, %v6755
        %v6884 = vadd.f32 %v6600, %v6756
        %v6885 = vadd.f32 %v6601, %v6757
        %v6886 = vadd.f32 %v6602, %v6758
        %v6887 = vadd.f32 %v6603, %v6759
        %v6888 = vadd.f32 %v6604, %v6760
        %v6889 = vadd.f32 %v6605, %v6761
        %v6890 = vadd.f32 %v6606, %v6762
        %v6891 = vadd.f32 %v6607, %v6763
        %v6892 = vadd.f32 %v6608, %v6764
        %v6893 = vadd.f32 %v6609, %v6765
        %v6894 = vadd.f32 %v6610, %v6766
        %v6895 = vadd.f32 %v6611, %v6767
        %v6896 = vadd.f32 %v6612, %v6768
        %v6897 = vadd.f32 %v6613, %v6769
        %v6898 = vadd.f32 %v6614, %v6770
        %v6899 = vadd.f32 %v6615, %v6771
        %v6900 = vadd.f32 %v6616, %v6772
        %v6901 = vadd.f32 %v6617, %v6773
        %v6902 = vadd.f32 %v6618, %v6774
        %v6903 = vadd.f32 %v6619, %v6775
        %v6904 = vadd.f32 %v6620, %v6776
        %v6905 = vadd.f32 %v6621, %v6777
        %v6906 = vadd.f32 %v6622, %v6778
        %v6907 = vadd.f32 %v6623, %v6779
        %v6908 = vadd.f32 %v6624, %v6780
        %v6909 = vadd.f32 %v6625, %v6781
        %v6910 = vadd.f32 %v6626, %v6782
        %v6911 = vadd.f32 %v6627, %v6783
        %v6912 = vadd.f32 %v6628, %v6784
        %v6913 = vadd.f32 %v6629, %v6785
        %v6914 = vadd.f32 %v6630, %v6786
        %v6915 = vadd.f32 %v6631, %v6787
        %v6916 = vadd.f32 %v6632, %v6788
        %v6917 = vadd.f32 %v6633, %v6789
        %v6918 = vadd.f32 %v6634, %v6790
        %v6919 = vadd.f32 %v6635, %v6791
        %v6920 = vadd.f32 %v6636, %v6792
        %v6921 = vadd.f32 %v6637, %v6793
        %v6922 = vadd.f32 %v6638, %v6794
        %v6923 = vadd.f32 %v6639, %v6795
        %v6924 = vadd.f32 %v6640, %v6796
        %v6925 = vadd.f32 %v6641, %v6797
        %v6926 = vadd.f32 %v6642, %v6798
        %v6927 = vadd.f32 %v6643, %v6799
        %v6928 = vadd.f32 %v6644, %v6800
        %v6929 = vadd.f32 %v6645, %v6801
        %v6930 = vadd.f32 %v6646, %v6802
        %v6931 = vadd.f32 %v6647, %v6803
        %v6932 = vadd.f32 %v6648, %v6804
        %v6933 = vadd.f32 %v6649, %v6805
        %v6934 = vadd.f32 %v6650, %v6806
        %v6935 = vadd.f32 %v6651, %v6807
        %v6936 = vadd.f32 %v6652, %v6808
        %v6937 = vadd.f32 %v6653, %v6809
        %v6938 = vadd.f32 %v6654, %v6810
        %v6939 = vadd.f32 %v6655, %v6811
        %v6940 = vadd.f32 %v6656, %v6812
        %v6941 = vadd.f32 %v6657, %v6813
        %v6942 = vadd.f32 %v6658, %v6814
        %v6943 = vadd.f32 %v6659, %v6815
        %v6944 = vadd.f32 %v6660, %v6816
        %v6945 = vadd.f32 %v6661, %v6817
        %v6946 = vadd.f32 %v6662, %v6818
        %v6947 = vadd.f32 %v6663, %v6819
        %v6948 = vadd.f32 %v6664, %v6820
        %v6949 = vadd.f32 %v6665, %v6821
        %v6950 = vadd.f32 %v6666, %v6822
        %v6951 = vadd.f32 %v6667, %v6823
        %v6952 = vadd.f32 %v6668, %v6824
        %v6953 = vadd.f32 %v6669, %v6825
        %v6954 = vadd.f32 %v6670, %v6826
        %v6955 = vadd.f32 %v6671, %v6827
        %v6956 = vadd.f32 %v6672, %v6828
        %v6957 = vadd.f32 %v6673, %v6829
        %v6958 = vadd.f32 %v6674, %v6830
        %v6959 = vadd.f32 %v6675, %v6831
        %v6960 = vadd.f32 %v6676, %v6832
        %v6961 = vadd.f32 %v6677, %v6833
        %v6962 = vadd.f32 %v6678, %v6834
        %v6963 = vadd.f32 %v6679, %v6835
        %v6964 = vadd.f32 %v6680, %v6836
        %v6965 = vadd.f32 %v6681, %v6837
        %v6966 = vadd.f32 %v6682, %v6838
        %v6967 = vadd.f32 %v6683, %v6839
        %v6968 = vadd.f32 %v6684, %v6840
        %v6969 = vadd.f32 %v6685, %v6841
        %v6970 = vadd.f32 %v6686, %v6842
        %v6971 = vadd.f32 %v6687, %v6843
        %v6972 = vadd.f32 %v6688, %v6844
        %v6973 = vadd.f32 %v6689, %v6845
        %v6974 = vadd.f32 %v6690, %v6846
        %v6975 = vadd.f32 %v6691, %v6847
        %v6976 = vadd.f32 %v6692, %v6848
        %v6977 = vadd.f32 %v6693, %v6849
        %v6978 = vadd.f32 %v6694, %v6850
        %v6979 = vadd.f32 %v6695, %v6851
        %v6980 = vadd.f32 %v6696, %v6852
        %v6981 = vadd.f32 %v6697, %v6853
        %v6982 = vadd.f32 %v6698, %v6854
        %v6983 = vadd.f32 %v6699, %v6855
        %v6984 = vadd.f32 %v6700, %v6856
        %v6985 = vadd.f32 %v6701, %v6857
        %v6986 = vadd.f32 %v6702, %v6858
        %v6987 = vadd.f32 %v6703, %v6859
        %v6988 = vadd.f32 %v6704, %v6860
        %v6989 = vadd.f32 %v6705, %v6861
        %v6990 = vadd.f32 %v6706, %v6862
        %v6991 = vadd.f32 %v6707, %v6863
        %v6992 = vadd.f32 %v6708, %v6864
        %v6993 = vadd.f32 %v6709, %v6865
        %v6994 = vadd.f32 %v6710, %v6866
        %v6995 = vadd.f32 %v6711, %v6867
        %v6996 = vadd.f32 %v6712, %v6868
        %v6997 = vadd.f32 %v6713, %v6869
        %v6998 = vadd.f32 %v6714, %v6870
        %v6999 = vadd.f32 %v6715, %v6871
        %v7000 = vadd.f32 %v6716, %v6872
        %v7001 = vadd.f32 %v6717, %v6873
        %v7002 = vadd.f32 %v6718, %v6874
        %v7003 = vadd.f32 %v6719, %v6875
        %v7004 = vadd.f32 %v6720, %v6876
        %v7005 = vld [vmem:[%s6721 + $0x1] sm:$0x1]
        %v7006 = vlaneseq
        %v7007 = vshrl.u32 %v7006, 7
        %v7008 = vsub.s32 0, %v7007
        %v7009 = vrot.slane %v7005, %v7008
        %v7011 = vcombine.high %v7009, %v7009
        %v7013 = vunpack.c.l.s4 1983009808
        %v7014 = vunpack.c.0.s8 %v7013
        %v7015 = vlaneseq
        %v7016 = vshrl.u32 %v7015, 7
        %v7017 = vsub.s32 %v7014, %v7016
        %v7018 = vrot.slane %v7009, %v7017
        %v7020 = vunpack.c.l.s4 1983009808
        %v7021 = vunpack.c.0.s8 %v7020
        %v7022 = vlaneseq
        %v7023 = vshrl.u32 %v7022, 7
        %v7024 = vsub.s32 %v7021, %v7023
        %v7025 = vrot.slane %v7011, %v7024
        %v7026 = vcombine.high %v7018, %v7018
        %v7027 = vcombine.high %v7025, %v7025
        %v7028 = vrot.slane %v7018, 7
        %v7029 = vrot.slane %v7028, 2
        %v7030 = vrot.slane %v7026, 7
        %v7031 = vsel %vm5475, %v7029, %v7030
        %v7032 = vrot.slane %v7030, 2
        %v7033 = vrot.slane %v7025, 7
        %v7034 = vsel %vm5475, %v7032, %v7033
        %v7035 = vrot.slane %v7033, 2
        %v7036 = vrot.slane %v7027, 7
        %v7037 = vsel %vm5475, %v7035, %v7036
        %v7038 = vrot.slane %v7036, 2
        %v7039 = vsel %vm5475, %v7038, %v7028
        %v7046 = vmul.f32 %v5010, %v7028
        %v7047 = vmul.f32 %v5011, %v7031
        %v7048 = vmul.f32 %v5012, %v7034
        %v7049 = vmul.f32 %v5013, %v7037
        %v7050 = vmul.f32 %v5014, %v7039
        %v7051 = vmul.f32 %v5015, %v7031
        %v7052 = vmul.f32 %v5016, %v7034
        %v7053 = vmul.f32 %v5017, %v7037
        %v7054 = vmul.f32 %v5018, %v7038
        %v7055 = vmul.f32 %v5019, %v7028
        %v7056 = vmul.f32 %v5020, %v7031
        %v7057 = vmul.f32 %v5021, %v7034
        %v7058 = vmul.f32 %v5022, %v7037
        %v7059 = vmul.f32 %v5023, %v7039
        %v7060 = vmul.f32 %v5024, %v7031
        %v7061 = vmul.f32 %v5025, %v7034
        %v7062 = vmul.f32 %v5026, %v7037
        %v7063 = vmul.f32 %v5027, %v7038
        %v7064 = vmul.f32 %v5028, %v7028
        %v7065 = vmul.f32 %v5029, %v7031
        %v7066 = vmul.f32 %v5030, %v7034
        %v7067 = vmul.f32 %v5031, %v7037
        %v7068 = vmul.f32 %v5032, %v7039
        %v7069 = vmul.f32 %v5033, %v7031
        %v7070 = vmul.f32 %v5034, %v7034
        %v7071 = vmul.f32 %v5035, %v7037
        %v7072 = vmul.f32 %v5036, %v7038
        %v7073 = vmul.f32 %v5037, %v7028
        %v7074 = vmul.f32 %v5038, %v7031
        %v7075 = vmul.f32 %v5039, %v7034
        %v7076 = vmul.f32 %v5040, %v7037
        %v7077 = vmul.f32 %v5041, %v7039
        %v7078 = vmul.f32 %v5042, %v7031
        %v7079 = vmul.f32 %v5043, %v7034
        %v7080 = vmul.f32 %v5044, %v7037
        %v7081 = vmul.f32 %v5045, %v7038
        %v7082 = vmul.f32 %v5046, %v7028
        %v7083 = vmul.f32 %v5047, %v7031
        %v7084 = vmul.f32 %v5048, %v7034
        %v7085 = vmul.f32 %v5049, %v7037
        %v7086 = vmul.f32 %v5050, %v7039
        %v7087 = vmul.f32 %v5051, %v7031
        %v7088 = vmul.f32 %v5052, %v7034
        %v7089 = vmul.f32 %v5053, %v7037
        %v7090 = vmul.f32 %v5054, %v7038
        %v7091 = vmul.f32 %v5055, %v7028
        %v7092 = vmul.f32 %v5056, %v7031
        %v7093 = vmul.f32 %v5057, %v7034
        %v7094 = vmul.f32 %v5058, %v7037
        %v7095 = vmul.f32 %v5059, %v7039
        %v7096 = vmul.f32 %v5060, %v7031
        %v7097 = vmul.f32 %v5061, %v7034
        %v7098 = vmul.f32 %v5062, %v7037
        %v7099 = vmul.f32 %v5063, %v7038
        %v7100 = vmul.f32 %v5064, %v7028
        %v7101 = vmul.f32 %v5065, %v7031
        %v7102 = vmul.f32 %v5066, %v7034
        %v7103 = vmul.f32 %v5067, %v7037
        %v7104 = vmul.f32 %v5068, %v7039
        %v7105 = vmul.f32 %v5069, %v7031
        %v7106 = vmul.f32 %v5070, %v7034
        %v7107 = vmul.f32 %v5071, %v7037
        %v7108 = vmul.f32 %v5072, %v7038
        %v7109 = vmul.f32 %v5073, %v7028
        %v7110 = vmul.f32 %v5074, %v7031
        %v7111 = vmul.f32 %v5075, %v7034
        %v7112 = vmul.f32 %v5076, %v7037
        %v7113 = vmul.f32 %v5077, %v7039
        %v7114 = vmul.f32 %v5078, %v7031
        %v7115 = vmul.f32 %v5079, %v7034
        %v7116 = vmul.f32 %v5080, %v7037
        %v7117 = vmul.f32 %v5081, %v7038
        %v7118 = vmul.f32 %v5082, %v7028
        %v7119 = vmul.f32 %v5083, %v7031
        %v7120 = vmul.f32 %v5084, %v7034
        %v7121 = vmul.f32 %v5085, %v7037
        %v7122 = vmul.f32 %v5086, %v7039
        %v7123 = vmul.f32 %v5087, %v7031
        %v7124 = vmul.f32 %v5088, %v7034
        %v7125 = vmul.f32 %v5089, %v7037
        %v7126 = vmul.f32 %v5090, %v7038
        %v7127 = vmul.f32 %v5091, %v7028
        %v7128 = vmul.f32 %v5092, %v7031
        %v7129 = vmul.f32 %v5093, %v7034
        %v7130 = vmul.f32 %v5094, %v7037
        %v7131 = vmul.f32 %v5095, %v7039
        %v7132 = vmul.f32 %v5096, %v7031
        %v7133 = vmul.f32 %v5097, %v7034
        %v7134 = vmul.f32 %v5098, %v7037
        %v7135 = vmul.f32 %v5099, %v7038
        %v7136 = vmul.f32 %v5100, %v7028
        %v7137 = vmul.f32 %v5101, %v7031
        %v7138 = vmul.f32 %v5102, %v7034
        %v7139 = vmul.f32 %v5103, %v7037
        %v7140 = vmul.f32 %v5104, %v7039
        %v7141 = vmul.f32 %v5105, %v7031
        %v7142 = vmul.f32 %v5106, %v7034
        %v7143 = vmul.f32 %v5107, %v7037
        %v7144 = vmul.f32 %v5108, %v7038
        %v7145 = vmul.f32 %v5109, %v7028
        %v7146 = vmul.f32 %v5110, %v7031
        %v7147 = vmul.f32 %v5111, %v7034
        %v7148 = vmul.f32 %v5112, %v7037
        %v7149 = vmul.f32 %v5113, %v7039
        %v7150 = vmul.f32 %v5114, %v7031
        %v7151 = vmul.f32 %v5115, %v7034
        %v7152 = vmul.f32 %v5116, %v7037
        %v7153 = vmul.f32 %v5117, %v7038
        %v7154 = vmul.f32 %v5118, %v7028
        %v7155 = vmul.f32 %v5119, %v7031
        %v7156 = vmul.f32 %v5120, %v7034
        %v7157 = vmul.f32 %v5121, %v7037
        %v7158 = vmul.f32 %v5122, %v7039
        %v7159 = vmul.f32 %v5123, %v7031
        %v7160 = vmul.f32 %v5124, %v7034
        %v7161 = vmul.f32 %v5125, %v7037
        %v7162 = vmul.f32 %v5126, %v7038
        %v7163 = vmul.f32 %v5127, %v7028
        %v7164 = vmul.f32 %v5128, %v7031
        %v7165 = vmul.f32 %v5129, %v7034
        %v7166 = vmul.f32 %v5130, %v7037
        %v7167 = vmul.f32 %v5131, %v7039
        %v7168 = vmul.f32 %v5132, %v7031
        %v7169 = vmul.f32 %v5133, %v7034
        %v7170 = vmul.f32 %v5134, %v7037
        %v7171 = vmul.f32 %v5135, %v7038
        %v7172 = vmul.f32 %v5136, %v7028
        %v7173 = vmul.f32 %v5137, %v7031
        %v7174 = vmul.f32 %v5138, %v7034
        %v7175 = vmul.f32 %v5139, %v7037
        %v7176 = vmul.f32 %v5140, %v7039
        %v7177 = vmul.f32 %v5141, %v7031
        %v7178 = vmul.f32 %v5142, %v7034
        %v7179 = vmul.f32 %v5143, %v7037
        %v7180 = vmul.f32 %v5144, %v7038
        %v7181 = vmul.f32 %v5145, %v7028
        %v7182 = vmul.f32 %v5146, %v7031
        %v7183 = vmul.f32 %v5147, %v7034
        %v7184 = vmul.f32 %v5148, %v7037
        %v7185 = vmul.f32 %v5149, %v7039
        %v7186 = vmul.f32 %v5150, %v7031
        %v7187 = vmul.f32 %v5151, %v7034
        %v7188 = vmul.f32 %v5152, %v7037
        %v7189 = vmul.f32 %v5153, %v7038
        %v7334 = vrot.slane %v7046, 7
        %v7335 = vrot.slane %v7334, 2
        %v7336 = vrot.slane %v7047, 7
        %v7337 = vsel %vm5475, %v7335, %v7336
        %v7338 = vrot.slane %v7336, 2
        %v7339 = vrot.slane %v7048, 7
        %v7340 = vsel %vm5475, %v7338, %v7339
        %v7341 = vrot.slane %v7339, 2
        %v7342 = vrot.slane %v7049, 7
        %v7343 = vsel %vm5475, %v7341, %v7342
        %v7344 = vrot.slane %v7342, 2
        %v7345 = vrot.slane %v7050, 7
        %v7346 = vsel %vm5475, %v7344, %v7345
        %v7347 = vrot.slane %v7345, 2
        %v7348 = vrot.slane %v7051, 7
        %v7349 = vsel %vm5475, %v7347, %v7348
        %v7350 = vrot.slane %v7348, 2
        %v7351 = vrot.slane %v7052, 7
        %v7352 = vsel %vm5475, %v7350, %v7351
        %v7353 = vrot.slane %v7351, 2
        %v7354 = vrot.slane %v7053, 7
        %v7355 = vsel %vm5475, %v7353, %v7354
        %v7356 = vrot.slane %v7354, 2
        %v7357 = vrot.slane %v7054, 7
        %v7358 = vsel %vm5475, %v7356, %v7357
        %v7359 = vrot.slane %v7055, 7
        %v7360 = vrot.slane %v7359, 2
        %v7361 = vrot.slane %v7056, 7
        %v7362 = vsel %vm5475, %v7360, %v7361
        %v7363 = vrot.slane %v7361, 2
        %v7364 = vrot.slane %v7057, 7
        %v7365 = vsel %vm5475, %v7363, %v7364
        %v7366 = vrot.slane %v7364, 2
        %v7367 = vrot.slane %v7058, 7
        %v7368 = vsel %vm5475, %v7366, %v7367
        %v7369 = vrot.slane %v7367, 2
        %v7370 = vrot.slane %v7059, 7
        %v7371 = vsel %vm5475, %v7369, %v7370
        %v7372 = vrot.slane %v7370, 2
        %v7373 = vrot.slane %v7060, 7
        %v7374 = vsel %vm5475, %v7372, %v7373
        %v7375 = vrot.slane %v7373, 2
        %v7376 = vrot.slane %v7061, 7
        %v7377 = vsel %vm5475, %v7375, %v7376
        %v7378 = vrot.slane %v7376, 2
        %v7379 = vrot.slane %v7062, 7
        %v7380 = vsel %vm5475, %v7378, %v7379
        %v7381 = vrot.slane %v7379, 2
        %v7382 = vrot.slane %v7063, 7
        %v7383 = vsel %vm5475, %v7381, %v7382
        %v7384 = vrot.slane %v7064, 7
        %v7385 = vrot.slane %v7384, 2
        %v7386 = vrot.slane %v7065, 7
        %v7387 = vsel %vm5475, %v7385, %v7386
        %v7388 = vrot.slane %v7386, 2
        %v7389 = vrot.slane %v7066, 7
        %v7390 = vsel %vm5475, %v7388, %v7389
        %v7391 = vrot.slane %v7389, 2
        %v7392 = vrot.slane %v7067, 7
        %v7393 = vsel %vm5475, %v7391, %v7392
        %v7394 = vrot.slane %v7392, 2
        %v7395 = vrot.slane %v7068, 7
        %v7396 = vsel %vm5475, %v7394, %v7395
        %v7397 = vrot.slane %v7395, 2
        %v7398 = vrot.slane %v7069, 7
        %v7399 = vsel %vm5475, %v7397, %v7398
        %v7400 = vrot.slane %v7398, 2
        %v7401 = vrot.slane %v7070, 7
        %v7402 = vsel %vm5475, %v7400, %v7401
        %v7403 = vrot.slane %v7401, 2
        %v7404 = vrot.slane %v7071, 7
        %v7405 = vsel %vm5475, %v7403, %v7404
        %v7406 = vrot.slane %v7404, 2
        %v7407 = vrot.slane %v7072, 7
        %v7408 = vsel %vm5475, %v7406, %v7407
        %v7409 = vrot.slane %v7073, 7
        %v7410 = vrot.slane %v7409, 2
        %v7411 = vrot.slane %v7074, 7
        %v7412 = vsel %vm5475, %v7410, %v7411
        %v7413 = vrot.slane %v7411, 2
        %v7414 = vrot.slane %v7075, 7
        %v7415 = vsel %vm5475, %v7413, %v7414
        %v7416 = vrot.slane %v7414, 2
        %v7417 = vrot.slane %v7076, 7
        %v7418 = vsel %vm5475, %v7416, %v7417
        %v7419 = vrot.slane %v7417, 2
        %v7420 = vrot.slane %v7077, 7
        %v7421 = vsel %vm5475, %v7419, %v7420
        %v7422 = vrot.slane %v7420, 2
        %v7423 = vrot.slane %v7078, 7
        %v7424 = vsel %vm5475, %v7422, %v7423
        %v7425 = vrot.slane %v7423, 2
        %v7426 = vrot.slane %v7079, 7
        %v7427 = vsel %vm5475, %v7425, %v7426
        %v7428 = vrot.slane %v7426, 2
        %v7429 = vrot.slane %v7080, 7
        %v7430 = vsel %vm5475, %v7428, %v7429
        %v7431 = vrot.slane %v7429, 2
        %v7432 = vrot.slane %v7081, 7
        %v7433 = vsel %vm5475, %v7431, %v7432
        %v7434 = vrot.slane %v7082, 7
        %v7435 = vrot.slane %v7434, 2
        %v7436 = vrot.slane %v7083, 7
        %v7437 = vsel %vm5475, %v7435, %v7436
        %v7438 = vrot.slane %v7436, 2
        %v7439 = vrot.slane %v7084, 7
        %v7440 = vsel %vm5475, %v7438, %v7439
        %v7441 = vrot.slane %v7439, 2
        %v7442 = vrot.slane %v7085, 7
        %v7443 = vsel %vm5475, %v7441, %v7442
        %v7444 = vrot.slane %v7442, 2
        %v7445 = vrot.slane %v7086, 7
        %v7446 = vsel %vm5475, %v7444, %v7445
        %v7447 = vrot.slane %v7445, 2
        %v7448 = vrot.slane %v7087, 7
        %v7449 = vsel %vm5475, %v7447, %v7448
        %v7450 = vrot.slane %v7448, 2
        %v7451 = vrot.slane %v7088, 7
        %v7452 = vsel %vm5475, %v7450, %v7451
        %v7453 = vrot.slane %v7451, 2
        %v7454 = vrot.slane %v7089, 7
        %v7455 = vsel %vm5475, %v7453, %v7454
        %v7456 = vrot.slane %v7454, 2
        %v7457 = vrot.slane %v7090, 7
        %v7458 = vsel %vm5475, %v7456, %v7457
        %v7459 = vrot.slane %v7091, 7
        %v7460 = vrot.slane %v7459, 2
        %v7461 = vrot.slane %v7092, 7
        %v7462 = vsel %vm5475, %v7460, %v7461
        %v7463 = vrot.slane %v7461, 2
        %v7464 = vrot.slane %v7093, 7
        %v7465 = vsel %vm5475, %v7463, %v7464
        %v7466 = vrot.slane %v7464, 2
        %v7467 = vrot.slane %v7094, 7
        %v7468 = vsel %vm5475, %v7466, %v7467
        %v7469 = vrot.slane %v7467, 2
        %v7470 = vrot.slane %v7095, 7
        %v7471 = vsel %vm5475, %v7469, %v7470
        %v7472 = vrot.slane %v7470, 2
        %v7473 = vrot.slane %v7096, 7
        %v7474 = vsel %vm5475, %v7472, %v7473
        %v7475 = vrot.slane %v7473, 2
        %v7476 = vrot.slane %v7097, 7
        %v7477 = vsel %vm5475, %v7475, %v7476
        %v7478 = vrot.slane %v7476, 2
        %v7479 = vrot.slane %v7098, 7
        %v7480 = vsel %vm5475, %v7478, %v7479
        %v7481 = vrot.slane %v7479, 2
        %v7482 = vrot.slane %v7099, 7
        %v7483 = vsel %vm5475, %v7481, %v7482
        %v7484 = vrot.slane %v7100, 7
        %v7485 = vrot.slane %v7484, 2
        %v7486 = vrot.slane %v7101, 7
        %v7487 = vsel %vm5475, %v7485, %v7486
        %v7488 = vrot.slane %v7486, 2
        %v7489 = vrot.slane %v7102, 7
        %v7490 = vsel %vm5475, %v7488, %v7489
        %v7491 = vrot.slane %v7489, 2
        %v7492 = vrot.slane %v7103, 7
        %v7493 = vsel %vm5475, %v7491, %v7492
        %v7494 = vrot.slane %v7492, 2
        %v7495 = vrot.slane %v7104, 7
        %v7496 = vsel %vm5475, %v7494, %v7495
        %v7497 = vrot.slane %v7495, 2
        %v7498 = vrot.slane %v7105, 7
        %v7499 = vsel %vm5475, %v7497, %v7498
        %v7500 = vrot.slane %v7498, 2
        %v7501 = vrot.slane %v7106, 7
        %v7502 = vsel %vm5475, %v7500, %v7501
        %v7503 = vrot.slane %v7501, 2
        %v7504 = vrot.slane %v7107, 7
        %v7505 = vsel %vm5475, %v7503, %v7504
        %v7506 = vrot.slane %v7504, 2
        %v7507 = vrot.slane %v7108, 7
        %v7508 = vsel %vm5475, %v7506, %v7507
        %v7509 = vrot.slane %v7109, 7
        %v7510 = vrot.slane %v7509, 2
        %v7511 = vrot.slane %v7110, 7
        %v7512 = vsel %vm5475, %v7510, %v7511
        %v7513 = vrot.slane %v7511, 2
        %v7514 = vrot.slane %v7111, 7
        %v7515 = vsel %vm5475, %v7513, %v7514
        %v7516 = vrot.slane %v7514, 2
        %v7517 = vrot.slane %v7112, 7
        %v7518 = vsel %vm5475, %v7516, %v7517
        %v7519 = vrot.slane %v7517, 2
        %v7520 = vrot.slane %v7113, 7
        %v7521 = vsel %vm5475, %v7519, %v7520
        %v7522 = vrot.slane %v7520, 2
        %v7523 = vrot.slane %v7114, 7
        %v7524 = vsel %vm5475, %v7522, %v7523
        %v7525 = vrot.slane %v7523, 2
        %v7526 = vrot.slane %v7115, 7
        %v7527 = vsel %vm5475, %v7525, %v7526
        %v7528 = vrot.slane %v7526, 2
        %v7529 = vrot.slane %v7116, 7
        %v7530 = vsel %vm5475, %v7528, %v7529
        %v7531 = vrot.slane %v7529, 2
        %v7532 = vrot.slane %v7117, 7
        %v7533 = vsel %vm5475, %v7531, %v7532
        %v7534 = vrot.slane %v7118, 7
        %v7535 = vrot.slane %v7534, 2
        %v7536 = vrot.slane %v7119, 7
        %v7537 = vsel %vm5475, %v7535, %v7536
        %v7538 = vrot.slane %v7536, 2
        %v7539 = vrot.slane %v7120, 7
        %v7540 = vsel %vm5475, %v7538, %v7539
        %v7541 = vrot.slane %v7539, 2
        %v7542 = vrot.slane %v7121, 7
        %v7543 = vsel %vm5475, %v7541, %v7542
        %v7544 = vrot.slane %v7542, 2
        %v7545 = vrot.slane %v7122, 7
        %v7546 = vsel %vm5475, %v7544, %v7545
        %v7547 = vrot.slane %v7545, 2
        %v7548 = vrot.slane %v7123, 7
        %v7549 = vsel %vm5475, %v7547, %v7548
        %v7550 = vrot.slane %v7548, 2
        %v7551 = vrot.slane %v7124, 7
        %v7552 = vsel %vm5475, %v7550, %v7551
        %v7553 = vrot.slane %v7551, 2
        %v7554 = vrot.slane %v7125, 7
        %v7555 = vsel %vm5475, %v7553, %v7554
        %v7556 = vrot.slane %v7554, 2
        %v7557 = vrot.slane %v7126, 7
        %v7558 = vsel %vm5475, %v7556, %v7557
        %v7559 = vrot.slane %v7127, 7
        %v7560 = vrot.slane %v7559, 2
        %v7561 = vrot.slane %v7128, 7
        %v7562 = vsel %vm5475, %v7560, %v7561
        %v7563 = vrot.slane %v7561, 2
        %v7564 = vrot.slane %v7129, 7
        %v7565 = vsel %vm5475, %v7563, %v7564
        %v7566 = vrot.slane %v7564, 2
        %v7567 = vrot.slane %v7130, 7
        %v7568 = vsel %vm5475, %v7566, %v7567
        %v7569 = vrot.slane %v7567, 2
        %v7570 = vrot.slane %v7131, 7
        %v7571 = vsel %vm5475, %v7569, %v7570
        %v7572 = vrot.slane %v7570, 2
        %v7573 = vrot.slane %v7132, 7
        %v7574 = vsel %vm5475, %v7572, %v7573
        %v7575 = vrot.slane %v7573, 2
        %v7576 = vrot.slane %v7133, 7
        %v7577 = vsel %vm5475, %v7575, %v7576
        %v7578 = vrot.slane %v7576, 2
        %v7579 = vrot.slane %v7134, 7
        %v7580 = vsel %vm5475, %v7578, %v7579
        %v7581 = vrot.slane %v7579, 2
        %v7582 = vrot.slane %v7135, 7
        %v7583 = vsel %vm5475, %v7581, %v7582
        %v7584 = vrot.slane %v7136, 7
        %v7585 = vrot.slane %v7584, 2
        %v7586 = vrot.slane %v7137, 7
        %v7587 = vsel %vm5475, %v7585, %v7586
        %v7588 = vrot.slane %v7586, 2
        %v7589 = vrot.slane %v7138, 7
        %v7590 = vsel %vm5475, %v7588, %v7589
        %v7591 = vrot.slane %v7589, 2
        %v7592 = vrot.slane %v7139, 7
        %v7593 = vsel %vm5475, %v7591, %v7592
        %v7594 = vrot.slane %v7592, 2
        %v7595 = vrot.slane %v7140, 7
        %v7596 = vsel %vm5475, %v7594, %v7595
        %v7597 = vrot.slane %v7595, 2
        %v7598 = vrot.slane %v7141, 7
        %v7599 = vsel %vm5475, %v7597, %v7598
        %v7600 = vrot.slane %v7598, 2
        %v7601 = vrot.slane %v7142, 7
        %v7602 = vsel %vm5475, %v7600, %v7601
        %v7603 = vrot.slane %v7601, 2
        %v7604 = vrot.slane %v7143, 7
        %v7605 = vsel %vm5475, %v7603, %v7604
        %v7606 = vrot.slane %v7604, 2
        %v7607 = vrot.slane %v7144, 7
        %v7608 = vsel %vm5475, %v7606, %v7607
        %v7609 = vrot.slane %v7145, 7
        %v7610 = vrot.slane %v7609, 2
        %v7611 = vrot.slane %v7146, 7
        %v7612 = vsel %vm5475, %v7610, %v7611
        %v7613 = vrot.slane %v7611, 2
        %v7614 = vrot.slane %v7147, 7
        %v7615 = vsel %vm5475, %v7613, %v7614
        %v7616 = vrot.slane %v7614, 2
        %v7617 = vrot.slane %v7148, 7
        %v7618 = vsel %vm5475, %v7616, %v7617
        %v7619 = vrot.slane %v7617, 2
        %v7620 = vrot.slane %v7149, 7
        %v7621 = vsel %vm5475, %v7619, %v7620
        %v7622 = vrot.slane %v7620, 2
        %v7623 = vrot.slane %v7150, 7
        %v7624 = vsel %vm5475, %v7622, %v7623
        %v7625 = vrot.slane %v7623, 2
        %v7626 = vrot.slane %v7151, 7
        %v7627 = vsel %vm5475, %v7625, %v7626
        %v7628 = vrot.slane %v7626, 2
        %v7629 = vrot.slane %v7152, 7
        %v7630 = vsel %vm5475, %v7628, %v7629
        %v7631 = vrot.slane %v7629, 2
        %v7632 = vrot.slane %v7153, 7
        %v7633 = vsel %vm5475, %v7631, %v7632
        %v7634 = vrot.slane %v7154, 7
        %v7635 = vrot.slane %v7634, 2
        %v7636 = vrot.slane %v7155, 7
        %v7637 = vsel %vm5475, %v7635, %v7636
        %v7638 = vrot.slane %v7636, 2
        %v7639 = vrot.slane %v7156, 7
        %v7640 = vsel %vm5475, %v7638, %v7639
        %v7641 = vrot.slane %v7639, 2
        %v7642 = vrot.slane %v7157, 7
        %v7643 = vsel %vm5475, %v7641, %v7642
        %v7644 = vrot.slane %v7642, 2
        %v7645 = vrot.slane %v7158, 7
        %v7646 = vsel %vm5475, %v7644, %v7645
        %v7647 = vrot.slane %v7645, 2
        %v7648 = vrot.slane %v7159, 7
        %v7649 = vsel %vm5475, %v7647, %v7648
        %v7650 = vrot.slane %v7648, 2
        %v7651 = vrot.slane %v7160, 7
        %v7652 = vsel %vm5475, %v7650, %v7651
        %v7653 = vrot.slane %v7651, 2
        %v7654 = vrot.slane %v7161, 7
        %v7655 = vsel %vm5475, %v7653, %v7654
        %v7656 = vrot.slane %v7654, 2
        %v7657 = vrot.slane %v7162, 7
        %v7658 = vsel %vm5475, %v7656, %v7657
        %v7659 = vrot.slane %v7163, 7
        %v7660 = vrot.slane %v7659, 2
        %v7661 = vrot.slane %v7164, 7
        %v7662 = vsel %vm5475, %v7660, %v7661
        %v7663 = vrot.slane %v7661, 2
        %v7664 = vrot.slane %v7165, 7
        %v7665 = vsel %vm5475, %v7663, %v7664
        %v7666 = vrot.slane %v7664, 2
        %v7667 = vrot.slane %v7166, 7
        %v7668 = vsel %vm5475, %v7666, %v7667
        %v7669 = vrot.slane %v7667, 2
        %v7670 = vrot.slane %v7167, 7
        %v7671 = vsel %vm5475, %v7669, %v7670
        %v7672 = vrot.slane %v7670, 2
        %v7673 = vrot.slane %v7168, 7
        %v7674 = vsel %vm5475, %v7672, %v7673
        %v7675 = vrot.slane %v7673, 2
        %v7676 = vrot.slane %v7169, 7
        %v7677 = vsel %vm5475, %v7675, %v7676
        %v7678 = vrot.slane %v7676, 2
        %v7679 = vrot.slane %v7170, 7
        %v7680 = vsel %vm5475, %v7678, %v7679
        %v7681 = vrot.slane %v7679, 2
        %v7682 = vrot.slane %v7171, 7
        %v7683 = vsel %vm5475, %v7681, %v7682
        %v7684 = vrot.slane %v7172, 7
        %v7685 = vrot.slane %v7684, 2
        %v7686 = vrot.slane %v7173, 7
        %v7687 = vsel %vm5475, %v7685, %v7686
        %v7688 = vrot.slane %v7686, 2
        %v7689 = vrot.slane %v7174, 7
        %v7690 = vsel %vm5475, %v7688, %v7689
        %v7691 = vrot.slane %v7689, 2
        %v7692 = vrot.slane %v7175, 7
        %v7693 = vsel %vm5475, %v7691, %v7692
        %v7694 = vrot.slane %v7692, 2
        %v7695 = vrot.slane %v7176, 7
        %v7696 = vsel %vm5475, %v7694, %v7695
        %v7697 = vrot.slane %v7695, 2
        %v7698 = vrot.slane %v7177, 7
        %v7699 = vsel %vm5475, %v7697, %v7698
        %v7700 = vrot.slane %v7698, 2
        %v7701 = vrot.slane %v7178, 7
        %v7702 = vsel %vm5475, %v7700, %v7701
        %v7703 = vrot.slane %v7701, 2
        %v7704 = vrot.slane %v7179, 7
        %v7705 = vsel %vm5475, %v7703, %v7704
        %v7706 = vrot.slane %v7704, 2
        %v7707 = vrot.slane %v7180, 7
        %v7708 = vsel %vm5475, %v7706, %v7707
        %v7709 = vrot.slane %v7181, 7
        %v7710 = vrot.slane %v7709, 2
        %v7711 = vrot.slane %v7182, 7
        %v7712 = vsel %vm5475, %v7710, %v7711
        %v7713 = vrot.slane %v7711, 2
        %v7714 = vrot.slane %v7183, 7
        %v7715 = vsel %vm5475, %v7713, %v7714
        %v7716 = vrot.slane %v7714, 2
        %v7717 = vrot.slane %v7184, 7
        %v7718 = vsel %vm5475, %v7716, %v7717
        %v7719 = vrot.slane %v7717, 2
        %v7720 = vrot.slane %v7185, 7
        %v7721 = vsel %vm5475, %v7719, %v7720
        %v7722 = vrot.slane %v7720, 2
        %v7723 = vrot.slane %v7186, 7
        %v7724 = vsel %vm5475, %v7722, %v7723
        %v7725 = vrot.slane %v7723, 2
        %v7726 = vrot.slane %v7187, 7
        %v7727 = vsel %vm5475, %v7725, %v7726
        %v7728 = vrot.slane %v7726, 2
        %v7729 = vrot.slane %v7188, 7
        %v7730 = vsel %vm5475, %v7728, %v7729
        %v7731 = vrot.slane %v7729, 2
        %v7732 = vrot.slane %v7189, 7
        %v7733 = vsel %vm5475, %v7731, %v7732
        %v7862 = vadd.f32 %v6877, %v7337
        %v7863 = vadd.f32 %v6878, %v7340
        %v7864 = vadd.f32 %v6879, %v7343
        %v7865 = vadd.f32 %v6880, %v7346
        %v7866 = vadd.f32 %v6881, %v7349
        %v7867 = vadd.f32 %v6882, %v7352
        %v7868 = vadd.f32 %v6883, %v7355
        %v7869 = vadd.f32 %v6884, %v7358
        %v7870 = vadd.f32 %v6885, %v7362
        %v7871 = vadd.f32 %v6886, %v7365
        %v7872 = vadd.f32 %v6887, %v7368
        %v7873 = vadd.f32 %v6888, %v7371
        %v7874 = vadd.f32 %v6889, %v7374
        %v7875 = vadd.f32 %v6890, %v7377
        %v7876 = vadd.f32 %v6891, %v7380
        %v7877 = vadd.f32 %v6892, %v7383
        %v7878 = vadd.f32 %v6893, %v7387
        %v7879 = vadd.f32 %v6894, %v7390
        %v7880 = vadd.f32 %v6895, %v7393
        %v7881 = vadd.f32 %v6896, %v7396
        %v7882 = vadd.f32 %v6897, %v7399
        %v7883 = vadd.f32 %v6898, %v7402
        %v7884 = vadd.f32 %v6899, %v7405
        %v7885 = vadd.f32 %v6900, %v7408
        %v7886 = vadd.f32 %v6901, %v7412
        %v7887 = vadd.f32 %v6902, %v7415
        %v7888 = vadd.f32 %v6903, %v7418
        %v7889 = vadd.f32 %v6904, %v7421
        %v7890 = vadd.f32 %v6905, %v7424
        %v7891 = vadd.f32 %v6906, %v7427
        %v7892 = vadd.f32 %v6907, %v7430
        %v7893 = vadd.f32 %v6908, %v7433
        %v7894 = vadd.f32 %v6909, %v7437
        %v7895 = vadd.f32 %v6910, %v7440
        %v7896 = vadd.f32 %v6911, %v7443
        %v7897 = vadd.f32 %v6912, %v7446
        %v7898 = vadd.f32 %v6913, %v7449
        %v7899 = vadd.f32 %v6914, %v7452
        %v7900 = vadd.f32 %v6915, %v7455
        %v7901 = vadd.f32 %v6916, %v7458
        %v7902 = vadd.f32 %v6917, %v7462
        %v7903 = vadd.f32 %v6918, %v7465
        %v7904 = vadd.f32 %v6919, %v7468
        %v7905 = vadd.f32 %v6920, %v7471
        %v7906 = vadd.f32 %v6921, %v7474
        %v7907 = vadd.f32 %v6922, %v7477
        %v7908 = vadd.f32 %v6923, %v7480
        %v7909 = vadd.f32 %v6924, %v7483
        %v7910 = vadd.f32 %v6925, %v7487
        %v7911 = vadd.f32 %v6926, %v7490
        %v7912 = vadd.f32 %v6927, %v7493
        %v7913 = vadd.f32 %v6928, %v7496
        %v7914 = vadd.f32 %v6929, %v7499
        %v7915 = vadd.f32 %v6930, %v7502
        %v7916 = vadd.f32 %v6931, %v7505
        %v7917 = vadd.f32 %v6932, %v7508
        %v7918 = vadd.f32 %v6933, %v7512
        %v7919 = vadd.f32 %v6934, %v7515
        %v7920 = vadd.f32 %v6935, %v7518
        %v7921 = vadd.f32 %v6936, %v7521
        %v7922 = vadd.f32 %v6937, %v7524
        %v7923 = vadd.f32 %v6938, %v7527
        %v7924 = vadd.f32 %v6939, %v7530
        %v7925 = vadd.f32 %v6940, %v7533
        %v7926 = vadd.f32 %v6941, %v7537
        %v7927 = vadd.f32 %v6942, %v7540
        %v7928 = vadd.f32 %v6943, %v7543
        %v7929 = vadd.f32 %v6944, %v7546
        %v7930 = vadd.f32 %v6945, %v7549
        %v7931 = vadd.f32 %v6946, %v7552
        %v7932 = vadd.f32 %v6947, %v7555
        %v7933 = vadd.f32 %v6948, %v7558
        %v7934 = vadd.f32 %v6949, %v7562
        %v7935 = vadd.f32 %v6950, %v7565
        %v7936 = vadd.f32 %v6951, %v7568
        %v7937 = vadd.f32 %v6952, %v7571
        %v7938 = vadd.f32 %v6953, %v7574
        %v7939 = vadd.f32 %v6954, %v7577
        %v7940 = vadd.f32 %v6955, %v7580
        %v7941 = vadd.f32 %v6956, %v7583
        %v7942 = vadd.f32 %v6957, %v7587
        %v7943 = vadd.f32 %v6958, %v7590
        %v7944 = vadd.f32 %v6959, %v7593
        %v7945 = vadd.f32 %v6960, %v7596
        %v7946 = vadd.f32 %v6961, %v7599
        %v7947 = vadd.f32 %v6962, %v7602
        %v7948 = vadd.f32 %v6963, %v7605
        %v7949 = vadd.f32 %v6964, %v7608
        %v7950 = vadd.f32 %v6965, %v7612
        %v7951 = vadd.f32 %v6966, %v7615
        %v7952 = vadd.f32 %v6967, %v7618
        %v7953 = vadd.f32 %v6968, %v7621
        %v7954 = vadd.f32 %v6969, %v7624
        %v7955 = vadd.f32 %v6970, %v7627
        %v7956 = vadd.f32 %v6971, %v7630
        %v7957 = vadd.f32 %v6972, %v7633
        %v7958 = vadd.f32 %v6973, %v7637
        %v7959 = vadd.f32 %v6974, %v7640
        %v7960 = vadd.f32 %v6975, %v7643
        %v7961 = vadd.f32 %v6976, %v7646
        %v7962 = vadd.f32 %v6977, %v7649
        %v7963 = vadd.f32 %v6978, %v7652
        %v7964 = vadd.f32 %v6979, %v7655
        %v7965 = vadd.f32 %v6980, %v7658
        %v7966 = vadd.f32 %v6981, %v7662
        %v7967 = vadd.f32 %v6982, %v7665
        %v7968 = vadd.f32 %v6983, %v7668
        %v7969 = vadd.f32 %v6984, %v7671
        %v7970 = vadd.f32 %v6985, %v7674
        %v7971 = vadd.f32 %v6986, %v7677
        %v7972 = vadd.f32 %v6987, %v7680
        %v7973 = vadd.f32 %v6988, %v7683
        %v7974 = vadd.f32 %v6989, %v7687
        %v7975 = vadd.f32 %v6990, %v7690
        %v7976 = vadd.f32 %v6991, %v7693
        %v7977 = vadd.f32 %v6992, %v7696
        %v7978 = vadd.f32 %v6993, %v7699
        %v7979 = vadd.f32 %v6994, %v7702
        %v7980 = vadd.f32 %v6995, %v7705
        %v7981 = vadd.f32 %v6996, %v7708
        %v7982 = vadd.f32 %v6997, %v7712
        %v7983 = vadd.f32 %v6998, %v7715
        %v7984 = vadd.f32 %v6999, %v7718
        %v7985 = vadd.f32 %v7000, %v7721
        %v7986 = vadd.f32 %v7001, %v7724
        %v7987 = vadd.f32 %v7002, %v7727
        %v7988 = vadd.f32 %v7003, %v7730
        %v7989 = vadd.f32 %v7004, %v7733
        %v7990 = vld [vmem:[%s6721 + $0x2] sm:$0x1]
        %v7991 = vlaneseq
        %v7992 = vshrl.u32 %v7991, 7
        %v7993 = vsub.s32 0, %v7992
        %v7994 = vrot.slane %v7990, %v7993
        %v7996 = vcombine.high %v7994, %v7994
        %v7998 = vunpack.c.l.s4 1983009808
        %v7999 = vunpack.c.0.s8 %v7998
        %v8000 = vlaneseq
        %v8001 = vshrl.u32 %v8000, 7
        %v8002 = vsub.s32 %v7999, %v8001
        %v8003 = vrot.slane %v7994, %v8002
        %v8005 = vunpack.c.l.s4 1983009808
        %v8006 = vunpack.c.0.s8 %v8005
        %v8007 = vlaneseq
        %v8008 = vshrl.u32 %v8007, 7
        %v8009 = vsub.s32 %v8006, %v8008
        %v8010 = vrot.slane %v7996, %v8009
        %v8011 = vcombine.high %v8003, %v8003
        %v8012 = vcombine.high %v8010, %v8010
        %v8017 = vmul.f32 %v5011, %v8003
        %v8018 = vmul.f32 %v5012, %v8011
        %v8019 = vmul.f32 %v5013, %v8010
        %v8020 = vmul.f32 %v5014, %v8012
        %v8021 = vmul.f32 %v5015, %v8003
        %v8022 = vmul.f32 %v5016, %v8011
        %v8023 = vmul.f32 %v5017, %v8010
        %v8024 = vmul.f32 %v5018, %v8012
        %v8025 = vmul.f32 %v5020, %v8003
        %v8026 = vmul.f32 %v5021, %v8011
        %v8027 = vmul.f32 %v5022, %v8010
        %v8028 = vmul.f32 %v5023, %v8012
        %v8029 = vmul.f32 %v5024, %v8003
        %v8030 = vmul.f32 %v5025, %v8011
        %v8031 = vmul.f32 %v5026, %v8010
        %v8032 = vmul.f32 %v5027, %v8012
        %v8033 = vmul.f32 %v5029, %v8003
        %v8034 = vmul.f32 %v5030, %v8011
        %v8035 = vmul.f32 %v5031, %v8010
        %v8036 = vmul.f32 %v5032, %v8012
        %v8037 = vmul.f32 %v5033, %v8003
        %v8038 = vmul.f32 %v5034, %v8011
        %v8039 = vmul.f32 %v5035, %v8010
        %v8040 = vmul.f32 %v5036, %v8012
        %v8041 = vmul.f32 %v5038, %v8003
        %v8042 = vmul.f32 %v5039, %v8011
        %v8043 = vmul.f32 %v5040, %v8010
        %v8044 = vmul.f32 %v5041, %v8012
        %v8045 = vmul.f32 %v5042, %v8003
        %v8046 = vmul.f32 %v5043, %v8011
        %v8047 = vmul.f32 %v5044, %v8010
        %v8048 = vmul.f32 %v5045, %v8012
        %v8049 = vmul.f32 %v5047, %v8003
        %v8050 = vmul.f32 %v5048, %v8011
        %v8051 = vmul.f32 %v5049, %v8010
        %v8052 = vmul.f32 %v5050, %v8012
        %v8053 = vmul.f32 %v5051, %v8003
        %v8054 = vmul.f32 %v5052, %v8011
        %v8055 = vmul.f32 %v5053, %v8010
        %v8056 = vmul.f32 %v5054, %v8012
        %v8057 = vmul.f32 %v5056, %v8003
        %v8058 = vmul.f32 %v5057, %v8011
        %v8059 = vmul.f32 %v5058, %v8010
        %v8060 = vmul.f32 %v5059, %v8012
        %v8061 = vmul.f32 %v5060, %v8003
        %v8062 = vmul.f32 %v5061, %v8011
        %v8063 = vmul.f32 %v5062, %v8010
        %v8064 = vmul.f32 %v5063, %v8012
        %v8065 = vmul.f32 %v5065, %v8003
        %v8066 = vmul.f32 %v5066, %v8011
        %v8067 = vmul.f32 %v5067, %v8010
        %v8068 = vmul.f32 %v5068, %v8012
        %v8069 = vmul.f32 %v5069, %v8003
        %v8070 = vmul.f32 %v5070, %v8011
        %v8071 = vmul.f32 %v5071, %v8010
        %v8072 = vmul.f32 %v5072, %v8012
        %v8073 = vmul.f32 %v5074, %v8003
        %v8074 = vmul.f32 %v5075, %v8011
        %v8075 = vmul.f32 %v5076, %v8010
        %v8076 = vmul.f32 %v5077, %v8012
        %v8077 = vmul.f32 %v5078, %v8003
        %v8078 = vmul.f32 %v5079, %v8011
        %v8079 = vmul.f32 %v5080, %v8010
        %v8080 = vmul.f32 %v5081, %v8012
        %v8081 = vmul.f32 %v5083, %v8003
        %v8082 = vmul.f32 %v5084, %v8011
        %v8083 = vmul.f32 %v5085, %v8010
        %v8084 = vmul.f32 %v5086, %v8012
        %v8085 = vmul.f32 %v5087, %v8003
        %v8086 = vmul.f32 %v5088, %v8011
        %v8087 = vmul.f32 %v5089, %v8010
        %v8088 = vmul.f32 %v5090, %v8012
        %v8089 = vmul.f32 %v5092, %v8003
        %v8090 = vmul.f32 %v5093, %v8011
        %v8091 = vmul.f32 %v5094, %v8010
        %v8092 = vmul.f32 %v5095, %v8012
        %v8093 = vmul.f32 %v5096, %v8003
        %v8094 = vmul.f32 %v5097, %v8011
        %v8095 = vmul.f32 %v5098, %v8010
        %v8096 = vmul.f32 %v5099, %v8012
        %v8097 = vmul.f32 %v5101, %v8003
        %v8098 = vmul.f32 %v5102, %v8011
        %v8099 = vmul.f32 %v5103, %v8010
        %v8100 = vmul.f32 %v5104, %v8012
        %v8101 = vmul.f32 %v5105, %v8003
        %v8102 = vmul.f32 %v5106, %v8011
        %v8103 = vmul.f32 %v5107, %v8010
        %v8104 = vmul.f32 %v5108, %v8012
        %v8105 = vmul.f32 %v5110, %v8003
        %v8106 = vmul.f32 %v5111, %v8011
        %v8107 = vmul.f32 %v5112, %v8010
        %v8108 = vmul.f32 %v5113, %v8012
        %v8109 = vmul.f32 %v5114, %v8003
        %v8110 = vmul.f32 %v5115, %v8011
        %v8111 = vmul.f32 %v5116, %v8010
        %v8112 = vmul.f32 %v5117, %v8012
        %v8113 = vmul.f32 %v5119, %v8003
        %v8114 = vmul.f32 %v5120, %v8011
        %v8115 = vmul.f32 %v5121, %v8010
        %v8116 = vmul.f32 %v5122, %v8012
        %v8117 = vmul.f32 %v5123, %v8003
        %v8118 = vmul.f32 %v5124, %v8011
        %v8119 = vmul.f32 %v5125, %v8010
        %v8120 = vmul.f32 %v5126, %v8012
        %v8121 = vmul.f32 %v5128, %v8003
        %v8122 = vmul.f32 %v5129, %v8011
        %v8123 = vmul.f32 %v5130, %v8010
        %v8124 = vmul.f32 %v5131, %v8012
        %v8125 = vmul.f32 %v5132, %v8003
        %v8126 = vmul.f32 %v5133, %v8011
        %v8127 = vmul.f32 %v5134, %v8010
        %v8128 = vmul.f32 %v5135, %v8012
        %v8129 = vmul.f32 %v5137, %v8003
        %v8130 = vmul.f32 %v5138, %v8011
        %v8131 = vmul.f32 %v5139, %v8010
        %v8132 = vmul.f32 %v5140, %v8012
        %v8133 = vmul.f32 %v5141, %v8003
        %v8134 = vmul.f32 %v5142, %v8011
        %v8135 = vmul.f32 %v5143, %v8010
        %v8136 = vmul.f32 %v5144, %v8012
        %v8137 = vmul.f32 %v5146, %v8003
        %v8138 = vmul.f32 %v5147, %v8011
        %v8139 = vmul.f32 %v5148, %v8010
        %v8140 = vmul.f32 %v5149, %v8012
        %v8141 = vmul.f32 %v5150, %v8003
        %v8142 = vmul.f32 %v5151, %v8011
        %v8143 = vmul.f32 %v5152, %v8010
        %v8144 = vmul.f32 %v5153, %v8012
        %v8145 = vadd.f32 %v7862, %v8017
        %v8146 = vadd.f32 %v7863, %v8018
        %v8147 = vadd.f32 %v7864, %v8019
        %v8148 = vadd.f32 %v7865, %v8020
        %v8149 = vadd.f32 %v7866, %v8021
        %v8150 = vadd.f32 %v7867, %v8022
        %v8151 = vadd.f32 %v7868, %v8023
        %v8152 = vadd.f32 %v7869, %v8024
        %v8153 = vadd.f32 %v7870, %v8025
        %v8154 = vadd.f32 %v7871, %v8026
        %v8155 = vadd.f32 %v7872, %v8027
        %v8156 = vadd.f32 %v7873, %v8028
        %v8157 = vadd.f32 %v7874, %v8029
        %v8158 = vadd.f32 %v7875, %v8030
        %v8159 = vadd.f32 %v7876, %v8031
        %v8160 = vadd.f32 %v7877, %v8032
        %v8161 = vadd.f32 %v7878, %v8033
        %v8162 = vadd.f32 %v7879, %v8034
        %v8163 = vadd.f32 %v7880, %v8035
        %v8164 = vadd.f32 %v7881, %v8036
        %v8165 = vadd.f32 %v7882, %v8037
        %v8166 = vadd.f32 %v7883, %v8038
        %v8167 = vadd.f32 %v7884, %v8039
        %v8168 = vadd.f32 %v7885, %v8040
        %v8169 = vadd.f32 %v7886, %v8041
        %v8170 = vadd.f32 %v7887, %v8042
        %v8171 = vadd.f32 %v7888, %v8043
        %v8172 = vadd.f32 %v7889, %v8044
        %v8173 = vadd.f32 %v7890, %v8045
        %v8174 = vadd.f32 %v7891, %v8046
        %v8175 = vadd.f32 %v7892, %v8047
        %v8176 = vadd.f32 %v7893, %v8048
        %v8177 = vadd.f32 %v7894, %v8049
        %v8178 = vadd.f32 %v7895, %v8050
        %v8179 = vadd.f32 %v7896, %v8051
        %v8180 = vadd.f32 %v7897, %v8052
        %v8181 = vadd.f32 %v7898, %v8053
        %v8182 = vadd.f32 %v7899, %v8054
        %v8183 = vadd.f32 %v7900, %v8055
        %v8184 = vadd.f32 %v7901, %v8056
        %v8185 = vadd.f32 %v7902, %v8057
        %v8186 = vadd.f32 %v7903, %v8058
        %v8187 = vadd.f32 %v7904, %v8059
        %v8188 = vadd.f32 %v7905, %v8060
        %v8189 = vadd.f32 %v7906, %v8061
        %v8190 = vadd.f32 %v7907, %v8062
        %v8191 = vadd.f32 %v7908, %v8063
        %v8192 = vadd.f32 %v7909, %v8064
        %v8193 = vadd.f32 %v7910, %v8065
        %v8194 = vadd.f32 %v7911, %v8066
        %v8195 = vadd.f32 %v7912, %v8067
        %v8196 = vadd.f32 %v7913, %v8068
        %v8197 = vadd.f32 %v7914, %v8069
        %v8198 = vadd.f32 %v7915, %v8070
        %v8199 = vadd.f32 %v7916, %v8071
        %v8200 = vadd.f32 %v7917, %v8072
        %v8201 = vadd.f32 %v7918, %v8073
        %v8202 = vadd.f32 %v7919, %v8074
        %v8203 = vadd.f32 %v7920, %v8075
        %v8204 = vadd.f32 %v7921, %v8076
        %v8205 = vadd.f32 %v7922, %v8077
        %v8206 = vadd.f32 %v7923, %v8078
        %v8207 = vadd.f32 %v7924, %v8079
        %v8208 = vadd.f32 %v7925, %v8080
        %v8209 = vadd.f32 %v7926, %v8081
        %v8210 = vadd.f32 %v7927, %v8082
        %v8211 = vadd.f32 %v7928, %v8083
        %v8212 = vadd.f32 %v7929, %v8084
        %v8213 = vadd.f32 %v7930, %v8085
        %v8214 = vadd.f32 %v7931, %v8086
        %v8215 = vadd.f32 %v7932, %v8087
        %v8216 = vadd.f32 %v7933, %v8088
        %v8217 = vadd.f32 %v7934, %v8089
        %v8218 = vadd.f32 %v7935, %v8090
        %v8219 = vadd.f32 %v7936, %v8091
        %v8220 = vadd.f32 %v7937, %v8092
        %v8221 = vadd.f32 %v7938, %v8093
        %v8222 = vadd.f32 %v7939, %v8094
        %v8223 = vadd.f32 %v7940, %v8095
        %v8224 = vadd.f32 %v7941, %v8096
        %v8225 = vadd.f32 %v7942, %v8097
        %v8226 = vadd.f32 %v7943, %v8098
        %v8227 = vadd.f32 %v7944, %v8099
        %v8228 = vadd.f32 %v7945, %v8100
        %v8229 = vadd.f32 %v7946, %v8101
        %v8230 = vadd.f32 %v7947, %v8102
        %v8231 = vadd.f32 %v7948, %v8103
        %v8232 = vadd.f32 %v7949, %v8104
        %v8233 = vadd.f32 %v7950, %v8105
        %v8234 = vadd.f32 %v7951, %v8106
        %v8235 = vadd.f32 %v7952, %v8107
        %v8236 = vadd.f32 %v7953, %v8108
        %v8237 = vadd.f32 %v7954, %v8109
        %v8238 = vadd.f32 %v7955, %v8110
        %v8239 = vadd.f32 %v7956, %v8111
        %v8240 = vadd.f32 %v7957, %v8112
        %v8241 = vadd.f32 %v7958, %v8113
        %v8242 = vadd.f32 %v7959, %v8114
        %v8243 = vadd.f32 %v7960, %v8115
        %v8244 = vadd.f32 %v7961, %v8116
        %v8245 = vadd.f32 %v7962, %v8117
        %v8246 = vadd.f32 %v7963, %v8118
        %v8247 = vadd.f32 %v7964, %v8119
        %v8248 = vadd.f32 %v7965, %v8120
        %v8249 = vadd.f32 %v7966, %v8121
        %v8250 = vadd.f32 %v7967, %v8122
        %v8251 = vadd.f32 %v7968, %v8123
        %v8252 = vadd.f32 %v7969, %v8124
        %v8253 = vadd.f32 %v7970, %v8125
        %v8254 = vadd.f32 %v7971, %v8126
        %v8255 = vadd.f32 %v7972, %v8127
        %v8256 = vadd.f32 %v7973, %v8128
        %v8257 = vadd.f32 %v7974, %v8129
        %v8258 = vadd.f32 %v7975, %v8130
        %v8259 = vadd.f32 %v7976, %v8131
        %v8260 = vadd.f32 %v7977, %v8132
        %v8261 = vadd.f32 %v7978, %v8133
        %v8262 = vadd.f32 %v7979, %v8134
        %v8263 = vadd.f32 %v7980, %v8135
        %v8264 = vadd.f32 %v7981, %v8136
        %v8265 = vadd.f32 %v7982, %v8137
        %v8266 = vadd.f32 %v7983, %v8138
        %v8267 = vadd.f32 %v7984, %v8139
        %v8268 = vadd.f32 %v7985, %v8140
        %v8269 = vadd.f32 %v7986, %v8141
        %v8270 = vadd.f32 %v7987, %v8142
        %v8271 = vadd.f32 %v7988, %v8143
        %v8272 = vadd.f32 %v7989, %v8144
        %s8273 = scalar_lea.vmem %s422, 8
        %v8274 = vld [vmem:[%s8273] sm:$0x1]
        %v8275 = vlaneseq
        %v8276 = vshrl.u32 %v8275, 7
        %v8277 = vsub.s32 0, %v8276
        %v8278 = vrot.slane %v8274, %v8277
        %v8280 = vcombine.high %v8278, %v8278
        %v8282 = vunpack.c.l.s4 1983009808
        %v8283 = vunpack.c.0.s8 %v8282
        %v8284 = vlaneseq
        %v8285 = vshrl.u32 %v8284, 7
        %v8286 = vsub.s32 %v8283, %v8285
        %v8287 = vrot.slane %v8278, %v8286
        %v8289 = vunpack.c.l.s4 1983009808
        %v8290 = vunpack.c.0.s8 %v8289
        %v8291 = vlaneseq
        %v8292 = vshrl.u32 %v8291, 7
        %v8293 = vsub.s32 %v8290, %v8292
        %v8294 = vrot.slane %v8280, %v8293
        %v8295 = vcombine.high %v8287, %v8287
        %v8296 = vcombine.high %v8294, %v8294
        %v8301 = vmul.f32 %v5019, %v8287
        %v8302 = vmul.f32 %v5020, %v8295
        %v8303 = vmul.f32 %v5021, %v8294
        %v8304 = vmul.f32 %v5022, %v8296
        %v8305 = vmul.f32 %v5023, %v8287
        %v8306 = vmul.f32 %v5024, %v8295
        %v8307 = vmul.f32 %v5025, %v8294
        %v8308 = vmul.f32 %v5026, %v8296
        %v8309 = vmul.f32 %v5028, %v8287
        %v8310 = vmul.f32 %v5029, %v8295
        %v8311 = vmul.f32 %v5030, %v8294
        %v8312 = vmul.f32 %v5031, %v8296
        %v8313 = vmul.f32 %v5032, %v8287
        %v8314 = vmul.f32 %v5033, %v8295
        %v8315 = vmul.f32 %v5034, %v8294
        %v8316 = vmul.f32 %v5035, %v8296
        %v8317 = vmul.f32 %v5037, %v8287
        %v8318 = vmul.f32 %v5038, %v8295
        %v8319 = vmul.f32 %v5039, %v8294
        %v8320 = vmul.f32 %v5040, %v8296
        %v8321 = vmul.f32 %v5041, %v8287
        %v8322 = vmul.f32 %v5042, %v8295
        %v8323 = vmul.f32 %v5043, %v8294
        %v8324 = vmul.f32 %v5044, %v8296
        %v8325 = vmul.f32 %v5046, %v8287
        %v8326 = vmul.f32 %v5047, %v8295
        %v8327 = vmul.f32 %v5048, %v8294
        %v8328 = vmul.f32 %v5049, %v8296
        %v8329 = vmul.f32 %v5050, %v8287
        %v8330 = vmul.f32 %v5051, %v8295
        %v8331 = vmul.f32 %v5052, %v8294
        %v8332 = vmul.f32 %v5053, %v8296
        %v8333 = vmul.f32 %v5055, %v8287
        %v8334 = vmul.f32 %v5056, %v8295
        %v8335 = vmul.f32 %v5057, %v8294
        %v8336 = vmul.f32 %v5058, %v8296
        %v8337 = vmul.f32 %v5059, %v8287
        %v8338 = vmul.f32 %v5060, %v8295
        %v8339 = vmul.f32 %v5061, %v8294
        %v8340 = vmul.f32 %v5062, %v8296
        %v8341 = vmul.f32 %v5064, %v8287
        %v8342 = vmul.f32 %v5065, %v8295
        %v8343 = vmul.f32 %v5066, %v8294
        %v8344 = vmul.f32 %v5067, %v8296
        %v8345 = vmul.f32 %v5068, %v8287
        %v8346 = vmul.f32 %v5069, %v8295
        %v8347 = vmul.f32 %v5070, %v8294
        %v8348 = vmul.f32 %v5071, %v8296
        %v8349 = vmul.f32 %v5073, %v8287
        %v8350 = vmul.f32 %v5074, %v8295
        %v8351 = vmul.f32 %v5075, %v8294
        %v8352 = vmul.f32 %v5076, %v8296
        %v8353 = vmul.f32 %v5077, %v8287
        %v8354 = vmul.f32 %v5078, %v8295
        %v8355 = vmul.f32 %v5079, %v8294
        %v8356 = vmul.f32 %v5080, %v8296
        %v8357 = vmul.f32 %v5082, %v8287
        %v8358 = vmul.f32 %v5083, %v8295
        %v8359 = vmul.f32 %v5084, %v8294
        %v8360 = vmul.f32 %v5085, %v8296
        %v8361 = vmul.f32 %v5086, %v8287
        %v8362 = vmul.f32 %v5087, %v8295
        %v8363 = vmul.f32 %v5088, %v8294
        %v8364 = vmul.f32 %v5089, %v8296
        %v8365 = vmul.f32 %v5091, %v8287
        %v8366 = vmul.f32 %v5092, %v8295
        %v8367 = vmul.f32 %v5093, %v8294
        %v8368 = vmul.f32 %v5094, %v8296
        %v8369 = vmul.f32 %v5095, %v8287
        %v8370 = vmul.f32 %v5096, %v8295
        %v8371 = vmul.f32 %v5097, %v8294
        %v8372 = vmul.f32 %v5098, %v8296
        %v8373 = vmul.f32 %v5100, %v8287
        %v8374 = vmul.f32 %v5101, %v8295
        %v8375 = vmul.f32 %v5102, %v8294
        %v8376 = vmul.f32 %v5103, %v8296
        %v8377 = vmul.f32 %v5104, %v8287
        %v8378 = vmul.f32 %v5105, %v8295
        %v8379 = vmul.f32 %v5106, %v8294
        %v8380 = vmul.f32 %v5107, %v8296
        %v8381 = vmul.f32 %v5109, %v8287
        %v8382 = vmul.f32 %v5110, %v8295
        %v8383 = vmul.f32 %v5111, %v8294
        %v8384 = vmul.f32 %v5112, %v8296
        %v8385 = vmul.f32 %v5113, %v8287
        %v8386 = vmul.f32 %v5114, %v8295
        %v8387 = vmul.f32 %v5115, %v8294
        %v8388 = vmul.f32 %v5116, %v8296
        %v8389 = vmul.f32 %v5118, %v8287
        %v8390 = vmul.f32 %v5119, %v8295
        %v8391 = vmul.f32 %v5120, %v8294
        %v8392 = vmul.f32 %v5121, %v8296
        %v8393 = vmul.f32 %v5122, %v8287
        %v8394 = vmul.f32 %v5123, %v8295
        %v8395 = vmul.f32 %v5124, %v8294
        %v8396 = vmul.f32 %v5125, %v8296
        %v8397 = vmul.f32 %v5127, %v8287
        %v8398 = vmul.f32 %v5128, %v8295
        %v8399 = vmul.f32 %v5129, %v8294
        %v8400 = vmul.f32 %v5130, %v8296
        %v8401 = vmul.f32 %v5131, %v8287
        %v8402 = vmul.f32 %v5132, %v8295
        %v8403 = vmul.f32 %v5133, %v8294
        %v8404 = vmul.f32 %v5134, %v8296
        %v8405 = vmul.f32 %v5136, %v8287
        %v8406 = vmul.f32 %v5137, %v8295
        %v8407 = vmul.f32 %v5138, %v8294
        %v8408 = vmul.f32 %v5139, %v8296
        %v8409 = vmul.f32 %v5140, %v8287
        %v8410 = vmul.f32 %v5141, %v8295
        %v8411 = vmul.f32 %v5142, %v8294
        %v8412 = vmul.f32 %v5143, %v8296
        %v8413 = vmul.f32 %v5145, %v8287
        %v8414 = vmul.f32 %v5146, %v8295
        %v8415 = vmul.f32 %v5147, %v8294
        %v8416 = vmul.f32 %v5148, %v8296
        %v8417 = vmul.f32 %v5149, %v8287
        %v8418 = vmul.f32 %v5150, %v8295
        %v8419 = vmul.f32 %v5151, %v8294
        %v8420 = vmul.f32 %v5152, %v8296
        %v8421 = vmul.f32 %v5154, %v8287
        %v8422 = vmul.f32 %v5155, %v8295
        %v8423 = vmul.f32 %v5156, %v8294
        %v8424 = vmul.f32 %v5157, %v8296
        %v8425 = vmul.f32 %v5158, %v8287
        %v8426 = vmul.f32 %v5159, %v8295
        %v8427 = vmul.f32 %v5160, %v8294
        %v8428 = vmul.f32 %v5161, %v8296
        %v8429 = vadd.f32 %v8145, %v8301
        %v8430 = vadd.f32 %v8146, %v8302
        %v8431 = vadd.f32 %v8147, %v8303
        %v8432 = vadd.f32 %v8148, %v8304
        %v8433 = vadd.f32 %v8149, %v8305
        %v8434 = vadd.f32 %v8150, %v8306
        %v8435 = vadd.f32 %v8151, %v8307
        %v8436 = vadd.f32 %v8152, %v8308
        %v8437 = vadd.f32 %v8153, %v8309
        %v8438 = vadd.f32 %v8154, %v8310
        %v8439 = vadd.f32 %v8155, %v8311
        %v8440 = vadd.f32 %v8156, %v8312
        %v8441 = vadd.f32 %v8157, %v8313
        %v8442 = vadd.f32 %v8158, %v8314
        %v8443 = vadd.f32 %v8159, %v8315
        %v8444 = vadd.f32 %v8160, %v8316
        %v8445 = vadd.f32 %v8161, %v8317
        %v8446 = vadd.f32 %v8162, %v8318
        %v8447 = vadd.f32 %v8163, %v8319
        %v8448 = vadd.f32 %v8164, %v8320
        %v8449 = vadd.f32 %v8165, %v8321
        %v8450 = vadd.f32 %v8166, %v8322
        %v8451 = vadd.f32 %v8167, %v8323
        %v8452 = vadd.f32 %v8168, %v8324
        %v8453 = vadd.f32 %v8169, %v8325
        %v8454 = vadd.f32 %v8170, %v8326
        %v8455 = vadd.f32 %v8171, %v8327
        %v8456 = vadd.f32 %v8172, %v8328
        %v8457 = vadd.f32 %v8173, %v8329
        %v8458 = vadd.f32 %v8174, %v8330
        %v8459 = vadd.f32 %v8175, %v8331
        %v8460 = vadd.f32 %v8176, %v8332
        %v8461 = vadd.f32 %v8177, %v8333
        %v8462 = vadd.f32 %v8178, %v8334
        %v8463 = vadd.f32 %v8179, %v8335
        %v8464 = vadd.f32 %v8180, %v8336
        %v8465 = vadd.f32 %v8181, %v8337
        %v8466 = vadd.f32 %v8182, %v8338
        %v8467 = vadd.f32 %v8183, %v8339
        %v8468 = vadd.f32 %v8184, %v8340
        %v8469 = vadd.f32 %v8185, %v8341
        %v8470 = vadd.f32 %v8186, %v8342
        %v8471 = vadd.f32 %v8187, %v8343
        %v8472 = vadd.f32 %v8188, %v8344
        %v8473 = vadd.f32 %v8189, %v8345
        %v8474 = vadd.f32 %v8190, %v8346
        %v8475 = vadd.f32 %v8191, %v8347
        %v8476 = vadd.f32 %v8192, %v8348
        %v8477 = vadd.f32 %v8193, %v8349
        %v8478 = vadd.f32 %v8194, %v8350
        %v8479 = vadd.f32 %v8195, %v8351
        %v8480 = vadd.f32 %v8196, %v8352
        %v8481 = vadd.f32 %v8197, %v8353
        %v8482 = vadd.f32 %v8198, %v8354
        %v8483 = vadd.f32 %v8199, %v8355
        %v8484 = vadd.f32 %v8200, %v8356
        %v8485 = vadd.f32 %v8201, %v8357
        %v8486 = vadd.f32 %v8202, %v8358
        %v8487 = vadd.f32 %v8203, %v8359
        %v8488 = vadd.f32 %v8204, %v8360
        %v8489 = vadd.f32 %v8205, %v8361
        %v8490 = vadd.f32 %v8206, %v8362
        %v8491 = vadd.f32 %v8207, %v8363
        %v8492 = vadd.f32 %v8208, %v8364
        %v8493 = vadd.f32 %v8209, %v8365
        %v8494 = vadd.f32 %v8210, %v8366
        %v8495 = vadd.f32 %v8211, %v8367
        %v8496 = vadd.f32 %v8212, %v8368
        %v8497 = vadd.f32 %v8213, %v8369
        %v8498 = vadd.f32 %v8214, %v8370
        %v8499 = vadd.f32 %v8215, %v8371
        %v8500 = vadd.f32 %v8216, %v8372
        %v8501 = vadd.f32 %v8217, %v8373
        %v8502 = vadd.f32 %v8218, %v8374
        %v8503 = vadd.f32 %v8219, %v8375
        %v8504 = vadd.f32 %v8220, %v8376
        %v8505 = vadd.f32 %v8221, %v8377
        %v8506 = vadd.f32 %v8222, %v8378
        %v8507 = vadd.f32 %v8223, %v8379
        %v8508 = vadd.f32 %v8224, %v8380
        %v8509 = vadd.f32 %v8225, %v8381
        %v8510 = vadd.f32 %v8226, %v8382
        %v8511 = vadd.f32 %v8227, %v8383
        %v8512 = vadd.f32 %v8228, %v8384
        %v8513 = vadd.f32 %v8229, %v8385
        %v8514 = vadd.f32 %v8230, %v8386
        %v8515 = vadd.f32 %v8231, %v8387
        %v8516 = vadd.f32 %v8232, %v8388
        %v8517 = vadd.f32 %v8233, %v8389
        %v8518 = vadd.f32 %v8234, %v8390
        %v8519 = vadd.f32 %v8235, %v8391
        %v8520 = vadd.f32 %v8236, %v8392
        %v8521 = vadd.f32 %v8237, %v8393
        %v8522 = vadd.f32 %v8238, %v8394
        %v8523 = vadd.f32 %v8239, %v8395
        %v8524 = vadd.f32 %v8240, %v8396
        %v8525 = vadd.f32 %v8241, %v8397
        %v8526 = vadd.f32 %v8242, %v8398
        %v8527 = vadd.f32 %v8243, %v8399
        %v8528 = vadd.f32 %v8244, %v8400
        %v8529 = vadd.f32 %v8245, %v8401
        %v8530 = vadd.f32 %v8246, %v8402
        %v8531 = vadd.f32 %v8247, %v8403
        %v8532 = vadd.f32 %v8248, %v8404
        %v8533 = vadd.f32 %v8249, %v8405
        %v8534 = vadd.f32 %v8250, %v8406
        %v8535 = vadd.f32 %v8251, %v8407
        %v8536 = vadd.f32 %v8252, %v8408
        %v8537 = vadd.f32 %v8253, %v8409
        %v8538 = vadd.f32 %v8254, %v8410
        %v8539 = vadd.f32 %v8255, %v8411
        %v8540 = vadd.f32 %v8256, %v8412
        %v8541 = vadd.f32 %v8257, %v8413
        %v8542 = vadd.f32 %v8258, %v8414
        %v8543 = vadd.f32 %v8259, %v8415
        %v8544 = vadd.f32 %v8260, %v8416
        %v8545 = vadd.f32 %v8261, %v8417
        %v8546 = vadd.f32 %v8262, %v8418
        %v8547 = vadd.f32 %v8263, %v8419
        %v8548 = vadd.f32 %v8264, %v8420
        %v8549 = vadd.f32 %v8265, %v8421
        %v8550 = vadd.f32 %v8266, %v8422
        %v8551 = vadd.f32 %v8267, %v8423
        %v8552 = vadd.f32 %v8268, %v8424
        %v8553 = vadd.f32 %v8269, %v8425
        %v8554 = vadd.f32 %v8270, %v8426
        %v8555 = vadd.f32 %v8271, %v8427
        %v8556 = vadd.f32 %v8272, %v8428
        %v8557 = vld [vmem:[%s8273 + $0x1] sm:$0x1]
        %v8558 = vlaneseq
        %v8559 = vshrl.u32 %v8558, 7
        %v8560 = vsub.s32 0, %v8559
        %v8561 = vrot.slane %v8557, %v8560
        %v8563 = vcombine.high %v8561, %v8561
        %v8565 = vunpack.c.l.s4 1983009808
        %v8566 = vunpack.c.0.s8 %v8565
        %v8567 = vlaneseq
        %v8568 = vshrl.u32 %v8567, 7
        %v8569 = vsub.s32 %v8566, %v8568
        %v8570 = vrot.slane %v8561, %v8569
        %v8572 = vunpack.c.l.s4 1983009808
        %v8573 = vunpack.c.0.s8 %v8572
        %v8574 = vlaneseq
        %v8575 = vshrl.u32 %v8574, 7
        %v8576 = vsub.s32 %v8573, %v8575
        %v8577 = vrot.slane %v8563, %v8576
        %v8578 = vcombine.high %v8570, %v8570
        %v8579 = vcombine.high %v8577, %v8577
        %v8580 = vrot.slane %v8570, 7
        %v8581 = vrot.slane %v8580, 2
        %v8582 = vrot.slane %v8578, 7
        %v8583 = vsel %vm5475, %v8581, %v8582
        %v8584 = vrot.slane %v8582, 2
        %v8585 = vrot.slane %v8577, 7
        %v8586 = vsel %vm5475, %v8584, %v8585
        %v8587 = vrot.slane %v8585, 2
        %v8588 = vrot.slane %v8579, 7
        %v8589 = vsel %vm5475, %v8587, %v8588
        %v8590 = vrot.slane %v8588, 2
        %v8591 = vsel %vm5475, %v8590, %v8580
        %v8598 = vmul.f32 %v5019, %v8580
        %v8599 = vmul.f32 %v5020, %v8583
        %v8600 = vmul.f32 %v5021, %v8586
        %v8601 = vmul.f32 %v5022, %v8589
        %v8602 = vmul.f32 %v5023, %v8591
        %v8603 = vmul.f32 %v5024, %v8583
        %v8604 = vmul.f32 %v5025, %v8586
        %v8605 = vmul.f32 %v5026, %v8589
        %v8606 = vmul.f32 %v5027, %v8590
        %v8607 = vmul.f32 %v5028, %v8580
        %v8608 = vmul.f32 %v5029, %v8583
        %v8609 = vmul.f32 %v5030, %v8586
        %v8610 = vmul.f32 %v5031, %v8589
        %v8611 = vmul.f32 %v5032, %v8591
        %v8612 = vmul.f32 %v5033, %v8583
        %v8613 = vmul.f32 %v5034, %v8586
        %v8614 = vmul.f32 %v5035, %v8589
        %v8615 = vmul.f32 %v5036, %v8590
        %v8616 = vmul.f32 %v5037, %v8580
        %v8617 = vmul.f32 %v5038, %v8583
        %v8618 = vmul.f32 %v5039, %v8586
        %v8619 = vmul.f32 %v5040, %v8589
        %v8620 = vmul.f32 %v5041, %v8591
        %v8621 = vmul.f32 %v5042, %v8583
        %v8622 = vmul.f32 %v5043, %v8586
        %v8623 = vmul.f32 %v5044, %v8589
        %v8624 = vmul.f32 %v5045, %v8590
        %v8625 = vmul.f32 %v5046, %v8580
        %v8626 = vmul.f32 %v5047, %v8583
        %v8627 = vmul.f32 %v5048, %v8586
        %v8628 = vmul.f32 %v5049, %v8589
        %v8629 = vmul.f32 %v5050, %v8591
        %v8630 = vmul.f32 %v5051, %v8583
        %v8631 = vmul.f32 %v5052, %v8586
        %v8632 = vmul.f32 %v5053, %v8589
        %v8633 = vmul.f32 %v5054, %v8590
        %v8634 = vmul.f32 %v5055, %v8580
        %v8635 = vmul.f32 %v5056, %v8583
        %v8636 = vmul.f32 %v5057, %v8586
        %v8637 = vmul.f32 %v5058, %v8589
        %v8638 = vmul.f32 %v5059, %v8591
        %v8639 = vmul.f32 %v5060, %v8583
        %v8640 = vmul.f32 %v5061, %v8586
        %v8641 = vmul.f32 %v5062, %v8589
        %v8642 = vmul.f32 %v5063, %v8590
        %v8643 = vmul.f32 %v5064, %v8580
        %v8644 = vmul.f32 %v5065, %v8583
        %v8645 = vmul.f32 %v5066, %v8586
        %v8646 = vmul.f32 %v5067, %v8589
        %v8647 = vmul.f32 %v5068, %v8591
        %v8648 = vmul.f32 %v5069, %v8583
        %v8649 = vmul.f32 %v5070, %v8586
        %v8650 = vmul.f32 %v5071, %v8589
        %v8651 = vmul.f32 %v5072, %v8590
        %v8652 = vmul.f32 %v5073, %v8580
        %v8653 = vmul.f32 %v5074, %v8583
        %v8654 = vmul.f32 %v5075, %v8586
        %v8655 = vmul.f32 %v5076, %v8589
        %v8656 = vmul.f32 %v5077, %v8591
        %v8657 = vmul.f32 %v5078, %v8583
        %v8658 = vmul.f32 %v5079, %v8586
        %v8659 = vmul.f32 %v5080, %v8589
        %v8660 = vmul.f32 %v5081, %v8590
        %v8661 = vmul.f32 %v5082, %v8580
        %v8662 = vmul.f32 %v5083, %v8583
        %v8663 = vmul.f32 %v5084, %v8586
        %v8664 = vmul.f32 %v5085, %v8589
        %v8665 = vmul.f32 %v5086, %v8591
        %v8666 = vmul.f32 %v5087, %v8583
        %v8667 = vmul.f32 %v5088, %v8586
        %v8668 = vmul.f32 %v5089, %v8589
        %v8669 = vmul.f32 %v5090, %v8590
        %v8670 = vmul.f32 %v5091, %v8580
        %v8671 = vmul.f32 %v5092, %v8583
        %v8672 = vmul.f32 %v5093, %v8586
        %v8673 = vmul.f32 %v5094, %v8589
        %v8674 = vmul.f32 %v5095, %v8591
        %v8675 = vmul.f32 %v5096, %v8583
        %v8676 = vmul.f32 %v5097, %v8586
        %v8677 = vmul.f32 %v5098, %v8589
        %v8678 = vmul.f32 %v5099, %v8590
        %v8679 = vmul.f32 %v5100, %v8580
        %v8680 = vmul.f32 %v5101, %v8583
        %v8681 = vmul.f32 %v5102, %v8586
        %v8682 = vmul.f32 %v5103, %v8589
        %v8683 = vmul.f32 %v5104, %v8591
        %v8684 = vmul.f32 %v5105, %v8583
        %v8685 = vmul.f32 %v5106, %v8586
        %v8686 = vmul.f32 %v5107, %v8589
        %v8687 = vmul.f32 %v5108, %v8590
        %v8688 = vmul.f32 %v5109, %v8580
        %v8689 = vmul.f32 %v5110, %v8583
        %v8690 = vmul.f32 %v5111, %v8586
        %v8691 = vmul.f32 %v5112, %v8589
        %v8692 = vmul.f32 %v5113, %v8591
        %v8693 = vmul.f32 %v5114, %v8583
        %v8694 = vmul.f32 %v5115, %v8586
        %v8695 = vmul.f32 %v5116, %v8589
        %v8696 = vmul.f32 %v5117, %v8590
        %v8697 = vmul.f32 %v5118, %v8580
        %v8698 = vmul.f32 %v5119, %v8583
        %v8699 = vmul.f32 %v5120, %v8586
        %v8700 = vmul.f32 %v5121, %v8589
        %v8701 = vmul.f32 %v5122, %v8591
        %v8702 = vmul.f32 %v5123, %v8583
        %v8703 = vmul.f32 %v5124, %v8586
        %v8704 = vmul.f32 %v5125, %v8589
        %v8705 = vmul.f32 %v5126, %v8590
        %v8706 = vmul.f32 %v5127, %v8580
        %v8707 = vmul.f32 %v5128, %v8583
        %v8708 = vmul.f32 %v5129, %v8586
        %v8709 = vmul.f32 %v5130, %v8589
        %v8710 = vmul.f32 %v5131, %v8591
        %v8711 = vmul.f32 %v5132, %v8583
        %v8712 = vmul.f32 %v5133, %v8586
        %v8713 = vmul.f32 %v5134, %v8589
        %v8714 = vmul.f32 %v5135, %v8590
        %v8715 = vmul.f32 %v5136, %v8580
        %v8716 = vmul.f32 %v5137, %v8583
        %v8717 = vmul.f32 %v5138, %v8586
        %v8718 = vmul.f32 %v5139, %v8589
        %v8719 = vmul.f32 %v5140, %v8591
        %v8720 = vmul.f32 %v5141, %v8583
        %v8721 = vmul.f32 %v5142, %v8586
        %v8722 = vmul.f32 %v5143, %v8589
        %v8723 = vmul.f32 %v5144, %v8590
        %v8724 = vmul.f32 %v5145, %v8580
        %v8725 = vmul.f32 %v5146, %v8583
        %v8726 = vmul.f32 %v5147, %v8586
        %v8727 = vmul.f32 %v5148, %v8589
        %v8728 = vmul.f32 %v5149, %v8591
        %v8729 = vmul.f32 %v5150, %v8583
        %v8730 = vmul.f32 %v5151, %v8586
        %v8731 = vmul.f32 %v5152, %v8589
        %v8732 = vmul.f32 %v5153, %v8590
        %v8733 = vmul.f32 %v5154, %v8580
        %v8734 = vmul.f32 %v5155, %v8583
        %v8735 = vmul.f32 %v5156, %v8586
        %v8736 = vmul.f32 %v5157, %v8589
        %v8737 = vmul.f32 %v5158, %v8591
        %v8738 = vmul.f32 %v5159, %v8583
        %v8739 = vmul.f32 %v5160, %v8586
        %v8740 = vmul.f32 %v5161, %v8589
        %v8741 = vmul.f32 %v5162, %v8590
        %v8886 = vrot.slane %v8598, 7
        %v8887 = vrot.slane %v8886, 2
        %v8888 = vrot.slane %v8599, 7
        %v8889 = vsel %vm5475, %v8887, %v8888
        %v8890 = vrot.slane %v8888, 2
        %v8891 = vrot.slane %v8600, 7
        %v8892 = vsel %vm5475, %v8890, %v8891
        %v8893 = vrot.slane %v8891, 2
        %v8894 = vrot.slane %v8601, 7
        %v8895 = vsel %vm5475, %v8893, %v8894
        %v8896 = vrot.slane %v8894, 2
        %v8897 = vrot.slane %v8602, 7
        %v8898 = vsel %vm5475, %v8896, %v8897
        %v8899 = vrot.slane %v8897, 2
        %v8900 = vrot.slane %v8603, 7
        %v8901 = vsel %vm5475, %v8899, %v8900
        %v8902 = vrot.slane %v8900, 2
        %v8903 = vrot.slane %v8604, 7
        %v8904 = vsel %vm5475, %v8902, %v8903
        %v8905 = vrot.slane %v8903, 2
        %v8906 = vrot.slane %v8605, 7
        %v8907 = vsel %vm5475, %v8905, %v8906
        %v8908 = vrot.slane %v8906, 2
        %v8909 = vrot.slane %v8606, 7
        %v8910 = vsel %vm5475, %v8908, %v8909
        %v8911 = vrot.slane %v8607, 7
        %v8912 = vrot.slane %v8911, 2
        %v8913 = vrot.slane %v8608, 7
        %v8914 = vsel %vm5475, %v8912, %v8913
        %v8915 = vrot.slane %v8913, 2
        %v8916 = vrot.slane %v8609, 7
        %v8917 = vsel %vm5475, %v8915, %v8916
        %v8918 = vrot.slane %v8916, 2
        %v8919 = vrot.slane %v8610, 7
        %v8920 = vsel %vm5475, %v8918, %v8919
        %v8921 = vrot.slane %v8919, 2
        %v8922 = vrot.slane %v8611, 7
        %v8923 = vsel %vm5475, %v8921, %v8922
        %v8924 = vrot.slane %v8922, 2
        %v8925 = vrot.slane %v8612, 7
        %v8926 = vsel %vm5475, %v8924, %v8925
        %v8927 = vrot.slane %v8925, 2
        %v8928 = vrot.slane %v8613, 7
        %v8929 = vsel %vm5475, %v8927, %v8928
        %v8930 = vrot.slane %v8928, 2
        %v8931 = vrot.slane %v8614, 7
        %v8932 = vsel %vm5475, %v8930, %v8931
        %v8933 = vrot.slane %v8931, 2
        %v8934 = vrot.slane %v8615, 7
        %v8935 = vsel %vm5475, %v8933, %v8934
        %v8936 = vrot.slane %v8616, 7
        %v8937 = vrot.slane %v8936, 2
        %v8938 = vrot.slane %v8617, 7
        %v8939 = vsel %vm5475, %v8937, %v8938
        %v8940 = vrot.slane %v8938, 2
        %v8941 = vrot.slane %v8618, 7
        %v8942 = vsel %vm5475, %v8940, %v8941
        %v8943 = vrot.slane %v8941, 2
        %v8944 = vrot.slane %v8619, 7
        %v8945 = vsel %vm5475, %v8943, %v8944
        %v8946 = vrot.slane %v8944, 2
        %v8947 = vrot.slane %v8620, 7
        %v8948 = vsel %vm5475, %v8946, %v8947
        %v8949 = vrot.slane %v8947, 2
        %v8950 = vrot.slane %v8621, 7
        %v8951 = vsel %vm5475, %v8949, %v8950
        %v8952 = vrot.slane %v8950, 2
        %v8953 = vrot.slane %v8622, 7
        %v8954 = vsel %vm5475, %v8952, %v8953
        %v8955 = vrot.slane %v8953, 2
        %v8956 = vrot.slane %v8623, 7
        %v8957 = vsel %vm5475, %v8955, %v8956
        %v8958 = vrot.slane %v8956, 2
        %v8959 = vrot.slane %v8624, 7
        %v8960 = vsel %vm5475, %v8958, %v8959
        %v8961 = vrot.slane %v8625, 7
        %v8962 = vrot.slane %v8961, 2
        %v8963 = vrot.slane %v8626, 7
        %v8964 = vsel %vm5475, %v8962, %v8963
        %v8965 = vrot.slane %v8963, 2
        %v8966 = vrot.slane %v8627, 7
        %v8967 = vsel %vm5475, %v8965, %v8966
        %v8968 = vrot.slane %v8966, 2
        %v8969 = vrot.slane %v8628, 7
        %v8970 = vsel %vm5475, %v8968, %v8969
        %v8971 = vrot.slane %v8969, 2
        %v8972 = vrot.slane %v8629, 7
        %v8973 = vsel %vm5475, %v8971, %v8972
        %v8974 = vrot.slane %v8972, 2
        %v8975 = vrot.slane %v8630, 7
        %v8976 = vsel %vm5475, %v8974, %v8975
        %v8977 = vrot.slane %v8975, 2
        %v8978 = vrot.slane %v8631, 7
        %v8979 = vsel %vm5475, %v8977, %v8978
        %v8980 = vrot.slane %v8978, 2
        %v8981 = vrot.slane %v8632, 7
        %v8982 = vsel %vm5475, %v8980, %v8981
        %v8983 = vrot.slane %v8981, 2
        %v8984 = vrot.slane %v8633, 7
        %v8985 = vsel %vm5475, %v8983, %v8984
        %v8986 = vrot.slane %v8634, 7
        %v8987 = vrot.slane %v8986, 2
        %v8988 = vrot.slane %v8635, 7
        %v8989 = vsel %vm5475, %v8987, %v8988
        %v8990 = vrot.slane %v8988, 2
        %v8991 = vrot.slane %v8636, 7
        %v8992 = vsel %vm5475, %v8990, %v8991
        %v8993 = vrot.slane %v8991, 2
        %v8994 = vrot.slane %v8637, 7
        %v8995 = vsel %vm5475, %v8993, %v8994
        %v8996 = vrot.slane %v8994, 2
        %v8997 = vrot.slane %v8638, 7
        %v8998 = vsel %vm5475, %v8996, %v8997
        %v8999 = vrot.slane %v8997, 2
        %v9000 = vrot.slane %v8639, 7
        %v9001 = vsel %vm5475, %v8999, %v9000
        %v9002 = vrot.slane %v9000, 2
        %v9003 = vrot.slane %v8640, 7
        %v9004 = vsel %vm5475, %v9002, %v9003
        %v9005 = vrot.slane %v9003, 2
        %v9006 = vrot.slane %v8641, 7
        %v9007 = vsel %vm5475, %v9005, %v9006
        %v9008 = vrot.slane %v9006, 2
        %v9009 = vrot.slane %v8642, 7
        %v9010 = vsel %vm5475, %v9008, %v9009
        %v9011 = vrot.slane %v8643, 7
        %v9012 = vrot.slane %v9011, 2
        %v9013 = vrot.slane %v8644, 7
        %v9014 = vsel %vm5475, %v9012, %v9013
        %v9015 = vrot.slane %v9013, 2
        %v9016 = vrot.slane %v8645, 7
        %v9017 = vsel %vm5475, %v9015, %v9016
        %v9018 = vrot.slane %v9016, 2
        %v9019 = vrot.slane %v8646, 7
        %v9020 = vsel %vm5475, %v9018, %v9019
        %v9021 = vrot.slane %v9019, 2
        %v9022 = vrot.slane %v8647, 7
        %v9023 = vsel %vm5475, %v9021, %v9022
        %v9024 = vrot.slane %v9022, 2
        %v9025 = vrot.slane %v8648, 7
        %v9026 = vsel %vm5475, %v9024, %v9025
        %v9027 = vrot.slane %v9025, 2
        %v9028 = vrot.slane %v8649, 7
        %v9029 = vsel %vm5475, %v9027, %v9028
        %v9030 = vrot.slane %v9028, 2
        %v9031 = vrot.slane %v8650, 7
        %v9032 = vsel %vm5475, %v9030, %v9031
        %v9033 = vrot.slane %v9031, 2
        %v9034 = vrot.slane %v8651, 7
        %v9035 = vsel %vm5475, %v9033, %v9034
        %v9036 = vrot.slane %v8652, 7
        %v9037 = vrot.slane %v9036, 2
        %v9038 = vrot.slane %v8653, 7
        %v9039 = vsel %vm5475, %v9037, %v9038
        %v9040 = vrot.slane %v9038, 2
        %v9041 = vrot.slane %v8654, 7
        %v9042 = vsel %vm5475, %v9040, %v9041
        %v9043 = vrot.slane %v9041, 2
        %v9044 = vrot.slane %v8655, 7
        %v9045 = vsel %vm5475, %v9043, %v9044
        %v9046 = vrot.slane %v9044, 2
        %v9047 = vrot.slane %v8656, 7
        %v9048 = vsel %vm5475, %v9046, %v9047
        %v9049 = vrot.slane %v9047, 2
        %v9050 = vrot.slane %v8657, 7
        %v9051 = vsel %vm5475, %v9049, %v9050
        %v9052 = vrot.slane %v9050, 2
        %v9053 = vrot.slane %v8658, 7
        %v9054 = vsel %vm5475, %v9052, %v9053
        %v9055 = vrot.slane %v9053, 2
        %v9056 = vrot.slane %v8659, 7
        %v9057 = vsel %vm5475, %v9055, %v9056
        %v9058 = vrot.slane %v9056, 2
        %v9059 = vrot.slane %v8660, 7
        %v9060 = vsel %vm5475, %v9058, %v9059
        %v9061 = vrot.slane %v8661, 7
        %v9062 = vrot.slane %v9061, 2
        %v9063 = vrot.slane %v8662, 7
        %v9064 = vsel %vm5475, %v9062, %v9063
        %v9065 = vrot.slane %v9063, 2
        %v9066 = vrot.slane %v8663, 7
        %v9067 = vsel %vm5475, %v9065, %v9066
        %v9068 = vrot.slane %v9066, 2
        %v9069 = vrot.slane %v8664, 7
        %v9070 = vsel %vm5475, %v9068, %v9069
        %v9071 = vrot.slane %v9069, 2
        %v9072 = vrot.slane %v8665, 7
        %v9073 = vsel %vm5475, %v9071, %v9072
        %v9074 = vrot.slane %v9072, 2
        %v9075 = vrot.slane %v8666, 7
        %v9076 = vsel %vm5475, %v9074, %v9075
        %v9077 = vrot.slane %v9075, 2
        %v9078 = vrot.slane %v8667, 7
        %v9079 = vsel %vm5475, %v9077, %v9078
        %v9080 = vrot.slane %v9078, 2
        %v9081 = vrot.slane %v8668, 7
        %v9082 = vsel %vm5475, %v9080, %v9081
        %v9083 = vrot.slane %v9081, 2
        %v9084 = vrot.slane %v8669, 7
        %v9085 = vsel %vm5475, %v9083, %v9084
        %v9086 = vrot.slane %v8670, 7
        %v9087 = vrot.slane %v9086, 2
        %v9088 = vrot.slane %v8671, 7
        %v9089 = vsel %vm5475, %v9087, %v9088
        %v9090 = vrot.slane %v9088, 2
        %v9091 = vrot.slane %v8672, 7
        %v9092 = vsel %vm5475, %v9090, %v9091
        %v9093 = vrot.slane %v9091, 2
        %v9094 = vrot.slane %v8673, 7
        %v9095 = vsel %vm5475, %v9093, %v9094
        %v9096 = vrot.slane %v9094, 2
        %v9097 = vrot.slane %v8674, 7
        %v9098 = vsel %vm5475, %v9096, %v9097
        %v9099 = vrot.slane %v9097, 2
        %v9100 = vrot.slane %v8675, 7
        %v9101 = vsel %vm5475, %v9099, %v9100
        %v9102 = vrot.slane %v9100, 2
        %v9103 = vrot.slane %v8676, 7
        %v9104 = vsel %vm5475, %v9102, %v9103
        %v9105 = vrot.slane %v9103, 2
        %v9106 = vrot.slane %v8677, 7
        %v9107 = vsel %vm5475, %v9105, %v9106
        %v9108 = vrot.slane %v9106, 2
        %v9109 = vrot.slane %v8678, 7
        %v9110 = vsel %vm5475, %v9108, %v9109
        %v9111 = vrot.slane %v8679, 7
        %v9112 = vrot.slane %v9111, 2
        %v9113 = vrot.slane %v8680, 7
        %v9114 = vsel %vm5475, %v9112, %v9113
        %v9115 = vrot.slane %v9113, 2
        %v9116 = vrot.slane %v8681, 7
        %v9117 = vsel %vm5475, %v9115, %v9116
        %v9118 = vrot.slane %v9116, 2
        %v9119 = vrot.slane %v8682, 7
        %v9120 = vsel %vm5475, %v9118, %v9119
        %v9121 = vrot.slane %v9119, 2
        %v9122 = vrot.slane %v8683, 7
        %v9123 = vsel %vm5475, %v9121, %v9122
        %v9124 = vrot.slane %v9122, 2
        %v9125 = vrot.slane %v8684, 7
        %v9126 = vsel %vm5475, %v9124, %v9125
        %v9127 = vrot.slane %v9125, 2
        %v9128 = vrot.slane %v8685, 7
        %v9129 = vsel %vm5475, %v9127, %v9128
        %v9130 = vrot.slane %v9128, 2
        %v9131 = vrot.slane %v8686, 7
        %v9132 = vsel %vm5475, %v9130, %v9131
        %v9133 = vrot.slane %v9131, 2
        %v9134 = vrot.slane %v8687, 7
        %v9135 = vsel %vm5475, %v9133, %v9134
        %v9136 = vrot.slane %v8688, 7
        %v9137 = vrot.slane %v9136, 2
        %v9138 = vrot.slane %v8689, 7
        %v9139 = vsel %vm5475, %v9137, %v9138
        %v9140 = vrot.slane %v9138, 2
        %v9141 = vrot.slane %v8690, 7
        %v9142 = vsel %vm5475, %v9140, %v9141
        %v9143 = vrot.slane %v9141, 2
        %v9144 = vrot.slane %v8691, 7
        %v9145 = vsel %vm5475, %v9143, %v9144
        %v9146 = vrot.slane %v9144, 2
        %v9147 = vrot.slane %v8692, 7
        %v9148 = vsel %vm5475, %v9146, %v9147
        %v9149 = vrot.slane %v9147, 2
        %v9150 = vrot.slane %v8693, 7
        %v9151 = vsel %vm5475, %v9149, %v9150
        %v9152 = vrot.slane %v9150, 2
        %v9153 = vrot.slane %v8694, 7
        %v9154 = vsel %vm5475, %v9152, %v9153
        %v9155 = vrot.slane %v9153, 2
        %v9156 = vrot.slane %v8695, 7
        %v9157 = vsel %vm5475, %v9155, %v9156
        %v9158 = vrot.slane %v9156, 2
        %v9159 = vrot.slane %v8696, 7
        %v9160 = vsel %vm5475, %v9158, %v9159
        %v9161 = vrot.slane %v8697, 7
        %v9162 = vrot.slane %v9161, 2
        %v9163 = vrot.slane %v8698, 7
        %v9164 = vsel %vm5475, %v9162, %v9163
        %v9165 = vrot.slane %v9163, 2
        %v9166 = vrot.slane %v8699, 7
        %v9167 = vsel %vm5475, %v9165, %v9166
        %v9168 = vrot.slane %v9166, 2
        %v9169 = vrot.slane %v8700, 7
        %v9170 = vsel %vm5475, %v9168, %v9169
        %v9171 = vrot.slane %v9169, 2
        %v9172 = vrot.slane %v8701, 7
        %v9173 = vsel %vm5475, %v9171, %v9172
        %v9174 = vrot.slane %v9172, 2
        %v9175 = vrot.slane %v8702, 7
        %v9176 = vsel %vm5475, %v9174, %v9175
        %v9177 = vrot.slane %v9175, 2
        %v9178 = vrot.slane %v8703, 7
        %v9179 = vsel %vm5475, %v9177, %v9178
        %v9180 = vrot.slane %v9178, 2
        %v9181 = vrot.slane %v8704, 7
        %v9182 = vsel %vm5475, %v9180, %v9181
        %v9183 = vrot.slane %v9181, 2
        %v9184 = vrot.slane %v8705, 7
        %v9185 = vsel %vm5475, %v9183, %v9184
        %v9186 = vrot.slane %v8706, 7
        %v9187 = vrot.slane %v9186, 2
        %v9188 = vrot.slane %v8707, 7
        %v9189 = vsel %vm5475, %v9187, %v9188
        %v9190 = vrot.slane %v9188, 2
        %v9191 = vrot.slane %v8708, 7
        %v9192 = vsel %vm5475, %v9190, %v9191
        %v9193 = vrot.slane %v9191, 2
        %v9194 = vrot.slane %v8709, 7
        %v9195 = vsel %vm5475, %v9193, %v9194
        %v9196 = vrot.slane %v9194, 2
        %v9197 = vrot.slane %v8710, 7
        %v9198 = vsel %vm5475, %v9196, %v9197
        %v9199 = vrot.slane %v9197, 2
        %v9200 = vrot.slane %v8711, 7
        %v9201 = vsel %vm5475, %v9199, %v9200
        %v9202 = vrot.slane %v9200, 2
        %v9203 = vrot.slane %v8712, 7
        %v9204 = vsel %vm5475, %v9202, %v9203
        %v9205 = vrot.slane %v9203, 2
        %v9206 = vrot.slane %v8713, 7
        %v9207 = vsel %vm5475, %v9205, %v9206
        %v9208 = vrot.slane %v9206, 2
        %v9209 = vrot.slane %v8714, 7
        %v9210 = vsel %vm5475, %v9208, %v9209
        %v9211 = vrot.slane %v8715, 7
        %v9212 = vrot.slane %v9211, 2
        %v9213 = vrot.slane %v8716, 7
        %v9214 = vsel %vm5475, %v9212, %v9213
        %v9215 = vrot.slane %v9213, 2
        %v9216 = vrot.slane %v8717, 7
        %v9217 = vsel %vm5475, %v9215, %v9216
        %v9218 = vrot.slane %v9216, 2
        %v9219 = vrot.slane %v8718, 7
        %v9220 = vsel %vm5475, %v9218, %v9219
        %v9221 = vrot.slane %v9219, 2
        %v9222 = vrot.slane %v8719, 7
        %v9223 = vsel %vm5475, %v9221, %v9222
        %v9224 = vrot.slane %v9222, 2
        %v9225 = vrot.slane %v8720, 7
        %v9226 = vsel %vm5475, %v9224, %v9225
        %v9227 = vrot.slane %v9225, 2
        %v9228 = vrot.slane %v8721, 7
        %v9229 = vsel %vm5475, %v9227, %v9228
        %v9230 = vrot.slane %v9228, 2
        %v9231 = vrot.slane %v8722, 7
        %v9232 = vsel %vm5475, %v9230, %v9231
        %v9233 = vrot.slane %v9231, 2
        %v9234 = vrot.slane %v8723, 7
        %v9235 = vsel %vm5475, %v9233, %v9234
        %v9236 = vrot.slane %v8724, 7
        %v9237 = vrot.slane %v9236, 2
        %v9238 = vrot.slane %v8725, 7
        %v9239 = vsel %vm5475, %v9237, %v9238
        %v9240 = vrot.slane %v9238, 2
        %v9241 = vrot.slane %v8726, 7
        %v9242 = vsel %vm5475, %v9240, %v9241
        %v9243 = vrot.slane %v9241, 2
        %v9244 = vrot.slane %v8727, 7
        %v9245 = vsel %vm5475, %v9243, %v9244
        %v9246 = vrot.slane %v9244, 2
        %v9247 = vrot.slane %v8728, 7
        %v9248 = vsel %vm5475, %v9246, %v9247
        %v9249 = vrot.slane %v9247, 2
        %v9250 = vrot.slane %v8729, 7
        %v9251 = vsel %vm5475, %v9249, %v9250
        %v9252 = vrot.slane %v9250, 2
        %v9253 = vrot.slane %v8730, 7
        %v9254 = vsel %vm5475, %v9252, %v9253
        %v9255 = vrot.slane %v9253, 2
        %v9256 = vrot.slane %v8731, 7
        %v9257 = vsel %vm5475, %v9255, %v9256
        %v9258 = vrot.slane %v9256, 2
        %v9259 = vrot.slane %v8732, 7
        %v9260 = vsel %vm5475, %v9258, %v9259
        %v9261 = vrot.slane %v8733, 7
        %v9262 = vrot.slane %v9261, 2
        %v9263 = vrot.slane %v8734, 7
        %v9264 = vsel %vm5475, %v9262, %v9263
        %v9265 = vrot.slane %v9263, 2
        %v9266 = vrot.slane %v8735, 7
        %v9267 = vsel %vm5475, %v9265, %v9266
        %v9268 = vrot.slane %v9266, 2
        %v9269 = vrot.slane %v8736, 7
        %v9270 = vsel %vm5475, %v9268, %v9269
        %v9271 = vrot.slane %v9269, 2
        %v9272 = vrot.slane %v8737, 7
        %v9273 = vsel %vm5475, %v9271, %v9272
        %v9274 = vrot.slane %v9272, 2
        %v9275 = vrot.slane %v8738, 7
        %v9276 = vsel %vm5475, %v9274, %v9275
        %v9277 = vrot.slane %v9275, 2
        %v9278 = vrot.slane %v8739, 7
        %v9279 = vsel %vm5475, %v9277, %v9278
        %v9280 = vrot.slane %v9278, 2
        %v9281 = vrot.slane %v8740, 7
        %v9282 = vsel %vm5475, %v9280, %v9281
        %v9283 = vrot.slane %v9281, 2
        %v9284 = vrot.slane %v8741, 7
        %v9285 = vsel %vm5475, %v9283, %v9284
        %v9414 = vadd.f32 %v8429, %v8889
        %v9415 = vadd.f32 %v8430, %v8892
        %v9416 = vadd.f32 %v8431, %v8895
        %v9417 = vadd.f32 %v8432, %v8898
        %v9418 = vadd.f32 %v8433, %v8901
        %v9419 = vadd.f32 %v8434, %v8904
        %v9420 = vadd.f32 %v8435, %v8907
        %v9421 = vadd.f32 %v8436, %v8910
        %v9422 = vadd.f32 %v8437, %v8914
        %v9423 = vadd.f32 %v8438, %v8917
        %v9424 = vadd.f32 %v8439, %v8920
        %v9425 = vadd.f32 %v8440, %v8923
        %v9426 = vadd.f32 %v8441, %v8926
        %v9427 = vadd.f32 %v8442, %v8929
        %v9428 = vadd.f32 %v8443, %v8932
        %v9429 = vadd.f32 %v8444, %v8935
        %v9430 = vadd.f32 %v8445, %v8939
        %v9431 = vadd.f32 %v8446, %v8942
        %v9432 = vadd.f32 %v8447, %v8945
        %v9433 = vadd.f32 %v8448, %v8948
        %v9434 = vadd.f32 %v8449, %v8951
        %v9435 = vadd.f32 %v8450, %v8954
        %v9436 = vadd.f32 %v8451, %v8957
        %v9437 = vadd.f32 %v8452, %v8960
        %v9438 = vadd.f32 %v8453, %v8964
        %v9439 = vadd.f32 %v8454, %v8967
        %v9440 = vadd.f32 %v8455, %v8970
        %v9441 = vadd.f32 %v8456, %v8973
        %v9442 = vadd.f32 %v8457, %v8976
        %v9443 = vadd.f32 %v8458, %v8979
        %v9444 = vadd.f32 %v8459, %v8982
        %v9445 = vadd.f32 %v8460, %v8985
        %v9446 = vadd.f32 %v8461, %v8989
        %v9447 = vadd.f32 %v8462, %v8992
        %v9448 = vadd.f32 %v8463, %v8995
        %v9449 = vadd.f32 %v8464, %v8998
        %v9450 = vadd.f32 %v8465, %v9001
        %v9451 = vadd.f32 %v8466, %v9004
        %v9452 = vadd.f32 %v8467, %v9007
        %v9453 = vadd.f32 %v8468, %v9010
        %v9454 = vadd.f32 %v8469, %v9014
        %v9455 = vadd.f32 %v8470, %v9017
        %v9456 = vadd.f32 %v8471, %v9020
        %v9457 = vadd.f32 %v8472, %v9023
        %v9458 = vadd.f32 %v8473, %v9026
        %v9459 = vadd.f32 %v8474, %v9029
        %v9460 = vadd.f32 %v8475, %v9032
        %v9461 = vadd.f32 %v8476, %v9035
        %v9462 = vadd.f32 %v8477, %v9039
        %v9463 = vadd.f32 %v8478, %v9042
        %v9464 = vadd.f32 %v8479, %v9045
        %v9465 = vadd.f32 %v8480, %v9048
        %v9466 = vadd.f32 %v8481, %v9051
        %v9467 = vadd.f32 %v8482, %v9054
        %v9468 = vadd.f32 %v8483, %v9057
        %v9469 = vadd.f32 %v8484, %v9060
        %v9470 = vadd.f32 %v8485, %v9064
        %v9471 = vadd.f32 %v8486, %v9067
        %v9472 = vadd.f32 %v8487, %v9070
        %v9473 = vadd.f32 %v8488, %v9073
        %v9474 = vadd.f32 %v8489, %v9076
        %v9475 = vadd.f32 %v8490, %v9079
        %v9476 = vadd.f32 %v8491, %v9082
        %v9477 = vadd.f32 %v8492, %v9085
        %v9478 = vadd.f32 %v8493, %v9089
        %v9479 = vadd.f32 %v8494, %v9092
        %v9480 = vadd.f32 %v8495, %v9095
        %v9481 = vadd.f32 %v8496, %v9098
        %v9482 = vadd.f32 %v8497, %v9101
        %v9483 = vadd.f32 %v8498, %v9104
        %v9484 = vadd.f32 %v8499, %v9107
        %v9485 = vadd.f32 %v8500, %v9110
        %v9486 = vadd.f32 %v8501, %v9114
        %v9487 = vadd.f32 %v8502, %v9117
        %v9488 = vadd.f32 %v8503, %v9120
        %v9489 = vadd.f32 %v8504, %v9123
        %v9490 = vadd.f32 %v8505, %v9126
        %v9491 = vadd.f32 %v8506, %v9129
        %v9492 = vadd.f32 %v8507, %v9132
        %v9493 = vadd.f32 %v8508, %v9135
        %v9494 = vadd.f32 %v8509, %v9139
        %v9495 = vadd.f32 %v8510, %v9142
        %v9496 = vadd.f32 %v8511, %v9145
        %v9497 = vadd.f32 %v8512, %v9148
        %v9498 = vadd.f32 %v8513, %v9151
        %v9499 = vadd.f32 %v8514, %v9154
        %v9500 = vadd.f32 %v8515, %v9157
        %v9501 = vadd.f32 %v8516, %v9160
        %v9502 = vadd.f32 %v8517, %v9164
        %v9503 = vadd.f32 %v8518, %v9167
        %v9504 = vadd.f32 %v8519, %v9170
        %v9505 = vadd.f32 %v8520, %v9173
        %v9506 = vadd.f32 %v8521, %v9176
        %v9507 = vadd.f32 %v8522, %v9179
        %v9508 = vadd.f32 %v8523, %v9182
        %v9509 = vadd.f32 %v8524, %v9185
        %v9510 = vadd.f32 %v8525, %v9189
        %v9511 = vadd.f32 %v8526, %v9192
        %v9512 = vadd.f32 %v8527, %v9195
        %v9513 = vadd.f32 %v8528, %v9198
        %v9514 = vadd.f32 %v8529, %v9201
        %v9515 = vadd.f32 %v8530, %v9204
        %v9516 = vadd.f32 %v8531, %v9207
        %v9517 = vadd.f32 %v8532, %v9210
        %v9518 = vadd.f32 %v8533, %v9214
        %v9519 = vadd.f32 %v8534, %v9217
        %v9520 = vadd.f32 %v8535, %v9220
        %v9521 = vadd.f32 %v8536, %v9223
        %v9522 = vadd.f32 %v8537, %v9226
        %v9523 = vadd.f32 %v8538, %v9229
        %v9524 = vadd.f32 %v8539, %v9232
        %v9525 = vadd.f32 %v8540, %v9235
        %v9526 = vadd.f32 %v8541, %v9239
        %v9527 = vadd.f32 %v8542, %v9242
        %v9528 = vadd.f32 %v8543, %v9245
        %v9529 = vadd.f32 %v8544, %v9248
        %v9530 = vadd.f32 %v8545, %v9251
        %v9531 = vadd.f32 %v8546, %v9254
        %v9532 = vadd.f32 %v8547, %v9257
        %v9533 = vadd.f32 %v8548, %v9260
        %v9534 = vadd.f32 %v8549, %v9264
        %v9535 = vadd.f32 %v8550, %v9267
        %v9536 = vadd.f32 %v8551, %v9270
        %v9537 = vadd.f32 %v8552, %v9273
        %v9538 = vadd.f32 %v8553, %v9276
        %v9539 = vadd.f32 %v8554, %v9279
        %v9540 = vadd.f32 %v8555, %v9282
        %v9541 = vadd.f32 %v8556, %v9285
        %v9542 = vld [vmem:[%s8273 + $0x2] sm:$0x1]
        %v9543 = vlaneseq
        %v9544 = vshrl.u32 %v9543, 7
        %v9545 = vsub.s32 0, %v9544
        %v9546 = vrot.slane %v9542, %v9545
        %v9548 = vcombine.high %v9546, %v9546
        %v9550 = vunpack.c.l.s4 1983009808
        %v9551 = vunpack.c.0.s8 %v9550
        %v9552 = vlaneseq
        %v9553 = vshrl.u32 %v9552, 7
        %v9554 = vsub.s32 %v9551, %v9553
        %v9555 = vrot.slane %v9546, %v9554
        %v9557 = vunpack.c.l.s4 1983009808
        %v9558 = vunpack.c.0.s8 %v9557
        %v9559 = vlaneseq
        %v9560 = vshrl.u32 %v9559, 7
        %v9561 = vsub.s32 %v9558, %v9560
        %v9562 = vrot.slane %v9548, %v9561
        %v9563 = vcombine.high %v9555, %v9555
        %v9564 = vcombine.high %v9562, %v9562
        %v9569 = vmul.f32 %v5020, %v9555
        %v9570 = vmul.f32 %v5021, %v9563
        %v9571 = vmul.f32 %v5022, %v9562
        %v9572 = vmul.f32 %v5023, %v9564
        %v9573 = vmul.f32 %v5024, %v9555
        %v9574 = vmul.f32 %v5025, %v9563
        %v9575 = vmul.f32 %v5026, %v9562
        %v9576 = vmul.f32 %v5027, %v9564
        %v9577 = vmul.f32 %v5029, %v9555
        %v9578 = vmul.f32 %v5030, %v9563
        %v9579 = vmul.f32 %v5031, %v9562
        %v9580 = vmul.f32 %v5032, %v9564
        %v9581 = vmul.f32 %v5033, %v9555
        %v9582 = vmul.f32 %v5034, %v9563
        %v9583 = vmul.f32 %v5035, %v9562
        %v9584 = vmul.f32 %v5036, %v9564
        %v9585 = vmul.f32 %v5038, %v9555
        %v9586 = vmul.f32 %v5039, %v9563
        %v9587 = vmul.f32 %v5040, %v9562
        %v9588 = vmul.f32 %v5041, %v9564
        %v9589 = vmul.f32 %v5042, %v9555
        %v9590 = vmul.f32 %v5043, %v9563
        %v9591 = vmul.f32 %v5044, %v9562
        %v9592 = vmul.f32 %v5045, %v9564
        %v9593 = vmul.f32 %v5047, %v9555
        %v9594 = vmul.f32 %v5048, %v9563
        %v9595 = vmul.f32 %v5049, %v9562
        %v9596 = vmul.f32 %v5050, %v9564
        %v9597 = vmul.f32 %v5051, %v9555
        %v9598 = vmul.f32 %v5052, %v9563
        %v9599 = vmul.f32 %v5053, %v9562
        %v9600 = vmul.f32 %v5054, %v9564
        %v9601 = vmul.f32 %v5056, %v9555
        %v9602 = vmul.f32 %v5057, %v9563
        %v9603 = vmul.f32 %v5058, %v9562
        %v9604 = vmul.f32 %v5059, %v9564
        %v9605 = vmul.f32 %v5060, %v9555
        %v9606 = vmul.f32 %v5061, %v9563
        %v9607 = vmul.f32 %v5062, %v9562
        %v9608 = vmul.f32 %v5063, %v9564
        %v9609 = vmul.f32 %v5065, %v9555
        %v9610 = vmul.f32 %v5066, %v9563
        %v9611 = vmul.f32 %v5067, %v9562
        %v9612 = vmul.f32 %v5068, %v9564
        %v9613 = vmul.f32 %v5069, %v9555
        %v9614 = vmul.f32 %v5070, %v9563
        %v9615 = vmul.f32 %v5071, %v9562
        %v9616 = vmul.f32 %v5072, %v9564
        %v9617 = vmul.f32 %v5074, %v9555
        %v9618 = vmul.f32 %v5075, %v9563
        %v9619 = vmul.f32 %v5076, %v9562
        %v9620 = vmul.f32 %v5077, %v9564
        %v9621 = vmul.f32 %v5078, %v9555
        %v9622 = vmul.f32 %v5079, %v9563
        %v9623 = vmul.f32 %v5080, %v9562
        %v9624 = vmul.f32 %v5081, %v9564
        %v9625 = vmul.f32 %v5083, %v9555
        %v9626 = vmul.f32 %v5084, %v9563
        %v9627 = vmul.f32 %v5085, %v9562
        %v9628 = vmul.f32 %v5086, %v9564
        %v9629 = vmul.f32 %v5087, %v9555
        %v9630 = vmul.f32 %v5088, %v9563
        %v9631 = vmul.f32 %v5089, %v9562
        %v9632 = vmul.f32 %v5090, %v9564
        %v9633 = vmul.f32 %v5092, %v9555
        %v9634 = vmul.f32 %v5093, %v9563
        %v9635 = vmul.f32 %v5094, %v9562
        %v9636 = vmul.f32 %v5095, %v9564
        %v9637 = vmul.f32 %v5096, %v9555
        %v9638 = vmul.f32 %v5097, %v9563
        %v9639 = vmul.f32 %v5098, %v9562
        %v9640 = vmul.f32 %v5099, %v9564
        %v9641 = vmul.f32 %v5101, %v9555
        %v9642 = vmul.f32 %v5102, %v9563
        %v9643 = vmul.f32 %v5103, %v9562
        %v9644 = vmul.f32 %v5104, %v9564
        %v9645 = vmul.f32 %v5105, %v9555
        %v9646 = vmul.f32 %v5106, %v9563
        %v9647 = vmul.f32 %v5107, %v9562
        %v9648 = vmul.f32 %v5108, %v9564
        %v9649 = vmul.f32 %v5110, %v9555
        %v9650 = vmul.f32 %v5111, %v9563
        %v9651 = vmul.f32 %v5112, %v9562
        %v9652 = vmul.f32 %v5113, %v9564
        %v9653 = vmul.f32 %v5114, %v9555
        %v9654 = vmul.f32 %v5115, %v9563
        %v9655 = vmul.f32 %v5116, %v9562
        %v9656 = vmul.f32 %v5117, %v9564
        %v9657 = vmul.f32 %v5119, %v9555
        %v9658 = vmul.f32 %v5120, %v9563
        %v9659 = vmul.f32 %v5121, %v9562
        %v9660 = vmul.f32 %v5122, %v9564
        %v9661 = vmul.f32 %v5123, %v9555
        %v9662 = vmul.f32 %v5124, %v9563
        %v9663 = vmul.f32 %v5125, %v9562
        %v9664 = vmul.f32 %v5126, %v9564
        %v9665 = vmul.f32 %v5128, %v9555
        %v9666 = vmul.f32 %v5129, %v9563
        %v9667 = vmul.f32 %v5130, %v9562
        %v9668 = vmul.f32 %v5131, %v9564
        %v9669 = vmul.f32 %v5132, %v9555
        %v9670 = vmul.f32 %v5133, %v9563
        %v9671 = vmul.f32 %v5134, %v9562
        %v9672 = vmul.f32 %v5135, %v9564
        %v9673 = vmul.f32 %v5137, %v9555
        %v9674 = vmul.f32 %v5138, %v9563
        %v9675 = vmul.f32 %v5139, %v9562
        %v9676 = vmul.f32 %v5140, %v9564
        %v9677 = vmul.f32 %v5141, %v9555
        %v9678 = vmul.f32 %v5142, %v9563
        %v9679 = vmul.f32 %v5143, %v9562
        %v9680 = vmul.f32 %v5144, %v9564
        %v9681 = vmul.f32 %v5146, %v9555
        %v9682 = vmul.f32 %v5147, %v9563
        %v9683 = vmul.f32 %v5148, %v9562
        %v9684 = vmul.f32 %v5149, %v9564
        %v9685 = vmul.f32 %v5150, %v9555
        %v9686 = vmul.f32 %v5151, %v9563
        %v9687 = vmul.f32 %v5152, %v9562
        %v9688 = vmul.f32 %v5153, %v9564
        %v9689 = vmul.f32 %v5155, %v9555
        %v9690 = vmul.f32 %v5156, %v9563
        %v9691 = vmul.f32 %v5157, %v9562
        %v9692 = vmul.f32 %v5158, %v9564
        %v9693 = vmul.f32 %v5159, %v9555
        %v9694 = vmul.f32 %v5160, %v9563
        %v9695 = vmul.f32 %v5161, %v9562
        %v9696 = vmul.f32 %v5162, %v9564
        %v9697 = vadd.f32 %v9414, %v9569
        %v9698 = vadd.f32 %v9415, %v9570
        %v9699 = vadd.f32 %v9416, %v9571
        %v9700 = vadd.f32 %v9417, %v9572
        %v9701 = vadd.f32 %v9418, %v9573
        %v9702 = vadd.f32 %v9419, %v9574
        %v9703 = vadd.f32 %v9420, %v9575
        %v9704 = vadd.f32 %v9421, %v9576
        %v9705 = vadd.f32 %v9422, %v9577
        %v9706 = vadd.f32 %v9423, %v9578
        %v9707 = vadd.f32 %v9424, %v9579
        %v9708 = vadd.f32 %v9425, %v9580
        %v9709 = vadd.f32 %v9426, %v9581
        %v9710 = vadd.f32 %v9427, %v9582
        %v9711 = vadd.f32 %v9428, %v9583
        %v9712 = vadd.f32 %v9429, %v9584
        %v9713 = vadd.f32 %v9430, %v9585
        %v9714 = vadd.f32 %v9431, %v9586
        %v9715 = vadd.f32 %v9432, %v9587
        %v9716 = vadd.f32 %v9433, %v9588
        %v9717 = vadd.f32 %v9434, %v9589
        %v9718 = vadd.f32 %v9435, %v9590
        %v9719 = vadd.f32 %v9436, %v9591
        %v9720 = vadd.f32 %v9437, %v9592
        %v9721 = vadd.f32 %v9438, %v9593
        %v9722 = vadd.f32 %v9439, %v9594
        %v9723 = vadd.f32 %v9440, %v9595
        %v9724 = vadd.f32 %v9441, %v9596
        %v9725 = vadd.f32 %v9442, %v9597
        %v9726 = vadd.f32 %v9443, %v9598
        %v9727 = vadd.f32 %v9444, %v9599
        %v9728 = vadd.f32 %v9445, %v9600
        %v9729 = vadd.f32 %v9446, %v9601
        %v9730 = vadd.f32 %v9447, %v9602
        %v9731 = vadd.f32 %v9448, %v9603
        %v9732 = vadd.f32 %v9449, %v9604
        %v9733 = vadd.f32 %v9450, %v9605
        %v9734 = vadd.f32 %v9451, %v9606
        %v9735 = vadd.f32 %v9452, %v9607
        %v9736 = vadd.f32 %v9453, %v9608
        %v9737 = vadd.f32 %v9454, %v9609
        %v9738 = vadd.f32 %v9455, %v9610
        %v9739 = vadd.f32 %v9456, %v9611
        %v9740 = vadd.f32 %v9457, %v9612
        %v9741 = vadd.f32 %v9458, %v9613
        %v9742 = vadd.f32 %v9459, %v9614
        %v9743 = vadd.f32 %v9460, %v9615
        %v9744 = vadd.f32 %v9461, %v9616
        %v9745 = vadd.f32 %v9462, %v9617
        %v9746 = vadd.f32 %v9463, %v9618
        %v9747 = vadd.f32 %v9464, %v9619
        %v9748 = vadd.f32 %v9465, %v9620
        %v9749 = vadd.f32 %v9466, %v9621
        %v9750 = vadd.f32 %v9467, %v9622
        %v9751 = vadd.f32 %v9468, %v9623
        %v9752 = vadd.f32 %v9469, %v9624
        %v9753 = vadd.f32 %v9470, %v9625
        %v9754 = vadd.f32 %v9471, %v9626
        %v9755 = vadd.f32 %v9472, %v9627
        %v9756 = vadd.f32 %v9473, %v9628
        %v9757 = vadd.f32 %v9474, %v9629
        %v9758 = vadd.f32 %v9475, %v9630
        %v9759 = vadd.f32 %v9476, %v9631
        %v9760 = vadd.f32 %v9477, %v9632
        %v9761 = vadd.f32 %v9478, %v9633
        %v9762 = vadd.f32 %v9479, %v9634
        %v9763 = vadd.f32 %v9480, %v9635
        %v9764 = vadd.f32 %v9481, %v9636
        %v9765 = vadd.f32 %v9482, %v9637
        %v9766 = vadd.f32 %v9483, %v9638
        %v9767 = vadd.f32 %v9484, %v9639
        %v9768 = vadd.f32 %v9485, %v9640
        %v9769 = vadd.f32 %v9486, %v9641
        %v9770 = vadd.f32 %v9487, %v9642
        %v9771 = vadd.f32 %v9488, %v9643
        %v9772 = vadd.f32 %v9489, %v9644
        %v9773 = vadd.f32 %v9490, %v9645
        %v9774 = vadd.f32 %v9491, %v9646
        %v9775 = vadd.f32 %v9492, %v9647
        %v9776 = vadd.f32 %v9493, %v9648
        %v9777 = vadd.f32 %v9494, %v9649
        %v9778 = vadd.f32 %v9495, %v9650
        %v9779 = vadd.f32 %v9496, %v9651
        %v9780 = vadd.f32 %v9497, %v9652
        %v9781 = vadd.f32 %v9498, %v9653
        %v9782 = vadd.f32 %v9499, %v9654
        %v9783 = vadd.f32 %v9500, %v9655
        %v9784 = vadd.f32 %v9501, %v9656
        %v9785 = vadd.f32 %v9502, %v9657
        %v9786 = vadd.f32 %v9503, %v9658
        %v9787 = vadd.f32 %v9504, %v9659
        %v9788 = vadd.f32 %v9505, %v9660
        %v9789 = vadd.f32 %v9506, %v9661
        %v9790 = vadd.f32 %v9507, %v9662
        %v9791 = vadd.f32 %v9508, %v9663
        %v9792 = vadd.f32 %v9509, %v9664
        %v9793 = vadd.f32 %v9510, %v9665
        %v9794 = vadd.f32 %v9511, %v9666
        %v9795 = vadd.f32 %v9512, %v9667
        %v9796 = vadd.f32 %v9513, %v9668
        %v9797 = vadd.f32 %v9514, %v9669
        %v9798 = vadd.f32 %v9515, %v9670
        %v9799 = vadd.f32 %v9516, %v9671
        %v9800 = vadd.f32 %v9517, %v9672
        %v9801 = vadd.f32 %v9518, %v9673
        %v9802 = vadd.f32 %v9519, %v9674
        %v9803 = vadd.f32 %v9520, %v9675
        %v9804 = vadd.f32 %v9521, %v9676
        %v9805 = vadd.f32 %v9522, %v9677
        %v9806 = vadd.f32 %v9523, %v9678
        %v9807 = vadd.f32 %v9524, %v9679
        %v9808 = vadd.f32 %v9525, %v9680
        %v9809 = vadd.f32 %v9526, %v9681
        %v9810 = vadd.f32 %v9527, %v9682
        %v9811 = vadd.f32 %v9528, %v9683
        %v9812 = vadd.f32 %v9529, %v9684
        %v9813 = vadd.f32 %v9530, %v9685
        %v9814 = vadd.f32 %v9531, %v9686
        %v9815 = vadd.f32 %v9532, %v9687
        %v9816 = vadd.f32 %v9533, %v9688
        %v9817 = vadd.f32 %v9534, %v9689
        %v9818 = vadd.f32 %v9535, %v9690
        %v9819 = vadd.f32 %v9536, %v9691
        %v9820 = vadd.f32 %v9537, %v9692
        %v9821 = vadd.f32 %v9538, %v9693
        %v9822 = vadd.f32 %v9539, %v9694
        %v9823 = vadd.f32 %v9540, %v9695
        %v9824 = vadd.f32 %v9541, %v9696
        %v9825 = vld [vmem:[%s425] sm:$0x1]
        %v9827 = vlaneseq
        %v9828 = vshrl.u32 %v9827, 7
        %v9829 = vsub.s32 0, %v9828
        %v9830 = vrot.slane %v9825, %v9829
        %v9831 = vcombine.high %v9830, %v9830
        %v9833 = vunpack.c.l.s4 1983009808
        %v9834 = vunpack.c.0.s8 %v9833
        %v9835 = vlaneseq
        %v9836 = vshrl.u32 %v9835, 7
        %v9837 = vsub.s32 %v9834, %v9836
        %v9838 = vrot.slane %v9830, %v9837
        %v9840 = vunpack.c.l.s4 1983009808
        %v9841 = vunpack.c.0.s8 %v9840
        %v9842 = vlaneseq
        %v9843 = vshrl.u32 %v9842, 7
        %v9844 = vsub.s32 %v9841, %v9843
        %v9845 = vrot.slane %v9831, %v9844
        %v9846 = vcombine.high %v9838, %v9838
        %v9847 = vcombine.high %v9845, %v9845
        %v9852 = vmul.f32 %v9697, %v9838
        %v9853 = vmul.f32 %v9698, %v9846
        %v9854 = vmul.f32 %v9699, %v9845
        %v9855 = vmul.f32 %v9700, %v9847
        %v9856 = vmul.f32 %v9701, %v9838
        %v9857 = vmul.f32 %v9702, %v9846
        %v9858 = vmul.f32 %v9703, %v9845
        %v9859 = vmul.f32 %v9704, %v9847
        %v9860 = vmul.f32 %v9705, %v9838
        %v9861 = vmul.f32 %v9706, %v9846
        %v9862 = vmul.f32 %v9707, %v9845
        %v9863 = vmul.f32 %v9708, %v9847
        %v9864 = vmul.f32 %v9709, %v9838
        %v9865 = vmul.f32 %v9710, %v9846
        %v9866 = vmul.f32 %v9711, %v9845
        %v9867 = vmul.f32 %v9712, %v9847
        %v9868 = vmul.f32 %v9713, %v9838
        %v9869 = vmul.f32 %v9714, %v9846
        %v9870 = vmul.f32 %v9715, %v9845
        %v9871 = vmul.f32 %v9716, %v9847
        %v9872 = vmul.f32 %v9717, %v9838
        %v9873 = vmul.f32 %v9718, %v9846
        %v9874 = vmul.f32 %v9719, %v9845
        %v9875 = vmul.f32 %v9720, %v9847
        %v9876 = vmul.f32 %v9721, %v9838
        %v9877 = vmul.f32 %v9722, %v9846
        %v9878 = vmul.f32 %v9723, %v9845
        %v9879 = vmul.f32 %v9724, %v9847
        %v9880 = vmul.f32 %v9725, %v9838
        %v9881 = vmul.f32 %v9726, %v9846
        %v9882 = vmul.f32 %v9727, %v9845
        %v9883 = vmul.f32 %v9728, %v9847
        %v9884 = vmul.f32 %v9729, %v9838
        %v9885 = vmul.f32 %v9730, %v9846
        %v9886 = vmul.f32 %v9731, %v9845
        %v9887 = vmul.f32 %v9732, %v9847
        %v9888 = vmul.f32 %v9733, %v9838
        %v9889 = vmul.f32 %v9734, %v9846
        %v9890 = vmul.f32 %v9735, %v9845
        %v9891 = vmul.f32 %v9736, %v9847
        %v9892 = vmul.f32 %v9737, %v9838
        %v9893 = vmul.f32 %v9738, %v9846
        %v9894 = vmul.f32 %v9739, %v9845
        %v9895 = vmul.f32 %v9740, %v9847
        %v9896 = vmul.f32 %v9741, %v9838
        %v9897 = vmul.f32 %v9742, %v9846
        %v9898 = vmul.f32 %v9743, %v9845
        %v9899 = vmul.f32 %v9744, %v9847
        %v9900 = vmul.f32 %v9745, %v9838
        %v9901 = vmul.f32 %v9746, %v9846
        %v9902 = vmul.f32 %v9747, %v9845
        %v9903 = vmul.f32 %v9748, %v9847
        %v9904 = vmul.f32 %v9749, %v9838
        %v9905 = vmul.f32 %v9750, %v9846
        %v9906 = vmul.f32 %v9751, %v9845
        %v9907 = vmul.f32 %v9752, %v9847
        %v9908 = vmul.f32 %v9753, %v9838
        %v9909 = vmul.f32 %v9754, %v9846
        %v9910 = vmul.f32 %v9755, %v9845
        %v9911 = vmul.f32 %v9756, %v9847
        %v9912 = vmul.f32 %v9757, %v9838
        %v9913 = vmul.f32 %v9758, %v9846
        %v9914 = vmul.f32 %v9759, %v9845
        %v9915 = vmul.f32 %v9760, %v9847
        %v9916 = vmul.f32 %v9761, %v9838
        %v9917 = vmul.f32 %v9762, %v9846
        %v9918 = vmul.f32 %v9763, %v9845
        %v9919 = vmul.f32 %v9764, %v9847
        %v9920 = vmul.f32 %v9765, %v9838
        %v9921 = vmul.f32 %v9766, %v9846
        %v9922 = vmul.f32 %v9767, %v9845
        %v9923 = vmul.f32 %v9768, %v9847
        %v9924 = vmul.f32 %v9769, %v9838
        %v9925 = vmul.f32 %v9770, %v9846
        %v9926 = vmul.f32 %v9771, %v9845
        %v9927 = vmul.f32 %v9772, %v9847
        %v9928 = vmul.f32 %v9773, %v9838
        %v9929 = vmul.f32 %v9774, %v9846
        %v9930 = vmul.f32 %v9775, %v9845
        %v9931 = vmul.f32 %v9776, %v9847
        %v9932 = vmul.f32 %v9777, %v9838
        %v9933 = vmul.f32 %v9778, %v9846
        %v9934 = vmul.f32 %v9779, %v9845
        %v9935 = vmul.f32 %v9780, %v9847
        %v9936 = vmul.f32 %v9781, %v9838
        %v9937 = vmul.f32 %v9782, %v9846
        %v9938 = vmul.f32 %v9783, %v9845
        %v9939 = vmul.f32 %v9784, %v9847
        %v9940 = vmul.f32 %v9785, %v9838
        %v9941 = vmul.f32 %v9786, %v9846
        %v9942 = vmul.f32 %v9787, %v9845
        %v9943 = vmul.f32 %v9788, %v9847
        %v9944 = vmul.f32 %v9789, %v9838
        %v9945 = vmul.f32 %v9790, %v9846
        %v9946 = vmul.f32 %v9791, %v9845
        %v9947 = vmul.f32 %v9792, %v9847
        %v9948 = vmul.f32 %v9793, %v9838
        %v9949 = vmul.f32 %v9794, %v9846
        %v9950 = vmul.f32 %v9795, %v9845
        %v9951 = vmul.f32 %v9796, %v9847
        %v9952 = vmul.f32 %v9797, %v9838
        %v9953 = vmul.f32 %v9798, %v9846
        %v9954 = vmul.f32 %v9799, %v9845
        %v9955 = vmul.f32 %v9800, %v9847
        %v9956 = vmul.f32 %v9801, %v9838
        %v9957 = vmul.f32 %v9802, %v9846
        %v9958 = vmul.f32 %v9803, %v9845
        %v9959 = vmul.f32 %v9804, %v9847
        %v9960 = vmul.f32 %v9805, %v9838
        %v9961 = vmul.f32 %v9806, %v9846
        %v9962 = vmul.f32 %v9807, %v9845
        %v9963 = vmul.f32 %v9808, %v9847
        %v9964 = vmul.f32 %v9809, %v9838
        %v9965 = vmul.f32 %v9810, %v9846
        %v9966 = vmul.f32 %v9811, %v9845
        %v9967 = vmul.f32 %v9812, %v9847
        %v9968 = vmul.f32 %v9813, %v9838
        %v9969 = vmul.f32 %v9814, %v9846
        %v9970 = vmul.f32 %v9815, %v9845
        %v9971 = vmul.f32 %v9816, %v9847
        %v9972 = vmul.f32 %v9817, %v9838
        %v9973 = vmul.f32 %v9818, %v9846
        %v9974 = vmul.f32 %v9819, %v9845
        %v9975 = vmul.f32 %v9820, %v9847
        %v9976 = vmul.f32 %v9821, %v9838
        %v9977 = vmul.f32 %v9822, %v9846
        %v9978 = vmul.f32 %v9823, %v9845
        %v9979 = vmul.f32 %v9824, %v9847
        %v9980 = vld [vmem:[%s428] sm:$0x1]
        %v9982 = vlaneseq
        %v9983 = vshrl.u32 %v9982, 7
        %v9984 = vsub.s32 0, %v9983
        %v9985 = vrot.slane %v9980, %v9984
        %v9986 = vcombine.high %v9985, %v9985
        %v9988 = vunpack.c.l.s4 1983009808
        %v9989 = vunpack.c.0.s8 %v9988
        %v9990 = vlaneseq
        %v9991 = vshrl.u32 %v9990, 7
        %v9992 = vsub.s32 %v9989, %v9991
        %v9993 = vrot.slane %v9985, %v9992
        %v9995 = vunpack.c.l.s4 1983009808
        %v9996 = vunpack.c.0.s8 %v9995
        %v9997 = vlaneseq
        %v9998 = vshrl.u32 %v9997, 7
        %v9999 = vsub.s32 %v9996, %v9998
        %v10000 = vrot.slane %v9986, %v9999
        %v10001 = vcombine.high %v9993, %v9993
        %v10002 = vcombine.high %v10000, %v10000
        %v10007 = vadd.f32 %v9852, %v9993
        %v10008 = vadd.f32 %v9853, %v10001
        %v10009 = vadd.f32 %v9854, %v10000
        %v10010 = vadd.f32 %v9855, %v10002
        %v10011 = vadd.f32 %v9856, %v9993
        %v10012 = vadd.f32 %v9857, %v10001
        %v10013 = vadd.f32 %v9858, %v10000
        %v10014 = vadd.f32 %v9859, %v10002
        %v10015 = vadd.f32 %v9860, %v9993
        %v10016 = vadd.f32 %v9861, %v10001
        %v10017 = vadd.f32 %v9862, %v10000
        %v10018 = vadd.f32 %v9863, %v10002
        %v10019 = vadd.f32 %v9864, %v9993
        %v10020 = vadd.f32 %v9865, %v10001
        %v10021 = vadd.f32 %v9866, %v10000
        %v10022 = vadd.f32 %v9867, %v10002
        %v10023 = vadd.f32 %v9868, %v9993
        %v10024 = vadd.f32 %v9869, %v10001
        %v10025 = vadd.f32 %v9870, %v10000
        %v10026 = vadd.f32 %v9871, %v10002
        %v10027 = vadd.f32 %v9872, %v9993
        %v10028 = vadd.f32 %v9873, %v10001
        %v10029 = vadd.f32 %v9874, %v10000
        %v10030 = vadd.f32 %v9875, %v10002
        %v10031 = vadd.f32 %v9876, %v9993
        %v10032 = vadd.f32 %v9877, %v10001
        %v10033 = vadd.f32 %v9878, %v10000
        %v10034 = vadd.f32 %v9879, %v10002
        %v10035 = vadd.f32 %v9880, %v9993
        %v10036 = vadd.f32 %v9881, %v10001
        %v10037 = vadd.f32 %v9882, %v10000
        %v10038 = vadd.f32 %v9883, %v10002
        %v10039 = vadd.f32 %v9884, %v9993
        %v10040 = vadd.f32 %v9885, %v10001
        %v10041 = vadd.f32 %v9886, %v10000
        %v10042 = vadd.f32 %v9887, %v10002
        %v10043 = vadd.f32 %v9888, %v9993
        %v10044 = vadd.f32 %v9889, %v10001
        %v10045 = vadd.f32 %v9890, %v10000
        %v10046 = vadd.f32 %v9891, %v10002
        %v10047 = vadd.f32 %v9892, %v9993
        %v10048 = vadd.f32 %v9893, %v10001
        %v10049 = vadd.f32 %v9894, %v10000
        %v10050 = vadd.f32 %v9895, %v10002
        %v10051 = vadd.f32 %v9896, %v9993
        %v10052 = vadd.f32 %v9897, %v10001
        %v10053 = vadd.f32 %v9898, %v10000
        %v10054 = vadd.f32 %v9899, %v10002
        %v10055 = vadd.f32 %v9900, %v9993
        %v10056 = vadd.f32 %v9901, %v10001
        %v10057 = vadd.f32 %v9902, %v10000
        %v10058 = vadd.f32 %v9903, %v10002
        %v10059 = vadd.f32 %v9904, %v9993
        %v10060 = vadd.f32 %v9905, %v10001
        %v10061 = vadd.f32 %v9906, %v10000
        %v10062 = vadd.f32 %v9907, %v10002
        %v10063 = vadd.f32 %v9908, %v9993
        %v10064 = vadd.f32 %v9909, %v10001
        %v10065 = vadd.f32 %v9910, %v10000
        %v10066 = vadd.f32 %v9911, %v10002
        %v10067 = vadd.f32 %v9912, %v9993
        %v10068 = vadd.f32 %v9913, %v10001
        %v10069 = vadd.f32 %v9914, %v10000
        %v10070 = vadd.f32 %v9915, %v10002
        %v10071 = vadd.f32 %v9916, %v9993
        %v10072 = vadd.f32 %v9917, %v10001
        %v10073 = vadd.f32 %v9918, %v10000
        %v10074 = vadd.f32 %v9919, %v10002
        %v10075 = vadd.f32 %v9920, %v9993
        %v10076 = vadd.f32 %v9921, %v10001
        %v10077 = vadd.f32 %v9922, %v10000
        %v10078 = vadd.f32 %v9923, %v10002
        %v10079 = vadd.f32 %v9924, %v9993
        %v10080 = vadd.f32 %v9925, %v10001
        %v10081 = vadd.f32 %v9926, %v10000
        %v10082 = vadd.f32 %v9927, %v10002
        %v10083 = vadd.f32 %v9928, %v9993
        %v10084 = vadd.f32 %v9929, %v10001
        %v10085 = vadd.f32 %v9930, %v10000
        %v10086 = vadd.f32 %v9931, %v10002
        %v10087 = vadd.f32 %v9932, %v9993
        %v10088 = vadd.f32 %v9933, %v10001
        %v10089 = vadd.f32 %v9934, %v10000
        %v10090 = vadd.f32 %v9935, %v10002
        %v10091 = vadd.f32 %v9936, %v9993
        %v10092 = vadd.f32 %v9937, %v10001
        %v10093 = vadd.f32 %v9938, %v10000
        %v10094 = vadd.f32 %v9939, %v10002
        %v10095 = vadd.f32 %v9940, %v9993
        %v10096 = vadd.f32 %v9941, %v10001
        %v10097 = vadd.f32 %v9942, %v10000
        %v10098 = vadd.f32 %v9943, %v10002
        %v10099 = vadd.f32 %v9944, %v9993
        %v10100 = vadd.f32 %v9945, %v10001
        %v10101 = vadd.f32 %v9946, %v10000
        %v10102 = vadd.f32 %v9947, %v10002
        %v10103 = vadd.f32 %v9948, %v9993
        %v10104 = vadd.f32 %v9949, %v10001
        %v10105 = vadd.f32 %v9950, %v10000
        %v10106 = vadd.f32 %v9951, %v10002
        %v10107 = vadd.f32 %v9952, %v9993
        %v10108 = vadd.f32 %v9953, %v10001
        %v10109 = vadd.f32 %v9954, %v10000
        %v10110 = vadd.f32 %v9955, %v10002
        %v10111 = vadd.f32 %v9956, %v9993
        %v10112 = vadd.f32 %v9957, %v10001
        %v10113 = vadd.f32 %v9958, %v10000
        %v10114 = vadd.f32 %v9959, %v10002
        %v10115 = vadd.f32 %v9960, %v9993
        %v10116 = vadd.f32 %v9961, %v10001
        %v10117 = vadd.f32 %v9962, %v10000
        %v10118 = vadd.f32 %v9963, %v10002
        %v10119 = vadd.f32 %v9964, %v9993
        %v10120 = vadd.f32 %v9965, %v10001
        %v10121 = vadd.f32 %v9966, %v10000
        %v10122 = vadd.f32 %v9967, %v10002
        %v10123 = vadd.f32 %v9968, %v9993
        %v10124 = vadd.f32 %v9969, %v10001
        %v10125 = vadd.f32 %v9970, %v10000
        %v10126 = vadd.f32 %v9971, %v10002
        %v10127 = vadd.f32 %v9972, %v9993
        %v10128 = vadd.f32 %v9973, %v10001
        %v10129 = vadd.f32 %v9974, %v10000
        %v10130 = vadd.f32 %v9975, %v10002
        %v10131 = vadd.f32 %v9976, %v9993
        %v10132 = vadd.f32 %v9977, %v10001
        %v10133 = vadd.f32 %v9978, %v10000
        %v10134 = vadd.f32 %v9979, %v10002
        %v10135 = vmax.f32 %v10007, 0.0
        %v10136 = vmax.f32 %v10008, 0.0
        %v10137 = vmax.f32 %v10009, 0.0
        %v10138 = vmax.f32 %v10010, 0.0
        %v10139 = vmax.f32 %v10011, 0.0
        %v10140 = vmax.f32 %v10012, 0.0
        %v10141 = vmax.f32 %v10013, 0.0
        %v10142 = vmax.f32 %v10014, 0.0
        %v10143 = vmax.f32 %v10015, 0.0
        %v10144 = vmax.f32 %v10016, 0.0
        %v10145 = vmax.f32 %v10017, 0.0
        %v10146 = vmax.f32 %v10018, 0.0
        %v10147 = vmax.f32 %v10019, 0.0
        %v10148 = vmax.f32 %v10020, 0.0
        %v10149 = vmax.f32 %v10021, 0.0
        %v10150 = vmax.f32 %v10022, 0.0
        %v10151 = vmax.f32 %v10023, 0.0
        %v10152 = vmax.f32 %v10024, 0.0
        %v10153 = vmax.f32 %v10025, 0.0
        %v10154 = vmax.f32 %v10026, 0.0
        %v10155 = vmax.f32 %v10027, 0.0
        %v10156 = vmax.f32 %v10028, 0.0
        %v10157 = vmax.f32 %v10029, 0.0
        %v10158 = vmax.f32 %v10030, 0.0
        %v10159 = vmax.f32 %v10031, 0.0
        %v10160 = vmax.f32 %v10032, 0.0
        %v10161 = vmax.f32 %v10033, 0.0
        %v10162 = vmax.f32 %v10034, 0.0
        %v10163 = vmax.f32 %v10035, 0.0
        %v10164 = vmax.f32 %v10036, 0.0
        %v10165 = vmax.f32 %v10037, 0.0
        %v10166 = vmax.f32 %v10038, 0.0
        %v10167 = vmax.f32 %v10039, 0.0
        %v10168 = vmax.f32 %v10040, 0.0
        %v10169 = vmax.f32 %v10041, 0.0
        %v10170 = vmax.f32 %v10042, 0.0
        %v10171 = vmax.f32 %v10043, 0.0
        %v10172 = vmax.f32 %v10044, 0.0
        %v10173 = vmax.f32 %v10045, 0.0
        %v10174 = vmax.f32 %v10046, 0.0
        %v10175 = vmax.f32 %v10047, 0.0
        %v10176 = vmax.f32 %v10048, 0.0
        %v10177 = vmax.f32 %v10049, 0.0
        %v10178 = vmax.f32 %v10050, 0.0
        %v10179 = vmax.f32 %v10051, 0.0
        %v10180 = vmax.f32 %v10052, 0.0
        %v10181 = vmax.f32 %v10053, 0.0
        %v10182 = vmax.f32 %v10054, 0.0
        %v10183 = vmax.f32 %v10055, 0.0
        %v10184 = vmax.f32 %v10056, 0.0
        %v10185 = vmax.f32 %v10057, 0.0
        %v10186 = vmax.f32 %v10058, 0.0
        %v10187 = vmax.f32 %v10059, 0.0
        %v10188 = vmax.f32 %v10060, 0.0
        %v10189 = vmax.f32 %v10061, 0.0
        %v10190 = vmax.f32 %v10062, 0.0
        %v10191 = vmax.f32 %v10063, 0.0
        %v10192 = vmax.f32 %v10064, 0.0
        %v10193 = vmax.f32 %v10065, 0.0
        %v10194 = vmax.f32 %v10066, 0.0
        %v10195 = vmax.f32 %v10067, 0.0
        %v10196 = vmax.f32 %v10068, 0.0
        %v10197 = vmax.f32 %v10069, 0.0
        %v10198 = vmax.f32 %v10070, 0.0
        %v10199 = vmax.f32 %v10071, 0.0
        %v10200 = vmax.f32 %v10072, 0.0
        %v10201 = vmax.f32 %v10073, 0.0
        %v10202 = vmax.f32 %v10074, 0.0
        %v10203 = vmax.f32 %v10075, 0.0
        %v10204 = vmax.f32 %v10076, 0.0
        %v10205 = vmax.f32 %v10077, 0.0
        %v10206 = vmax.f32 %v10078, 0.0
        %v10207 = vmax.f32 %v10079, 0.0
        %v10208 = vmax.f32 %v10080, 0.0
        %v10209 = vmax.f32 %v10081, 0.0
        %v10210 = vmax.f32 %v10082, 0.0
        %v10211 = vmax.f32 %v10083, 0.0
        %v10212 = vmax.f32 %v10084, 0.0
        %v10213 = vmax.f32 %v10085, 0.0
        %v10214 = vmax.f32 %v10086, 0.0
        %v10215 = vmax.f32 %v10087, 0.0
        %v10216 = vmax.f32 %v10088, 0.0
        %v10217 = vmax.f32 %v10089, 0.0
        %v10218 = vmax.f32 %v10090, 0.0
        %v10219 = vmax.f32 %v10091, 0.0
        %v10220 = vmax.f32 %v10092, 0.0
        %v10221 = vmax.f32 %v10093, 0.0
        %v10222 = vmax.f32 %v10094, 0.0
        %v10223 = vmax.f32 %v10095, 0.0
        %v10224 = vmax.f32 %v10096, 0.0
        %v10225 = vmax.f32 %v10097, 0.0
        %v10226 = vmax.f32 %v10098, 0.0
        %v10227 = vmax.f32 %v10099, 0.0
        %v10228 = vmax.f32 %v10100, 0.0
        %v10229 = vmax.f32 %v10101, 0.0
        %v10230 = vmax.f32 %v10102, 0.0
        %v10231 = vmax.f32 %v10103, 0.0
        %v10232 = vmax.f32 %v10104, 0.0
        %v10233 = vmax.f32 %v10105, 0.0
        %v10234 = vmax.f32 %v10106, 0.0
        %v10235 = vmax.f32 %v10107, 0.0
        %v10236 = vmax.f32 %v10108, 0.0
        %v10237 = vmax.f32 %v10109, 0.0
        %v10238 = vmax.f32 %v10110, 0.0
        %v10239 = vmax.f32 %v10111, 0.0
        %v10240 = vmax.f32 %v10112, 0.0
        %v10241 = vmax.f32 %v10113, 0.0
        %v10242 = vmax.f32 %v10114, 0.0
        %v10243 = vmax.f32 %v10115, 0.0
        %v10244 = vmax.f32 %v10116, 0.0
        %v10245 = vmax.f32 %v10117, 0.0
        %v10246 = vmax.f32 %v10118, 0.0
        %v10247 = vmax.f32 %v10119, 0.0
        %v10248 = vmax.f32 %v10120, 0.0
        %v10249 = vmax.f32 %v10121, 0.0
        %v10250 = vmax.f32 %v10122, 0.0
        %v10251 = vmax.f32 %v10123, 0.0
        %v10252 = vmax.f32 %v10124, 0.0
        %v10253 = vmax.f32 %v10125, 0.0
        %v10254 = vmax.f32 %v10126, 0.0
        %v10255 = vmax.f32 %v10127, 0.0
        %v10256 = vmax.f32 %v10128, 0.0
        %v10257 = vmax.f32 %v10129, 0.0
        %v10258 = vmax.f32 %v10130, 0.0
        %v10259 = vmax.f32 %v10131, 0.0
        %v10260 = vmax.f32 %v10132, 0.0
        %v10261 = vmax.f32 %v10133, 0.0
        %v10262 = vmax.f32 %v10134, 0.0
        %v10391 = vcombine.low %v10135, %v10136
        %v10392 = vcombine.low %v10137, %v10138
        %v10394 = vunpack.c.l.s4 1983009808
        %v10395 = vunpack.c.0.s8 %v10394
        %v10396 = vlaneseq
        %v10397 = vshrl.u32 %v10396, 7
        %v10398 = vsub.s32 %v10395, %v10397
        %v10399 = vrot.slane %v10391, %v10398
        %v10401 = vunpack.c.l.s4 1983009808
        %v10402 = vunpack.c.0.s8 %v10401
        %v10403 = vlaneseq
        %v10404 = vshrl.u32 %v10403, 7
        %v10405 = vsub.s32 %v10402, %v10404
        %v10406 = vrot.slane %v10392, %v10405
        %v10407 = vcombine.low %v10399, %v10406
        %v10408 = vcombine.low %v10139, %v10140
        %v10409 = vcombine.low %v10141, %v10142
        %v10411 = vunpack.c.l.s4 1983009808
        %v10412 = vunpack.c.0.s8 %v10411
        %v10413 = vlaneseq
        %v10414 = vshrl.u32 %v10413, 7
        %v10415 = vsub.s32 %v10412, %v10414
        %v10416 = vrot.slane %v10408, %v10415
        %v10418 = vunpack.c.l.s4 1983009808
        %v10419 = vunpack.c.0.s8 %v10418
        %v10420 = vlaneseq
        %v10421 = vshrl.u32 %v10420, 7
        %v10422 = vsub.s32 %v10419, %v10421
        %v10423 = vrot.slane %v10409, %v10422
        %v10424 = vcombine.low %v10416, %v10423
        %v10425 = vcombine.low %v10143, %v10144
        %v10426 = vcombine.low %v10145, %v10146
        %v10428 = vunpack.c.l.s4 1983009808
        %v10429 = vunpack.c.0.s8 %v10428
        %v10430 = vlaneseq
        %v10431 = vshrl.u32 %v10430, 7
        %v10432 = vsub.s32 %v10429, %v10431
        %v10433 = vrot.slane %v10425, %v10432
        %v10435 = vunpack.c.l.s4 1983009808
        %v10436 = vunpack.c.0.s8 %v10435
        %v10437 = vlaneseq
        %v10438 = vshrl.u32 %v10437, 7
        %v10439 = vsub.s32 %v10436, %v10438
        %v10440 = vrot.slane %v10426, %v10439
        %v10441 = vcombine.low %v10433, %v10440
        %v10442 = vcombine.low %v10147, %v10148
        %v10443 = vcombine.low %v10149, %v10150
        %v10445 = vunpack.c.l.s4 1983009808
        %v10446 = vunpack.c.0.s8 %v10445
        %v10447 = vlaneseq
        %v10448 = vshrl.u32 %v10447, 7
        %v10449 = vsub.s32 %v10446, %v10448
        %v10450 = vrot.slane %v10442, %v10449
        %v10452 = vunpack.c.l.s4 1983009808
        %v10453 = vunpack.c.0.s8 %v10452
        %v10454 = vlaneseq
        %v10455 = vshrl.u32 %v10454, 7
        %v10456 = vsub.s32 %v10453, %v10455
        %v10457 = vrot.slane %v10443, %v10456
        %v10458 = vcombine.low %v10450, %v10457
        %v10459 = vcombine.low %v10151, %v10152
        %v10460 = vcombine.low %v10153, %v10154
        %v10462 = vunpack.c.l.s4 1983009808
        %v10463 = vunpack.c.0.s8 %v10462
        %v10464 = vlaneseq
        %v10465 = vshrl.u32 %v10464, 7
        %v10466 = vsub.s32 %v10463, %v10465
        %v10467 = vrot.slane %v10459, %v10466
        %v10469 = vunpack.c.l.s4 1983009808
        %v10470 = vunpack.c.0.s8 %v10469
        %v10471 = vlaneseq
        %v10472 = vshrl.u32 %v10471, 7
        %v10473 = vsub.s32 %v10470, %v10472
        %v10474 = vrot.slane %v10460, %v10473
        %v10475 = vcombine.low %v10467, %v10474
        %v10476 = vcombine.low %v10155, %v10156
        %v10477 = vcombine.low %v10157, %v10158
        %v10479 = vunpack.c.l.s4 1983009808
        %v10480 = vunpack.c.0.s8 %v10479
        %v10481 = vlaneseq
        %v10482 = vshrl.u32 %v10481, 7
        %v10483 = vsub.s32 %v10480, %v10482
        %v10484 = vrot.slane %v10476, %v10483
        %v10486 = vunpack.c.l.s4 1983009808
        %v10487 = vunpack.c.0.s8 %v10486
        %v10488 = vlaneseq
        %v10489 = vshrl.u32 %v10488, 7
        %v10490 = vsub.s32 %v10487, %v10489
        %v10491 = vrot.slane %v10477, %v10490
        %v10492 = vcombine.low %v10484, %v10491
        %v10493 = vcombine.low %v10159, %v10160
        %v10494 = vcombine.low %v10161, %v10162
        %v10496 = vunpack.c.l.s4 1983009808
        %v10497 = vunpack.c.0.s8 %v10496
        %v10498 = vlaneseq
        %v10499 = vshrl.u32 %v10498, 7
        %v10500 = vsub.s32 %v10497, %v10499
        %v10501 = vrot.slane %v10493, %v10500
        %v10503 = vunpack.c.l.s4 1983009808
        %v10504 = vunpack.c.0.s8 %v10503
        %v10505 = vlaneseq
        %v10506 = vshrl.u32 %v10505, 7
        %v10507 = vsub.s32 %v10504, %v10506
        %v10508 = vrot.slane %v10494, %v10507
        %v10509 = vcombine.low %v10501, %v10508
        %v10510 = vcombine.low %v10163, %v10164
        %v10511 = vcombine.low %v10165, %v10166
        %v10513 = vunpack.c.l.s4 1983009808
        %v10514 = vunpack.c.0.s8 %v10513
        %v10515 = vlaneseq
        %v10516 = vshrl.u32 %v10515, 7
        %v10517 = vsub.s32 %v10514, %v10516
        %v10518 = vrot.slane %v10510, %v10517
        %v10520 = vunpack.c.l.s4 1983009808
        %v10521 = vunpack.c.0.s8 %v10520
        %v10522 = vlaneseq
        %v10523 = vshrl.u32 %v10522, 7
        %v10524 = vsub.s32 %v10521, %v10523
        %v10525 = vrot.slane %v10511, %v10524
        %v10526 = vcombine.low %v10518, %v10525
        %v10527 = vcombine.low %v10167, %v10168
        %v10528 = vcombine.low %v10169, %v10170
        %v10530 = vunpack.c.l.s4 1983009808
        %v10531 = vunpack.c.0.s8 %v10530
        %v10532 = vlaneseq
        %v10533 = vshrl.u32 %v10532, 7
        %v10534 = vsub.s32 %v10531, %v10533
        %v10535 = vrot.slane %v10527, %v10534
        %v10537 = vunpack.c.l.s4 1983009808
        %v10538 = vunpack.c.0.s8 %v10537
        %v10539 = vlaneseq
        %v10540 = vshrl.u32 %v10539, 7
        %v10541 = vsub.s32 %v10538, %v10540
        %v10542 = vrot.slane %v10528, %v10541
        %v10543 = vcombine.low %v10535, %v10542
        %v10544 = vcombine.low %v10171, %v10172
        %v10545 = vcombine.low %v10173, %v10174
        %v10547 = vunpack.c.l.s4 1983009808
        %v10548 = vunpack.c.0.s8 %v10547
        %v10549 = vlaneseq
        %v10550 = vshrl.u32 %v10549, 7
        %v10551 = vsub.s32 %v10548, %v10550
        %v10552 = vrot.slane %v10544, %v10551
        %v10554 = vunpack.c.l.s4 1983009808
        %v10555 = vunpack.c.0.s8 %v10554
        %v10556 = vlaneseq
        %v10557 = vshrl.u32 %v10556, 7
        %v10558 = vsub.s32 %v10555, %v10557
        %v10559 = vrot.slane %v10545, %v10558
        %v10560 = vcombine.low %v10552, %v10559
        %v10561 = vcombine.low %v10175, %v10176
        %v10562 = vcombine.low %v10177, %v10178
        %v10564 = vunpack.c.l.s4 1983009808
        %v10565 = vunpack.c.0.s8 %v10564
        %v10566 = vlaneseq
        %v10567 = vshrl.u32 %v10566, 7
        %v10568 = vsub.s32 %v10565, %v10567
        %v10569 = vrot.slane %v10561, %v10568
        %v10571 = vunpack.c.l.s4 1983009808
        %v10572 = vunpack.c.0.s8 %v10571
        %v10573 = vlaneseq
        %v10574 = vshrl.u32 %v10573, 7
        %v10575 = vsub.s32 %v10572, %v10574
        %v10576 = vrot.slane %v10562, %v10575
        %v10577 = vcombine.low %v10569, %v10576
        %v10578 = vcombine.low %v10179, %v10180
        %v10579 = vcombine.low %v10181, %v10182
        %v10581 = vunpack.c.l.s4 1983009808
        %v10582 = vunpack.c.0.s8 %v10581
        %v10583 = vlaneseq
        %v10584 = vshrl.u32 %v10583, 7
        %v10585 = vsub.s32 %v10582, %v10584
        %v10586 = vrot.slane %v10578, %v10585
        %v10588 = vunpack.c.l.s4 1983009808
        %v10589 = vunpack.c.0.s8 %v10588
        %v10590 = vlaneseq
        %v10591 = vshrl.u32 %v10590, 7
        %v10592 = vsub.s32 %v10589, %v10591
        %v10593 = vrot.slane %v10579, %v10592
        %v10594 = vcombine.low %v10586, %v10593
        %v10595 = vcombine.low %v10183, %v10184
        %v10596 = vcombine.low %v10185, %v10186
        %v10598 = vunpack.c.l.s4 1983009808
        %v10599 = vunpack.c.0.s8 %v10598
        %v10600 = vlaneseq
        %v10601 = vshrl.u32 %v10600, 7
        %v10602 = vsub.s32 %v10599, %v10601
        %v10603 = vrot.slane %v10595, %v10602
        %v10605 = vunpack.c.l.s4 1983009808
        %v10606 = vunpack.c.0.s8 %v10605
        %v10607 = vlaneseq
        %v10608 = vshrl.u32 %v10607, 7
        %v10609 = vsub.s32 %v10606, %v10608
        %v10610 = vrot.slane %v10596, %v10609
        %v10611 = vcombine.low %v10603, %v10610
        %v10612 = vcombine.low %v10187, %v10188
        %v10613 = vcombine.low %v10189, %v10190
        %v10615 = vunpack.c.l.s4 1983009808
        %v10616 = vunpack.c.0.s8 %v10615
        %v10617 = vlaneseq
        %v10618 = vshrl.u32 %v10617, 7
        %v10619 = vsub.s32 %v10616, %v10618
        %v10620 = vrot.slane %v10612, %v10619
        %v10622 = vunpack.c.l.s4 1983009808
        %v10623 = vunpack.c.0.s8 %v10622
        %v10624 = vlaneseq
        %v10625 = vshrl.u32 %v10624, 7
        %v10626 = vsub.s32 %v10623, %v10625
        %v10627 = vrot.slane %v10613, %v10626
        %v10628 = vcombine.low %v10620, %v10627
        %v10629 = vcombine.low %v10191, %v10192
        %v10630 = vcombine.low %v10193, %v10194
        %v10632 = vunpack.c.l.s4 1983009808
        %v10633 = vunpack.c.0.s8 %v10632
        %v10634 = vlaneseq
        %v10635 = vshrl.u32 %v10634, 7
        %v10636 = vsub.s32 %v10633, %v10635
        %v10637 = vrot.slane %v10629, %v10636
        %v10639 = vunpack.c.l.s4 1983009808
        %v10640 = vunpack.c.0.s8 %v10639
        %v10641 = vlaneseq
        %v10642 = vshrl.u32 %v10641, 7
        %v10643 = vsub.s32 %v10640, %v10642
        %v10644 = vrot.slane %v10630, %v10643
        %v10645 = vcombine.low %v10637, %v10644
        %v10646 = vcombine.low %v10195, %v10196
        %v10647 = vcombine.low %v10197, %v10198
        %v10649 = vunpack.c.l.s4 1983009808
        %v10650 = vunpack.c.0.s8 %v10649
        %v10651 = vlaneseq
        %v10652 = vshrl.u32 %v10651, 7
        %v10653 = vsub.s32 %v10650, %v10652
        %v10654 = vrot.slane %v10646, %v10653
        %v10656 = vunpack.c.l.s4 1983009808
        %v10657 = vunpack.c.0.s8 %v10656
        %v10658 = vlaneseq
        %v10659 = vshrl.u32 %v10658, 7
        %v10660 = vsub.s32 %v10657, %v10659
        %v10661 = vrot.slane %v10647, %v10660
        %v10662 = vcombine.low %v10654, %v10661
        %v10663 = vcombine.low %v10199, %v10200
        %v10664 = vcombine.low %v10201, %v10202
        %v10666 = vunpack.c.l.s4 1983009808
        %v10667 = vunpack.c.0.s8 %v10666
        %v10668 = vlaneseq
        %v10669 = vshrl.u32 %v10668, 7
        %v10670 = vsub.s32 %v10667, %v10669
        %v10671 = vrot.slane %v10663, %v10670
        %v10673 = vunpack.c.l.s4 1983009808
        %v10674 = vunpack.c.0.s8 %v10673
        %v10675 = vlaneseq
        %v10676 = vshrl.u32 %v10675, 7
        %v10677 = vsub.s32 %v10674, %v10676
        %v10678 = vrot.slane %v10664, %v10677
        %v10679 = vcombine.low %v10671, %v10678
        %v10680 = vcombine.low %v10203, %v10204
        %v10681 = vcombine.low %v10205, %v10206
        %v10683 = vunpack.c.l.s4 1983009808
        %v10684 = vunpack.c.0.s8 %v10683
        %v10685 = vlaneseq
        %v10686 = vshrl.u32 %v10685, 7
        %v10687 = vsub.s32 %v10684, %v10686
        %v10688 = vrot.slane %v10680, %v10687
        %v10690 = vunpack.c.l.s4 1983009808
        %v10691 = vunpack.c.0.s8 %v10690
        %v10692 = vlaneseq
        %v10693 = vshrl.u32 %v10692, 7
        %v10694 = vsub.s32 %v10691, %v10693
        %v10695 = vrot.slane %v10681, %v10694
        %v10696 = vcombine.low %v10688, %v10695
        %v10697 = vcombine.low %v10207, %v10208
        %v10698 = vcombine.low %v10209, %v10210
        %v10700 = vunpack.c.l.s4 1983009808
        %v10701 = vunpack.c.0.s8 %v10700
        %v10702 = vlaneseq
        %v10703 = vshrl.u32 %v10702, 7
        %v10704 = vsub.s32 %v10701, %v10703
        %v10705 = vrot.slane %v10697, %v10704
        %v10707 = vunpack.c.l.s4 1983009808
        %v10708 = vunpack.c.0.s8 %v10707
        %v10709 = vlaneseq
        %v10710 = vshrl.u32 %v10709, 7
        %v10711 = vsub.s32 %v10708, %v10710
        %v10712 = vrot.slane %v10698, %v10711
        %v10713 = vcombine.low %v10705, %v10712
        %v10714 = vcombine.low %v10211, %v10212
        %v10715 = vcombine.low %v10213, %v10214
        %v10717 = vunpack.c.l.s4 1983009808
        %v10718 = vunpack.c.0.s8 %v10717
        %v10719 = vlaneseq
        %v10720 = vshrl.u32 %v10719, 7
        %v10721 = vsub.s32 %v10718, %v10720
        %v10722 = vrot.slane %v10714, %v10721
        %v10724 = vunpack.c.l.s4 1983009808
        %v10725 = vunpack.c.0.s8 %v10724
        %v10726 = vlaneseq
        %v10727 = vshrl.u32 %v10726, 7
        %v10728 = vsub.s32 %v10725, %v10727
        %v10729 = vrot.slane %v10715, %v10728
        %v10730 = vcombine.low %v10722, %v10729
        %v10731 = vcombine.low %v10215, %v10216
        %v10732 = vcombine.low %v10217, %v10218
        %v10734 = vunpack.c.l.s4 1983009808
        %v10735 = vunpack.c.0.s8 %v10734
        %v10736 = vlaneseq
        %v10737 = vshrl.u32 %v10736, 7
        %v10738 = vsub.s32 %v10735, %v10737
        %v10739 = vrot.slane %v10731, %v10738
        %v10741 = vunpack.c.l.s4 1983009808
        %v10742 = vunpack.c.0.s8 %v10741
        %v10743 = vlaneseq
        %v10744 = vshrl.u32 %v10743, 7
        %v10745 = vsub.s32 %v10742, %v10744
        %v10746 = vrot.slane %v10732, %v10745
        %v10747 = vcombine.low %v10739, %v10746
        %v10748 = vcombine.low %v10219, %v10220
        %v10749 = vcombine.low %v10221, %v10222
        %v10751 = vunpack.c.l.s4 1983009808
        %v10752 = vunpack.c.0.s8 %v10751
        %v10753 = vlaneseq
        %v10754 = vshrl.u32 %v10753, 7
        %v10755 = vsub.s32 %v10752, %v10754
        %v10756 = vrot.slane %v10748, %v10755
        %v10758 = vunpack.c.l.s4 1983009808
        %v10759 = vunpack.c.0.s8 %v10758
        %v10760 = vlaneseq
        %v10761 = vshrl.u32 %v10760, 7
        %v10762 = vsub.s32 %v10759, %v10761
        %v10763 = vrot.slane %v10749, %v10762
        %v10764 = vcombine.low %v10756, %v10763
        %v10765 = vcombine.low %v10223, %v10224
        %v10766 = vcombine.low %v10225, %v10226
        %v10768 = vunpack.c.l.s4 1983009808
        %v10769 = vunpack.c.0.s8 %v10768
        %v10770 = vlaneseq
        %v10771 = vshrl.u32 %v10770, 7
        %v10772 = vsub.s32 %v10769, %v10771
        %v10773 = vrot.slane %v10765, %v10772
        %v10775 = vunpack.c.l.s4 1983009808
        %v10776 = vunpack.c.0.s8 %v10775
        %v10777 = vlaneseq
        %v10778 = vshrl.u32 %v10777, 7
        %v10779 = vsub.s32 %v10776, %v10778
        %v10780 = vrot.slane %v10766, %v10779
        %v10781 = vcombine.low %v10773, %v10780
        %v10782 = vcombine.low %v10227, %v10228
        %v10783 = vcombine.low %v10229, %v10230
        %v10785 = vunpack.c.l.s4 1983009808
        %v10786 = vunpack.c.0.s8 %v10785
        %v10787 = vlaneseq
        %v10788 = vshrl.u32 %v10787, 7
        %v10789 = vsub.s32 %v10786, %v10788
        %v10790 = vrot.slane %v10782, %v10789
        %v10792 = vunpack.c.l.s4 1983009808
        %v10793 = vunpack.c.0.s8 %v10792
        %v10794 = vlaneseq
        %v10795 = vshrl.u32 %v10794, 7
        %v10796 = vsub.s32 %v10793, %v10795
        %v10797 = vrot.slane %v10783, %v10796
        %v10798 = vcombine.low %v10790, %v10797
        %v10799 = vcombine.low %v10231, %v10232
        %v10800 = vcombine.low %v10233, %v10234
        %v10802 = vunpack.c.l.s4 1983009808
        %v10803 = vunpack.c.0.s8 %v10802
        %v10804 = vlaneseq
        %v10805 = vshrl.u32 %v10804, 7
        %v10806 = vsub.s32 %v10803, %v10805
        %v10807 = vrot.slane %v10799, %v10806
        %v10809 = vunpack.c.l.s4 1983009808
        %v10810 = vunpack.c.0.s8 %v10809
        %v10811 = vlaneseq
        %v10812 = vshrl.u32 %v10811, 7
        %v10813 = vsub.s32 %v10810, %v10812
        %v10814 = vrot.slane %v10800, %v10813
        %v10815 = vcombine.low %v10807, %v10814
        %v10816 = vcombine.low %v10235, %v10236
        %v10817 = vcombine.low %v10237, %v10238
        %v10819 = vunpack.c.l.s4 1983009808
        %v10820 = vunpack.c.0.s8 %v10819
        %v10821 = vlaneseq
        %v10822 = vshrl.u32 %v10821, 7
        %v10823 = vsub.s32 %v10820, %v10822
        %v10824 = vrot.slane %v10816, %v10823
        %v10826 = vunpack.c.l.s4 1983009808
        %v10827 = vunpack.c.0.s8 %v10826
        %v10828 = vlaneseq
        %v10829 = vshrl.u32 %v10828, 7
        %v10830 = vsub.s32 %v10827, %v10829
        %v10831 = vrot.slane %v10817, %v10830
        %v10832 = vcombine.low %v10824, %v10831
        %v10833 = vcombine.low %v10239, %v10240
        %v10834 = vcombine.low %v10241, %v10242
        %v10836 = vunpack.c.l.s4 1983009808
        %v10837 = vunpack.c.0.s8 %v10836
        %v10838 = vlaneseq
        %v10839 = vshrl.u32 %v10838, 7
        %v10840 = vsub.s32 %v10837, %v10839
        %v10841 = vrot.slane %v10833, %v10840
        %v10843 = vunpack.c.l.s4 1983009808
        %v10844 = vunpack.c.0.s8 %v10843
        %v10845 = vlaneseq
        %v10846 = vshrl.u32 %v10845, 7
        %v10847 = vsub.s32 %v10844, %v10846
        %v10848 = vrot.slane %v10834, %v10847
        %v10849 = vcombine.low %v10841, %v10848
        %v10850 = vcombine.low %v10243, %v10244
        %v10851 = vcombine.low %v10245, %v10246
        %v10853 = vunpack.c.l.s4 1983009808
        %v10854 = vunpack.c.0.s8 %v10853
        %v10855 = vlaneseq
        %v10856 = vshrl.u32 %v10855, 7
        %v10857 = vsub.s32 %v10854, %v10856
        %v10858 = vrot.slane %v10850, %v10857
        %v10860 = vunpack.c.l.s4 1983009808
        %v10861 = vunpack.c.0.s8 %v10860
        %v10862 = vlaneseq
        %v10863 = vshrl.u32 %v10862, 7
        %v10864 = vsub.s32 %v10861, %v10863
        %v10865 = vrot.slane %v10851, %v10864
        %v10866 = vcombine.low %v10858, %v10865
        %v10867 = vcombine.low %v10247, %v10248
        %v10868 = vcombine.low %v10249, %v10250
        %v10870 = vunpack.c.l.s4 1983009808
        %v10871 = vunpack.c.0.s8 %v10870
        %v10872 = vlaneseq
        %v10873 = vshrl.u32 %v10872, 7
        %v10874 = vsub.s32 %v10871, %v10873
        %v10875 = vrot.slane %v10867, %v10874
        %v10877 = vunpack.c.l.s4 1983009808
        %v10878 = vunpack.c.0.s8 %v10877
        %v10879 = vlaneseq
        %v10880 = vshrl.u32 %v10879, 7
        %v10881 = vsub.s32 %v10878, %v10880
        %v10882 = vrot.slane %v10868, %v10881
        %v10883 = vcombine.low %v10875, %v10882
        %v10884 = vcombine.low %v10251, %v10252
        %v10885 = vcombine.low %v10253, %v10254
        %v10887 = vunpack.c.l.s4 1983009808
        %v10888 = vunpack.c.0.s8 %v10887
        %v10889 = vlaneseq
        %v10890 = vshrl.u32 %v10889, 7
        %v10891 = vsub.s32 %v10888, %v10890
        %v10892 = vrot.slane %v10884, %v10891
        %v10894 = vunpack.c.l.s4 1983009808
        %v10895 = vunpack.c.0.s8 %v10894
        %v10896 = vlaneseq
        %v10897 = vshrl.u32 %v10896, 7
        %v10898 = vsub.s32 %v10895, %v10897
        %v10899 = vrot.slane %v10885, %v10898
        %v10900 = vcombine.low %v10892, %v10899
        %v10901 = vcombine.low %v10255, %v10256
        %v10902 = vcombine.low %v10257, %v10258
        %v10904 = vunpack.c.l.s4 1983009808
        %v10905 = vunpack.c.0.s8 %v10904
        %v10906 = vlaneseq
        %v10907 = vshrl.u32 %v10906, 7
        %v10908 = vsub.s32 %v10905, %v10907
        %v10909 = vrot.slane %v10901, %v10908
        %v10911 = vunpack.c.l.s4 1983009808
        %v10912 = vunpack.c.0.s8 %v10911
        %v10913 = vlaneseq
        %v10914 = vshrl.u32 %v10913, 7
        %v10915 = vsub.s32 %v10912, %v10914
        %v10916 = vrot.slane %v10902, %v10915
        %v10917 = vcombine.low %v10909, %v10916
        %v10918 = vcombine.low %v10259, %v10260
        %v10919 = vcombine.low %v10261, %v10262
        %v10921 = vunpack.c.l.s4 1983009808
        %v10922 = vunpack.c.0.s8 %v10921
        %v10923 = vlaneseq
        %v10924 = vshrl.u32 %v10923, 7
        %v10925 = vsub.s32 %v10922, %v10924
        %v10926 = vrot.slane %v10918, %v10925
        %v10928 = vunpack.c.l.s4 1983009808
        %v10929 = vunpack.c.0.s8 %v10928
        %v10930 = vlaneseq
        %v10931 = vshrl.u32 %v10930, 7
        %v10932 = vsub.s32 %v10929, %v10931
        %v10933 = vrot.slane %v10919, %v10932
        %v10934 = vcombine.low %v10926, %v10933
        %v10967 = vpack.c.bf16 %v10424, %v10407
        %v10968 = vpack.c.bf16 %v10458, %v10441
        %v10969 = vpack.c.bf16 %v10492, %v10475
        %v10970 = vpack.c.bf16 %v10526, %v10509
        %v10971 = vpack.c.bf16 %v10560, %v10543
        %v10972 = vpack.c.bf16 %v10594, %v10577
        %v10973 = vpack.c.bf16 %v10628, %v10611
        %v10974 = vpack.c.bf16 %v10662, %v10645
        %v10975 = vpack.c.bf16 %v10696, %v10679
        %v10976 = vpack.c.bf16 %v10730, %v10713
        %v10977 = vpack.c.bf16 %v10764, %v10747
        %v10978 = vpack.c.bf16 %v10798, %v10781
        %v10979 = vpack.c.bf16 %v10832, %v10815
        %v10980 = vpack.c.bf16 %v10866, %v10849
        %v10981 = vpack.c.bf16 %v10900, %v10883
        %v10982 = vpack.c.bf16 %v10934, %v10917
        %v10999 = vunpack.c.l.b16 %v10967
        %v11000 = vunpack.c.h.b16 %v10967
        %v11001 = vunpack.c.l.b16 %v10968
        %v11002 = vunpack.c.h.b16 %v10968
        %v11003 = vunpack.c.l.b16 %v10969
        %v11004 = vunpack.c.h.b16 %v10969
        %v11005 = vunpack.c.l.b16 %v10970
        %v11006 = vunpack.c.h.b16 %v10970
        %v11007 = vunpack.c.l.b16 %v10971
        %v11008 = vunpack.c.h.b16 %v10971
        %v11009 = vunpack.c.l.b16 %v10972
        %v11010 = vunpack.c.h.b16 %v10972
        %v11011 = vunpack.c.l.b16 %v10973
        %v11012 = vunpack.c.h.b16 %v10973
        %v11013 = vunpack.c.l.b16 %v10974
        %v11014 = vunpack.c.h.b16 %v10974
        %v11015 = vunpack.c.l.b16 %v10975
        %v11016 = vunpack.c.h.b16 %v10975
        %v11017 = vunpack.c.l.b16 %v10976
        %v11018 = vunpack.c.h.b16 %v10976
        %v11019 = vunpack.c.l.b16 %v10977
        %v11020 = vunpack.c.h.b16 %v10977
        %v11021 = vunpack.c.l.b16 %v10978
        %v11022 = vunpack.c.h.b16 %v10978
        %v11023 = vunpack.c.l.b16 %v10979
        %v11024 = vunpack.c.h.b16 %v10979
        %v11025 = vunpack.c.l.b16 %v10980
        %v11026 = vunpack.c.h.b16 %v10980
        %v11027 = vunpack.c.l.b16 %v10981
        %v11028 = vunpack.c.h.b16 %v10981
        %v11029 = vunpack.c.l.b16 %v10982
        %v11030 = vunpack.c.h.b16 %v10982
        %v11031 = vpack.c.b16 %v10999, %v10999
        %v11032 = vpack.c.b16 %v11000, %v11000
        %v11033 = vpack.c.b16 %v11001, %v11001
        %v11034 = vpack.c.b16 %v11002, %v11002
        %v11035 = vpack.c.b16 %v11003, %v11003
        %v11036 = vpack.c.b16 %v11004, %v11004
        %v11037 = vpack.c.b16 %v11005, %v11005
        %v11038 = vpack.c.b16 %v11006, %v11006
        %v11039 = vpack.c.b16 %v11007, %v11007
        %v11040 = vpack.c.b16 %v11008, %v11008
        %v11041 = vpack.c.b16 %v11009, %v11009
        %v11042 = vpack.c.b16 %v11010, %v11010
        %v11043 = vpack.c.b16 %v11011, %v11011
        %v11044 = vpack.c.b16 %v11012, %v11012
        %v11045 = vpack.c.b16 %v11013, %v11013
        %v11046 = vpack.c.b16 %v11014, %v11014
        %v11047 = vpack.c.b16 %v11015, %v11015
        %v11048 = vpack.c.b16 %v11016, %v11016
        %v11049 = vpack.c.b16 %v11017, %v11017
        %v11050 = vpack.c.b16 %v11018, %v11018
        %v11051 = vpack.c.b16 %v11019, %v11019
        %v11052 = vpack.c.b16 %v11020, %v11020
        %v11053 = vpack.c.b16 %v11021, %v11021
        %v11054 = vpack.c.b16 %v11022, %v11022
        %v11055 = vpack.c.b16 %v11023, %v11023
        %v11056 = vpack.c.b16 %v11024, %v11024
        %v11057 = vpack.c.b16 %v11025, %v11025
        %v11058 = vpack.c.b16 %v11026, %v11026
        %v11059 = vpack.c.b16 %v11027, %v11027
        %v11060 = vpack.c.b16 %v11028, %v11028
        %v11061 = vpack.c.b16 %v11029, %v11029
        %v11062 = vpack.c.b16 %v11030, %v11030
        %11095 = vst [vmem:[%s397] sm:$0xf] %v11031
        %11096 = vst [vmem:[%s397 + $0x4] sm:$0xf] %v11032
        %11097 = vst [vmem:[%s397 + $0x8] sm:$0xf] %v11033
        %11098 = vst [vmem:[%s397 + $0xc] sm:$0xf] %v11034
        %11099 = vst [vmem:[%s397 + $0x10] sm:$0xf] %v11035
        %11100 = vst [vmem:[%s397 + $0x14] sm:$0xf] %v11036
        %11101 = vst [vmem:[%s397 + $0x18] sm:$0xf] %v11037
        %11102 = vst [vmem:[%s397 + $0x1c] sm:$0xf] %v11038
        %11103 = vst [vmem:[%s397 + $0x20] sm:$0xf] %v11039
        %11104 = vst [vmem:[%s397 + $0x24] sm:$0xf] %v11040
        %11105 = vst [vmem:[%s397 + $0x28] sm:$0xf] %v11041
        %11106 = vst [vmem:[%s397 + $0x2c] sm:$0xf] %v11042
        %11107 = vst [vmem:[%s397 + $0x30] sm:$0xf] %v11043
        %11108 = vst [vmem:[%s397 + $0x34] sm:$0xf] %v11044
        %11109 = vst [vmem:[%s397 + $0x38] sm:$0xf] %v11045
        %11110 = vst [vmem:[%s397 + $0x3c] sm:$0xf] %v11046
        %11111 = vst [vmem:[%s397 + $0x40] sm:$0xf] %v11047
        %11112 = vst [vmem:[%s397 + $0x44] sm:$0xf] %v11048
        %11113 = vst [vmem:[%s397 + $0x48] sm:$0xf] %v11049
        %11114 = vst [vmem:[%s397 + $0x4c] sm:$0xf] %v11050
        %11115 = vst [vmem:[%s397 + $0x50] sm:$0xf] %v11051
        %11116 = vst [vmem:[%s397 + $0x54] sm:$0xf] %v11052
        %11117 = vst [vmem:[%s397 + $0x58] sm:$0xf] %v11053
        %11118 = vst [vmem:[%s397 + $0x5c] sm:$0xf] %v11054
        %11119 = vst [vmem:[%s397 + $0x60] sm:$0xf] %v11055
        %11120 = vst [vmem:[%s397 + $0x64] sm:$0xf] %v11056
        %11121 = vst [vmem:[%s397 + $0x68] sm:$0xf] %v11057
        %11122 = vst [vmem:[%s397 + $0x6c] sm:$0xf] %v11058
        %11123 = vst [vmem:[%s397 + $0x70] sm:$0xf] %v11059
        %11124 = vst [vmem:[%s397 + $0x74] sm:$0xf] %v11060
        %11125 = vst [vmem:[%s397 + $0x78] sm:$0xf] %v11061
        %11126 = vst [vmem:[%s397 + $0x7c] sm:$0xf] %v11062
        %p11127 = scmp.eq.s32.totalorder %s33, 0
        // Predicated region
        $region49: #{tpu_custom_call.1} parent=47 // pred_check
          %p11128 = pneg %p11127
        $region50: #{tpu_custom_call.1} parent=47 // pred_check_branch
          %11130 = sbr.rel (%p11128) target = $region52
        $region51: #{tpu_custom_call.1} parent=47 // pred_region
          %11131 = vst [vmem:[%s403] sm:$0x1] 0.0
        $region52: #{tpu_custom_call.1} parent=47 // pred_fallthru
          _
        %v11132 = vld [vmem:[%s403] sm:$0x1]
        %v11133 = vadd.f32 %v10407, %v10424
        %v11134 = vadd.f32 %v11133, %v10441
        %v11135 = vadd.f32 %v11134, %v10458
        %v11136 = vadd.f32 %v11135, %v10475
        %v11137 = vadd.f32 %v11136, %v10492
        %v11138 = vadd.f32 %v11137, %v10509
        %v11139 = vadd.f32 %v11138, %v10526
        %v11140 = vadd.f32 %v11139, %v10543
        %v11141 = vadd.f32 %v11140, %v10560
        %v11142 = vadd.f32 %v11141, %v10577
        %v11143 = vadd.f32 %v11142, %v10594
        %v11144 = vadd.f32 %v11143, %v10611
        %v11145 = vadd.f32 %v11144, %v10628
        %v11146 = vadd.f32 %v11145, %v10645
        %v11147 = vadd.f32 %v11146, %v10662
        %v11148 = vadd.f32 %v11147, %v10679
        %v11149 = vadd.f32 %v11148, %v10696
        %v11150 = vadd.f32 %v11149, %v10713
        %v11151 = vadd.f32 %v11150, %v10730
        %v11152 = vadd.f32 %v11151, %v10747
        %v11153 = vadd.f32 %v11152, %v10764
        %v11154 = vadd.f32 %v11153, %v10781
        %v11155 = vadd.f32 %v11154, %v10798
        %v11156 = vadd.f32 %v11155, %v10815
        %v11157 = vadd.f32 %v11156, %v10832
        %v11158 = vadd.f32 %v11157, %v10849
        %v11159 = vadd.f32 %v11158, %v10866
        %v11160 = vadd.f32 %v11159, %v10883
        %v11161 = vadd.f32 %v11160, %v10900
        %v11162 = vadd.f32 %v11161, %v10917
        %v11163 = vadd.f32 %v11162, %v10934
        %v11164 = vrot.slane %v11163, 4
        %v11165 = vadd.f32 %v11163, %v11164
        %v11166 = vrot.slane %v11165, 2
        %v11167 = vadd.f32 %v11165, %v11166
        %v11168 = vrot.slane %v11167, 1
        %v11169 = vadd.f32 %v11167, %v11168
        %v11170 = vadd.f32 %v11132, %v11169
        %11171 = vst [vmem:[%s403] sm:$0x1] %v11170
        %s11172 = sand.u32 %s239, 1
        %s11173 = scalar_lea.sflag [#allocation3], %s11172
        %s11174 = sand.u32 %s239, 1
        %s11175 = smul.addr %s11174, 128
        %s11176 = scalar_lea.vmem [#allocation2], %s11175
        %s11177 = sand.u32 %s267, 1
        %s11178 = scalar_lea.sflag [#allocation5], %s11177
        %s11179 = sand.u32 %s267, 1
        %s11180 = scalar_lea.vmem [#allocation4], %s11179
        // Predicated region
        $region53: #{tpu_custom_call.1} parent=47 // pred_check
          %p11181 = pneg %p249
        $region54: #{tpu_custom_call.1} parent=47 // pred_check_branch
          %11183 = sbr.rel (%p11181) target = $region56
        $region55: #{tpu_custom_call.1} parent=47 // pred_region
          %s11184 = smul.u32 16, %s33
          %s11186 = ssub.s32 2048, 2048
          %11187 = vsyncadd %s11173, %s11186
          %s11188 = smul.addr %s11184, 2
          %s11189 = sadd.s32 %s32, %s11188
          %s11190 = smul.addr %s31, 32
          %s11191 = sadd.s32 %s11189, %s11190
          %s11192 = smul.addr %s11191, 64
          %s11193 = scalar_lea.hbm %s7, %s11192
          %s11194 = sshll.u32 %s11176, 4
          %s11195 = int_to_ptr.vmem [resolvable:$true] %s11194
          %11200 = dma.vmem_to_hbm [thread:$0]  %s11195, 2048, %s11193, %s11173, 64, 64, 4
        $region56: #{tpu_custom_call.1} parent=47 // pred_fallthru
          _
        // Predicated region
        $region57: #{tpu_custom_call.1} parent=47 // pred_check
          %p11201 = pneg %p277
        $region58: #{tpu_custom_call.1} parent=47 // pred_check_branch
          %11203 = sbr.rel (%p11201) target = $region60
        $region59: #{tpu_custom_call.1} parent=47 // pred_region
          %s11205 = ssub.s32 16, 16
          %11206 = vsyncadd %s11178, %s11205
          %s11207 = sadd.s32 %s32, %s31
          %s11208 = smul.addr %s11207, 16
          %s11209 = scalar_lea.hbm %s8, %s11208
          %s11211 = sshll.u32 %s11180, 4
          %s11212 = int_to_ptr.vmem [resolvable:$true] %s11211
          %11214 = dma.vmem_to_hbm [thread:$0]  %s11212, 16, %s11209, %s11178
        $region60: #{tpu_custom_call.1} parent=47 // pred_fallthru
          _
      $region48: #{tpu_custom_call.1} parent=5 // pred_fallthru
        _
      %p11215 = scmp.le.s32.totalorder 2, %s21
      // Predicated region
      $region61: #{tpu_custom_call.1} parent=5 // pred_check
        %p11216 = pneg %p11215
      $region62: #{tpu_custom_call.1} parent=5 // pred_check_branch
        %11218 = sbr.rel (%p11216) target = $region64
      $region63: #{tpu_custom_call.1} parent=5 // pred_region
        %s11219 = ssub.s32 %s21, 2
        // Predicated region
        $region65: #{tpu_custom_call.1} parent=63 // pred_check
          %p11220 = pneg %p255
        $region66: #{tpu_custom_call.1} parent=63 // pred_check_branch
          %11222 = sbr.rel (%p11220) target = $region68
        $region67: #{tpu_custom_call.1} parent=63 // pred_region
          %s11223 = sand.u32 %s240, 1
          %s11224 = scalar_lea.sflag [#allocation3], %s11223
          %s11225 = sand.u32 %s240, 1
          %s11226 = smul.addr %s11225, 128
          %s11227 = scalar_lea.vmem [#allocation2], %s11226
          %11228 = dma.done %s11224, 2048
        $region68: #{tpu_custom_call.1} parent=63 // pred_fallthru
          _
        // Predicated region
        $region69: #{tpu_custom_call.1} parent=63 // pred_check
          %p11229 = pneg %p283
        $region70: #{tpu_custom_call.1} parent=63 // pred_check_branch
          %11231 = sbr.rel (%p11229) target = $region72
        $region71: #{tpu_custom_call.1} parent=63 // pred_region
          %s11232 = sand.u32 %s268, 1
          %s11233 = scalar_lea.sflag [#allocation5], %s11232
          %s11234 = sand.u32 %s268, 1
          %s11235 = scalar_lea.vmem [#allocation4], %s11234
          %11236 = dma.done %s11233, 16
        $region72: #{tpu_custom_call.1} parent=63 // pred_fallthru
          _
      $region64: #{tpu_custom_call.1} parent=5 // pred_fallthru
        _
    $region6: #{tpu_custom_call.1} parent=1 // loop_footer
      %s25 = sadd.s32 1, %s21
    $region7: #{tpu_custom_call.1} parent=1 // loop_footer_branch
      %20 = sbr.rel target = $region3
    $region8: #{tpu_custom_call.1} parent=1 // loop_exit
      _
    %11237 = vsyncpa [#allocation3], 1
    %s11238 = scalar_lea.sflag [#allocation3], 1
    %11239 = vsyncpa %s11238, 1
    %11240 = vsyncpa [#allocation5], 1
    %s11241 = scalar_lea.sflag [#allocation5], 1
    %11242 = vsyncpa %s11241, 1

</llo_original>
